<compile_context>
chip_gen: v7x
topology: tpu7x:2x2x1
jax: 0.10.0
libtpu: 0.0.40
codegen_flags: <defaults>
</compile_context>

<pallas_src>
import functools

import jax
import jax.numpy as jnp
from jax import lax
from jax.experimental import pallas as pl
from jax.experimental.pallas import tpu as pltpu

_NEG_SLOPE = 0.4


def _round_up(x, m):
    return ((x + m - 1) // m) * m


def _band_matrix(w, s, tk):
    """Periodic band of the width transposed-conv, K-folded over (kh, local column).

    Entry for local input column r and output column t is w[kh, t - r*s + s//2] when that
    kw lies in [0, 2s), else 0.  Local column order is [0..tk-1, left halo (-1), right
    halo (tk)], matching the kernel's lane-concat order.  Returns (3*(tk+2), s*tk) bf16.
    """
    tn = s * tk
    r = jnp.concatenate([jnp.arange(tk), jnp.array([-1, tk])])          # (tk+2,)
    t = jnp.arange(tn)                                                   # (tn,)
    kw = t[None, :] - r[:, None] * s + (s // 2)                          # (tk+2, tn)
    ok = (kw >= 0) & (kw < 2 * s)
    blocks = jnp.where(ok[None, :, :],
                       w[:, jnp.clip(kw, 0, 2 * s - 1)], 0.0)            # (3, tk+2, tn)
    return blocks.reshape(3 * (tk + 2), tn).astype(jnp.bfloat16)


def _convt_kernel(x_ref, halo_ref, band_ref, bias_ref, o_ref, *,
                  hp, nch, tk, fold, s, valid_out, neg_slope):
    """One (n, jj) output tile: fold sub-tiles of ConvT(1,1,(3,2s),(1,s),(1,s//2)) + bias + LReLU."""
    jj = pl.program_id(1)
    tn = s * tk
    kc = tk + 2

    x = x_ref[...]                      # (hp, fold*tk) bf16, H-zero-padded input slab
    halo = halo_ref[...]                # (hp, 2)  bf16: [left of sub-tile 0, right of sub-tile fold-1]

    # Per sub-tile LHS block: [main tk cols | left halo col | right halo col].
    # Interior halos come straight from the combined block; only the 2 outer ones are extra.
    subs = []
    for f in range(fold):
        xm = x[:, f * tk:(f + 1) * tk]
        left = halo[:, 0:1] if f == 0 else x[:, f * tk - 1:f * tk]
        right = halo[:, 1:2] if f == fold - 1 else x[:, (f + 1) * tk:(f + 1) * tk + 1]
        subs.append(jnp.concatenate([xm, left, right], axis=1))
    xs = jnp.concatenate(subs, axis=0)                    # (fold*hp, tk+2)  (M-fold for MXU occupancy)

    # Fold the 3 kh taps into K: [x(h+1) | x(h) | x(h-1)].  Each sub-tile carries its own
    # zero pad rows, so a +/-1 row shift on the stacked slab never leaks data across sub-tiles.
    zrow = jnp.zeros((1, kc), xs.dtype)
    xup = jnp.concatenate([xs[1:], zrow], axis=0)         # x[h+1]  (kh = 0)
    xdn = jnp.concatenate([zrow, xs[:-1]], axis=0)        # x[h-1]  (kh = 2)
    lhs = jnp.concatenate([xup, xs, xdn], axis=1)         # (fold*hp, 3*(tk+2)) bf16

    # Single MXU contraction per grid step; f32 accumulation.
    acc = jnp.dot(lhs, band_ref[...], preferred_element_type=jnp.float32)   # (fold*hp, tn)

    y = acc + bias_ref[0]
    y = jnp.where(y >= 0, y, neg_slope * y)

    # H pad rows must be stored as exact zeros (next layer reads them as the conv zero pad).
    row = lax.broadcasted_iota(jnp.int32, (hp, tn), 0)
    row_ok = (row >= 1) & (row <= nch)

    def _store(mask_cols):
        pieces = []
        for f in range(fold):
            yf = y[f * hp:(f + 1) * hp, :]
            m = row_ok
            if mask_cols:
                off = (jj * fold + f) * tn
                col = lax.broadcasted_iota(jnp.int32, (hp, tn), 1)
                m = jnp.logical_and(m, col < (valid_out - off))
            pieces.append(jnp.where(m, yf, 0.0))
        o_ref[...] = jnp.concatenate(pieces, axis=1).astype(o_ref.dtype)

    # Column masking only where the tile touches / passes the valid-width boundary; tiles
    # entirely past it still get written as zeros (threshold goes negative).
    at_boundary = (jj + 1) * (fold * tn) > valid_out

    @pl.when(at_boundary)
    def _():
        _store(True)

    @pl.when(jnp.logical_not(at_boundary))
    def _():
        _store(False)


def _convt_layer(x, valid_w, w, b, s, *, nch, tk, fold):
    """x: (N, HP, Wp) bf16 with zero H/W pad.  Returns ((N, HP, s*Wp) bf16, s*valid_w)."""
    if s % 2 != 0:
        # TODO(synk): odd upsample scales change the ConvTranspose2d output-length formula;
        # only the module's default even scales are supported here.
        raise NotImplementedError("only even upsample scales are supported")
    N, HP, Wp = x.shape
    step = fold * tk
    assert Wp % step == 0
    J2 = Wp // step
    tn = s * tk

    band = _band_matrix(jnp.asarray(w, jnp.float32), s, tk)          # (3*(tk+2), tn) bf16, resident
    bias = jnp.reshape(jnp.asarray(b, jnp.float32), (1,))

    # Outer halo columns per combined tile (the interior one lives inside the main block).
    lastc = x[:, :, step - 1::step]                                   # (N, HP, J2)
    firstc = x[:, :, 0::step]                                         # (N, HP, J2)
    zcol = jnp.zeros((N, HP, 1), x.dtype)
    left = jnp.concatenate([zcol, lastc[:, :, :J2 - 1]], axis=2)
    right = jnp.concatenate([firstc[:, :, 1:], zcol], axis=2)
    halo = jnp.transpose(jnp.stack([left, right], axis=-1), (0, 2, 1, 3))   # (N, J2, HP, 2)

    valid_out = s * valid_w
    kernel = functools.partial(_convt_kernel, hp=HP, nch=nch, tk=tk, fold=fold, s=s,
                               valid_out=valid_out, neg_slope=_NEG_SLOPE)

    out = pl.pallas_call(
        kernel,
        out_shape=jax.ShapeDtypeStruct((N, HP, s * Wp), jnp.bfloat16),
        grid=(N, J2),
        in_specs=[
            pl.BlockSpec((None, HP, step), lambda n, j: (n, 0, j)),          # input slab (bf16)
            pl.BlockSpec((None, None, HP, 2), lambda n, j: (n, j, 0, 0)),    # 2 outer halo cols
            pl.BlockSpec((3 * (tk + 2), tn), lambda n, j: (0, 0)),           # band (resident, bf16)
            pl.BlockSpec(memory_space=pltpu.MemorySpace.SMEM),               # bias scalar
        ],
        out_specs=pl.BlockSpec((None, HP, fold * tn), lambda n, j: (n, 0, j)),
        compiler_params=pltpu.CompilerParams(
            dimension_semantics=("parallel", "parallel"),
            vmem_limit_bytes=32 * 1024 * 1024,
        ),
    )(x, halo, band, bias)
    return out, valid_out


@functools.partial(jax.jit, static_argnames=("upsample_scales",))
def upsample_net2_forward(c, weights, biases, upsample_scales):
    """Pallas forward of UpsampleNet2: c (N, C, L) -> (N, C, L * prod(upsample_scales))."""
    N, C, L = c.shape
    tk = 128                         # input columns per sub-tile (lane-dense, small band K)
    fold = 2                         # adjacent sub-tiles stacked into the matmul M dim
    HP = _round_up(C + 2, 16)        # 1 top zero row + C data + zero rows; bf16 packs 2 rows/sublane
    Wp = _round_up(L, fold * tk)
    x = jnp.pad(c.astype(jnp.bfloat16), ((0, 0), (1, HP - 1 - C), (0, Wp - L)))
    valid = L
    for w, b, s in zip(weights, biases, upsample_scales):
        x, valid = _convt_layer(x, valid, w, b, s, nch=C, tk=tk, fold=fold)
    return x[:, 1:C + 1, :valid].astype(jnp.float32)


def _reference_forward(c, weights, biases, upsample_scales, neg_slope=_NEG_SLOPE):
    """Pure-JAX gather reference of the ConvTranspose2d(1,1,(3,2s),(1,s),(1,s//2)) + LeakyReLU
    stack, mirroring the kernel's quantization points (bf16 input/weights/inter-layer
    activations, f32 accumulation) so the comparison stays tight."""
    x = c.astype(jnp.bfloat16).astype(jnp.float32)
    for w, b, s in zip(weights, biases, upsample_scales):
        N, H, W = x.shape
        Wo = s * W
        xp = jnp.pad(x, ((0, 0), (1, 1), (0, 0)))
        ow = jnp.arange(Wo)
        acc = jnp.zeros((N, H, Wo), jnp.float32)
        wf = jnp.asarray(w, jnp.float32).astype(jnp.bfloat16).astype(jnp.float32)
        for kh in range(3):
            xs = xp[:, 2 - kh:2 - kh + H, :]
            for kw in range(2 * s):
                t = ow + s // 2 - kw
                ok = (t % s == 0) & (t >= 0) & (t < s * W)
                iw = jnp.clip(t // s, 0, W - 1)
                acc = acc + jnp.where(ok[None, None, :], wf[kh, kw] * xs[:, :, iw], 0.0)
        y = acc + jnp.asarray(b, jnp.float32)
        y = jnp.where(y >= 0, y, neg_slope * y)
        x = y.astype(jnp.bfloat16).astype(jnp.float32)   # bf16 inter-layer storage, like the kernel
    return x


if __name__ == "__main__":
    key = jax.random.PRNGKey(0)
    N, C, L = 2, 80, 16                      # (batch, mel channels, frames) -- small test shape
    upsample_scales = (2, 2, 2, 2)           # module default -> 16x time upsampling

    keys = jax.random.split(key, 1 + 2 * len(upsample_scales))
    c = jax.random.normal(keys[0], (N, C, L), dtype=jnp.float32)

    weights, biases = [], []
    for i, s in enumerate(upsample_scales):
        fan_in = 1 * 3 * (2 * s)             # kaiming_normal_-like scale for the effective kernel
        std = (2.0 / fan_in) ** 0.5
        weights.append(std * jax.random.normal(keys[1 + 2 * i], (3, 2 * s), dtype=jnp.float32))
        biases.append(0.1 * jax.random.normal(keys[2 + 2 * i], (), dtype=jnp.float32))

    out = upsample_net2_forward(c, tuple(weights), tuple(biases),
                                upsample_scales=upsample_scales)
    out = jax.block_until_ready(out)

    total = 1
    for s in upsample_scales:
        total *= s
    assert out.shape == (N, C, L * total), out.shape

    ref = _reference_forward(c, weights, biases, upsample_scales)
    max_err = float(jnp.max(jnp.abs(out - ref)))
    # Reference mirrors the kernel's bf16 quantization, so differences are only f32
    # accumulation-order + occasional 1-ulp bf16 rounding flips; genuine bugs are O(0.1+).
    assert jnp.allclose(out, ref, atol=2e-2, rtol=2e-2), f"mismatch vs reference: {max_err}"

    print("KERNEL_OK")
</pallas_src>

<mosaic_0001>
module attributes {stable_mosaic.version = 11 : i64} {
  func.func @_convt_kernel(%arg0: i32, %arg1: i32, %arg2: memref<1x96x256xbf16, #tpu.memory_space<vmem>>, %arg3: memref<1x1x96x2xbf16, #tpu.memory_space<vmem>>, %arg4: memref<390x256xbf16, #tpu.memory_space<vmem>>, %arg5: memref<1xf32, #tpu.memory_space<smem>>, %arg6: memref<1x96x512xbf16, #tpu.memory_space<vmem>>) attributes {dimension_semantics = [#tpu.dimension_semantics<parallel>, #tpu.dimension_semantics<parallel>], iteration_bounds = array<i64: 2, 1>, scalar_prefetch = 0 : i64, scratch_operands = 0 : i64, tpu.core_type = #tpu.core_type<tc>, window_params = [{transform_indices = @transform_0, window_bounds = array<i64: 1, 96, 256>}, {transform_indices = @transform_1, window_bounds = array<i64: 1, 1, 96, 2>}, {pipeline_mode = #tpu.pipeline_mode<synchronous>, transform_indices = @transform_2, window_bounds = array<i64: 390, 256>}, {transform_indices = @transform_3, window_bounds = array<i64: 1>}, {transform_indices = @transform_4, window_bounds = array<i64: 1, 96, 512>}]} {
    %c0 = arith.constant 0 : index
    %c0_0 = arith.constant 0 : index
    %c0_1 = arith.constant 0 : index
    %0 = vector.load %arg2[%c0, %c0_0, %c0_1] : memref<1x96x256xbf16, #tpu.memory_space<vmem>>, vector<1x96x256xbf16>
    %1 = vector.shape_cast %0 : vector<1x96x256xbf16> to vector<96x256xbf16>
    %c0_2 = arith.constant 0 : index
    %c0_3 = arith.constant 0 : index
    %c0_4 = arith.constant 0 : index
    %c0_5 = arith.constant 0 : index
    %2 = vector.load %arg3[%c0_2, %c0_3, %c0_4, %c0_5] : memref<1x1x96x2xbf16, #tpu.memory_space<vmem>>, vector<1x1x96x2xbf16>
    %3 = vector.shape_cast %2 : vector<1x1x96x2xbf16> to vector<96x2xbf16>
    %4 = vector.extract_strided_slice %1 {offsets = [0, 0], sizes = [96, 128], strides = [1, 1]} : vector<96x256xbf16> to vector<96x128xbf16>
    %5 = vector.extract_strided_slice %3 {offsets = [0, 0], sizes = [96, 1], strides = [1, 1]} : vector<96x2xbf16> to vector<96x1xbf16>
    %6 = vector.extract_strided_slice %1 {offsets = [0, 128], sizes = [96, 1], strides = [1, 1]} : vector<96x256xbf16> to vector<96x1xbf16>
    %7 = tpu.concatenate %4, %5, %6 in 1 : vector<96x128xbf16>, vector<96x1xbf16>, vector<96x1xbf16> -> vector<96x130xbf16>
    %8 = vector.extract_strided_slice %1 {offsets = [0, 128], sizes = [96, 128], strides = [1, 1]} : vector<96x256xbf16> to vector<96x128xbf16>
    %9 = vector.extract_strided_slice %1 {offsets = [0, 127], sizes = [96, 1], strides = [1, 1]} : vector<96x256xbf16> to vector<96x1xbf16>
    %10 = vector.extract_strided_slice %3 {offsets = [0, 1], sizes = [96, 1], strides = [1, 1]} : vector<96x2xbf16> to vector<96x1xbf16>
    %11 = tpu.concatenate %8, %9, %10 in 1 : vector<96x128xbf16>, vector<96x1xbf16>, vector<96x1xbf16> -> vector<96x130xbf16>
    %12 = tpu.concatenate %7, %11 in 0 : vector<96x130xbf16>, vector<96x130xbf16> -> vector<192x130xbf16>
    %cst = arith.constant 0.000000e+00 : bf16
    %13 = vector.broadcast %cst : bf16 to vector<1x130xbf16>
    %14 = vector.extract_strided_slice %12 {offsets = [1, 0], sizes = [191, 130], strides = [1, 1]} : vector<192x130xbf16> to vector<191x130xbf16>
    %15 = tpu.concatenate %14, %13 in 0 : vector<191x130xbf16>, vector<1x130xbf16> -> vector<192x130xbf16>
    %16 = vector.extract_strided_slice %12 {offsets = [0, 0], sizes = [191, 130], strides = [1, 1]} : vector<192x130xbf16> to vector<191x130xbf16>
    %17 = tpu.concatenate %13, %16 in 0 : vector<1x130xbf16>, vector<191x130xbf16> -> vector<192x130xbf16>
    %18 = tpu.concatenate %15, %12, %17 in 1 : vector<192x130xbf16>, vector<192x130xbf16>, vector<192x130xbf16> -> vector<192x390xbf16>
    %c0_6 = arith.constant 0 : index
    %c0_7 = arith.constant 0 : index
    %19 = vector.load %arg4[%c0_6, %c0_7] : memref<390x256xbf16, #tpu.memory_space<vmem>>, vector<390x256xbf16>
    %cst_8 = arith.constant dense<0.000000e+00> : vector<192x256xf32>
    %20 = tpu.matmul %18, %19, %cst_8 {dimension_numbers = #tpu.dot_dimension_numbers<[1], [0], [0], [1], [0, 0, 1, 1], [], []>} : vector<192x390xbf16>, vector<390x256xbf16>, vector<192x256xf32> -> vector<192x256xf32>
    %c0_9 = arith.constant 0 : index
    %21 = memref.load %arg5[%c0_9] : memref<1xf32, #tpu.memory_space<smem>>
    %22 = vector.broadcast %21 : f32 to vector<192x256xf32>
    %23 = arith.addf %20, %22 : vector<192x256xf32>
    %cst_10 = arith.constant 0.000000e+00 : f32
    %24 = vector.broadcast %cst_10 : f32 to vector<192x256xf32>
    %25 = arith.cmpf oge, %23, %24 : vector<192x256xf32>
    %cst_11 = arith.constant 4.000000e-01 : f32
    %26 = vector.broadcast %cst_11 : f32 to vector<192x256xf32>
    %27 = arith.mulf %26, %23 : vector<192x256xf32>
    %28 = arith.select %25, %23, %27 : vector<192x256xi1>, vector<192x256xf32>
    %29 = tpu.iota {dimensions = array<i32: 0>} : vector<96x256xi32>
    %c1_i32 = arith.constant 1 : i32
    %30 = vector.broadcast %c1_i32 : i32 to vector<96x256xi32>
    %31 = arith.cmpi sge, %29, %30 : vector<96x256xi32>
    %c80_i32 = arith.constant 80 : i32
    %32 = vector.broadcast %c80_i32 : i32 to vector<96x256xi32>
    %33 = arith.cmpi sle, %29, %32 : vector<96x256xi32>
    %34 = arith.andi %31, %33 : vector<96x256xi1>
    %c1_i32_12 = arith.constant 1 : i32
    %35 = arith.addi %arg1, %c1_i32_12 : i32
    %c512_i32 = arith.constant 512 : i32
    %36 = arith.muli %35, %c512_i32 : i32
    %c32_i32 = arith.constant 32 : i32
    %37 = arith.cmpi sgt, %36, %c32_i32 : i32
    %38 = arith.extui %37 : i1 to i32
    %c0_i32 = arith.constant 0 : i32
    %39 = arith.cmpi ne, %38, %c0_i32 : i32
    scf.if %39 {
      %43 = vector.extract_strided_slice %28 {offsets = [0, 0], sizes = [96, 256], strides = [1, 1]} : vector<192x256xf32> to vector<96x256xf32>
      %c2_i32 = arith.constant 2 : i32
      %44 = arith.muli %arg1, %c2_i32 : i32
      %c0_i32_14 = arith.constant 0 : i32
      %45 = arith.addi %44, %c0_i32_14 : i32
      %c256_i32 = arith.constant 256 : i32
      %46 = arith.muli %45, %c256_i32 : i32
      %47 = tpu.iota {dimensions = array<i32: 1>} : vector<96x256xi32>
      %c32_i32_15 = arith.constant 32 : i32
      %48 = arith.subi %c32_i32_15, %46 : i32
      %49 = vector.broadcast %48 : i32 to vector<96x256xi32>
      %50 = arith.cmpi slt, %47, %49 : vector<96x256xi32>
      %51 = arith.andi %34, %50 : vector<96x256xi1>
      %cst_16 = arith.constant 0.000000e+00 : f32
      %52 = vector.broadcast %cst_16 : f32 to vector<96x256xf32>
      %53 = arith.select %51, %43, %52 : vector<96x256xi1>, vector<96x256xf32>
      %54 = vector.extract_strided_slice %28 {offsets = [96, 0], sizes = [96, 256], strides = [1, 1]} : vector<192x256xf32> to vector<96x256xf32>
      %c2_i32_17 = arith.constant 2 : i32
      %55 = arith.muli %arg1, %c2_i32_17 : i32
      %c1_i32_18 = arith.constant 1 : i32
      %56 = arith.addi %55, %c1_i32_18 : i32
      %c256_i32_19 = arith.constant 256 : i32
      %57 = arith.muli %56, %c256_i32_19 : i32
      %58 = tpu.iota {dimensions = array<i32: 1>} : vector<96x256xi32>
      %c32_i32_20 = arith.constant 32 : i32
      %59 = arith.subi %c32_i32_20, %57 : i32
      %60 = vector.broadcast %59 : i32 to vector<96x256xi32>
      %61 = arith.cmpi slt, %58, %60 : vector<96x256xi32>
      %62 = arith.andi %34, %61 : vector<96x256xi1>
      %cst_21 = arith.constant 0.000000e+00 : f32
      %63 = vector.broadcast %cst_21 : f32 to vector<96x256xf32>
      %64 = arith.select %62, %54, %63 : vector<96x256xi1>, vector<96x256xf32>
      %65 = tpu.concatenate %53, %64 in 1 : vector<96x256xf32>, vector<96x256xf32> -> vector<96x512xf32>
      %66 = arith.truncf %65 : vector<96x512xf32> to vector<96x512xbf16>
      %c0_22 = arith.constant 0 : index
      %c0_23 = arith.constant 0 : index
      %c0_24 = arith.constant 0 : index
      %67 = vector.load %arg6[%c0_22, %c0_23, %c0_24] : memref<1x96x512xbf16, #tpu.memory_space<vmem>>, vector<1x96x512xbf16>
      %68 = vector.shape_cast %67 : vector<1x96x512xbf16> to vector<96x512xbf16>
      %69 = vector.shape_cast %66 : vector<96x512xbf16> to vector<1x96x512xbf16>
      tpu.vector_store %arg6[%c0_22, %c0_23, %c0_24], %69 {strides = array<i32>} : memref<1x96x512xbf16, #tpu.memory_space<vmem>>, vector<1x96x512xbf16>,
    } else {
    }
    %true = arith.constant true
    %40 = arith.xori %37, %true : i1
    %41 = arith.extui %40 : i1 to i32
    %c0_i32_13 = arith.constant 0 : i32
    %42 = arith.cmpi ne, %41, %c0_i32_13 : i32
    scf.if %42 {
      %43 = vector.extract_strided_slice %28 {offsets = [0, 0], sizes = [96, 256], strides = [1, 1]} : vector<192x256xf32> to vector<96x256xf32>
      %cst_14 = arith.constant 0.000000e+00 : f32
      %44 = vector.broadcast %cst_14 : f32 to vector<96x256xf32>
      %45 = arith.select %34, %43, %44 : vector<96x256xi1>, vector<96x256xf32>
      %46 = vector.extract_strided_slice %28 {offsets = [96, 0], sizes = [96, 256], strides = [1, 1]} : vector<192x256xf32> to vector<96x256xf32>
      %cst_15 = arith.constant 0.000000e+00 : f32
      %47 = vector.broadcast %cst_15 : f32 to vector<96x256xf32>
      %48 = arith.select %34, %46, %47 : vector<96x256xi1>, vector<96x256xf32>
      %49 = tpu.concatenate %45, %48 in 1 : vector<96x256xf32>, vector<96x256xf32> -> vector<96x512xf32>
      %50 = arith.truncf %49 : vector<96x512xf32> to vector<96x512xbf16>
      %c0_16 = arith.constant 0 : index
      %c0_17 = arith.constant 0 : index
      %c0_18 = arith.constant 0 : index
      %51 = vector.load %arg6[%c0_16, %c0_17, %c0_18] : memref<1x96x512xbf16, #tpu.memory_space<vmem>>, vector<1x96x512xbf16>
      %52 = vector.shape_cast %51 : vector<1x96x512xbf16> to vector<96x512xbf16>
      %53 = vector.shape_cast %50 : vector<96x512xbf16> to vector<1x96x512xbf16>
      tpu.vector_store %arg6[%c0_16, %c0_17, %c0_18], %53 {strides = array<i32>} : memref<1x96x512xbf16, #tpu.memory_space<vmem>>, vector<1x96x512xbf16>,
    } else {
    }
    return
  }
  func.func @transform_0(%arg0: i32, %arg1: i32) -> (i32, i32, i32) {
    %c0_i32 = arith.constant 0 : i32
    %c0_i32_0 = arith.constant 0 : i32
    return %arg0, %c0_i32, %arg1 : i32, i32, i32
  }
  func.func @transform_1(%arg0: i32, %arg1: i32) -> (i32, i32, i32, i32) {
    %c0_i32 = arith.constant 0 : i32
    %c0_i32_0 = arith.constant 0 : i32
    %c0_i32_1 = arith.constant 0 : i32
    return %arg0, %arg1, %c0_i32, %c0_i32_0 : i32, i32, i32, i32
  }
  func.func @transform_2(%arg0: i32, %arg1: i32) -> (i32, i32) {
    %c0_i32 = arith.constant 0 : i32
    %c0_i32_0 = arith.constant 0 : i32
    %c0_i32_1 = arith.constant 0 : i32
    return %c0_i32, %c0_i32_0 : i32, i32
  }
  func.func @transform_3(%arg0: i32, %arg1: i32) -> i32 {
    %c0_i32 = arith.constant 0 : i32
    %c0_i32_0 = arith.constant 0 : i32
    return %c0_i32 : i32
  }
  func.func @transform_4(%arg0: i32, %arg1: i32) -> (i32, i32, i32) {
    %c0_i32 = arith.constant 0 : i32
    %c0_i32_0 = arith.constant 0 : i32
    return %arg0, %c0_i32, %arg1 : i32, i32, i32
  }
}

module attributes {stable_mosaic.version = 11 : i64} {
  func.func @_convt_kernel(%arg0: i32, %arg1: i32, %arg2: memref<1x96x256xbf16, #tpu.memory_space<vmem>>, %arg3: memref<1x1x96x2xbf16, #tpu.memory_space<vmem>>, %arg4: memref<390x256xbf16, #tpu.memory_space<vmem>>, %arg5: memref<1xf32, #tpu.memory_space<smem>>, %arg6: memref<1x96x512xbf16, #tpu.memory_space<vmem>>) attributes {dimension_semantics = [#tpu.dimension_semantics<parallel>, #tpu.dimension_semantics<parallel>], iteration_bounds = array<i64: 2, 2>, scalar_prefetch = 0 : i64, scratch_operands = 0 : i64, tpu.core_type = #tpu.core_type<tc>, window_params = [{transform_indices = @transform_0, window_bounds = array<i64: 1, 96, 256>}, {transform_indices = @transform_1, window_bounds = array<i64: 1, 1, 96, 2>}, {pipeline_mode = #tpu.pipeline_mode<synchronous>, transform_indices = @transform_2, window_bounds = array<i64: 390, 256>}, {transform_indices = @transform_3, window_bounds = array<i64: 1>}, {transform_indices = @transform_4, window_bounds = array<i64: 1, 96, 512>}]} {
    %c0 = arith.constant 0 : index
    %c0_0 = arith.constant 0 : index
    %c0_1 = arith.constant 0 : index
    %0 = vector.load %arg2[%c0, %c0_0, %c0_1] : memref<1x96x256xbf16, #tpu.memory_space<vmem>>, vector<1x96x256xbf16>
    %1 = vector.shape_cast %0 : vector<1x96x256xbf16> to vector<96x256xbf16>
    %c0_2 = arith.constant 0 : index
    %c0_3 = arith.constant 0 : index
    %c0_4 = arith.constant 0 : index
    %c0_5 = arith.constant 0 : index
    %2 = vector.load %arg3[%c0_2, %c0_3, %c0_4, %c0_5] : memref<1x1x96x2xbf16, #tpu.memory_space<vmem>>, vector<1x1x96x2xbf16>
    %3 = vector.shape_cast %2 : vector<1x1x96x2xbf16> to vector<96x2xbf16>
    %4 = vector.extract_strided_slice %1 {offsets = [0, 0], sizes = [96, 128], strides = [1, 1]} : vector<96x256xbf16> to vector<96x128xbf16>
    %5 = vector.extract_strided_slice %3 {offsets = [0, 0], sizes = [96, 1], strides = [1, 1]} : vector<96x2xbf16> to vector<96x1xbf16>
    %6 = vector.extract_strided_slice %1 {offsets = [0, 128], sizes = [96, 1], strides = [1, 1]} : vector<96x256xbf16> to vector<96x1xbf16>
    %7 = tpu.concatenate %4, %5, %6 in 1 : vector<96x128xbf16>, vector<96x1xbf16>, vector<96x1xbf16> -> vector<96x130xbf16>
    %8 = vector.extract_strided_slice %1 {offsets = [0, 128], sizes = [96, 128], strides = [1, 1]} : vector<96x256xbf16> to vector<96x128xbf16>
    %9 = vector.extract_strided_slice %1 {offsets = [0, 127], sizes = [96, 1], strides = [1, 1]} : vector<96x256xbf16> to vector<96x1xbf16>
    %10 = vector.extract_strided_slice %3 {offsets = [0, 1], sizes = [96, 1], strides = [1, 1]} : vector<96x2xbf16> to vector<96x1xbf16>
    %11 = tpu.concatenate %8, %9, %10 in 1 : vector<96x128xbf16>, vector<96x1xbf16>, vector<96x1xbf16> -> vector<96x130xbf16>
    %12 = tpu.concatenate %7, %11 in 0 : vector<96x130xbf16>, vector<96x130xbf16> -> vector<192x130xbf16>
    %cst = arith.constant 0.000000e+00 : bf16
    %13 = vector.broadcast %cst : bf16 to vector<1x130xbf16>
    %14 = vector.extract_strided_slice %12 {offsets = [1, 0], sizes = [191, 130], strides = [1, 1]} : vector<192x130xbf16> to vector<191x130xbf16>
    %15 = tpu.concatenate %14, %13 in 0 : vector<191x130xbf16>, vector<1x130xbf16> -> vector<192x130xbf16>
    %16 = vector.extract_strided_slice %12 {offsets = [0, 0], sizes = [191, 130], strides = [1, 1]} : vector<192x130xbf16> to vector<191x130xbf16>
    %17 = tpu.concatenate %13, %16 in 0 : vector<1x130xbf16>, vector<191x130xbf16> -> vector<192x130xbf16>
    %18 = tpu.concatenate %15, %12, %17 in 1 : vector<192x130xbf16>, vector<192x130xbf16>, vector<192x130xbf16> -> vector<192x390xbf16>
    %c0_6 = arith.constant 0 : index
    %c0_7 = arith.constant 0 : index
    %19 = vector.load %arg4[%c0_6, %c0_7] : memref<390x256xbf16, #tpu.memory_space<vmem>>, vector<390x256xbf16>
    %cst_8 = arith.constant dense<0.000000e+00> : vector<192x256xf32>
    %20 = tpu.matmul %18, %19, %cst_8 {dimension_numbers = #tpu.dot_dimension_numbers<[1], [0], [0], [1], [0, 0, 1, 1], [], []>} : vector<192x390xbf16>, vector<390x256xbf16>, vector<192x256xf32> -> vector<192x256xf32>
    %c0_9 = arith.constant 0 : index
    %21 = memref.load %arg5[%c0_9] : memref<1xf32, #tpu.memory_space<smem>>
    %22 = vector.broadcast %21 : f32 to vector<192x256xf32>
    %23 = arith.addf %20, %22 : vector<192x256xf32>
    %cst_10 = arith.constant 0.000000e+00 : f32
    %24 = vector.broadcast %cst_10 : f32 to vector<192x256xf32>
    %25 = arith.cmpf oge, %23, %24 : vector<192x256xf32>
    %cst_11 = arith.constant 4.000000e-01 : f32
    %26 = vector.broadcast %cst_11 : f32 to vector<192x256xf32>
    %27 = arith.mulf %26, %23 : vector<192x256xf32>
    %28 = arith.select %25, %23, %27 : vector<192x256xi1>, vector<192x256xf32>
    %29 = tpu.iota {dimensions = array<i32: 0>} : vector<96x256xi32>
    %c1_i32 = arith.constant 1 : i32
    %30 = vector.broadcast %c1_i32 : i32 to vector<96x256xi32>
    %31 = arith.cmpi sge, %29, %30 : vector<96x256xi32>
    %c80_i32 = arith.constant 80 : i32
    %32 = vector.broadcast %c80_i32 : i32 to vector<96x256xi32>
    %33 = arith.cmpi sle, %29, %32 : vector<96x256xi32>
    %34 = arith.andi %31, %33 : vector<96x256xi1>
    %c1_i32_12 = arith.constant 1 : i32
    %35 = arith.addi %arg1, %c1_i32_12 : i32
    %c512_i32 = arith.constant 512 : i32
    %36 = arith.muli %35, %c512_i32 : i32
    %c64_i32 = arith.constant 64 : i32
    %37 = arith.cmpi sgt, %36, %c64_i32 : i32
    %38 = arith.extui %37 : i1 to i32
    %c0_i32 = arith.constant 0 : i32
    %39 = arith.cmpi ne, %38, %c0_i32 : i32
    scf.if %39 {
      %43 = vector.extract_strided_slice %28 {offsets = [0, 0], sizes = [96, 256], strides = [1, 1]} : vector<192x256xf32> to vector<96x256xf32>
      %c2_i32 = arith.constant 2 : i32
      %44 = arith.muli %arg1, %c2_i32 : i32
      %c0_i32_14 = arith.constant 0 : i32
      %45 = arith.addi %44, %c0_i32_14 : i32
      %c256_i32 = arith.constant 256 : i32
      %46 = arith.muli %45, %c256_i32 : i32
      %47 = tpu.iota {dimensions = array<i32: 1>} : vector<96x256xi32>
      %c64_i32_15 = arith.constant 64 : i32
      %48 = arith.subi %c64_i32_15, %46 : i32
      %49 = vector.broadcast %48 : i32 to vector<96x256xi32>
      %50 = arith.cmpi slt, %47, %49 : vector<96x256xi32>
      %51 = arith.andi %34, %50 : vector<96x256xi1>
      %cst_16 = arith.constant 0.000000e+00 : f32
      %52 = vector.broadcast %cst_16 : f32 to vector<96x256xf32>
      %53 = arith.select %51, %43, %52 : vector<96x256xi1>, vector<96x256xf32>
      %54 = vector.extract_strided_slice %28 {offsets = [96, 0], sizes = [96, 256], strides = [1, 1]} : vector<192x256xf32> to vector<96x256xf32>
      %c2_i32_17 = arith.constant 2 : i32
      %55 = arith.muli %arg1, %c2_i32_17 : i32
      %c1_i32_18 = arith.constant 1 : i32
      %56 = arith.addi %55, %c1_i32_18 : i32
      %c256_i32_19 = arith.constant 256 : i32
      %57 = arith.muli %56, %c256_i32_19 : i32
      %58 = tpu.iota {dimensions = array<i32: 1>} : vector<96x256xi32>
      %c64_i32_20 = arith.constant 64 : i32
      %59 = arith.subi %c64_i32_20, %57 : i32
      %60 = vector.broadcast %59 : i32 to vector<96x256xi32>
      %61 = arith.cmpi slt, %58, %60 : vector<96x256xi32>
      %62 = arith.andi %34, %61 : vector<96x256xi1>
      %cst_21 = arith.constant 0.000000e+00 : f32
      %63 = vector.broadcast %cst_21 : f32 to vector<96x256xf32>
      %64 = arith.select %62, %54, %63 : vector<96x256xi1>, vector<96x256xf32>
      %65 = tpu.concatenate %53, %64 in 1 : vector<96x256xf32>, vector<96x256xf32> -> vector<96x512xf32>
      %66 = arith.truncf %65 : vector<96x512xf32> to vector<96x512xbf16>
      %c0_22 = arith.constant 0 : index
      %c0_23 = arith.constant 0 : index
      %c0_24 = arith.constant 0 : index
      %67 = vector.load %arg6[%c0_22, %c0_23, %c0_24] : memref<1x96x512xbf16, #tpu.memory_space<vmem>>, vector<1x96x512xbf16>
      %68 = vector.shape_cast %67 : vector<1x96x512xbf16> to vector<96x512xbf16>
      %69 = vector.shape_cast %66 : vector<96x512xbf16> to vector<1x96x512xbf16>
      tpu.vector_store %arg6[%c0_22, %c0_23, %c0_24], %69 {strides = array<i32>} : memref<1x96x512xbf16, #tpu.memory_space<vmem>>, vector<1x96x512xbf16>,
    } else {
    }
    %true = arith.constant true
    %40 = arith.xori %37, %true : i1
    %41 = arith.extui %40 : i1 to i32
    %c0_i32_13 = arith.constant 0 : i32
    %42 = arith.cmpi ne, %41, %c0_i32_13 : i32
    scf.if %42 {
      %43 = vector.extract_strided_slice %28 {offsets = [0, 0], sizes = [96, 256], strides = [1, 1]} : vector<192x256xf32> to vector<96x256xf32>
      %cst_14 = arith.constant 0.000000e+00 : f32
      %44 = vector.broadcast %cst_14 : f32 to vector<96x256xf32>
      %45 = arith.select %34, %43, %44 : vector<96x256xi1>, vector<96x256xf32>
      %46 = vector.extract_strided_slice %28 {offsets = [96, 0], sizes = [96, 256], strides = [1, 1]} : vector<192x256xf32> to vector<96x256xf32>
      %cst_15 = arith.constant 0.000000e+00 : f32
      %47 = vector.broadcast %cst_15 : f32 to vector<96x256xf32>
      %48 = arith.select %34, %46, %47 : vector<96x256xi1>, vector<96x256xf32>
      %49 = tpu.concatenate %45, %48 in 1 : vector<96x256xf32>, vector<96x256xf32> -> vector<96x512xf32>
      %50 = arith.truncf %49 : vector<96x512xf32> to vector<96x512xbf16>
      %c0_16 = arith.constant 0 : index
      %c0_17 = arith.constant 0 : index
      %c0_18 = arith.constant 0 : index
      %51 = vector.load %arg6[%c0_16, %c0_17, %c0_18] : memref<1x96x512xbf16, #tpu.memory_space<vmem>>, vector<1x96x512xbf16>
      %52 = vector.shape_cast %51 : vector<1x96x512xbf16> to vector<96x512xbf16>
      %53 = vector.shape_cast %50 : vector<96x512xbf16> to vector<1x96x512xbf16>
      tpu.vector_store %arg6[%c0_16, %c0_17, %c0_18], %53 {strides = array<i32>} : memref<1x96x512xbf16, #tpu.memory_space<vmem>>, vector<1x96x512xbf16>,
    } else {
    }
    return
  }
  func.func @transform_0(%arg0: i32, %arg1: i32) -> (i32, i32, i32) {
    %c0_i32 = arith.constant 0 : i32
    %c0_i32_0 = arith.constant 0 : i32
    return %arg0, %c0_i32, %arg1 : i32, i32, i32
  }
  func.func @transform_1(%arg0: i32, %arg1: i32) -> (i32, i32, i32, i32) {
    %c0_i32 = arith.constant 0 : i32
    %c0_i32_0 = arith.constant 0 : i32
    %c0_i32_1 = arith.constant 0 : i32
    return %arg0, %arg1, %c0_i32, %c0_i32_0 : i32, i32, i32, i32
  }
  func.func @transform_2(%arg0: i32, %arg1: i32) -> (i32, i32) {
    %c0_i32 = arith.constant 0 : i32
    %c0_i32_0 = arith.constant 0 : i32
    %c0_i32_1 = arith.constant 0 : i32
    return %c0_i32, %c0_i32_0 : i32, i32
  }
  func.func @transform_3(%arg0: i32, %arg1: i32) -> i32 {
    %c0_i32 = arith.constant 0 : i32
    %c0_i32_0 = arith.constant 0 : i32
    return %c0_i32 : i32
  }
  func.func @transform_4(%arg0: i32, %arg1: i32) -> (i32, i32, i32) {
    %c0_i32 = arith.constant 0 : i32
    %c0_i32_0 = arith.constant 0 : i32
    return %arg0, %c0_i32, %arg1 : i32, i32, i32
  }
}

module attributes {stable_mosaic.version = 11 : i64} {
  func.func @_convt_kernel(%arg0: i32, %arg1: i32, %arg2: memref<1x96x256xbf16, #tpu.memory_space<vmem>>, %arg3: memref<1x1x96x2xbf16, #tpu.memory_space<vmem>>, %arg4: memref<390x256xbf16, #tpu.memory_space<vmem>>, %arg5: memref<1xf32, #tpu.memory_space<smem>>, %arg6: memref<1x96x512xbf16, #tpu.memory_space<vmem>>) attributes {dimension_semantics = [#tpu.dimension_semantics<parallel>, #tpu.dimension_semantics<parallel>], iteration_bounds = array<i64: 2, 4>, scalar_prefetch = 0 : i64, scratch_operands = 0 : i64, tpu.core_type = #tpu.core_type<tc>, window_params = [{transform_indices = @transform_0, window_bounds = array<i64: 1, 96, 256>}, {transform_indices = @transform_1, window_bounds = array<i64: 1, 1, 96, 2>}, {pipeline_mode = #tpu.pipeline_mode<synchronous>, transform_indices = @transform_2, window_bounds = array<i64: 390, 256>}, {transform_indices = @transform_3, window_bounds = array<i64: 1>}, {transform_indices = @transform_4, window_bounds = array<i64: 1, 96, 512>}]} {
    %c0 = arith.constant 0 : index
    %c0_0 = arith.constant 0 : index
    %c0_1 = arith.constant 0 : index
    %0 = vector.load %arg2[%c0, %c0_0, %c0_1] : memref<1x96x256xbf16, #tpu.memory_space<vmem>>, vector<1x96x256xbf16>
    %1 = vector.shape_cast %0 : vector<1x96x256xbf16> to vector<96x256xbf16>
    %c0_2 = arith.constant 0 : index
    %c0_3 = arith.constant 0 : index
    %c0_4 = arith.constant 0 : index
    %c0_5 = arith.constant 0 : index
    %2 = vector.load %arg3[%c0_2, %c0_3, %c0_4, %c0_5] : memref<1x1x96x2xbf16, #tpu.memory_space<vmem>>, vector<1x1x96x2xbf16>
    %3 = vector.shape_cast %2 : vector<1x1x96x2xbf16> to vector<96x2xbf16>
    %4 = vector.extract_strided_slice %1 {offsets = [0, 0], sizes = [96, 128], strides = [1, 1]} : vector<96x256xbf16> to vector<96x128xbf16>
    %5 = vector.extract_strided_slice %3 {offsets = [0, 0], sizes = [96, 1], strides = [1, 1]} : vector<96x2xbf16> to vector<96x1xbf16>
    %6 = vector.extract_strided_slice %1 {offsets = [0, 128], sizes = [96, 1], strides = [1, 1]} : vector<96x256xbf16> to vector<96x1xbf16>
    %7 = tpu.concatenate %4, %5, %6 in 1 : vector<96x128xbf16>, vector<96x1xbf16>, vector<96x1xbf16> -> vector<96x130xbf16>
    %8 = vector.extract_strided_slice %1 {offsets = [0, 128], sizes = [96, 128], strides = [1, 1]} : vector<96x256xbf16> to vector<96x128xbf16>
    %9 = vector.extract_strided_slice %1 {offsets = [0, 127], sizes = [96, 1], strides = [1, 1]} : vector<96x256xbf16> to vector<96x1xbf16>
    %10 = vector.extract_strided_slice %3 {offsets = [0, 1], sizes = [96, 1], strides = [1, 1]} : vector<96x2xbf16> to vector<96x1xbf16>
    %11 = tpu.concatenate %8, %9, %10 in 1 : vector<96x128xbf16>, vector<96x1xbf16>, vector<96x1xbf16> -> vector<96x130xbf16>
    %12 = tpu.concatenate %7, %11 in 0 : vector<96x130xbf16>, vector<96x130xbf16> -> vector<192x130xbf16>
    %cst = arith.constant 0.000000e+00 : bf16
    %13 = vector.broadcast %cst : bf16 to vector<1x130xbf16>
    %14 = vector.extract_strided_slice %12 {offsets = [1, 0], sizes = [191, 130], strides = [1, 1]} : vector<192x130xbf16> to vector<191x130xbf16>
    %15 = tpu.concatenate %14, %13 in 0 : vector<191x130xbf16>, vector<1x130xbf16> -> vector<192x130xbf16>
    %16 = vector.extract_strided_slice %12 {offsets = [0, 0], sizes = [191, 130], strides = [1, 1]} : vector<192x130xbf16> to vector<191x130xbf16>
    %17 = tpu.concatenate %13, %16 in 0 : vector<1x130xbf16>, vector<191x130xbf16> -> vector<192x130xbf16>
    %18 = tpu.concatenate %15, %12, %17 in 1 : vector<192x130xbf16>, vector<192x130xbf16>, vector<192x130xbf16> -> vector<192x390xbf16>
    %c0_6 = arith.constant 0 : index
    %c0_7 = arith.constant 0 : index
    %19 = vector.load %arg4[%c0_6, %c0_7] : memref<390x256xbf16, #tpu.memory_space<vmem>>, vector<390x256xbf16>
    %cst_8 = arith.constant dense<0.000000e+00> : vector<192x256xf32>
    %20 = tpu.matmul %18, %19, %cst_8 {dimension_numbers = #tpu.dot_dimension_numbers<[1], [0], [0], [1], [0, 0, 1, 1], [], []>} : vector<192x390xbf16>, vector<390x256xbf16>, vector<192x256xf32> -> vector<192x256xf32>
    %c0_9 = arith.constant 0 : index
    %21 = memref.load %arg5[%c0_9] : memref<1xf32, #tpu.memory_space<smem>>
    %22 = vector.broadcast %21 : f32 to vector<192x256xf32>
    %23 = arith.addf %20, %22 : vector<192x256xf32>
    %cst_10 = arith.constant 0.000000e+00 : f32
    %24 = vector.broadcast %cst_10 : f32 to vector<192x256xf32>
    %25 = arith.cmpf oge, %23, %24 : vector<192x256xf32>
    %cst_11 = arith.constant 4.000000e-01 : f32
    %26 = vector.broadcast %cst_11 : f32 to vector<192x256xf32>
    %27 = arith.mulf %26, %23 : vector<192x256xf32>
    %28 = arith.select %25, %23, %27 : vector<192x256xi1>, vector<192x256xf32>
    %29 = tpu.iota {dimensions = array<i32: 0>} : vector<96x256xi32>
    %c1_i32 = arith.constant 1 : i32
    %30 = vector.broadcast %c1_i32 : i32 to vector<96x256xi32>
    %31 = arith.cmpi sge, %29, %30 : vector<96x256xi32>
    %c80_i32 = arith.constant 80 : i32
    %32 = vector.broadcast %c80_i32 : i32 to vector<96x256xi32>
    %33 = arith.cmpi sle, %29, %32 : vector<96x256xi32>
    %34 = arith.andi %31, %33 : vector<96x256xi1>
    %c1_i32_12 = arith.constant 1 : i32
    %35 = arith.addi %arg1, %c1_i32_12 : i32
    %c512_i32 = arith.constant 512 : i32
    %36 = arith.muli %35, %c512_i32 : i32
    %c128_i32 = arith.constant 128 : i32
    %37 = arith.cmpi sgt, %36, %c128_i32 : i32
    %38 = arith.extui %37 : i1 to i32
    %c0_i32 = arith.constant 0 : i32
    %39 = arith.cmpi ne, %38, %c0_i32 : i32
    scf.if %39 {
      %43 = vector.extract_strided_slice %28 {offsets = [0, 0], sizes = [96, 256], strides = [1, 1]} : vector<192x256xf32> to vector<96x256xf32>
      %c2_i32 = arith.constant 2 : i32
      %44 = arith.muli %arg1, %c2_i32 : i32
      %c0_i32_14 = arith.constant 0 : i32
      %45 = arith.addi %44, %c0_i32_14 : i32
      %c256_i32 = arith.constant 256 : i32
      %46 = arith.muli %45, %c256_i32 : i32
      %47 = tpu.iota {dimensions = array<i32: 1>} : vector<96x256xi32>
      %c128_i32_15 = arith.constant 128 : i32
      %48 = arith.subi %c128_i32_15, %46 : i32
      %49 = vector.broadcast %48 : i32 to vector<96x256xi32>
      %50 = arith.cmpi slt, %47, %49 : vector<96x256xi32>
      %51 = arith.andi %34, %50 : vector<96x256xi1>
      %cst_16 = arith.constant 0.000000e+00 : f32
      %52 = vector.broadcast %cst_16 : f32 to vector<96x256xf32>
      %53 = arith.select %51, %43, %52 : vector<96x256xi1>, vector<96x256xf32>
      %54 = vector.extract_strided_slice %28 {offsets = [96, 0], sizes = [96, 256], strides = [1, 1]} : vector<192x256xf32> to vector<96x256xf32>
      %c2_i32_17 = arith.constant 2 : i32
      %55 = arith.muli %arg1, %c2_i32_17 : i32
      %c1_i32_18 = arith.constant 1 : i32
      %56 = arith.addi %55, %c1_i32_18 : i32
      %c256_i32_19 = arith.constant 256 : i32
      %57 = arith.muli %56, %c256_i32_19 : i32
      %58 = tpu.iota {dimensions = array<i32: 1>} : vector<96x256xi32>
      %c128_i32_20 = arith.constant 128 : i32
      %59 = arith.subi %c128_i32_20, %57 : i32
      %60 = vector.broadcast %59 : i32 to vector<96x256xi32>
      %61 = arith.cmpi slt, %58, %60 : vector<96x256xi32>
      %62 = arith.andi %34, %61 : vector<96x256xi1>
      %cst_21 = arith.constant 0.000000e+00 : f32
      %63 = vector.broadcast %cst_21 : f32 to vector<96x256xf32>
      %64 = arith.select %62, %54, %63 : vector<96x256xi1>, vector<96x256xf32>
      %65 = tpu.concatenate %53, %64 in 1 : vector<96x256xf32>, vector<96x256xf32> -> vector<96x512xf32>
      %66 = arith.truncf %65 : vector<96x512xf32> to vector<96x512xbf16>
      %c0_22 = arith.constant 0 : index
      %c0_23 = arith.constant 0 : index
      %c0_24 = arith.constant 0 : index
      %67 = vector.load %arg6[%c0_22, %c0_23, %c0_24] : memref<1x96x512xbf16, #tpu.memory_space<vmem>>, vector<1x96x512xbf16>
      %68 = vector.shape_cast %67 : vector<1x96x512xbf16> to vector<96x512xbf16>
      %69 = vector.shape_cast %66 : vector<96x512xbf16> to vector<1x96x512xbf16>
      tpu.vector_store %arg6[%c0_22, %c0_23, %c0_24], %69 {strides = array<i32>} : memref<1x96x512xbf16, #tpu.memory_space<vmem>>, vector<1x96x512xbf16>,
    } else {
    }
    %true = arith.constant true
    %40 = arith.xori %37, %true : i1
    %41 = arith.extui %40 : i1 to i32
    %c0_i32_13 = arith.constant 0 : i32
    %42 = arith.cmpi ne, %41, %c0_i32_13 : i32
    scf.if %42 {
      %43 = vector.extract_strided_slice %28 {offsets = [0, 0], sizes = [96, 256], strides = [1, 1]} : vector<192x256xf32> to vector<96x256xf32>
      %cst_14 = arith.constant 0.000000e+00 : f32
      %44 = vector.broadcast %cst_14 : f32 to vector<96x256xf32>
      %45 = arith.select %34, %43, %44 : vector<96x256xi1>, vector<96x256xf32>
      %46 = vector.extract_strided_slice %28 {offsets = [96, 0], sizes = [96, 256], strides = [1, 1]} : vector<192x256xf32> to vector<96x256xf32>
      %cst_15 = arith.constant 0.000000e+00 : f32
      %47 = vector.broadcast %cst_15 : f32 to vector<96x256xf32>
      %48 = arith.select %34, %46, %47 : vector<96x256xi1>, vector<96x256xf32>
      %49 = tpu.concatenate %45, %48 in 1 : vector<96x256xf32>, vector<96x256xf32> -> vector<96x512xf32>
      %50 = arith.truncf %49 : vector<96x512xf32> to vector<96x512xbf16>
      %c0_16 = arith.constant 0 : index
      %c0_17 = arith.constant 0 : index
      %c0_18 = arith.constant 0 : index
      %51 = vector.load %arg6[%c0_16, %c0_17, %c0_18] : memref<1x96x512xbf16, #tpu.memory_space<vmem>>, vector<1x96x512xbf16>
      %52 = vector.shape_cast %51 : vector<1x96x512xbf16> to vector<96x512xbf16>
      %53 = vector.shape_cast %50 : vector<96x512xbf16> to vector<1x96x512xbf16>
      tpu.vector_store %arg6[%c0_16, %c0_17, %c0_18], %53 {strides = array<i32>} : memref<1x96x512xbf16, #tpu.memory_space<vmem>>, vector<1x96x512xbf16>,
    } else {
    }
    return
  }
  func.func @transform_0(%arg0: i32, %arg1: i32) -> (i32, i32, i32) {
    %c0_i32 = arith.constant 0 : i32
    %c0_i32_0 = arith.constant 0 : i32
    return %arg0, %c0_i32, %arg1 : i32, i32, i32
  }
  func.func @transform_1(%arg0: i32, %arg1: i32) -> (i32, i32, i32, i32) {
    %c0_i32 = arith.constant 0 : i32
    %c0_i32_0 = arith.constant 0 : i32
    %c0_i32_1 = arith.constant 0 : i32
    return %arg0, %arg1, %c0_i32, %c0_i32_0 : i32, i32, i32, i32
  }
  func.func @transform_2(%arg0: i32, %arg1: i32) -> (i32, i32) {
    %c0_i32 = arith.constant 0 : i32
    %c0_i32_0 = arith.constant 0 : i32
    %c0_i32_1 = arith.constant 0 : i32
    return %c0_i32, %c0_i32_0 : i32, i32
  }
  func.func @transform_3(%arg0: i32, %arg1: i32) -> i32 {
    %c0_i32 = arith.constant 0 : i32
    %c0_i32_0 = arith.constant 0 : i32
    return %c0_i32 : i32
  }
  func.func @transform_4(%arg0: i32, %arg1: i32) -> (i32, i32, i32) {
    %c0_i32 = arith.constant 0 : i32
    %c0_i32_0 = arith.constant 0 : i32
    return %arg0, %c0_i32, %arg1 : i32, i32, i32
  }
}

module attributes {stable_mosaic.version = 11 : i64} {
  func.func @_convt_kernel(%arg0: i32, %arg1: i32, %arg2: memref<1x96x256xbf16, #tpu.memory_space<vmem>>, %arg3: memref<1x1x96x2xbf16, #tpu.memory_space<vmem>>, %arg4: memref<390x256xbf16, #tpu.memory_space<vmem>>, %arg5: memref<1xf32, #tpu.memory_space<smem>>, %arg6: memref<1x96x512xbf16, #tpu.memory_space<vmem>>) attributes {dimension_semantics = [#tpu.dimension_semantics<parallel>, #tpu.dimension_semantics<parallel>], iteration_bounds = array<i64: 2, 8>, scalar_prefetch = 0 : i64, scratch_operands = 0 : i64, tpu.core_type = #tpu.core_type<tc>, window_params = [{transform_indices = @transform_0, window_bounds = array<i64: 1, 96, 256>}, {transform_indices = @transform_1, window_bounds = array<i64: 1, 1, 96, 2>}, {pipeline_mode = #tpu.pipeline_mode<synchronous>, transform_indices = @transform_2, window_bounds = array<i64: 390, 256>}, {transform_indices = @transform_3, window_bounds = array<i64: 1>}, {transform_indices = @transform_4, window_bounds = array<i64: 1, 96, 512>}]} {
    %c0 = arith.constant 0 : index
    %c0_0 = arith.constant 0 : index
    %c0_1 = arith.constant 0 : index
    %0 = vector.load %arg2[%c0, %c0_0, %c0_1] : memref<1x96x256xbf16, #tpu.memory_space<vmem>>, vector<1x96x256xbf16>
    %1 = vector.shape_cast %0 : vector<1x96x256xbf16> to vector<96x256xbf16>
    %c0_2 = arith.constant 0 : index
    %c0_3 = arith.constant 0 : index
    %c0_4 = arith.constant 0 : index
    %c0_5 = arith.constant 0 : index
    %2 = vector.load %arg3[%c0_2, %c0_3, %c0_4, %c0_5] : memref<1x1x96x2xbf16, #tpu.memory_space<vmem>>, vector<1x1x96x2xbf16>
    %3 = vector.shape_cast %2 : vector<1x1x96x2xbf16> to vector<96x2xbf16>
    %4 = vector.extract_strided_slice %1 {offsets = [0, 0], sizes = [96, 128], strides = [1, 1]} : vector<96x256xbf16> to vector<96x128xbf16>
    %5 = vector.extract_strided_slice %3 {offsets = [0, 0], sizes = [96, 1], strides = [1, 1]} : vector<96x2xbf16> to vector<96x1xbf16>
    %6 = vector.extract_strided_slice %1 {offsets = [0, 128], sizes = [96, 1], strides = [1, 1]} : vector<96x256xbf16> to vector<96x1xbf16>
    %7 = tpu.concatenate %4, %5, %6 in 1 : vector<96x128xbf16>, vector<96x1xbf16>, vector<96x1xbf16> -> vector<96x130xbf16>
    %8 = vector.extract_strided_slice %1 {offsets = [0, 128], sizes = [96, 128], strides = [1, 1]} : vector<96x256xbf16> to vector<96x128xbf16>
    %9 = vector.extract_strided_slice %1 {offsets = [0, 127], sizes = [96, 1], strides = [1, 1]} : vector<96x256xbf16> to vector<96x1xbf16>
    %10 = vector.extract_strided_slice %3 {offsets = [0, 1], sizes = [96, 1], strides = [1, 1]} : vector<96x2xbf16> to vector<96x1xbf16>
    %11 = tpu.concatenate %8, %9, %10 in 1 : vector<96x128xbf16>, vector<96x1xbf16>, vector<96x1xbf16> -> vector<96x130xbf16>
    %12 = tpu.concatenate %7, %11 in 0 : vector<96x130xbf16>, vector<96x130xbf16> -> vector<192x130xbf16>
    %cst = arith.constant 0.000000e+00 : bf16
    %13 = vector.broadcast %cst : bf16 to vector<1x130xbf16>
    %14 = vector.extract_strided_slice %12 {offsets = [1, 0], sizes = [191, 130], strides = [1, 1]} : vector<192x130xbf16> to vector<191x130xbf16>
    %15 = tpu.concatenate %14, %13 in 0 : vector<191x130xbf16>, vector<1x130xbf16> -> vector<192x130xbf16>
    %16 = vector.extract_strided_slice %12 {offsets = [0, 0], sizes = [191, 130], strides = [1, 1]} : vector<192x130xbf16> to vector<191x130xbf16>
    %17 = tpu.concatenate %13, %16 in 0 : vector<1x130xbf16>, vector<191x130xbf16> -> vector<192x130xbf16>
    %18 = tpu.concatenate %15, %12, %17 in 1 : vector<192x130xbf16>, vector<192x130xbf16>, vector<192x130xbf16> -> vector<192x390xbf16>
    %c0_6 = arith.constant 0 : index
    %c0_7 = arith.constant 0 : index
    %19 = vector.load %arg4[%c0_6, %c0_7] : memref<390x256xbf16, #tpu.memory_space<vmem>>, vector<390x256xbf16>
    %cst_8 = arith.constant dense<0.000000e+00> : vector<192x256xf32>
    %20 = tpu.matmul %18, %19, %cst_8 {dimension_numbers = #tpu.dot_dimension_numbers<[1], [0], [0], [1], [0, 0, 1, 1], [], []>} : vector<192x390xbf16>, vector<390x256xbf16>, vector<192x256xf32> -> vector<192x256xf32>
    %c0_9 = arith.constant 0 : index
    %21 = memref.load %arg5[%c0_9] : memref<1xf32, #tpu.memory_space<smem>>
    %22 = vector.broadcast %21 : f32 to vector<192x256xf32>
    %23 = arith.addf %20, %22 : vector<192x256xf32>
    %cst_10 = arith.constant 0.000000e+00 : f32
    %24 = vector.broadcast %cst_10 : f32 to vector<192x256xf32>
    %25 = arith.cmpf oge, %23, %24 : vector<192x256xf32>
    %cst_11 = arith.constant 4.000000e-01 : f32
    %26 = vector.broadcast %cst_11 : f32 to vector<192x256xf32>
    %27 = arith.mulf %26, %23 : vector<192x256xf32>
    %28 = arith.select %25, %23, %27 : vector<192x256xi1>, vector<192x256xf32>
    %29 = tpu.iota {dimensions = array<i32: 0>} : vector<96x256xi32>
    %c1_i32 = arith.constant 1 : i32
    %30 = vector.broadcast %c1_i32 : i32 to vector<96x256xi32>
    %31 = arith.cmpi sge, %29, %30 : vector<96x256xi32>
    %c80_i32 = arith.constant 80 : i32
    %32 = vector.broadcast %c80_i32 : i32 to vector<96x256xi32>
    %33 = arith.cmpi sle, %29, %32 : vector<96x256xi32>
    %34 = arith.andi %31, %33 : vector<96x256xi1>
    %c1_i32_12 = arith.constant 1 : i32
    %35 = arith.addi %arg1, %c1_i32_12 : i32
    %c512_i32 = arith.constant 512 : i32
    %36 = arith.muli %35, %c512_i32 : i32
    %c256_i32 = arith.constant 256 : i32
    %37 = arith.cmpi sgt, %36, %c256_i32 : i32
    %38 = arith.extui %37 : i1 to i32
    %c0_i32 = arith.constant 0 : i32
    %39 = arith.cmpi ne, %38, %c0_i32 : i32
    scf.if %39 {
      %43 = vector.extract_strided_slice %28 {offsets = [0, 0], sizes = [96, 256], strides = [1, 1]} : vector<192x256xf32> to vector<96x256xf32>
      %c2_i32 = arith.constant 2 : i32
      %44 = arith.muli %arg1, %c2_i32 : i32
      %c0_i32_14 = arith.constant 0 : i32
      %45 = arith.addi %44, %c0_i32_14 : i32
      %c256_i32_15 = arith.constant 256 : i32
      %46 = arith.muli %45, %c256_i32_15 : i32
      %47 = tpu.iota {dimensions = array<i32: 1>} : vector<96x256xi32>
      %c256_i32_16 = arith.constant 256 : i32
      %48 = arith.subi %c256_i32_16, %46 : i32
      %49 = vector.broadcast %48 : i32 to vector<96x256xi32>
      %50 = arith.cmpi slt, %47, %49 : vector<96x256xi32>
      %51 = arith.andi %34, %50 : vector<96x256xi1>
      %cst_17 = arith.constant 0.000000e+00 : f32
      %52 = vector.broadcast %cst_17 : f32 to vector<96x256xf32>
      %53 = arith.select %51, %43, %52 : vector<96x256xi1>, vector<96x256xf32>
      %54 = vector.extract_strided_slice %28 {offsets = [96, 0], sizes = [96, 256], strides = [1, 1]} : vector<192x256xf32> to vector<96x256xf32>
      %c2_i32_18 = arith.constant 2 : i32
      %55 = arith.muli %arg1, %c2_i32_18 : i32
      %c1_i32_19 = arith.constant 1 : i32
      %56 = arith.addi %55, %c1_i32_19 : i32
      %c256_i32_20 = arith.constant 256 : i32
      %57 = arith.muli %56, %c256_i32_20 : i32
      %58 = tpu.iota {dimensions = array<i32: 1>} : vector<96x256xi32>
      %c256_i32_21 = arith.constant 256 : i32
      %59 = arith.subi %c256_i32_21, %57 : i32
      %60 = vector.broadcast %59 : i32 to vector<96x256xi32>
      %61 = arith.cmpi slt, %58, %60 : vector<96x256xi32>
      %62 = arith.andi %34, %61 : vector<96x256xi1>
      %cst_22 = arith.constant 0.000000e+00 : f32
      %63 = vector.broadcast %cst_22 : f32 to vector<96x256xf32>
      %64 = arith.select %62, %54, %63 : vector<96x256xi1>, vector<96x256xf32>
      %65 = tpu.concatenate %53, %64 in 1 : vector<96x256xf32>, vector<96x256xf32> -> vector<96x512xf32>
      %66 = arith.truncf %65 : vector<96x512xf32> to vector<96x512xbf16>
      %c0_23 = arith.constant 0 : index
      %c0_24 = arith.constant 0 : index
      %c0_25 = arith.constant 0 : index
      %67 = vector.load %arg6[%c0_23, %c0_24, %c0_25] : memref<1x96x512xbf16, #tpu.memory_space<vmem>>, vector<1x96x512xbf16>
      %68 = vector.shape_cast %67 : vector<1x96x512xbf16> to vector<96x512xbf16>
      %69 = vector.shape_cast %66 : vector<96x512xbf16> to vector<1x96x512xbf16>
      tpu.vector_store %arg6[%c0_23, %c0_24, %c0_25], %69 {strides = array<i32>} : memref<1x96x512xbf16, #tpu.memory_space<vmem>>, vector<1x96x512xbf16>,
    } else {
    }
    %true = arith.constant true
    %40 = arith.xori %37, %true : i1
    %41 = arith.extui %40 : i1 to i32
    %c0_i32_13 = arith.constant 0 : i32
    %42 = arith.cmpi ne, %41, %c0_i32_13 : i32
    scf.if %42 {
      %43 = vector.extract_strided_slice %28 {offsets = [0, 0], sizes = [96, 256], strides = [1, 1]} : vector<192x256xf32> to vector<96x256xf32>
      %cst_14 = arith.constant 0.000000e+00 : f32
      %44 = vector.broadcast %cst_14 : f32 to vector<96x256xf32>
      %45 = arith.select %34, %43, %44 : vector<96x256xi1>, vector<96x256xf32>
      %46 = vector.extract_strided_slice %28 {offsets = [96, 0], sizes = [96, 256], strides = [1, 1]} : vector<192x256xf32> to vector<96x256xf32>
      %cst_15 = arith.constant 0.000000e+00 : f32
      %47 = vector.broadcast %cst_15 : f32 to vector<96x256xf32>
      %48 = arith.select %34, %46, %47 : vector<96x256xi1>, vector<96x256xf32>
      %49 = tpu.concatenate %45, %48 in 1 : vector<96x256xf32>, vector<96x256xf32> -> vector<96x512xf32>
      %50 = arith.truncf %49 : vector<96x512xf32> to vector<96x512xbf16>
      %c0_16 = arith.constant 0 : index
      %c0_17 = arith.constant 0 : index
      %c0_18 = arith.constant 0 : index
      %51 = vector.load %arg6[%c0_16, %c0_17, %c0_18] : memref<1x96x512xbf16, #tpu.memory_space<vmem>>, vector<1x96x512xbf16>
      %52 = vector.shape_cast %51 : vector<1x96x512xbf16> to vector<96x512xbf16>
      %53 = vector.shape_cast %50 : vector<96x512xbf16> to vector<1x96x512xbf16>
      tpu.vector_store %arg6[%c0_16, %c0_17, %c0_18], %53 {strides = array<i32>} : memref<1x96x512xbf16, #tpu.memory_space<vmem>>, vector<1x96x512xbf16>,
    } else {
    }
    return
  }
  func.func @transform_0(%arg0: i32, %arg1: i32) -> (i32, i32, i32) {
    %c0_i32 = arith.constant 0 : i32
    %c0_i32_0 = arith.constant 0 : i32
    return %arg0, %c0_i32, %arg1 : i32, i32, i32
  }
  func.func @transform_1(%arg0: i32, %arg1: i32) -> (i32, i32, i32, i32) {
    %c0_i32 = arith.constant 0 : i32
    %c0_i32_0 = arith.constant 0 : i32
    %c0_i32_1 = arith.constant 0 : i32
    return %arg0, %arg1, %c0_i32, %c0_i32_0 : i32, i32, i32, i32
  }
  func.func @transform_2(%arg0: i32, %arg1: i32) -> (i32, i32) {
    %c0_i32 = arith.constant 0 : i32
    %c0_i32_0 = arith.constant 0 : i32
    %c0_i32_1 = arith.constant 0 : i32
    return %c0_i32, %c0_i32_0 : i32, i32
  }
  func.func @transform_3(%arg0: i32, %arg1: i32) -> i32 {
    %c0_i32 = arith.constant 0 : i32
    %c0_i32_0 = arith.constant 0 : i32
    return %c0_i32 : i32
  }
  func.func @transform_4(%arg0: i32, %arg1: i32) -> (i32, i32, i32) {
    %c0_i32 = arith.constant 0 : i32
    %c0_i32_0 = arith.constant 0 : i32
    return %arg0, %c0_i32, %arg1 : i32, i32, i32
  }
}

</mosaic_0001>

<llo_original>
// kernel: upsample_net2_forward.4
$region0: #{upsample_net2_forward.4}
  #allocation0 [shape = 'u32[]', space=smem, size = 0x4, offset = 0x4, fixed_abs, tag = 'smem constant byte address 0x4 - core index']
  #allocation1 [shape = 'u32[144,128]{1,0:T(1,128)}', space=vmem, size = 0x12000, scoped, tag = 'internal scratch']
  #allocation2 [shape = 'f32[1]{0:T(128)S(6)}', space=smem, size = 0x200, scoped, tag = 'scoped memory for upsample_net2_forward.4']
  %s0 = inlined_call_operand.vmem [shape: bf16[2,96,256], index: 0, kind: input, shape index: {}]
  %s1 = inlined_call_operand.vmem [shape: bf16[2,1,96,2], index: 1, kind: input, shape index: {}]
  %s2 = inlined_call_operand.vmem [shape: bf16[390,256], index: 2, kind: input, shape index: {}]
  %s3 = inlined_call_operand.<no memory space> [shape: f32[1], index: 3, kind: input, shape index: {}]
  %s4 = inlined_call_operand.vmem [shape: bf16[2,96,512], index: 4, kind: output, shape index: {}]
  %s5 = sld [smem:[#allocation0]]
  $region57: #{upsample_net2_forward.4} parent=0
    _
  %s7 = ssub.s32 1, %s5
  %s8 = scalar_select 0, %s7, %s5
  %9 = sst [smem:[#allocation2]] %s3
  loop: start=0, step=1, limit=4
  $region2: #{upsample_net2_forward.4} parent=0 // loop_pre_header
    _
  $region3: #{upsample_net2_forward.4} parent=0 // loop_header
    %s11 = sphi 0, %s15
    %p12 = scmp.ge.s32.totalorder %s11, 4
    %s18 = sphi 0, %s30
    %s19 = sphi 0, %s26
    %s20 = sphi 0, %s18
    %s21 = sphi 0, %s19
    %s22 = sphi 0, %s20
    %s23 = sphi 0, %s21
    %s35 = sphi 0, %s37
    %s38 = sphi 0, %s35
    %s39 = sphi 0, %s38
    %s55 = sphi 0, %s39
    %s63 = sphi 0, %s65
    %s66 = sphi 0, %s63
    %s67 = sphi 0, %s66
    %s83 = sphi 0, %s67
    %s87 = sphi 0, %s87
    %s89 = sphi 0, %s87
    %s90 = sphi 0, %s89
    %s104 = sphi 0, %s90
    %s108 = sphi 0, %s108
    %s110 = sphi 0, %s108
    %s111 = sphi 0, %s110
    %s125 = sphi 0, %s111
    %s133 = sphi 0, %s135
    %s136 = sphi 0, %s133
    %s137 = sphi 0, %s136
    %s153 = sphi 0, %s137
  $region4: #{upsample_net2_forward.4} parent=0 // loop_header_branch
    %14 = sbr.rel (%p12) target = $region8
  $region5: #{upsample_net2_forward.4} parent=0 // loop_body
    %s16 = ssub.s32 %s11, 1
    %s17 = ssub.s32 %s11, 2
    %s24 = sadd.s32 1, %s19
    %p25 = scmp.ge.s32.totalorder %s24, 1
    %s26 = scalar_select %p25, 0, %s24
    %s27 = sadd.s32 1, %s18
    %s28 = scalar_select %p25, %s27, %s18
    %p29 = scmp.ge.s32.totalorder %s28, 2
    %s30 = scalar_select %p29, 0, %s28
    %s31 = ssub.s32 %s18, %s30
    %s32 = ssub.s32 %s19, %s26
    %s33 = sor.u32 %s31, %s32
    %p34 = scmp.eq.s32.totalorder %s33, 0
    %s36 = sadd.s32 %s35, 1
    %s37 = scalar_select %p34, %s35, %s36
    %p40 = pneg %p34
    %p41 = scmp.eq.s32.totalorder %s11, 1
    %p42 = por %p40, %p41
    %p43 = scmp.ne.s32.totalorder %s35, %s38
    %p44 = scmp.eq.s32.totalorder %s11, 0
    %p45 = por %p43, %p44
    %p46 = scmp.ne.s32.totalorder %s35, %s38
    %p47 = scmp.eq.s32.totalorder %s16, 1
    %p48 = por %p46, %p47
    %p49 = scmp.ne.s32.totalorder %s38, %s39
    %p50 = scmp.eq.s32.totalorder %s16, 0
    %p51 = por %p49, %p50
    %p52 = scmp.ne.s32.totalorder %s38, %s39
    %p53 = scmp.eq.s32.totalorder %s17, 1
    %p54 = por %p52, %p53
    %p56 = scmp.ne.s32.totalorder %s39, %s55
    %p57 = scmp.eq.s32.totalorder %s17, 0
    %p58 = por %p56, %p57
    %s59 = ssub.s32 %s18, %s30
    %s60 = ssub.s32 %s19, %s26
    %s61 = sor.u32 %s59, %s60
    %p62 = scmp.eq.s32.totalorder %s61, 0
    %s64 = sadd.s32 %s63, 1
    %s65 = scalar_select %p62, %s63, %s64
    %p68 = pneg %p62
    %p69 = scmp.eq.s32.totalorder %s11, 1
    %p70 = por %p68, %p69
    %p71 = scmp.ne.s32.totalorder %s63, %s66
    %p72 = scmp.eq.s32.totalorder %s11, 0
    %p73 = por %p71, %p72
    %p74 = scmp.ne.s32.totalorder %s63, %s66
    %p75 = scmp.eq.s32.totalorder %s16, 1
    %p76 = por %p74, %p75
    %p77 = scmp.ne.s32.totalorder %s66, %s67
    %p78 = scmp.eq.s32.totalorder %s16, 0
    %p79 = por %p77, %p78
    %p80 = scmp.ne.s32.totalorder %s66, %s67
    %p81 = scmp.eq.s32.totalorder %s17, 1
    %p82 = por %p80, %p81
    %p84 = scmp.ne.s32.totalorder %s67, %s83
    %p85 = scmp.eq.s32.totalorder %s17, 0
    %p86 = por %p84, %p85
    %s88 = sadd.s32 %s87, 1
    %p91 = scmp.eq.s32.totalorder %s11, 1
    %p92 = scmp.ne.s32.totalorder %s87, %s89
    %p93 = scmp.eq.s32.totalorder %s11, 0
    %p94 = por %p92, %p93
    %p95 = scmp.ne.s32.totalorder %s87, %s89
    %p96 = scmp.eq.s32.totalorder %s16, 1
    %p97 = por %p95, %p96
    %p98 = scmp.ne.s32.totalorder %s89, %s90
    %p99 = scmp.eq.s32.totalorder %s16, 0
    %p100 = por %p98, %p99
    %p101 = scmp.ne.s32.totalorder %s89, %s90
    %p102 = scmp.eq.s32.totalorder %s17, 1
    %p103 = por %p101, %p102
    %p105 = scmp.ne.s32.totalorder %s90, %s104
    %p106 = scmp.eq.s32.totalorder %s17, 0
    %p107 = por %p105, %p106
    %s109 = sadd.s32 %s108, 1
    %p112 = scmp.eq.s32.totalorder %s11, 1
    %p113 = scmp.ne.s32.totalorder %s108, %s110
    %p114 = scmp.eq.s32.totalorder %s11, 0
    %p115 = por %p113, %p114
    %p116 = scmp.ne.s32.totalorder %s108, %s110
    %p117 = scmp.eq.s32.totalorder %s16, 1
    %p118 = por %p116, %p117
    %p119 = scmp.ne.s32.totalorder %s110, %s111
    %p120 = scmp.eq.s32.totalorder %s16, 0
    %p121 = por %p119, %p120
    %p122 = scmp.ne.s32.totalorder %s110, %s111
    %p123 = scmp.eq.s32.totalorder %s17, 1
    %p124 = por %p122, %p123
    %p126 = scmp.ne.s32.totalorder %s111, %s125
    %p127 = scmp.eq.s32.totalorder %s17, 0
    %p128 = por %p126, %p127
    %s129 = ssub.s32 %s18, %s30
    %s130 = ssub.s32 %s19, %s26
    %s131 = sor.u32 %s129, %s130
    %p132 = scmp.eq.s32.totalorder %s131, 0
    %s134 = sadd.s32 %s133, 1
    %s135 = scalar_select %p132, %s133, %s134
    %p138 = pneg %p132
    %p139 = scmp.eq.s32.totalorder %s11, 1
    %p140 = por %p138, %p139
    %p141 = scmp.ne.s32.totalorder %s133, %s136
    %p142 = scmp.eq.s32.totalorder %s11, 0
    %p143 = por %p141, %p142
    %p144 = scmp.ne.s32.totalorder %s133, %s136
    %p145 = scmp.eq.s32.totalorder %s16, 1
    %p146 = por %p144, %p145
    %p147 = scmp.ne.s32.totalorder %s136, %s137
    %p148 = scmp.eq.s32.totalorder %s16, 0
    %p149 = por %p147, %p148
    %p150 = scmp.ne.s32.totalorder %s136, %s137
    %p151 = scmp.eq.s32.totalorder %s17, 1
    %p152 = por %p150, %p151
    %p154 = scmp.ne.s32.totalorder %s137, %s153
    %p155 = scmp.eq.s32.totalorder %s17, 0
    %p156 = por %p154, %p155
    %p157 = scmp.le.s32.totalorder 1, %s11
    %p158 = scmp.lt.s32.totalorder %s11, 3
    %p159 = pnand %p157, %p158
    %p160 = pneg %p159
    // Predicated region
    $region9: #{upsample_net2_forward.4} parent=5 // pred_check
      _
    $region10: #{upsample_net2_forward.4} parent=5 // pred_check_branch
      %162 = sbr.rel (%p159) target = $region12
    $region11: #{upsample_net2_forward.4} parent=5 // pred_region
      %s163 = ssub.s32 %s11, 1
      // Predicated region
      $region13: #{upsample_net2_forward.4} parent=11 // pred_check
        %p164 = pneg %p100
      $region14: #{upsample_net2_forward.4} parent=11 // pred_check_branch
        %166 = sbr.rel (%p164) target = $region16
      $region15: #{upsample_net2_forward.4} parent=11 // pred_region
        _
      $region16: #{upsample_net2_forward.4} parent=11 // pred_fallthru
        _
      // Predicated region
      $region17: #{upsample_net2_forward.4} parent=11 // pred_check
        %p167 = pneg %p121
      $region18: #{upsample_net2_forward.4} parent=11 // pred_check_branch
        %169 = sbr.rel (%p167) target = $region20
      $region19: #{upsample_net2_forward.4} parent=11 // pred_region
        _
      $region20: #{upsample_net2_forward.4} parent=11 // pred_fallthru
        _
    $region12: #{upsample_net2_forward.4} parent=5 // pred_fallthru
      _
    %p170 = scmp.lt.s32.totalorder %s11, 2
    // Predicated region
    $region21: #{upsample_net2_forward.4} parent=5 // pred_check
      %p171 = pneg %p170
    $region22: #{upsample_net2_forward.4} parent=5 // pred_check_branch
      %173 = sbr.rel (%p171) target = $region24
    $region23: #{upsample_net2_forward.4} parent=5 // pred_region
      // Predicated region
      $region25: #{upsample_net2_forward.4} parent=23 // pred_check
        %p174 = pneg %p45
      $region26: #{upsample_net2_forward.4} parent=23 // pred_check_branch
        %176 = sbr.rel (%p174) target = $region28
      $region27: #{upsample_net2_forward.4} parent=23 // pred_region
        %s177 = smul.u32 2, %s19
        %p178 = scmp.lt.s32.totalorder %s18, 1
        %s179 = scalar_select %p178, %s18, 1
        %p180 = scmp.lt.s32.totalorder %s177, 1
        %s181 = scalar_select %p180, %s177, 1
        %s182 = smul.addr %s179, 24
        %s183 = sadd.s32 %s181, %s182
        %s184 = smul.addr %s183, 4
        %s185 = scalar_lea.vmem %s0, %s184
        %s186 = smul.u32 2, %s19
      $region28: #{upsample_net2_forward.4} parent=23 // pred_fallthru
        _
      // Predicated region
      $region29: #{upsample_net2_forward.4} parent=23 // pred_check
        %p187 = pneg %p73
      $region30: #{upsample_net2_forward.4} parent=23 // pred_check_branch
        %189 = sbr.rel (%p187) target = $region32
      $region31: #{upsample_net2_forward.4} parent=23 // pred_region
        %p190 = scmp.lt.s32.totalorder %s18, 1
        %s191 = scalar_select %p190, %s18, 1
        %p192 = scmp.lt.s32.totalorder %s19, 0
        %s193 = scalar_select %p192, %s19, 0
        %s194 = smul.addr %s193, 12
        %s195 = smul.addr %s191, 12
        %s196 = sadd.s32 %s194, %s195
        %s197 = smul.addr %s196, 4
        %s198 = scalar_lea.vmem %s1, %s197
      $region32: #{upsample_net2_forward.4} parent=23 // pred_fallthru
        _
    $region24: #{upsample_net2_forward.4} parent=5 // pred_fallthru
      _
    %p199 = scmp.le.s32.totalorder 1, %s11
    %p200 = scmp.lt.s32.totalorder %s11, 3
    %p201 = pnand %p199, %p200
    %p202 = pneg %p201
    // Predicated region
    $region33: #{upsample_net2_forward.4} parent=5 // pred_check
      _
    $region34: #{upsample_net2_forward.4} parent=5 // pred_check_branch
      %204 = sbr.rel (%p201) target = $region36
    $region35: #{upsample_net2_forward.4} parent=5 // pred_region
      %s205 = ssub.s32 %s11, 1
      %s206 = smul.u32 2, %s21
      %p207 = scmp.lt.s32.totalorder %s20, 1
      %s208 = scalar_select %p207, %s20, 1
      %p209 = scmp.lt.s32.totalorder %s206, 1
      %s210 = scalar_select %p209, %s206, 1
      %s211 = smul.addr %s208, 24
      %s212 = sadd.s32 %s210, %s211
      %s213 = smul.addr %s212, 4
      %s214 = scalar_lea.vmem %s0, %s213
      %p215 = pneg %p51
      %p216 = pneg %p48
      %p217 = scmp.lt.s32.totalorder %s20, 1
      %s218 = scalar_select %p217, %s20, 1
      %p219 = scmp.lt.s32.totalorder %s21, 0
      %s220 = scalar_select %p219, %s21, 0
      %s221 = smul.addr %s220, 12
      %s222 = smul.addr %s218, 12
      %s223 = sadd.s32 %s221, %s222
      %s224 = smul.addr %s223, 4
      %s225 = scalar_lea.vmem %s1, %s224
      %p226 = pneg %p79
      %p227 = pneg %p76
      %p228 = pneg %p100
      %p229 = pneg %p97
      %p230 = pneg %p121
      %p231 = pneg %p118
      %p232 = pneg %p149
      %p233 = pneg %p146
      %s234 = smul.u32 4, %s21
      %p235 = scmp.lt.s32.totalorder %s20, 1
      %s236 = scalar_select %p235, %s20, 1
      %p237 = scmp.lt.s32.totalorder %s234, 3
      %s238 = scalar_select %p237, %s234, 3
      %s239 = smul.addr %s236, 48
      %s240 = sadd.s32 %s238, %s239
      %s241 = smul.addr %s240, 4
      %s242 = scalar_lea.vmem %s4, %s241
      %s243 = smul.u32 2, %s21
      %p244 = scmp.lt.s32.totalorder %s20, 1
      %s245 = scalar_select %p244, %s20, 1
      %p246 = scmp.lt.s32.totalorder %s243, 1
      %s247 = scalar_select %p246, %s243, 1
      %s248 = smul.addr %s245, 24
      %s249 = sadd.s32 %s247, %s248
      %s250 = smul.addr %s249, 4
      %s251 = scalar_lea.vmem %s0, %s250
      %s252 = smul.u32 2, %s21
      %p253 = scmp.lt.s32.totalorder %s20, 1
      %s254 = scalar_select %p253, %s20, 1
      %p255 = scmp.lt.s32.totalorder %s21, 0
      %s256 = scalar_select %p255, %s21, 0
      %s257 = smul.addr %s256, 12
      %s258 = smul.addr %s254, 12
      %s259 = sadd.s32 %s257, %s258
      %s260 = smul.addr %s259, 4
      %s261 = scalar_lea.vmem %s1, %s260
      %s262 = smul.u32 4, %s21
      %p263 = scmp.lt.s32.totalorder %s20, 1
      %s264 = scalar_select %p263, %s20, 1
      %p265 = scmp.lt.s32.totalorder %s262, 3
      %s266 = scalar_select %p265, %s262, 3
      %s267 = smul.addr %s264, 48
      %s268 = sadd.s32 %s266, %s267
      %s269 = smul.addr %s268, 4
      %s270 = scalar_lea.vmem %s4, %s269
      %s271 = smul.u32 4, %s21
      %v273 = vld [vmem:[%s251] sm:$0xff]
      %v274 = vld [vmem:[%s251 + $0x8] sm:$0xff]
      %v275 = vld [vmem:[%s251 + $0x10] sm:$0xff]
      %v276 = vld [vmem:[%s251 + $0x18] sm:$0xff]
      %v277 = vld [vmem:[%s251 + $0x20] sm:$0xff]
      %v278 = vld [vmem:[%s251 + $0x28] sm:$0xff]
      %v279 = vld [vmem:[%s251 + $0x30] sm:$0xff]
      %v280 = vld [vmem:[%s251 + $0x38] sm:$0xff]
      %v281 = vld [vmem:[%s251 + $0x40] sm:$0xff]
      %v282 = vld [vmem:[%s251 + $0x48] sm:$0xff]
      %v283 = vld [vmem:[%s251 + $0x50] sm:$0xff]
      %v284 = vld [vmem:[%s251 + $0x58] sm:$0xff]
      %v285 = vld [vmem:[%s261] sm:$0xf]
      %v286 = vld [vmem:[%s261 + $0x4] sm:$0xf]
      %v287 = vld [vmem:[%s261 + $0x8] sm:$0xf]
      %v288 = vld [vmem:[%s261 + $0xc] sm:$0xf]
      %v289 = vld [vmem:[%s261 + $0x10] sm:$0xf]
      %v290 = vld [vmem:[%s261 + $0x14] sm:$0xf]
      %v291 = vld [vmem:[%s261 + $0x18] sm:$0xf]
      %v292 = vld [vmem:[%s261 + $0x1c] sm:$0xf]
      %v293 = vld [vmem:[%s261 + $0x20] sm:$0xf]
      %v294 = vld [vmem:[%s261 + $0x24] sm:$0xf]
      %v295 = vld [vmem:[%s261 + $0x28] sm:$0xf]
      %v296 = vld [vmem:[%s261 + $0x2c] sm:$0xf]
      %v309 = vunpack.c.l.b16 %v273
      %v310 = vunpack.c.l.b16 %v274
      %v311 = vunpack.c.l.b16 %v275
      %v312 = vunpack.c.l.b16 %v276
      %v313 = vunpack.c.l.b16 %v277
      %v314 = vunpack.c.l.b16 %v278
      %v315 = vunpack.c.l.b16 %v279
      %v316 = vunpack.c.l.b16 %v280
      %v317 = vunpack.c.l.b16 %v281
      %v318 = vunpack.c.l.b16 %v282
      %v319 = vunpack.c.l.b16 %v283
      %v320 = vunpack.c.l.b16 %v284
      %v321 = vpack.c.b16 %v310, %v309
      %v322 = vpack.c.b16 %v312, %v311
      %v323 = vpack.c.b16 %v314, %v313
      %v324 = vpack.c.b16 %v316, %v315
      %v325 = vpack.c.b16 %v318, %v317
      %v326 = vpack.c.b16 %v320, %v319
      %v339 = vunpack.c.l.b16 %v285
      %v340 = vunpack.c.l.b16 %v286
      %v341 = vunpack.c.l.b16 %v287
      %v342 = vunpack.c.l.b16 %v288
      %v343 = vunpack.c.l.b16 %v289
      %v344 = vunpack.c.l.b16 %v290
      %v345 = vunpack.c.l.b16 %v291
      %v346 = vunpack.c.l.b16 %v292
      %v347 = vunpack.c.l.b16 %v293
      %v348 = vunpack.c.l.b16 %v294
      %v349 = vunpack.c.l.b16 %v295
      %v350 = vunpack.c.l.b16 %v296
      %v351 = vpack.c.b16 %v340, %v339
      %v352 = vpack.c.b16 %v342, %v341
      %v353 = vpack.c.b16 %v344, %v343
      %v354 = vpack.c.b16 %v346, %v345
      %v355 = vpack.c.b16 %v348, %v347
      %v356 = vpack.c.b16 %v350, %v349
      %v357 = vunpack.c.h.b16 %v273
      %v358 = vunpack.c.h.b16 %v274
      %v359 = vunpack.c.h.b16 %v275
      %v360 = vunpack.c.h.b16 %v276
      %v361 = vunpack.c.h.b16 %v277
      %v362 = vunpack.c.h.b16 %v278
      %v363 = vunpack.c.h.b16 %v279
      %v364 = vunpack.c.h.b16 %v280
      %v365 = vunpack.c.h.b16 %v281
      %v366 = vunpack.c.h.b16 %v282
      %v367 = vunpack.c.h.b16 %v283
      %v368 = vunpack.c.h.b16 %v284
      %v369 = vpack.c.b16 %v358, %v357
      %v370 = vpack.c.b16 %v360, %v359
      %v371 = vpack.c.b16 %v362, %v361
      %v372 = vpack.c.b16 %v364, %v363
      %v373 = vpack.c.b16 %v366, %v365
      %v374 = vpack.c.b16 %v368, %v367
      %375 = vrot.lane.b32.xlu0 %v369, 1
      %v376 = vpop.permute.xlu0 %375
      %377 = vrot.lane.b32.xlu0 %v370, 1
      %v378 = vpop.permute.xlu0 %377
      %379 = vrot.lane.b32.xlu0 %v371, 1
      %v380 = vpop.permute.xlu0 %379
      %381 = vrot.lane.b32.xlu0 %v372, 1
      %v382 = vpop.permute.xlu0 %381
      %383 = vrot.lane.b32.xlu0 %v373, 1
      %v384 = vpop.permute.xlu0 %383
      %385 = vrot.lane.b32.xlu0 %v374, 1
      %v386 = vpop.permute.xlu0 %385
      %vm387 = vcmask 7168
      %v390 = vsel %vm387, %v351, %v376
      %v393 = vsel %vm387, %v352, %v378
      %v396 = vsel %vm387, %v353, %v380
      %v399 = vsel %vm387, %v354, %v382
      %v402 = vsel %vm387, %v355, %v384
      %v405 = vsel %vm387, %v356, %v386
      %406 = vrot.lane.b32.xlu0 %v321, 1
      %v407 = vpop.permute.xlu0 %406
      %408 = vrot.lane.b32.xlu0 %v322, 1
      %v409 = vpop.permute.xlu0 %408
      %410 = vrot.lane.b32.xlu0 %v323, 1
      %v411 = vpop.permute.xlu0 %410
      %412 = vrot.lane.b32.xlu0 %v324, 1
      %v413 = vpop.permute.xlu0 %412
      %414 = vrot.lane.b32.xlu0 %v325, 1
      %v415 = vpop.permute.xlu0 %414
      %416 = vrot.lane.b32.xlu0 %v326, 1
      %v417 = vpop.permute.xlu0 %416
      %v419 = vsel %vm387, %v407, %v351
      %v421 = vsel %vm387, %v409, %v352
      %v423 = vsel %vm387, %v411, %v353
      %v425 = vsel %vm387, %v413, %v354
      %v427 = vsel %vm387, %v415, %v355
      %v429 = vsel %vm387, %v417, %v356
      %vm430 = vsmask.f32 7424
      %v432 = vshrl.u32 %v321, 16
      %v434 = vshll.u32 %v321, 16
      %v436 = vrot.slane %v434, 1
      %v437 = vor.u32 %v432, %v436
      %v439 = vshll.u32 %v322, 16
      %v441 = vrot.slane %v439, 1
      %v442 = vsel %vm430, %v437, %v441
      %v443 = vshrl.u32 %v390, 16
      %v445 = vshll.u32 %v390, 16
      %v447 = vrot.slane %v445, 1
      %v448 = vor.u32 %v443, %v447
      %v449 = vshll.u32 %v393, 16
      %v451 = vrot.slane %v449, 1
      %v452 = vsel %vm430, %v448, %v451
      %v453 = vshrl.u32 %v322, 16
      %v455 = vor.u32 %v453, %v441
      %v457 = vshll.u32 %v323, 16
      %v459 = vrot.slane %v457, 1
      %v460 = vsel %vm430, %v455, %v459
      %v461 = vshrl.u32 %v393, 16
      %v463 = vor.u32 %v461, %v451
      %v464 = vshll.u32 %v396, 16
      %v466 = vrot.slane %v464, 1
      %v467 = vsel %vm430, %v463, %v466
      %v468 = vshrl.u32 %v323, 16
      %v470 = vor.u32 %v468, %v459
      %v472 = vshll.u32 %v324, 16
      %v474 = vrot.slane %v472, 1
      %v475 = vsel %vm430, %v470, %v474
      %v476 = vshrl.u32 %v396, 16
      %v478 = vor.u32 %v476, %v466
      %v479 = vshll.u32 %v399, 16
      %v481 = vrot.slane %v479, 1
      %v482 = vsel %vm430, %v478, %v481
      %v483 = vshrl.u32 %v324, 16
      %v485 = vor.u32 %v483, %v474
      %v487 = vshll.u32 %v325, 16
      %v489 = vrot.slane %v487, 1
      %v490 = vsel %vm430, %v485, %v489
      %v491 = vshrl.u32 %v399, 16
      %v493 = vor.u32 %v491, %v481
      %v494 = vshll.u32 %v402, 16
      %v496 = vrot.slane %v494, 1
      %v497 = vsel %vm430, %v493, %v496
      %v498 = vshrl.u32 %v325, 16
      %v500 = vor.u32 %v498, %v489
      %v502 = vshll.u32 %v326, 16
      %v504 = vrot.slane %v502, 1
      %v505 = vsel %vm430, %v500, %v504
      %v506 = vshrl.u32 %v402, 16
      %v508 = vor.u32 %v506, %v496
      %v509 = vshll.u32 %v405, 16
      %v511 = vrot.slane %v509, 1
      %v512 = vsel %vm430, %v508, %v511
      %v513 = vshrl.u32 %v326, 16
      %v515 = vor.u32 %v513, %v504
      %v517 = vshll.u32 %v369, 16
      %v519 = vrot.slane %v517, 1
      %v520 = vsel %vm430, %v515, %v519
      %v521 = vshrl.u32 %v405, 16
      %v523 = vor.u32 %v521, %v511
      %v524 = vshll.u32 %v419, 16
      %v526 = vrot.slane %v524, 1
      %v527 = vsel %vm430, %v523, %v526
      %v528 = vshrl.u32 %v369, 16
      %v530 = vor.u32 %v528, %v519
      %v532 = vshll.u32 %v370, 16
      %v534 = vrot.slane %v532, 1
      %v535 = vsel %vm430, %v530, %v534
      %v536 = vshrl.u32 %v419, 16
      %v538 = vor.u32 %v536, %v526
      %v539 = vshll.u32 %v421, 16
      %v541 = vrot.slane %v539, 1
      %v542 = vsel %vm430, %v538, %v541
      %v543 = vshrl.u32 %v370, 16
      %v545 = vor.u32 %v543, %v534
      %v547 = vshll.u32 %v371, 16
      %v549 = vrot.slane %v547, 1
      %v550 = vsel %vm430, %v545, %v549
      %v551 = vshrl.u32 %v421, 16
      %v553 = vor.u32 %v551, %v541
      %v554 = vshll.u32 %v423, 16
      %v556 = vrot.slane %v554, 1
      %v557 = vsel %vm430, %v553, %v556
      %v558 = vshrl.u32 %v371, 16
      %v560 = vor.u32 %v558, %v549
      %v562 = vshll.u32 %v372, 16
      %v564 = vrot.slane %v562, 1
      %v565 = vsel %vm430, %v560, %v564
      %v566 = vshrl.u32 %v423, 16
      %v568 = vor.u32 %v566, %v556
      %v569 = vshll.u32 %v425, 16
      %v571 = vrot.slane %v569, 1
      %v572 = vsel %vm430, %v568, %v571
      %v573 = vshrl.u32 %v372, 16
      %v575 = vor.u32 %v573, %v564
      %v577 = vshll.u32 %v373, 16
      %v579 = vrot.slane %v577, 1
      %v580 = vsel %vm430, %v575, %v579
      %v581 = vshrl.u32 %v425, 16
      %v583 = vor.u32 %v581, %v571
      %v584 = vshll.u32 %v427, 16
      %v586 = vrot.slane %v584, 1
      %v587 = vsel %vm430, %v583, %v586
      %v588 = vshrl.u32 %v373, 16
      %v590 = vor.u32 %v588, %v579
      %v592 = vshll.u32 %v374, 16
      %v594 = vrot.slane %v592, 1
      %v595 = vsel %vm430, %v590, %v594
      %v596 = vshrl.u32 %v427, 16
      %v598 = vor.u32 %v596, %v586
      %v599 = vshll.u32 %v429, 16
      %v601 = vrot.slane %v599, 1
      %v602 = vsel %vm430, %v598, %v601
      %v603 = vshrl.u32 %v374, 16
      %v605 = vor.u32 %v603, %v594
      %v606 = vshrl.u32 %v429, 16
      %v608 = vor.u32 %v606, %v601
      %vm622 = vcmask 1047552
      %vm623 = vmand %vm622, %vm430
      %v624 = vsel %vm623, %v605, 0
      %v625 = vsel %vm623, %v608, 0
      %vm626 = vsmask.f32 256
      %v627 = vrot.slane %v432, 7
      %v628 = vor.u32 %v627, %v434
      %v629 = vrot.slane %v443, 7
      %v630 = vor.u32 %v629, %v445
      %v631 = vrot.slane %v453, 7
      %v632 = vor.u32 %v631, %v439
      %v633 = vsel %vm626, %v627, %v632
      %v634 = vrot.slane %v461, 7
      %v635 = vor.u32 %v634, %v449
      %v636 = vsel %vm626, %v629, %v635
      %v637 = vrot.slane %v468, 7
      %v638 = vor.u32 %v637, %v457
      %v639 = vsel %vm626, %v631, %v638
      %v640 = vrot.slane %v476, 7
      %v641 = vor.u32 %v640, %v464
      %v642 = vsel %vm626, %v634, %v641
      %v643 = vrot.slane %v483, 7
      %v644 = vor.u32 %v643, %v472
      %v645 = vsel %vm626, %v637, %v644
      %v646 = vrot.slane %v491, 7
      %v647 = vor.u32 %v646, %v479
      %v648 = vsel %vm626, %v640, %v647
      %v649 = vrot.slane %v498, 7
      %v650 = vor.u32 %v649, %v487
      %v651 = vsel %vm626, %v643, %v650
      %v652 = vrot.slane %v506, 7
      %v653 = vor.u32 %v652, %v494
      %v654 = vsel %vm626, %v646, %v653
      %v655 = vrot.slane %v513, 7
      %v656 = vor.u32 %v655, %v502
      %v657 = vsel %vm626, %v649, %v656
      %v658 = vrot.slane %v521, 7
      %v659 = vor.u32 %v658, %v509
      %v660 = vsel %vm626, %v652, %v659
      %v661 = vrot.slane %v528, 7
      %v662 = vor.u32 %v661, %v517
      %v663 = vsel %vm626, %v655, %v662
      %v664 = vrot.slane %v536, 7
      %v665 = vor.u32 %v664, %v524
      %v666 = vsel %vm626, %v658, %v665
      %v667 = vrot.slane %v543, 7
      %v668 = vor.u32 %v667, %v532
      %v669 = vsel %vm626, %v661, %v668
      %v670 = vrot.slane %v551, 7
      %v671 = vor.u32 %v670, %v539
      %v672 = vsel %vm626, %v664, %v671
      %v673 = vrot.slane %v558, 7
      %v674 = vor.u32 %v673, %v547
      %v675 = vsel %vm626, %v667, %v674
      %v676 = vrot.slane %v566, 7
      %v677 = vor.u32 %v676, %v554
      %v678 = vsel %vm626, %v670, %v677
      %v679 = vrot.slane %v573, 7
      %v680 = vor.u32 %v679, %v562
      %v681 = vsel %vm626, %v673, %v680
      %v682 = vrot.slane %v581, 7
      %v683 = vor.u32 %v682, %v569
      %v684 = vsel %vm626, %v676, %v683
      %v685 = vrot.slane %v588, 7
      %v686 = vor.u32 %v685, %v577
      %v687 = vsel %vm626, %v679, %v686
      %v688 = vrot.slane %v596, 7
      %v689 = vor.u32 %v688, %v584
      %v690 = vsel %vm626, %v682, %v689
      %v691 = vrot.slane %v603, 7
      %v692 = vor.u32 %v691, %v592
      %v693 = vsel %vm626, %v685, %v692
      %v694 = vrot.slane %v606, 7
      %v695 = vor.u32 %v694, %v599
      %v696 = vsel %vm626, %v688, %v695
      %vm699 = vcmask 1040384
      %vm700 = vmand %vm699, %vm626
      %v701 = vsel %vm700, 0, %v628
      %v702 = vsel %vm700, 0, %v630
      %715 = vrot.lane.b32.xlu0 %v321, 2
      %v716 = vpop.permute.xlu0 %715
      %717 = vrot.lane.b32.xlu0 %v390, 2
      %v718 = vpop.permute.xlu0 %717
      %719 = vrot.lane.b32.xlu0 %v322, 2
      %v720 = vpop.permute.xlu0 %719
      %721 = vrot.lane.b32.xlu0 %v393, 2
      %v722 = vpop.permute.xlu0 %721
      %723 = vrot.lane.b32.xlu0 %v323, 2
      %v724 = vpop.permute.xlu0 %723
      %725 = vrot.lane.b32.xlu0 %v396, 2
      %v726 = vpop.permute.xlu0 %725
      %727 = vrot.lane.b32.xlu0 %v324, 2
      %v728 = vpop.permute.xlu0 %727
      %729 = vrot.lane.b32.xlu0 %v399, 2
      %v730 = vpop.permute.xlu0 %729
      %731 = vrot.lane.b32.xlu0 %v325, 2
      %v732 = vpop.permute.xlu0 %731
      %733 = vrot.lane.b32.xlu0 %v402, 2
      %v734 = vpop.permute.xlu0 %733
      %735 = vrot.lane.b32.xlu0 %v326, 2
      %v736 = vpop.permute.xlu0 %735
      %737 = vrot.lane.b32.xlu0 %v405, 2
      %v738 = vpop.permute.xlu0 %737
      %739 = vrot.lane.b32.xlu0 %v369, 2
      %v740 = vpop.permute.xlu0 %739
      %741 = vrot.lane.b32.xlu0 %v419, 2
      %v742 = vpop.permute.xlu0 %741
      %743 = vrot.lane.b32.xlu0 %v370, 2
      %v744 = vpop.permute.xlu0 %743
      %745 = vrot.lane.b32.xlu0 %v421, 2
      %v746 = vpop.permute.xlu0 %745
      %747 = vrot.lane.b32.xlu0 %v371, 2
      %v748 = vpop.permute.xlu0 %747
      %749 = vrot.lane.b32.xlu0 %v423, 2
      %v750 = vpop.permute.xlu0 %749
      %751 = vrot.lane.b32.xlu0 %v372, 2
      %v752 = vpop.permute.xlu0 %751
      %753 = vrot.lane.b32.xlu0 %v425, 2
      %v754 = vpop.permute.xlu0 %753
      %755 = vrot.lane.b32.xlu0 %v373, 2
      %v756 = vpop.permute.xlu0 %755
      %757 = vrot.lane.b32.xlu0 %v427, 2
      %v758 = vpop.permute.xlu0 %757
      %759 = vrot.lane.b32.xlu0 %v374, 2
      %v760 = vpop.permute.xlu0 %759
      %761 = vrot.lane.b32.xlu0 %v429, 2
      %v762 = vpop.permute.xlu0 %761
      %vm763 = vcmask 15360
      %v764 = vsel %vm763, %v716, %v718
      %v765 = vsel %vm763, %v720, %v722
      %v766 = vsel %vm763, %v724, %v726
      %v767 = vsel %vm763, %v728, %v730
      %v768 = vsel %vm763, %v732, %v734
      %v769 = vsel %vm763, %v736, %v738
      %v770 = vsel %vm763, %v740, %v742
      %v771 = vsel %vm763, %v744, %v746
      %v772 = vsel %vm763, %v748, %v750
      %v773 = vsel %vm763, %v752, %v754
      %v774 = vsel %vm763, %v756, %v758
      %v775 = vsel %vm763, %v760, %v762
      %778 = vrot.lane.b32.xlu0 %v701, 4
      %v779 = vpop.permute.xlu0 %778
      %780 = vrot.lane.b32.xlu0 %v702, 4
      %v781 = vpop.permute.xlu0 %780
      %782 = vrot.lane.b32.xlu0 %v633, 4
      %v783 = vpop.permute.xlu0 %782
      %784 = vrot.lane.b32.xlu0 %v636, 4
      %v785 = vpop.permute.xlu0 %784
      %786 = vrot.lane.b32.xlu0 %v639, 4
      %v787 = vpop.permute.xlu0 %786
      %788 = vrot.lane.b32.xlu0 %v642, 4
      %v789 = vpop.permute.xlu0 %788
      %790 = vrot.lane.b32.xlu0 %v645, 4
      %v791 = vpop.permute.xlu0 %790
      %792 = vrot.lane.b32.xlu0 %v648, 4
      %v793 = vpop.permute.xlu0 %792
      %794 = vrot.lane.b32.xlu0 %v651, 4
      %v795 = vpop.permute.xlu0 %794
      %796 = vrot.lane.b32.xlu0 %v654, 4
      %v797 = vpop.permute.xlu0 %796
      %798 = vrot.lane.b32.xlu0 %v657, 4
      %v799 = vpop.permute.xlu0 %798
      %800 = vrot.lane.b32.xlu0 %v660, 4
      %v801 = vpop.permute.xlu0 %800
      %802 = vrot.lane.b32.xlu0 %v663, 4
      %v803 = vpop.permute.xlu0 %802
      %804 = vrot.lane.b32.xlu0 %v666, 4
      %v805 = vpop.permute.xlu0 %804
      %806 = vrot.lane.b32.xlu0 %v669, 4
      %v807 = vpop.permute.xlu0 %806
      %808 = vrot.lane.b32.xlu0 %v672, 4
      %v809 = vpop.permute.xlu0 %808
      %810 = vrot.lane.b32.xlu0 %v675, 4
      %v811 = vpop.permute.xlu0 %810
      %812 = vrot.lane.b32.xlu0 %v678, 4
      %v813 = vpop.permute.xlu0 %812
      %814 = vrot.lane.b32.xlu0 %v681, 4
      %v815 = vpop.permute.xlu0 %814
      %816 = vrot.lane.b32.xlu0 %v684, 4
      %v817 = vpop.permute.xlu0 %816
      %818 = vrot.lane.b32.xlu0 %v687, 4
      %v819 = vpop.permute.xlu0 %818
      %820 = vrot.lane.b32.xlu0 %v690, 4
      %v821 = vpop.permute.xlu0 %820
      %822 = vrot.lane.b32.xlu0 %v693, 4
      %v823 = vpop.permute.xlu0 %822
      %824 = vrot.lane.b32.xlu0 %v696, 4
      %v825 = vpop.permute.xlu0 %824
      %vm826 = vcmask 31744
      %v827 = vsel %vm826, %v779, %v781
      %v828 = vsel %vm826, %v783, %v785
      %v829 = vsel %vm826, %v787, %v789
      %v830 = vsel %vm826, %v791, %v793
      %v831 = vsel %vm826, %v795, %v797
      %v832 = vsel %vm826, %v799, %v801
      %v833 = vsel %vm826, %v803, %v805
      %v834 = vsel %vm826, %v807, %v809
      %v835 = vsel %vm826, %v811, %v813
      %v836 = vsel %vm826, %v815, %v817
      %v837 = vsel %vm826, %v819, %v821
      %v838 = vsel %vm826, %v823, %v825
      %vm839 = vcmask 15360
      %v842 = vsel %vm839, %v452, %v716
      %v846 = vsel %vm839, %v467, %v720
      %v850 = vsel %vm839, %v482, %v724
      %v854 = vsel %vm839, %v497, %v728
      %v858 = vsel %vm839, %v512, %v732
      %v862 = vsel %vm839, %v527, %v736
      %v866 = vsel %vm839, %v542, %v740
      %v870 = vsel %vm839, %v557, %v744
      %v874 = vsel %vm839, %v572, %v748
      %v878 = vsel %vm839, %v587, %v752
      %v882 = vsel %vm839, %v602, %v756
      %v886 = vsel %vm839, %v625, %v760
      %vm888 = vcmask 31744
      %v891 = vsel %vm888, %v764, %v779
      %v895 = vsel %vm888, %v765, %v783
      %v899 = vsel %vm888, %v766, %v787
      %v903 = vsel %vm888, %v767, %v791
      %v907 = vsel %vm888, %v768, %v795
      %v911 = vsel %vm888, %v769, %v799
      %v915 = vsel %vm888, %v770, %v803
      %v919 = vsel %vm888, %v771, %v807
      %v923 = vsel %vm888, %v772, %v811
      %v927 = vsel %vm888, %v773, %v815
      %v931 = vsel %vm888, %v774, %v819
      %v935 = vsel %vm888, %v775, %v823
      %v937 = vld [vmem:[%s2] sm:$0xff]
      %v938 = vld [vmem:[%s2 + $0x8] sm:$0xff]
      %v939 = vld [vmem:[%s2 + $0x10] sm:$0xff]
      %v940 = vld [vmem:[%s2 + $0x18] sm:$0xff]
      %v941 = vld [vmem:[%s2 + $0x20] sm:$0xff]
      %v942 = vld [vmem:[%s2 + $0x28] sm:$0xff]
      %v943 = vld [vmem:[%s2 + $0x30] sm:$0xff]
      %v944 = vld [vmem:[%s2 + $0x38] sm:$0xff]
      %v945 = vld [vmem:[%s2 + $0x40] sm:$0xff]
      %v946 = vld [vmem:[%s2 + $0x48] sm:$0xff]
      %v947 = vld [vmem:[%s2 + $0x50] sm:$0xff]
      %v948 = vld [vmem:[%s2 + $0x58] sm:$0xff]
      %v949 = vld [vmem:[%s2 + $0x60] sm:$0xff]
      %v950 = vld [vmem:[%s2 + $0x68] sm:$0xff]
      %v951 = vld [vmem:[%s2 + $0x70] sm:$0xff]
      %v952 = vld [vmem:[%s2 + $0x78] sm:$0xff]
      %v953 = vld [vmem:[%s2 + $0x80] sm:$0xff]
      %v954 = vld [vmem:[%s2 + $0x88] sm:$0xff]
      %v955 = vld [vmem:[%s2 + $0x90] sm:$0xff]
      %v956 = vld [vmem:[%s2 + $0x98] sm:$0xff]
      %v957 = vld [vmem:[%s2 + $0xa0] sm:$0xff]
      %v958 = vld [vmem:[%s2 + $0xa8] sm:$0xff]
      %v959 = vld [vmem:[%s2 + $0xb0] sm:$0xff]
      %v960 = vld [vmem:[%s2 + $0xb8] sm:$0xff]
      %v961 = vld [vmem:[%s2 + $0xc0] sm:$0xff]
      %v962 = vld [vmem:[%s2 + $0xc8] sm:$0xff]
      %v963 = vld [vmem:[%s2 + $0xd0] sm:$0xff]
      %v964 = vld [vmem:[%s2 + $0xd8] sm:$0xff]
      %v965 = vld [vmem:[%s2 + $0xe0] sm:$0xff]
      %v966 = vld [vmem:[%s2 + $0xe8] sm:$0xff]
      %v967 = vld [vmem:[%s2 + $0xf0] sm:$0xff]
      %v968 = vld [vmem:[%s2 + $0xf8] sm:$0xff]
      %v969 = vld [vmem:[%s2 + $0x100] sm:$0xff]
      %v970 = vld [vmem:[%s2 + $0x108] sm:$0xff]
      %v971 = vld [vmem:[%s2 + $0x110] sm:$0xff]
      %v972 = vld [vmem:[%s2 + $0x118] sm:$0xff]
      %v973 = vld [vmem:[%s2 + $0x120] sm:$0xff]
      %v974 = vld [vmem:[%s2 + $0x128] sm:$0xff]
      %v975 = vld [vmem:[%s2 + $0x130] sm:$0xff]
      %v976 = vld [vmem:[%s2 + $0x138] sm:$0xff]
      %v977 = vld [vmem:[%s2 + $0x140] sm:$0xff]
      %v978 = vld [vmem:[%s2 + $0x148] sm:$0xff]
      %v979 = vld [vmem:[%s2 + $0x150] sm:$0xff]
      %v980 = vld [vmem:[%s2 + $0x158] sm:$0xff]
      %v981 = vld [vmem:[%s2 + $0x160] sm:$0xff]
      %v982 = vld [vmem:[%s2 + $0x168] sm:$0xff]
      %v983 = vld [vmem:[%s2 + $0x170] sm:$0xff]
      %v984 = vld [vmem:[%s2 + $0x178] sm:$0xff]
      %v985 = vld [vmem:[%s2 + $0x180] sm:$0x77]
      %s986 = sld [smem:[#allocation2]]
      %v987 = vstv %s986
      %v1037 = vunpack.c.l.b16 %v937
      %v1038 = vunpack.c.h.b16 %v937
      %v1039 = vunpack.c.l.b16 %v938
      %v1040 = vunpack.c.h.b16 %v938
      %v1041 = vunpack.c.l.b16 %v939
      %v1042 = vunpack.c.h.b16 %v939
      %v1043 = vunpack.c.l.b16 %v940
      %v1044 = vunpack.c.h.b16 %v940
      %v1045 = vunpack.c.l.b16 %v941
      %v1046 = vunpack.c.h.b16 %v941
      %v1047 = vunpack.c.l.b16 %v942
      %v1048 = vunpack.c.h.b16 %v942
      %v1049 = vunpack.c.l.b16 %v943
      %v1050 = vunpack.c.h.b16 %v943
      %v1051 = vunpack.c.l.b16 %v944
      %v1052 = vunpack.c.h.b16 %v944
      %v1053 = vunpack.c.l.b16 %v945
      %v1054 = vunpack.c.h.b16 %v945
      %v1055 = vunpack.c.l.b16 %v946
      %v1056 = vunpack.c.h.b16 %v946
      %v1057 = vunpack.c.l.b16 %v947
      %v1058 = vunpack.c.h.b16 %v947
      %v1059 = vunpack.c.l.b16 %v948
      %v1060 = vunpack.c.h.b16 %v948
      %v1061 = vunpack.c.l.b16 %v949
      %v1062 = vunpack.c.h.b16 %v949
      %v1063 = vunpack.c.l.b16 %v950
      %v1064 = vunpack.c.h.b16 %v950
      %v1065 = vunpack.c.l.b16 %v951
      %v1066 = vunpack.c.h.b16 %v951
      %v1067 = vunpack.c.l.b16 %v952
      %v1068 = vunpack.c.h.b16 %v952
      %v1069 = vunpack.c.l.b16 %v953
      %v1070 = vunpack.c.h.b16 %v953
      %v1071 = vunpack.c.l.b16 %v954
      %v1072 = vunpack.c.h.b16 %v954
      %v1073 = vunpack.c.l.b16 %v955
      %v1074 = vunpack.c.h.b16 %v955
      %v1075 = vunpack.c.l.b16 %v956
      %v1076 = vunpack.c.h.b16 %v956
      %v1077 = vunpack.c.l.b16 %v957
      %v1078 = vunpack.c.h.b16 %v957
      %v1079 = vunpack.c.l.b16 %v958
      %v1080 = vunpack.c.h.b16 %v958
      %v1081 = vunpack.c.l.b16 %v959
      %v1082 = vunpack.c.h.b16 %v959
      %v1083 = vunpack.c.l.b16 %v960
      %v1084 = vunpack.c.h.b16 %v960
      %v1085 = vunpack.c.l.b16 %v961
      %v1086 = vunpack.c.h.b16 %v961
      %v1087 = vunpack.c.l.b16 %v962
      %v1088 = vunpack.c.h.b16 %v962
      %v1089 = vunpack.c.l.b16 %v963
      %v1090 = vunpack.c.h.b16 %v963
      %v1091 = vunpack.c.l.b16 %v964
      %v1092 = vunpack.c.h.b16 %v964
      %v1093 = vunpack.c.l.b16 %v965
      %v1094 = vunpack.c.h.b16 %v965
      %v1095 = vunpack.c.l.b16 %v966
      %v1096 = vunpack.c.h.b16 %v966
      %v1097 = vunpack.c.l.b16 %v967
      %v1098 = vunpack.c.h.b16 %v967
      %v1099 = vunpack.c.l.b16 %v968
      %v1100 = vunpack.c.h.b16 %v968
      %v1101 = vunpack.c.l.b16 %v969
      %v1102 = vunpack.c.h.b16 %v969
      %v1103 = vunpack.c.l.b16 %v970
      %v1104 = vunpack.c.h.b16 %v970
      %v1105 = vunpack.c.l.b16 %v971
      %v1106 = vunpack.c.h.b16 %v971
      %v1107 = vunpack.c.l.b16 %v972
      %v1108 = vunpack.c.h.b16 %v972
      %v1109 = vunpack.c.l.b16 %v973
      %v1110 = vunpack.c.h.b16 %v973
      %v1111 = vunpack.c.l.b16 %v974
      %v1112 = vunpack.c.h.b16 %v974
      %v1113 = vunpack.c.l.b16 %v975
      %v1114 = vunpack.c.h.b16 %v975
      %v1115 = vunpack.c.l.b16 %v976
      %v1116 = vunpack.c.h.b16 %v976
      %v1117 = vunpack.c.l.b16 %v977
      %v1118 = vunpack.c.h.b16 %v977
      %v1119 = vunpack.c.l.b16 %v978
      %v1120 = vunpack.c.h.b16 %v978
      %v1121 = vunpack.c.l.b16 %v979
      %v1122 = vunpack.c.h.b16 %v979
      %v1123 = vunpack.c.l.b16 %v980
      %v1124 = vunpack.c.h.b16 %v980
      %v1125 = vunpack.c.l.b16 %v981
      %v1126 = vunpack.c.h.b16 %v981
      %v1127 = vunpack.c.l.b16 %v982
      %v1128 = vunpack.c.h.b16 %v982
      %v1129 = vunpack.c.l.b16 %v983
      %v1130 = vunpack.c.h.b16 %v983
      %v1131 = vunpack.c.l.b16 %v984
      %v1132 = vunpack.c.h.b16 %v984
      %v1133 = vunpack.c.l.b16 %v985
      %v1134 = vunpack.c.h.b16 %v985
      %v1135 = vpack.c.b16 %v1039, %v1037
      %v1136 = vpack.c.b16 %v1040, %v1038
      %v1137 = vpack.c.b16 %v1043, %v1041
      %v1138 = vpack.c.b16 %v1044, %v1042
      %v1139 = vpack.c.b16 %v1047, %v1045
      %v1140 = vpack.c.b16 %v1048, %v1046
      %v1141 = vpack.c.b16 %v1051, %v1049
      %v1142 = vpack.c.b16 %v1052, %v1050
      %v1143 = vpack.c.b16 %v1055, %v1053
      %v1144 = vpack.c.b16 %v1056, %v1054
      %v1145 = vpack.c.b16 %v1059, %v1057
      %v1146 = vpack.c.b16 %v1060, %v1058
      %v1147 = vpack.c.b16 %v1063, %v1061
      %v1148 = vpack.c.b16 %v1064, %v1062
      %v1149 = vpack.c.b16 %v1067, %v1065
      %v1150 = vpack.c.b16 %v1068, %v1066
      %v1151 = vpack.c.b16 %v1071, %v1069
      %v1152 = vpack.c.b16 %v1072, %v1070
      %v1153 = vpack.c.b16 %v1075, %v1073
      %v1154 = vpack.c.b16 %v1076, %v1074
      %v1155 = vpack.c.b16 %v1079, %v1077
      %v1156 = vpack.c.b16 %v1080, %v1078
      %v1157 = vpack.c.b16 %v1083, %v1081
      %v1158 = vpack.c.b16 %v1084, %v1082
      %v1159 = vpack.c.b16 %v1087, %v1085
      %v1160 = vpack.c.b16 %v1088, %v1086
      %v1161 = vpack.c.b16 %v1091, %v1089
      %v1162 = vpack.c.b16 %v1092, %v1090
      %v1163 = vpack.c.b16 %v1095, %v1093
      %v1164 = vpack.c.b16 %v1096, %v1094
      %v1165 = vpack.c.b16 %v1099, %v1097
      %v1166 = vpack.c.b16 %v1100, %v1098
      %v1167 = vpack.c.b16 %v1103, %v1101
      %v1168 = vpack.c.b16 %v1104, %v1102
      %v1169 = vpack.c.b16 %v1107, %v1105
      %v1170 = vpack.c.b16 %v1108, %v1106
      %v1171 = vpack.c.b16 %v1111, %v1109
      %v1172 = vpack.c.b16 %v1112, %v1110
      %v1173 = vpack.c.b16 %v1115, %v1113
      %v1174 = vpack.c.b16 %v1116, %v1114
      %v1175 = vpack.c.b16 %v1119, %v1117
      %v1176 = vpack.c.b16 %v1120, %v1118
      %v1177 = vpack.c.b16 %v1123, %v1121
      %v1178 = vpack.c.b16 %v1124, %v1122
      %v1179 = vpack.c.b16 %v1127, %v1125
      %v1180 = vpack.c.b16 %v1128, %v1126
      %v1181 = vpack.c.b16 %v1131, %v1129
      %v1182 = vpack.c.b16 %v1132, %v1130
      %v1183 = vpack.c.b16 %v1133, %v1133
      %v1184 = vpack.c.b16 %v1134, %v1134
      %vm1233 = vcmask 48128
      %v1235 = vsel %vm1233, %v827, 0
      %v1238 = vsel %vm1233, %v828, 0
      %v1241 = vsel %vm1233, %v829, 0
      %v1244 = vsel %vm1233, %v830, 0
      %v1247 = vsel %vm1233, %v831, 0
      %v1250 = vsel %vm1233, %v832, 0
      %v1253 = vsel %vm1233, %v833, 0
      %v1256 = vsel %vm1233, %v834, 0
      %v1259 = vsel %vm1233, %v835, 0
      %v1262 = vsel %vm1233, %v836, 0
      %v1265 = vsel %vm1233, %v837, 0
      %v1268 = vsel %vm1233, %v838, 0
      %vm1270 = vcmask 1042432
      %v1272 = vsel %vm1270, %v1183, 0
      %v1275 = vsel %vm1270, %v1184, 0
      %1277 = vmatprep.subr.bf16.mxu0 %v1136
      %1278 = vmatpush1.bf16.msra.mxu0 %v1135
      %1279 = vmatprep.subr.bf16.mxu0 %v1138
      %1280 = vmatpush1.bf16.msra.mxu0 %v1137
      %1281 = vmatprep.subr.bf16.mxu0 %v1140
      %1282 = vmatpush1.bf16.msra.mxu0 %v1139
      %1283 = vmatprep.subr.bf16.mxu0 %v1142
      %1284 = vmatpush1.bf16.msra.mxu0 %v1141
      %1285 = vmatprep.subr.bf16.mxu0 %v1144
      %1286 = vmatpush1.bf16.msra.mxu0 %v1143
      %1287 = vmatprep.subr.bf16.mxu0 %v1146
      %1288 = vmatpush1.bf16.msra.mxu0 %v1145
      %1289 = vmatprep.subr.bf16.mxu0 %v1148
      %1290 = vmatpush1.bf16.msra.mxu0 %v1147
      %1291 = vmatprep.subr.bf16.mxu0 %v1150
      %1292 = vmatpush1.bf16.msra.mxu0 %v1149
      %1293 = vmatprep.subr.bf16.mxu0 %v1152
      %1294 = vmatpush1.bf16.msra.mxu0 %v1151
      %1295 = vmatprep.subr.bf16.mxu0 %v1154
      %1296 = vmatpush1.bf16.msra.mxu0 %v1153
      %1297 = vmatprep.subr.bf16.mxu0 %v1156
      %1298 = vmatpush1.bf16.msra.mxu0 %v1155
      %1299 = vmatprep.subr.bf16.mxu0 %v1158
      %1300 = vmatpush1.bf16.msra.mxu0 %v1157
      %1301 = vmatprep.subr.bf16.mxu0 %v1160
      %1302 = vmatpush1.bf16.msra.mxu0 %v1159
      %1303 = vmatprep.subr.bf16.mxu0 %v1162
      %1304 = vmatpush1.bf16.msra.mxu0 %v1161
      %1305 = vmatprep.subr.bf16.mxu0 %v1164
      %1306 = vmatpush1.bf16.msra.mxu0 %v1163
      %1307 = vmatprep.subr.bf16.mxu0 %v1166
      %1308 = vmatpush1.bf16.msra.mxu0 %v1165
      %1309 = vmatprep.mubr.bf16.mxu0 %v842
      %1310 = vmatmul.mubr.bf16.gmra.mrb[0].mxu0 %v442
      %v1311 = vpop.f32.mrb[0].mxu0
      %v1312 = vadd.f32 %v987, %v1311
      %v1313 = vpop.f32.mrb[0].mxu0
      %v1314 = vadd.f32 %v987, %v1313
      %v1315 = vpop.f32.mrb[0].mxu0
      %v1316 = vadd.f32 %v987, %v1315
      %v1317 = vpop.f32.mrb[0].mxu0
      %v1318 = vadd.f32 %v987, %v1317
      %1319 = vmatprep.mubr.bf16.mxu0 %v846
      %1320 = vmatmul.mubr.bf16.gmra.mrb[0].mxu0 %v460
      %v1321 = vpop.f32.mrb[0].mxu0
      %v1322 = vadd.f32 %v987, %v1321
      %v1323 = vpop.f32.mrb[0].mxu0
      %v1324 = vadd.f32 %v987, %v1323
      %v1325 = vpop.f32.mrb[0].mxu0
      %v1326 = vadd.f32 %v987, %v1325
      %v1327 = vpop.f32.mrb[0].mxu0
      %v1328 = vadd.f32 %v987, %v1327
      %1329 = vmatprep.mubr.bf16.mxu0 %v850
      %1330 = vmatmul.mubr.bf16.gmra.mrb[0].mxu0 %v475
      %v1331 = vpop.f32.mrb[0].mxu0
      %v1332 = vadd.f32 %v987, %v1331
      %v1333 = vpop.f32.mrb[0].mxu0
      %v1334 = vadd.f32 %v987, %v1333
      %v1335 = vpop.f32.mrb[0].mxu0
      %v1336 = vadd.f32 %v987, %v1335
      %v1337 = vpop.f32.mrb[0].mxu0
      %v1338 = vadd.f32 %v987, %v1337
      %1339 = vmatprep.mubr.bf16.mxu0 %v854
      %1340 = vmatmul.mubr.bf16.gmra.mrb[0].mxu0 %v490
      %v1341 = vpop.f32.mrb[0].mxu0
      %v1342 = vadd.f32 %v987, %v1341
      %v1343 = vpop.f32.mrb[0].mxu0
      %v1344 = vadd.f32 %v987, %v1343
      %v1345 = vpop.f32.mrb[0].mxu0
      %v1346 = vadd.f32 %v987, %v1345
      %v1347 = vpop.f32.mrb[0].mxu0
      %v1348 = vadd.f32 %v987, %v1347
      %1349 = vmatprep.mubr.bf16.mxu0 %v858
      %1350 = vmatmul.mubr.bf16.gmra.mrb[0].mxu0 %v505
      %v1351 = vpop.f32.mrb[0].mxu0
      %v1352 = vadd.f32 %v987, %v1351
      %v1353 = vpop.f32.mrb[0].mxu0
      %v1354 = vadd.f32 %v987, %v1353
      %v1355 = vpop.f32.mrb[0].mxu0
      %v1356 = vadd.f32 %v987, %v1355
      %v1357 = vpop.f32.mrb[0].mxu0
      %v1358 = vadd.f32 %v987, %v1357
      %1359 = vmatprep.mubr.bf16.mxu0 %v862
      %1360 = vmatmul.mubr.bf16.gmra.mrb[0].mxu0 %v520
      %v1361 = vpop.f32.mrb[0].mxu0
      %v1362 = vadd.f32 %v987, %v1361
      %v1363 = vpop.f32.mrb[0].mxu0
      %v1364 = vadd.f32 %v987, %v1363
      %v1365 = vpop.f32.mrb[0].mxu0
      %v1366 = vadd.f32 %v987, %v1365
      %v1367 = vpop.f32.mrb[0].mxu0
      %v1368 = vadd.f32 %v987, %v1367
      %1369 = vmatprep.mubr.bf16.mxu0 %v866
      %1370 = vmatmul.mubr.bf16.gmra.mrb[0].mxu0 %v535
      %v1371 = vpop.f32.mrb[0].mxu0
      %v1372 = vadd.f32 %v987, %v1371
      %v1373 = vpop.f32.mrb[0].mxu0
      %v1374 = vadd.f32 %v987, %v1373
      %v1375 = vpop.f32.mrb[0].mxu0
      %v1376 = vadd.f32 %v987, %v1375
      %v1377 = vpop.f32.mrb[0].mxu0
      %v1378 = vadd.f32 %v987, %v1377
      %1379 = vmatprep.mubr.bf16.mxu0 %v870
      %1380 = vmatmul.mubr.bf16.gmra.mrb[0].mxu0 %v550
      %v1381 = vpop.f32.mrb[0].mxu0
      %v1382 = vadd.f32 %v987, %v1381
      %v1383 = vpop.f32.mrb[0].mxu0
      %v1384 = vadd.f32 %v987, %v1383
      %v1385 = vpop.f32.mrb[0].mxu0
      %v1386 = vadd.f32 %v987, %v1385
      %v1387 = vpop.f32.mrb[0].mxu0
      %v1388 = vadd.f32 %v987, %v1387
      %1389 = vmatprep.mubr.bf16.mxu0 %v874
      %1390 = vmatmul.mubr.bf16.gmra.mrb[0].mxu0 %v565
      %v1391 = vpop.f32.mrb[0].mxu0
      %v1392 = vadd.f32 %v987, %v1391
      %v1393 = vpop.f32.mrb[0].mxu0
      %v1394 = vadd.f32 %v987, %v1393
      %v1395 = vpop.f32.mrb[0].mxu0
      %v1396 = vadd.f32 %v987, %v1395
      %v1397 = vpop.f32.mrb[0].mxu0
      %v1398 = vadd.f32 %v987, %v1397
      %1399 = vmatprep.mubr.bf16.mxu0 %v878
      %1400 = vmatmul.mubr.bf16.gmra.mrb[0].mxu0 %v580
      %v1401 = vpop.f32.mrb[0].mxu0
      %v1402 = vadd.f32 %v987, %v1401
      %v1403 = vpop.f32.mrb[0].mxu0
      %v1404 = vadd.f32 %v987, %v1403
      %v1405 = vpop.f32.mrb[0].mxu0
      %v1406 = vadd.f32 %v987, %v1405
      %v1407 = vpop.f32.mrb[0].mxu0
      %v1408 = vadd.f32 %v987, %v1407
      %1409 = vmatprep.mubr.bf16.mxu0 %v882
      %1410 = vmatmul.mubr.bf16.gmra.mrb[0].mxu0 %v595
      %v1411 = vpop.f32.mrb[0].mxu0
      %v1412 = vadd.f32 %v987, %v1411
      %v1413 = vpop.f32.mrb[0].mxu0
      %v1414 = vadd.f32 %v987, %v1413
      %v1415 = vpop.f32.mrb[0].mxu0
      %v1416 = vadd.f32 %v987, %v1415
      %v1417 = vpop.f32.mrb[0].mxu0
      %v1418 = vadd.f32 %v987, %v1417
      %1419 = vmatprep.mubr.bf16.mxu0 %v886
      %1420 = vmatmul.mubr.bf16.gmra.mrb[0].mxu0 %v624
      %v1421 = vpop.f32.mrb[0].mxu0
      %v1422 = vadd.f32 %v987, %v1421
      %v1423 = vpop.f32.mrb[0].mxu0
      %v1424 = vadd.f32 %v987, %v1423
      %v1425 = vpop.f32.mrb[0].mxu0
      %v1426 = vadd.f32 %v987, %v1425
      %v1427 = vpop.f32.mrb[0].mxu0
      %v1428 = vadd.f32 %v987, %v1427
      %1429 = vdwg.mxu0
      %1430 = vmatprep.subr.bf16.mxu0 %v1168
      %1431 = vmatpush1.bf16.msra.mxu0 %v1167
      %1432 = vmatprep.subr.bf16.mxu0 %v1170
      %1433 = vmatpush1.bf16.msra.mxu0 %v1169
      %1434 = vmatprep.subr.bf16.mxu0 %v1172
      %1435 = vmatpush1.bf16.msra.mxu0 %v1171
      %1436 = vmatprep.subr.bf16.mxu0 %v1174
      %1437 = vmatpush1.bf16.msra.mxu0 %v1173
      %1438 = vmatprep.subr.bf16.mxu0 %v1176
      %1439 = vmatpush1.bf16.msra.mxu0 %v1175
      %1440 = vmatprep.subr.bf16.mxu0 %v1178
      %1441 = vmatpush1.bf16.msra.mxu0 %v1177
      %1442 = vmatprep.subr.bf16.mxu0 %v1180
      %1443 = vmatpush1.bf16.msra.mxu0 %v1179
      %1444 = vmatprep.subr.bf16.mxu0 %v1182
      %1445 = vmatpush1.bf16.msra.mxu0 %v1181
      %1446 = vmatprep.subr.bf16.mxu0 %v1275
      %1447 = vmatpush1.bf16.msra.mxu0 %v1272
      %1448 = vmatprep.subr.bf16.mxu0 0
      %1449 = vmatpush1.bf16.msra.mxu0 0
      %1450 = vmatprep.subr.bf16.mxu0 0
      %1451 = vmatpush1.bf16.msra.mxu0 0
      %1452 = vmatprep.subr.bf16.mxu0 0
      %1453 = vmatpush1.bf16.msra.mxu0 0
      %1454 = vmatprep.subr.bf16.mxu0 0
      %1455 = vmatpush1.bf16.msra.mxu0 0
      %1456 = vmatprep.subr.bf16.mxu0 0
      %1457 = vmatpush1.bf16.msra.mxu0 0
      %1458 = vmatprep.subr.bf16.mxu0 0
      %1459 = vmatpush1.bf16.msra.mxu0 0
      %1460 = vmatprep.subr.bf16.mxu0 0
      %1461 = vmatpush1.bf16.msra.mxu0 0
      %1462 = vmatprep.mubr.bf16.mxu0 %v1235
      %1463 = vmatmul.mubr.bf16.gmra.mrb[0].mxu0 %v891
      %v1464 = vpop.f32.mrb[0].mxu0
      %v1465 = vadd.f32 %v1312, %v1464
      %v1466 = vpop.f32.mrb[0].mxu0
      %v1467 = vadd.f32 %v1314, %v1466
      %v1468 = vpop.f32.mrb[0].mxu0
      %v1469 = vadd.f32 %v1316, %v1468
      %v1470 = vpop.f32.mrb[0].mxu0
      %v1471 = vadd.f32 %v1318, %v1470
      %1472 = vmatprep.mubr.bf16.mxu0 %v1238
      %1473 = vmatmul.mubr.bf16.gmra.mrb[0].mxu0 %v895
      %v1474 = vpop.f32.mrb[0].mxu0
      %v1475 = vadd.f32 %v1322, %v1474
      %v1476 = vpop.f32.mrb[0].mxu0
      %v1477 = vadd.f32 %v1324, %v1476
      %v1478 = vpop.f32.mrb[0].mxu0
      %v1479 = vadd.f32 %v1326, %v1478
      %v1480 = vpop.f32.mrb[0].mxu0
      %v1481 = vadd.f32 %v1328, %v1480
      %1482 = vmatprep.mubr.bf16.mxu0 %v1241
      %1483 = vmatmul.mubr.bf16.gmra.mrb[0].mxu0 %v899
      %v1484 = vpop.f32.mrb[0].mxu0
      %v1485 = vadd.f32 %v1332, %v1484
      %v1486 = vpop.f32.mrb[0].mxu0
      %v1487 = vadd.f32 %v1334, %v1486
      %v1488 = vpop.f32.mrb[0].mxu0
      %v1489 = vadd.f32 %v1336, %v1488
      %v1490 = vpop.f32.mrb[0].mxu0
      %v1491 = vadd.f32 %v1338, %v1490
      %1492 = vmatprep.mubr.bf16.mxu0 %v1244
      %1493 = vmatmul.mubr.bf16.gmra.mrb[0].mxu0 %v903
      %v1494 = vpop.f32.mrb[0].mxu0
      %v1495 = vadd.f32 %v1342, %v1494
      %v1496 = vpop.f32.mrb[0].mxu0
      %v1497 = vadd.f32 %v1344, %v1496
      %v1498 = vpop.f32.mrb[0].mxu0
      %v1499 = vadd.f32 %v1346, %v1498
      %v1500 = vpop.f32.mrb[0].mxu0
      %v1501 = vadd.f32 %v1348, %v1500
      %1502 = vmatprep.mubr.bf16.mxu0 %v1247
      %1503 = vmatmul.mubr.bf16.gmra.mrb[0].mxu0 %v907
      %v1504 = vpop.f32.mrb[0].mxu0
      %v1505 = vadd.f32 %v1352, %v1504
      %v1506 = vpop.f32.mrb[0].mxu0
      %v1507 = vadd.f32 %v1354, %v1506
      %v1508 = vpop.f32.mrb[0].mxu0
      %v1509 = vadd.f32 %v1356, %v1508
      %v1510 = vpop.f32.mrb[0].mxu0
      %v1511 = vadd.f32 %v1358, %v1510
      %1512 = vmatprep.mubr.bf16.mxu0 %v1250
      %1513 = vmatmul.mubr.bf16.gmra.mrb[0].mxu0 %v911
      %v1514 = vpop.f32.mrb[0].mxu0
      %v1515 = vadd.f32 %v1362, %v1514
      %v1516 = vpop.f32.mrb[0].mxu0
      %v1517 = vadd.f32 %v1364, %v1516
      %v1518 = vpop.f32.mrb[0].mxu0
      %v1519 = vadd.f32 %v1366, %v1518
      %v1520 = vpop.f32.mrb[0].mxu0
      %v1521 = vadd.f32 %v1368, %v1520
      %1522 = vmatprep.mubr.bf16.mxu0 %v1253
      %1523 = vmatmul.mubr.bf16.gmra.mrb[0].mxu0 %v915
      %v1524 = vpop.f32.mrb[0].mxu0
      %v1525 = vadd.f32 %v1372, %v1524
      %v1526 = vpop.f32.mrb[0].mxu0
      %v1527 = vadd.f32 %v1374, %v1526
      %v1528 = vpop.f32.mrb[0].mxu0
      %v1529 = vadd.f32 %v1376, %v1528
      %v1530 = vpop.f32.mrb[0].mxu0
      %v1531 = vadd.f32 %v1378, %v1530
      %1532 = vmatprep.mubr.bf16.mxu0 %v1256
      %1533 = vmatmul.mubr.bf16.gmra.mrb[0].mxu0 %v919
      %v1534 = vpop.f32.mrb[0].mxu0
      %v1535 = vadd.f32 %v1382, %v1534
      %v1536 = vpop.f32.mrb[0].mxu0
      %v1537 = vadd.f32 %v1384, %v1536
      %v1538 = vpop.f32.mrb[0].mxu0
      %v1539 = vadd.f32 %v1386, %v1538
      %v1540 = vpop.f32.mrb[0].mxu0
      %v1541 = vadd.f32 %v1388, %v1540
      %1542 = vmatprep.mubr.bf16.mxu0 %v1259
      %1543 = vmatmul.mubr.bf16.gmra.mrb[0].mxu0 %v923
      %v1544 = vpop.f32.mrb[0].mxu0
      %v1545 = vadd.f32 %v1392, %v1544
      %v1546 = vpop.f32.mrb[0].mxu0
      %v1547 = vadd.f32 %v1394, %v1546
      %v1548 = vpop.f32.mrb[0].mxu0
      %v1549 = vadd.f32 %v1396, %v1548
      %v1550 = vpop.f32.mrb[0].mxu0
      %v1551 = vadd.f32 %v1398, %v1550
      %1552 = vmatprep.mubr.bf16.mxu0 %v1262
      %1553 = vmatmul.mubr.bf16.gmra.mrb[0].mxu0 %v927
      %v1554 = vpop.f32.mrb[0].mxu0
      %v1555 = vadd.f32 %v1402, %v1554
      %v1556 = vpop.f32.mrb[0].mxu0
      %v1557 = vadd.f32 %v1404, %v1556
      %v1558 = vpop.f32.mrb[0].mxu0
      %v1559 = vadd.f32 %v1406, %v1558
      %v1560 = vpop.f32.mrb[0].mxu0
      %v1561 = vadd.f32 %v1408, %v1560
      %1562 = vmatprep.mubr.bf16.mxu0 %v1265
      %1563 = vmatmul.mubr.bf16.gmra.mrb[0].mxu0 %v931
      %v1564 = vpop.f32.mrb[0].mxu0
      %v1565 = vadd.f32 %v1412, %v1564
      %v1566 = vpop.f32.mrb[0].mxu0
      %v1567 = vadd.f32 %v1414, %v1566
      %v1568 = vpop.f32.mrb[0].mxu0
      %v1569 = vadd.f32 %v1416, %v1568
      %v1570 = vpop.f32.mrb[0].mxu0
      %v1571 = vadd.f32 %v1418, %v1570
      %1572 = vmatprep.mubr.bf16.mxu0 %v1268
      %1573 = vmatmul.mubr.bf16.gmra.mrb[0].mxu0 %v935
      %v1574 = vpop.f32.mrb[0].mxu0
      %v1575 = vadd.f32 %v1422, %v1574
      %v1576 = vpop.f32.mrb[0].mxu0
      %v1577 = vadd.f32 %v1424, %v1576
      %v1578 = vpop.f32.mrb[0].mxu0
      %v1579 = vadd.f32 %v1426, %v1578
      %v1580 = vpop.f32.mrb[0].mxu0
      %v1581 = vadd.f32 %v1428, %v1580
      %1582 = vdwg.mxu0
      %vm1583 = vcmp.ge.f32.partialorder %v1465, 0.0
      %vm1584 = vcmp.ge.f32.partialorder %v1467, 0.0
      %vm1585 = vcmp.ge.f32.partialorder %v1469, 0.0
      %vm1586 = vcmp.ge.f32.partialorder %v1471, 0.0
      %vm1587 = vcmp.ge.f32.partialorder %v1475, 0.0
      %vm1588 = vcmp.ge.f32.partialorder %v1477, 0.0
      %vm1589 = vcmp.ge.f32.partialorder %v1479, 0.0
      %vm1590 = vcmp.ge.f32.partialorder %v1481, 0.0
      %vm1591 = vcmp.ge.f32.partialorder %v1485, 0.0
      %vm1592 = vcmp.ge.f32.partialorder %v1487, 0.0
      %vm1593 = vcmp.ge.f32.partialorder %v1489, 0.0
      %vm1594 = vcmp.ge.f32.partialorder %v1491, 0.0
      %vm1595 = vcmp.ge.f32.partialorder %v1495, 0.0
      %vm1596 = vcmp.ge.f32.partialorder %v1497, 0.0
      %vm1597 = vcmp.ge.f32.partialorder %v1499, 0.0
      %vm1598 = vcmp.ge.f32.partialorder %v1501, 0.0
      %vm1599 = vcmp.ge.f32.partialorder %v1505, 0.0
      %vm1600 = vcmp.ge.f32.partialorder %v1507, 0.0
      %vm1601 = vcmp.ge.f32.partialorder %v1509, 0.0
      %vm1602 = vcmp.ge.f32.partialorder %v1511, 0.0
      %vm1603 = vcmp.ge.f32.partialorder %v1515, 0.0
      %vm1604 = vcmp.ge.f32.partialorder %v1517, 0.0
      %vm1605 = vcmp.ge.f32.partialorder %v1519, 0.0
      %vm1606 = vcmp.ge.f32.partialorder %v1521, 0.0
      %vm1607 = vcmp.ge.f32.partialorder %v1525, 0.0
      %vm1608 = vcmp.ge.f32.partialorder %v1527, 0.0
      %vm1609 = vcmp.ge.f32.partialorder %v1529, 0.0
      %vm1610 = vcmp.ge.f32.partialorder %v1531, 0.0
      %vm1611 = vcmp.ge.f32.partialorder %v1535, 0.0
      %vm1612 = vcmp.ge.f32.partialorder %v1537, 0.0
      %vm1613 = vcmp.ge.f32.partialorder %v1539, 0.0
      %vm1614 = vcmp.ge.f32.partialorder %v1541, 0.0
      %vm1615 = vcmp.ge.f32.partialorder %v1545, 0.0
      %vm1616 = vcmp.ge.f32.partialorder %v1547, 0.0
      %vm1617 = vcmp.ge.f32.partialorder %v1549, 0.0
      %vm1618 = vcmp.ge.f32.partialorder %v1551, 0.0
      %vm1619 = vcmp.ge.f32.partialorder %v1555, 0.0
      %vm1620 = vcmp.ge.f32.partialorder %v1557, 0.0
      %vm1621 = vcmp.ge.f32.partialorder %v1559, 0.0
      %vm1622 = vcmp.ge.f32.partialorder %v1561, 0.0
      %vm1623 = vcmp.ge.f32.partialorder %v1565, 0.0
      %vm1624 = vcmp.ge.f32.partialorder %v1567, 0.0
      %vm1625 = vcmp.ge.f32.partialorder %v1569, 0.0
      %vm1626 = vcmp.ge.f32.partialorder %v1571, 0.0
      %vm1627 = vcmp.ge.f32.partialorder %v1575, 0.0
      %vm1628 = vcmp.ge.f32.partialorder %v1577, 0.0
      %vm1629 = vcmp.ge.f32.partialorder %v1579, 0.0
      %vm1630 = vcmp.ge.f32.partialorder %v1581, 0.0
      %v1631 = vmul.f32 %v1465, 0.4
      %v1632 = vmul.f32 %v1467, 0.4
      %v1633 = vmul.f32 %v1469, 0.4
      %v1634 = vmul.f32 %v1471, 0.4
      %v1635 = vmul.f32 %v1475, 0.4
      %v1636 = vmul.f32 %v1477, 0.4
      %v1637 = vmul.f32 %v1479, 0.4
      %v1638 = vmul.f32 %v1481, 0.4
      %v1639 = vmul.f32 %v1485, 0.4
      %v1640 = vmul.f32 %v1487, 0.4
      %v1641 = vmul.f32 %v1489, 0.4
      %v1642 = vmul.f32 %v1491, 0.4
      %v1643 = vmul.f32 %v1495, 0.4
      %v1644 = vmul.f32 %v1497, 0.4
      %v1645 = vmul.f32 %v1499, 0.4
      %v1646 = vmul.f32 %v1501, 0.4
      %v1647 = vmul.f32 %v1505, 0.4
      %v1648 = vmul.f32 %v1507, 0.4
      %v1649 = vmul.f32 %v1509, 0.4
      %v1650 = vmul.f32 %v1511, 0.4
      %v1651 = vmul.f32 %v1515, 0.4
      %v1652 = vmul.f32 %v1517, 0.4
      %v1653 = vmul.f32 %v1519, 0.4
      %v1654 = vmul.f32 %v1521, 0.4
      %v1655 = vmul.f32 %v1525, 0.4
      %v1656 = vmul.f32 %v1527, 0.4
      %v1657 = vmul.f32 %v1529, 0.4
      %v1658 = vmul.f32 %v1531, 0.4
      %v1659 = vmul.f32 %v1535, 0.4
      %v1660 = vmul.f32 %v1537, 0.4
      %v1661 = vmul.f32 %v1539, 0.4
      %v1662 = vmul.f32 %v1541, 0.4
      %v1663 = vmul.f32 %v1545, 0.4
      %v1664 = vmul.f32 %v1547, 0.4
      %v1665 = vmul.f32 %v1549, 0.4
      %v1666 = vmul.f32 %v1551, 0.4
      %v1667 = vmul.f32 %v1555, 0.4
      %v1668 = vmul.f32 %v1557, 0.4
      %v1669 = vmul.f32 %v1559, 0.4
      %v1670 = vmul.f32 %v1561, 0.4
      %v1671 = vmul.f32 %v1565, 0.4
      %v1672 = vmul.f32 %v1567, 0.4
      %v1673 = vmul.f32 %v1569, 0.4
      %v1674 = vmul.f32 %v1571, 0.4
      %v1675 = vmul.f32 %v1575, 0.4
      %v1676 = vmul.f32 %v1577, 0.4
      %v1677 = vmul.f32 %v1579, 0.4
      %v1678 = vmul.f32 %v1581, 0.4
      %v1679 = vsel %vm1583, %v1465, %v1631
      %v1680 = vsel %vm1584, %v1467, %v1632
      %v1681 = vsel %vm1585, %v1469, %v1633
      %v1682 = vsel %vm1586, %v1471, %v1634
      %v1683 = vsel %vm1587, %v1475, %v1635
      %v1684 = vsel %vm1588, %v1477, %v1636
      %v1685 = vsel %vm1589, %v1479, %v1637
      %v1686 = vsel %vm1590, %v1481, %v1638
      %v1687 = vsel %vm1591, %v1485, %v1639
      %v1688 = vsel %vm1592, %v1487, %v1640
      %v1689 = vsel %vm1593, %v1489, %v1641
      %v1690 = vsel %vm1594, %v1491, %v1642
      %v1691 = vsel %vm1595, %v1495, %v1643
      %v1692 = vsel %vm1596, %v1497, %v1644
      %v1693 = vsel %vm1597, %v1499, %v1645
      %v1694 = vsel %vm1598, %v1501, %v1646
      %v1695 = vsel %vm1599, %v1505, %v1647
      %v1696 = vsel %vm1600, %v1507, %v1648
      %v1697 = vsel %vm1601, %v1509, %v1649
      %v1698 = vsel %vm1602, %v1511, %v1650
      %v1699 = vsel %vm1603, %v1515, %v1651
      %v1700 = vsel %vm1604, %v1517, %v1652
      %v1701 = vsel %vm1605, %v1519, %v1653
      %v1702 = vsel %vm1606, %v1521, %v1654
      %v1703 = vsel %vm1607, %v1525, %v1655
      %v1704 = vsel %vm1608, %v1527, %v1656
      %v1705 = vsel %vm1609, %v1529, %v1657
      %v1706 = vsel %vm1610, %v1531, %v1658
      %v1707 = vsel %vm1611, %v1535, %v1659
      %v1708 = vsel %vm1612, %v1537, %v1660
      %v1709 = vsel %vm1613, %v1539, %v1661
      %v1710 = vsel %vm1614, %v1541, %v1662
      %v1711 = vsel %vm1615, %v1545, %v1663
      %v1712 = vsel %vm1616, %v1547, %v1664
      %v1713 = vsel %vm1617, %v1549, %v1665
      %v1714 = vsel %vm1618, %v1551, %v1666
      %v1715 = vsel %vm1619, %v1555, %v1667
      %v1716 = vsel %vm1620, %v1557, %v1668
      %v1717 = vsel %vm1621, %v1559, %v1669
      %v1718 = vsel %vm1622, %v1561, %v1670
      %v1719 = vsel %vm1623, %v1565, %v1671
      %v1720 = vsel %vm1624, %v1567, %v1672
      %v1721 = vsel %vm1625, %v1569, %v1673
      %v1722 = vsel %vm1626, %v1571, %v1674
      %v1723 = vsel %vm1627, %v1575, %v1675
      %v1724 = vsel %vm1628, %v1577, %v1676
      %v1725 = vsel %vm1629, %v1579, %v1677
      %v1726 = vsel %vm1630, %v1581, %v1678
      %v1727 = vlaneseq
      %v1728 = vshrl.u32 %v1727, 7
      %v1729 = vadd.s32 %v1728, 8
      %v1730 = vadd.s32 %v1728, 16
      %v1731 = vadd.s32 %v1728, 24
      %v1732 = vadd.s32 %v1728, 32
      %v1733 = vadd.s32 %v1728, 40
      %v1734 = vadd.s32 %v1728, 48
      %v1735 = vadd.s32 %v1728, 56
      %v1736 = vadd.s32 %v1728, 64
      %v1737 = vadd.s32 %v1728, 72
      %v1738 = vadd.s32 %v1728, 80
      %v1739 = vadd.s32 %v1728, 88
      %vm1740 = vcmp.ge.s32.totalorder %v1728, 1
      %vm1741 = vcmp.ge.s32.totalorder %v1729, 1
      %vm1742 = vcmp.ge.s32.totalorder %v1730, 1
      %vm1743 = vcmp.ge.s32.totalorder %v1731, 1
      %vm1744 = vcmp.ge.s32.totalorder %v1732, 1
      %vm1745 = vcmp.ge.s32.totalorder %v1733, 1
      %vm1746 = vcmp.ge.s32.totalorder %v1734, 1
      %vm1747 = vcmp.ge.s32.totalorder %v1735, 1
      %vm1748 = vcmp.ge.s32.totalorder %v1736, 1
      %vm1749 = vcmp.ge.s32.totalorder %v1737, 1
      %vm1750 = vcmp.ge.s32.totalorder %v1738, 1
      %vm1751 = vcmp.ge.s32.totalorder %v1739, 1
      %vm1752 = vcmp.le.s32.totalorder %v1728, 80
      %vm1753 = vcmp.le.s32.totalorder %v1729, 80
      %vm1754 = vcmp.le.s32.totalorder %v1730, 80
      %vm1755 = vcmp.le.s32.totalorder %v1731, 80
      %vm1756 = vcmp.le.s32.totalorder %v1732, 80
      %vm1757 = vcmp.le.s32.totalorder %v1733, 80
      %vm1758 = vcmp.le.s32.totalorder %v1734, 80
      %vm1759 = vcmp.le.s32.totalorder %v1735, 80
      %vm1760 = vcmp.le.s32.totalorder %v1736, 80
      %vm1761 = vcmp.le.s32.totalorder %v1737, 80
      %vm1762 = vcmp.le.s32.totalorder %v1738, 80
      %vm1763 = vcmp.le.s32.totalorder %v1739, 80
      %vm1764 = vmand %vm1740, %vm1752
      %vm1765 = vmand %vm1741, %vm1753
      %vm1766 = vmand %vm1742, %vm1754
      %vm1767 = vmand %vm1743, %vm1755
      %vm1768 = vmand %vm1744, %vm1756
      %vm1769 = vmand %vm1745, %vm1757
      %vm1770 = vmand %vm1746, %vm1758
      %vm1771 = vmand %vm1747, %vm1759
      %vm1772 = vmand %vm1748, %vm1760
      %vm1773 = vmand %vm1749, %vm1761
      %vm1774 = vmand %vm1750, %vm1762
      %vm1775 = vmand %vm1751, %vm1763
      %s1776 = sadd.s32 %s21, 1
      %s1777 = smul.u32 %s1776, 512
      %p1778 = scmp.gt.s32.totalorder %s1777, 32
      // Predicated region
      $region37: #{upsample_net2_forward.4} parent=35 // pred_check
        %p1779 = pneg %p1778
      $region38: #{upsample_net2_forward.4} parent=35 // pred_check_branch
        %1781 = sbr.rel (%p1779) target = $region40
      $region39: #{upsample_net2_forward.4} parent=35 // pred_region
        %s1782 = smul.u32 %s21, 512
        %v1783 = vlaneseq
        %v1784 = vand.u32 %v1783, 127
        %v1785 = vadd.s32 %v1784, 128
        %s1786 = ssub.s32 32, %s1782
        %v1787 = vstv %s1786
        %vm1788 = vcmp.lt.s32.totalorder %v1784, %v1787
        %vm1789 = vcmp.lt.s32.totalorder %v1785, %v1787
        %vm1790 = vmand %vm1764, %vm1788
        %vm1791 = vmand %vm1764, %vm1789
        %vm1792 = vmand %vm1765, %vm1788
        %vm1793 = vmand %vm1765, %vm1789
        %vm1794 = vmand %vm1766, %vm1788
        %vm1795 = vmand %vm1766, %vm1789
        %vm1796 = vmand %vm1767, %vm1788
        %vm1797 = vmand %vm1767, %vm1789
        %vm1798 = vmand %vm1768, %vm1788
        %vm1799 = vmand %vm1768, %vm1789
        %vm1800 = vmand %vm1769, %vm1788
        %vm1801 = vmand %vm1769, %vm1789
        %vm1802 = vmand %vm1770, %vm1788
        %vm1803 = vmand %vm1770, %vm1789
        %vm1804 = vmand %vm1771, %vm1788
        %vm1805 = vmand %vm1771, %vm1789
        %vm1806 = vmand %vm1772, %vm1788
        %vm1807 = vmand %vm1772, %vm1789
        %vm1808 = vmand %vm1773, %vm1788
        %vm1809 = vmand %vm1773, %vm1789
        %vm1810 = vmand %vm1774, %vm1788
        %vm1811 = vmand %vm1774, %vm1789
        %vm1812 = vmand %vm1775, %vm1788
        %vm1813 = vmand %vm1775, %vm1789
        %v1814 = vsel %vm1790, %v1679, 0.0
        %v1815 = vsel %vm1791, %v1680, 0.0
        %v1816 = vsel %vm1792, %v1681, 0.0
        %v1817 = vsel %vm1793, %v1682, 0.0
        %v1818 = vsel %vm1794, %v1683, 0.0
        %v1819 = vsel %vm1795, %v1684, 0.0
        %v1820 = vsel %vm1796, %v1685, 0.0
        %v1821 = vsel %vm1797, %v1686, 0.0
        %v1822 = vsel %vm1798, %v1687, 0.0
        %v1823 = vsel %vm1799, %v1688, 0.0
        %v1824 = vsel %vm1800, %v1689, 0.0
        %v1825 = vsel %vm1801, %v1690, 0.0
        %v1826 = vsel %vm1802, %v1691, 0.0
        %v1827 = vsel %vm1803, %v1692, 0.0
        %v1828 = vsel %vm1804, %v1693, 0.0
        %v1829 = vsel %vm1805, %v1694, 0.0
        %v1830 = vsel %vm1806, %v1695, 0.0
        %v1831 = vsel %vm1807, %v1696, 0.0
        %v1832 = vsel %vm1808, %v1697, 0.0
        %v1833 = vsel %vm1809, %v1698, 0.0
        %v1834 = vsel %vm1810, %v1699, 0.0
        %v1835 = vsel %vm1811, %v1700, 0.0
        %v1836 = vsel %vm1812, %v1701, 0.0
        %v1837 = vsel %vm1813, %v1702, 0.0
        %s1838 = smul.u32 %s21, 2
        %s1839 = sadd.s32 %s1838, 1
        %s1840 = smul.u32 %s1839, 256
        %s1841 = ssub.s32 32, %s1840
        %v1842 = vstv %s1841
        %vm1843 = vcmp.lt.s32.totalorder %v1784, %v1842
        %vm1844 = vcmp.lt.s32.totalorder %v1785, %v1842
        %vm1845 = vmand %vm1764, %vm1843
        %vm1846 = vmand %vm1764, %vm1844
        %vm1847 = vmand %vm1765, %vm1843
        %vm1848 = vmand %vm1765, %vm1844
        %vm1849 = vmand %vm1766, %vm1843
        %vm1850 = vmand %vm1766, %vm1844
        %vm1851 = vmand %vm1767, %vm1843
        %vm1852 = vmand %vm1767, %vm1844
        %vm1853 = vmand %vm1768, %vm1843
        %vm1854 = vmand %vm1768, %vm1844
        %vm1855 = vmand %vm1769, %vm1843
        %vm1856 = vmand %vm1769, %vm1844
        %vm1857 = vmand %vm1770, %vm1843
        %vm1858 = vmand %vm1770, %vm1844
        %vm1859 = vmand %vm1771, %vm1843
        %vm1860 = vmand %vm1771, %vm1844
        %vm1861 = vmand %vm1772, %vm1843
        %vm1862 = vmand %vm1772, %vm1844
        %vm1863 = vmand %vm1773, %vm1843
        %vm1864 = vmand %vm1773, %vm1844
        %vm1865 = vmand %vm1774, %vm1843
        %vm1866 = vmand %vm1774, %vm1844
        %vm1867 = vmand %vm1775, %vm1843
        %vm1868 = vmand %vm1775, %vm1844
        %v1869 = vsel %vm1845, %v1703, 0.0
        %v1870 = vsel %vm1846, %v1704, 0.0
        %v1871 = vsel %vm1847, %v1705, 0.0
        %v1872 = vsel %vm1848, %v1706, 0.0
        %v1873 = vsel %vm1849, %v1707, 0.0
        %v1874 = vsel %vm1850, %v1708, 0.0
        %v1875 = vsel %vm1851, %v1709, 0.0
        %v1876 = vsel %vm1852, %v1710, 0.0
        %v1877 = vsel %vm1853, %v1711, 0.0
        %v1878 = vsel %vm1854, %v1712, 0.0
        %v1879 = vsel %vm1855, %v1713, 0.0
        %v1880 = vsel %vm1856, %v1714, 0.0
        %v1881 = vsel %vm1857, %v1715, 0.0
        %v1882 = vsel %vm1858, %v1716, 0.0
        %v1883 = vsel %vm1859, %v1717, 0.0
        %v1884 = vsel %vm1860, %v1718, 0.0
        %v1885 = vsel %vm1861, %v1719, 0.0
        %v1886 = vsel %vm1862, %v1720, 0.0
        %v1887 = vsel %vm1863, %v1721, 0.0
        %v1888 = vsel %vm1864, %v1722, 0.0
        %v1889 = vsel %vm1865, %v1723, 0.0
        %v1890 = vsel %vm1866, %v1724, 0.0
        %v1891 = vsel %vm1867, %v1725, 0.0
        %v1892 = vsel %vm1868, %v1726, 0.0
        %v1893 = vpack.c.bf16 %v1816, %v1814
        %v1894 = vpack.c.bf16 %v1817, %v1815
        %v1895 = vpack.c.bf16 %v1871, %v1869
        %v1896 = vpack.c.bf16 %v1872, %v1870
        %v1897 = vpack.c.bf16 %v1820, %v1818
        %v1898 = vpack.c.bf16 %v1821, %v1819
        %v1899 = vpack.c.bf16 %v1875, %v1873
        %v1900 = vpack.c.bf16 %v1876, %v1874
        %v1901 = vpack.c.bf16 %v1824, %v1822
        %v1902 = vpack.c.bf16 %v1825, %v1823
        %v1903 = vpack.c.bf16 %v1879, %v1877
        %v1904 = vpack.c.bf16 %v1880, %v1878
        %v1905 = vpack.c.bf16 %v1828, %v1826
        %v1906 = vpack.c.bf16 %v1829, %v1827
        %v1907 = vpack.c.bf16 %v1883, %v1881
        %v1908 = vpack.c.bf16 %v1884, %v1882
        %v1909 = vpack.c.bf16 %v1832, %v1830
        %v1910 = vpack.c.bf16 %v1833, %v1831
        %v1911 = vpack.c.bf16 %v1887, %v1885
        %v1912 = vpack.c.bf16 %v1888, %v1886
        %v1913 = vpack.c.bf16 %v1836, %v1834
        %v1914 = vpack.c.bf16 %v1837, %v1835
        %v1915 = vpack.c.bf16 %v1891, %v1889
        %v1916 = vpack.c.bf16 %v1892, %v1890
        %v1941 = vunpack.c.l.b16 %v1893
        %v1942 = vunpack.c.l.b16 %v1894
        %v1943 = vunpack.c.l.b16 %v1895
        %v1944 = vunpack.c.l.b16 %v1896
        %v1945 = vunpack.c.h.b16 %v1893
        %v1946 = vunpack.c.h.b16 %v1894
        %v1947 = vunpack.c.h.b16 %v1895
        %v1948 = vunpack.c.h.b16 %v1896
        %v1949 = vunpack.c.l.b16 %v1897
        %v1950 = vunpack.c.l.b16 %v1898
        %v1951 = vunpack.c.l.b16 %v1899
        %v1952 = vunpack.c.l.b16 %v1900
        %v1953 = vunpack.c.h.b16 %v1897
        %v1954 = vunpack.c.h.b16 %v1898
        %v1955 = vunpack.c.h.b16 %v1899
        %v1956 = vunpack.c.h.b16 %v1900
        %v1957 = vunpack.c.l.b16 %v1901
        %v1958 = vunpack.c.l.b16 %v1902
        %v1959 = vunpack.c.l.b16 %v1903
        %v1960 = vunpack.c.l.b16 %v1904
        %v1961 = vunpack.c.h.b16 %v1901
        %v1962 = vunpack.c.h.b16 %v1902
        %v1963 = vunpack.c.h.b16 %v1903
        %v1964 = vunpack.c.h.b16 %v1904
        %v1965 = vunpack.c.l.b16 %v1905
        %v1966 = vunpack.c.l.b16 %v1906
        %v1967 = vunpack.c.l.b16 %v1907
        %v1968 = vunpack.c.l.b16 %v1908
        %v1969 = vunpack.c.h.b16 %v1905
        %v1970 = vunpack.c.h.b16 %v1906
        %v1971 = vunpack.c.h.b16 %v1907
        %v1972 = vunpack.c.h.b16 %v1908
        %v1973 = vunpack.c.l.b16 %v1909
        %v1974 = vunpack.c.l.b16 %v1910
        %v1975 = vunpack.c.l.b16 %v1911
        %v1976 = vunpack.c.l.b16 %v1912
        %v1977 = vunpack.c.h.b16 %v1909
        %v1978 = vunpack.c.h.b16 %v1910
        %v1979 = vunpack.c.h.b16 %v1911
        %v1980 = vunpack.c.h.b16 %v1912
        %v1981 = vunpack.c.l.b16 %v1913
        %v1982 = vunpack.c.l.b16 %v1914
        %v1983 = vunpack.c.l.b16 %v1915
        %v1984 = vunpack.c.l.b16 %v1916
        %v1985 = vunpack.c.h.b16 %v1913
        %v1986 = vunpack.c.h.b16 %v1914
        %v1987 = vunpack.c.h.b16 %v1915
        %v1988 = vunpack.c.h.b16 %v1916
        %v1989 = vpack.c.b16 %v1942, %v1941
        %v1990 = vpack.c.b16 %v1944, %v1943
        %v1991 = vpack.c.b16 %v1946, %v1945
        %v1992 = vpack.c.b16 %v1948, %v1947
        %v1993 = vpack.c.b16 %v1950, %v1949
        %v1994 = vpack.c.b16 %v1952, %v1951
        %v1995 = vpack.c.b16 %v1954, %v1953
        %v1996 = vpack.c.b16 %v1956, %v1955
        %v1997 = vpack.c.b16 %v1958, %v1957
        %v1998 = vpack.c.b16 %v1960, %v1959
        %v1999 = vpack.c.b16 %v1962, %v1961
        %v2000 = vpack.c.b16 %v1964, %v1963
        %v2001 = vpack.c.b16 %v1966, %v1965
        %v2002 = vpack.c.b16 %v1968, %v1967
        %v2003 = vpack.c.b16 %v1970, %v1969
        %v2004 = vpack.c.b16 %v1972, %v1971
        %v2005 = vpack.c.b16 %v1974, %v1973
        %v2006 = vpack.c.b16 %v1976, %v1975
        %v2007 = vpack.c.b16 %v1978, %v1977
        %v2008 = vpack.c.b16 %v1980, %v1979
        %v2009 = vpack.c.b16 %v1982, %v1981
        %v2010 = vpack.c.b16 %v1984, %v1983
        %v2011 = vpack.c.b16 %v1986, %v1985
        %v2012 = vpack.c.b16 %v1988, %v1987
        %2037 = vst [vmem:[%s270] sm:$0xff] %v1989
        %2038 = vst [vmem:[%s270 + $0x8] sm:$0xff] %v1990
        %2039 = vst [vmem:[%s270 + $0x10] sm:$0xff] %v1991
        %2040 = vst [vmem:[%s270 + $0x18] sm:$0xff] %v1992
        %2041 = vst [vmem:[%s270 + $0x20] sm:$0xff] %v1993
        %2042 = vst [vmem:[%s270 + $0x28] sm:$0xff] %v1994
        %2043 = vst [vmem:[%s270 + $0x30] sm:$0xff] %v1995
        %2044 = vst [vmem:[%s270 + $0x38] sm:$0xff] %v1996
        %2045 = vst [vmem:[%s270 + $0x40] sm:$0xff] %v1997
        %2046 = vst [vmem:[%s270 + $0x48] sm:$0xff] %v1998
        %2047 = vst [vmem:[%s270 + $0x50] sm:$0xff] %v1999
        %2048 = vst [vmem:[%s270 + $0x58] sm:$0xff] %v2000
        %2049 = vst [vmem:[%s270 + $0x60] sm:$0xff] %v2001
        %2050 = vst [vmem:[%s270 + $0x68] sm:$0xff] %v2002
        %2051 = vst [vmem:[%s270 + $0x70] sm:$0xff] %v2003
        %2052 = vst [vmem:[%s270 + $0x78] sm:$0xff] %v2004
        %2053 = vst [vmem:[%s270 + $0x80] sm:$0xff] %v2005
        %2054 = vst [vmem:[%s270 + $0x88] sm:$0xff] %v2006
        %2055 = vst [vmem:[%s270 + $0x90] sm:$0xff] %v2007
        %2056 = vst [vmem:[%s270 + $0x98] sm:$0xff] %v2008
        %2057 = vst [vmem:[%s270 + $0xa0] sm:$0xff] %v2009
        %2058 = vst [vmem:[%s270 + $0xa8] sm:$0xff] %v2010
        %2059 = vst [vmem:[%s270 + $0xb0] sm:$0xff] %v2011
        %2060 = vst [vmem:[%s270 + $0xb8] sm:$0xff] %v2012
      $region40: #{upsample_net2_forward.4} parent=35 // pred_fallthru
        _
      %p2061 = scmp.le.s32.totalorder %s1777, 32
      // Predicated region
      $region41: #{upsample_net2_forward.4} parent=35 // pred_check
        %p2062 = pneg %p2061
      $region42: #{upsample_net2_forward.4} parent=35 // pred_check_branch
        %2064 = sbr.rel (%p2062) target = $region44
      $region43: #{upsample_net2_forward.4} parent=35 // pred_region
        %v2065 = vsel %vm1764, %v1679, 0.0
        %v2066 = vsel %vm1764, %v1680, 0.0
        %v2067 = vsel %vm1765, %v1681, 0.0
        %v2068 = vsel %vm1765, %v1682, 0.0
        %v2069 = vsel %vm1766, %v1683, 0.0
        %v2070 = vsel %vm1766, %v1684, 0.0
        %v2071 = vsel %vm1767, %v1685, 0.0
        %v2072 = vsel %vm1767, %v1686, 0.0
        %v2073 = vsel %vm1768, %v1687, 0.0
        %v2074 = vsel %vm1768, %v1688, 0.0
        %v2075 = vsel %vm1769, %v1689, 0.0
        %v2076 = vsel %vm1769, %v1690, 0.0
        %v2077 = vsel %vm1770, %v1691, 0.0
        %v2078 = vsel %vm1770, %v1692, 0.0
        %v2079 = vsel %vm1771, %v1693, 0.0
        %v2080 = vsel %vm1771, %v1694, 0.0
        %v2081 = vsel %vm1772, %v1695, 0.0
        %v2082 = vsel %vm1772, %v1696, 0.0
        %v2083 = vsel %vm1773, %v1697, 0.0
        %v2084 = vsel %vm1773, %v1698, 0.0
        %v2085 = vsel %vm1774, %v1699, 0.0
        %v2086 = vsel %vm1774, %v1700, 0.0
        %v2087 = vsel %vm1775, %v1701, 0.0
        %v2088 = vsel %vm1775, %v1702, 0.0
        %v2089 = vsel %vm1764, %v1703, 0.0
        %v2090 = vsel %vm1764, %v1704, 0.0
        %v2091 = vsel %vm1765, %v1705, 0.0
        %v2092 = vsel %vm1765, %v1706, 0.0
        %v2093 = vsel %vm1766, %v1707, 0.0
        %v2094 = vsel %vm1766, %v1708, 0.0
        %v2095 = vsel %vm1767, %v1709, 0.0
        %v2096 = vsel %vm1767, %v1710, 0.0
        %v2097 = vsel %vm1768, %v1711, 0.0
        %v2098 = vsel %vm1768, %v1712, 0.0
        %v2099 = vsel %vm1769, %v1713, 0.0
        %v2100 = vsel %vm1769, %v1714, 0.0
        %v2101 = vsel %vm1770, %v1715, 0.0
        %v2102 = vsel %vm1770, %v1716, 0.0
        %v2103 = vsel %vm1771, %v1717, 0.0
        %v2104 = vsel %vm1771, %v1718, 0.0
        %v2105 = vsel %vm1772, %v1719, 0.0
        %v2106 = vsel %vm1772, %v1720, 0.0
        %v2107 = vsel %vm1773, %v1721, 0.0
        %v2108 = vsel %vm1773, %v1722, 0.0
        %v2109 = vsel %vm1774, %v1723, 0.0
        %v2110 = vsel %vm1774, %v1724, 0.0
        %v2111 = vsel %vm1775, %v1725, 0.0
        %v2112 = vsel %vm1775, %v1726, 0.0
        %v2113 = vpack.c.bf16 %v2067, %v2065
        %v2114 = vpack.c.bf16 %v2068, %v2066
        %v2115 = vpack.c.bf16 %v2091, %v2089
        %v2116 = vpack.c.bf16 %v2092, %v2090
        %v2117 = vpack.c.bf16 %v2071, %v2069
        %v2118 = vpack.c.bf16 %v2072, %v2070
        %v2119 = vpack.c.bf16 %v2095, %v2093
        %v2120 = vpack.c.bf16 %v2096, %v2094
        %v2121 = vpack.c.bf16 %v2075, %v2073
        %v2122 = vpack.c.bf16 %v2076, %v2074
        %v2123 = vpack.c.bf16 %v2099, %v2097
        %v2124 = vpack.c.bf16 %v2100, %v2098
        %v2125 = vpack.c.bf16 %v2079, %v2077
        %v2126 = vpack.c.bf16 %v2080, %v2078
        %v2127 = vpack.c.bf16 %v2103, %v2101
        %v2128 = vpack.c.bf16 %v2104, %v2102
        %v2129 = vpack.c.bf16 %v2083, %v2081
        %v2130 = vpack.c.bf16 %v2084, %v2082
        %v2131 = vpack.c.bf16 %v2107, %v2105
        %v2132 = vpack.c.bf16 %v2108, %v2106
        %v2133 = vpack.c.bf16 %v2087, %v2085
        %v2134 = vpack.c.bf16 %v2088, %v2086
        %v2135 = vpack.c.bf16 %v2111, %v2109
        %v2136 = vpack.c.bf16 %v2112, %v2110
        %v2161 = vunpack.c.l.b16 %v2113
        %v2162 = vunpack.c.l.b16 %v2114
        %v2163 = vunpack.c.l.b16 %v2115
        %v2164 = vunpack.c.l.b16 %v2116
        %v2165 = vunpack.c.h.b16 %v2113
        %v2166 = vunpack.c.h.b16 %v2114
        %v2167 = vunpack.c.h.b16 %v2115
        %v2168 = vunpack.c.h.b16 %v2116
        %v2169 = vunpack.c.l.b16 %v2117
        %v2170 = vunpack.c.l.b16 %v2118
        %v2171 = vunpack.c.l.b16 %v2119
        %v2172 = vunpack.c.l.b16 %v2120
        %v2173 = vunpack.c.h.b16 %v2117
        %v2174 = vunpack.c.h.b16 %v2118
        %v2175 = vunpack.c.h.b16 %v2119
        %v2176 = vunpack.c.h.b16 %v2120
        %v2177 = vunpack.c.l.b16 %v2121
        %v2178 = vunpack.c.l.b16 %v2122
        %v2179 = vunpack.c.l.b16 %v2123
        %v2180 = vunpack.c.l.b16 %v2124
        %v2181 = vunpack.c.h.b16 %v2121
        %v2182 = vunpack.c.h.b16 %v2122
        %v2183 = vunpack.c.h.b16 %v2123
        %v2184 = vunpack.c.h.b16 %v2124
        %v2185 = vunpack.c.l.b16 %v2125
        %v2186 = vunpack.c.l.b16 %v2126
        %v2187 = vunpack.c.l.b16 %v2127
        %v2188 = vunpack.c.l.b16 %v2128
        %v2189 = vunpack.c.h.b16 %v2125
        %v2190 = vunpack.c.h.b16 %v2126
        %v2191 = vunpack.c.h.b16 %v2127
        %v2192 = vunpack.c.h.b16 %v2128
        %v2193 = vunpack.c.l.b16 %v2129
        %v2194 = vunpack.c.l.b16 %v2130
        %v2195 = vunpack.c.l.b16 %v2131
        %v2196 = vunpack.c.l.b16 %v2132
        %v2197 = vunpack.c.h.b16 %v2129
        %v2198 = vunpack.c.h.b16 %v2130
        %v2199 = vunpack.c.h.b16 %v2131
        %v2200 = vunpack.c.h.b16 %v2132
        %v2201 = vunpack.c.l.b16 %v2133
        %v2202 = vunpack.c.l.b16 %v2134
        %v2203 = vunpack.c.l.b16 %v2135
        %v2204 = vunpack.c.l.b16 %v2136
        %v2205 = vunpack.c.h.b16 %v2133
        %v2206 = vunpack.c.h.b16 %v2134
        %v2207 = vunpack.c.h.b16 %v2135
        %v2208 = vunpack.c.h.b16 %v2136
        %v2209 = vpack.c.b16 %v2162, %v2161
        %v2210 = vpack.c.b16 %v2164, %v2163
        %v2211 = vpack.c.b16 %v2166, %v2165
        %v2212 = vpack.c.b16 %v2168, %v2167
        %v2213 = vpack.c.b16 %v2170, %v2169
        %v2214 = vpack.c.b16 %v2172, %v2171
        %v2215 = vpack.c.b16 %v2174, %v2173
        %v2216 = vpack.c.b16 %v2176, %v2175
        %v2217 = vpack.c.b16 %v2178, %v2177
        %v2218 = vpack.c.b16 %v2180, %v2179
        %v2219 = vpack.c.b16 %v2182, %v2181
        %v2220 = vpack.c.b16 %v2184, %v2183
        %v2221 = vpack.c.b16 %v2186, %v2185
        %v2222 = vpack.c.b16 %v2188, %v2187
        %v2223 = vpack.c.b16 %v2190, %v2189
        %v2224 = vpack.c.b16 %v2192, %v2191
        %v2225 = vpack.c.b16 %v2194, %v2193
        %v2226 = vpack.c.b16 %v2196, %v2195
        %v2227 = vpack.c.b16 %v2198, %v2197
        %v2228 = vpack.c.b16 %v2200, %v2199
        %v2229 = vpack.c.b16 %v2202, %v2201
        %v2230 = vpack.c.b16 %v2204, %v2203
        %v2231 = vpack.c.b16 %v2206, %v2205
        %v2232 = vpack.c.b16 %v2208, %v2207
        %2257 = vst [vmem:[%s270] sm:$0xff] %v2209
        %2258 = vst [vmem:[%s270 + $0x8] sm:$0xff] %v2210
        %2259 = vst [vmem:[%s270 + $0x10] sm:$0xff] %v2211
        %2260 = vst [vmem:[%s270 + $0x18] sm:$0xff] %v2212
        %2261 = vst [vmem:[%s270 + $0x20] sm:$0xff] %v2213
        %2262 = vst [vmem:[%s270 + $0x28] sm:$0xff] %v2214
        %2263 = vst [vmem:[%s270 + $0x30] sm:$0xff] %v2215
        %2264 = vst [vmem:[%s270 + $0x38] sm:$0xff] %v2216
        %2265 = vst [vmem:[%s270 + $0x40] sm:$0xff] %v2217
        %2266 = vst [vmem:[%s270 + $0x48] sm:$0xff] %v2218
        %2267 = vst [vmem:[%s270 + $0x50] sm:$0xff] %v2219
        %2268 = vst [vmem:[%s270 + $0x58] sm:$0xff] %v2220
        %2269 = vst [vmem:[%s270 + $0x60] sm:$0xff] %v2221
        %2270 = vst [vmem:[%s270 + $0x68] sm:$0xff] %v2222
        %2271 = vst [vmem:[%s270 + $0x70] sm:$0xff] %v2223
        %2272 = vst [vmem:[%s270 + $0x78] sm:$0xff] %v2224
        %2273 = vst [vmem:[%s270 + $0x80] sm:$0xff] %v2225
        %2274 = vst [vmem:[%s270 + $0x88] sm:$0xff] %v2226
        %2275 = vst [vmem:[%s270 + $0x90] sm:$0xff] %v2227
        %2276 = vst [vmem:[%s270 + $0x98] sm:$0xff] %v2228
        %2277 = vst [vmem:[%s270 + $0xa0] sm:$0xff] %v2229
        %2278 = vst [vmem:[%s270 + $0xa8] sm:$0xff] %v2230
        %2279 = vst [vmem:[%s270 + $0xb0] sm:$0xff] %v2231
        %2280 = vst [vmem:[%s270 + $0xb8] sm:$0xff] %v2232
      $region44: #{upsample_net2_forward.4} parent=35 // pred_fallthru
        _
      %s2281 = smul.u32 4, %s21
      %p2282 = scmp.lt.s32.totalorder %s20, 1
      %s2283 = scalar_select %p2282, %s20, 1
      %p2284 = scmp.lt.s32.totalorder %s2281, 3
      %s2285 = scalar_select %p2284, %s2281, 3
      %s2286 = smul.addr %s2283, 48
      %s2287 = sadd.s32 %s2285, %s2286
      %s2288 = smul.addr %s2287, 4
      %s2289 = scalar_lea.vmem %s4, %s2288
      // Predicated region
      $region45: #{upsample_net2_forward.4} parent=35 // pred_check
        %p2290 = pneg %p146
      $region46: #{upsample_net2_forward.4} parent=35 // pred_check_branch
        %2292 = sbr.rel (%p2290) target = $region48
      $region47: #{upsample_net2_forward.4} parent=35 // pred_region
        %s2293 = smul.u32 4, %s21
      $region48: #{upsample_net2_forward.4} parent=35 // pred_fallthru
        _
    $region36: #{upsample_net2_forward.4} parent=5 // pred_fallthru
      _
    %p2294 = scmp.le.s32.totalorder 2, %s11
    // Predicated region
    $region49: #{upsample_net2_forward.4} parent=5 // pred_check
      %p2295 = pneg %p2294
    $region50: #{upsample_net2_forward.4} parent=5 // pred_check_branch
      %2297 = sbr.rel (%p2295) target = $region52
    $region51: #{upsample_net2_forward.4} parent=5 // pred_region
      %s2298 = ssub.s32 %s11, 2
      // Predicated region
      $region53: #{upsample_net2_forward.4} parent=51 // pred_check
        %p2299 = pneg %p152
      $region54: #{upsample_net2_forward.4} parent=51 // pred_check_branch
        %2301 = sbr.rel (%p2299) target = $region56
      $region55: #{upsample_net2_forward.4} parent=51 // pred_region
        %s2302 = smul.u32 4, %s23
        %p2303 = scmp.lt.s32.totalorder %s22, 1
        %s2304 = scalar_select %p2303, %s22, 1
        %p2305 = scmp.lt.s32.totalorder %s2302, 3
        %s2306 = scalar_select %p2305, %s2302, 3
        %s2307 = smul.addr %s2304, 48
        %s2308 = sadd.s32 %s2306, %s2307
        %s2309 = smul.addr %s2308, 4
        %s2310 = scalar_lea.vmem %s4, %s2309
      $region56: #{upsample_net2_forward.4} parent=51 // pred_fallthru
        _
    $region52: #{upsample_net2_forward.4} parent=5 // pred_fallthru
      _
  $region6: #{upsample_net2_forward.4} parent=0 // loop_footer
    %s15 = sadd.s32 1, %s11
  $region7: #{upsample_net2_forward.4} parent=0 // loop_footer_branch
    %10 = sbr.rel target = $region3
  $region8: #{upsample_net2_forward.4} parent=0 // loop_exit
    _

// kernel: upsample_net2_forward.5
$region0: #{upsample_net2_forward.5}
  #allocation0 [shape = 'u32[]', space=smem, size = 0x4, offset = 0x4, fixed_abs, tag = 'smem constant byte address 0x4 - core index']
  #allocation1 [shape = 'u32[144,128]{1,0:T(1,128)}', space=vmem, size = 0x12000, scoped, tag = 'internal scratch']
  #allocation2 [shape = 'f32[1]{0:T(128)S(6)}', space=smem, size = 0x200, scoped, tag = 'scoped memory for upsample_net2_forward.5']
  %s0 = inlined_call_operand.vmem [shape: bf16[2,96,512], index: 0, kind: input, shape index: {}]
  %s1 = inlined_call_operand.vmem [shape: bf16[2,2,96,2], index: 1, kind: input, shape index: {}]
  %s2 = inlined_call_operand.vmem [shape: bf16[390,256], index: 2, kind: input, shape index: {}]
  %s3 = inlined_call_operand.<no memory space> [shape: f32[1], index: 3, kind: input, shape index: {}]
  %s4 = inlined_call_operand.vmem [shape: bf16[2,96,1024], index: 4, kind: output, shape index: {}]
  %s5 = sld [smem:[#allocation0]]
  $region114: #{upsample_net2_forward.5} parent=0
    _
  %s7 = ssub.s32 1, %s5
  %s8 = scalar_select 0, %s7, %s5
  %9 = sst [smem:[#allocation2]] %s3
  $region1: #{upsample_net2_forward.5} parent=0
    #allocation3 [shape = 'u8[98304]{0}', space=vmem, size = 0x18000, scoped, tag = 'input window, operand 0']
    #allocation4 [shape = 'u8[196608]{0}', space=vmem, size = 0x30000, scoped, tag = 'output window, operand 0']
    loop: start=0, step=1, limit=6
    $region2: #{upsample_net2_forward.5} parent=1 // loop_pre_header
      _
    $region3: #{upsample_net2_forward.5} parent=1 // loop_header
      %s11 = sphi 0, %s15
      %p12 = scmp.ge.s32.totalorder %s11, 6
      %s18 = sphi 0, %s30
      %s19 = sphi 0, %s26
      %s20 = sphi 0, %s18
      %s21 = sphi 0, %s19
      %s22 = sphi 0, %s20
      %s23 = sphi 0, %s21
      %s35 = sphi 0, %s37
      %s38 = sphi 0, %s35
      %s39 = sphi 0, %s38
      %s55 = sphi 0, %s39
      %s63 = sphi 0, %s65
      %s66 = sphi 0, %s63
      %s67 = sphi 0, %s66
      %s83 = sphi 0, %s67
      %s87 = sphi 0, %s87
      %s89 = sphi 0, %s87
      %s90 = sphi 0, %s89
      %s104 = sphi 0, %s90
      %s108 = sphi 0, %s108
      %s110 = sphi 0, %s108
      %s111 = sphi 0, %s110
      %s125 = sphi 0, %s111
      %s133 = sphi 0, %s135
      %s136 = sphi 0, %s133
      %s137 = sphi 0, %s136
      %s153 = sphi 0, %s137
    $region4: #{upsample_net2_forward.5} parent=1 // loop_header_branch
      %14 = sbr.rel (%p12) target = $region8
    $region5: #{upsample_net2_forward.5} parent=1 // loop_body
      %s16 = ssub.s32 %s11, 1
      %s17 = ssub.s32 %s11, 2
      %s24 = sadd.s32 1, %s19
      %p25 = scmp.ge.s32.totalorder %s24, 2
      %s26 = scalar_select %p25, 0, %s24
      %s27 = sadd.s32 1, %s18
      %s28 = scalar_select %p25, %s27, %s18
      %p29 = scmp.ge.s32.totalorder %s28, 2
      %s30 = scalar_select %p29, 0, %s28
      %s31 = ssub.s32 %s18, %s30
      %s32 = ssub.s32 %s19, %s26
      %s33 = sor.u32 %s31, %s32
      %p34 = scmp.eq.s32.totalorder %s33, 0
      %s36 = sadd.s32 %s35, 1
      %s37 = scalar_select %p34, %s35, %s36
      %p40 = pneg %p34
      %p41 = scmp.eq.s32.totalorder %s11, 3
      %p42 = por %p40, %p41
      %p43 = scmp.ne.s32.totalorder %s35, %s38
      %p44 = scmp.eq.s32.totalorder %s11, 0
      %p45 = por %p43, %p44
      %p46 = scmp.ne.s32.totalorder %s35, %s38
      %p47 = scmp.eq.s32.totalorder %s16, 3
      %p48 = por %p46, %p47
      %p49 = scmp.ne.s32.totalorder %s38, %s39
      %p50 = scmp.eq.s32.totalorder %s16, 0
      %p51 = por %p49, %p50
      %p52 = scmp.ne.s32.totalorder %s38, %s39
      %p53 = scmp.eq.s32.totalorder %s17, 3
      %p54 = por %p52, %p53
      %p56 = scmp.ne.s32.totalorder %s39, %s55
      %p57 = scmp.eq.s32.totalorder %s17, 0
      %p58 = por %p56, %p57
      %s59 = ssub.s32 %s18, %s30
      %s60 = ssub.s32 %s19, %s26
      %s61 = sor.u32 %s59, %s60
      %p62 = scmp.eq.s32.totalorder %s61, 0
      %s64 = sadd.s32 %s63, 1
      %s65 = scalar_select %p62, %s63, %s64
      %p68 = pneg %p62
      %p69 = scmp.eq.s32.totalorder %s11, 3
      %p70 = por %p68, %p69
      %p71 = scmp.ne.s32.totalorder %s63, %s66
      %p72 = scmp.eq.s32.totalorder %s11, 0
      %p73 = por %p71, %p72
      %p74 = scmp.ne.s32.totalorder %s63, %s66
      %p75 = scmp.eq.s32.totalorder %s16, 3
      %p76 = por %p74, %p75
      %p77 = scmp.ne.s32.totalorder %s66, %s67
      %p78 = scmp.eq.s32.totalorder %s16, 0
      %p79 = por %p77, %p78
      %p80 = scmp.ne.s32.totalorder %s66, %s67
      %p81 = scmp.eq.s32.totalorder %s17, 3
      %p82 = por %p80, %p81
      %p84 = scmp.ne.s32.totalorder %s67, %s83
      %p85 = scmp.eq.s32.totalorder %s17, 0
      %p86 = por %p84, %p85
      %s88 = sadd.s32 %s87, 1
      %p91 = scmp.eq.s32.totalorder %s11, 3
      %p92 = scmp.ne.s32.totalorder %s87, %s89
      %p93 = scmp.eq.s32.totalorder %s11, 0
      %p94 = por %p92, %p93
      %p95 = scmp.ne.s32.totalorder %s87, %s89
      %p96 = scmp.eq.s32.totalorder %s16, 3
      %p97 = por %p95, %p96
      %p98 = scmp.ne.s32.totalorder %s89, %s90
      %p99 = scmp.eq.s32.totalorder %s16, 0
      %p100 = por %p98, %p99
      %p101 = scmp.ne.s32.totalorder %s89, %s90
      %p102 = scmp.eq.s32.totalorder %s17, 3
      %p103 = por %p101, %p102
      %p105 = scmp.ne.s32.totalorder %s90, %s104
      %p106 = scmp.eq.s32.totalorder %s17, 0
      %p107 = por %p105, %p106
      %s109 = sadd.s32 %s108, 1
      %p112 = scmp.eq.s32.totalorder %s11, 3
      %p113 = scmp.ne.s32.totalorder %s108, %s110
      %p114 = scmp.eq.s32.totalorder %s11, 0
      %p115 = por %p113, %p114
      %p116 = scmp.ne.s32.totalorder %s108, %s110
      %p117 = scmp.eq.s32.totalorder %s16, 3
      %p118 = por %p116, %p117
      %p119 = scmp.ne.s32.totalorder %s110, %s111
      %p120 = scmp.eq.s32.totalorder %s16, 0
      %p121 = por %p119, %p120
      %p122 = scmp.ne.s32.totalorder %s110, %s111
      %p123 = scmp.eq.s32.totalorder %s17, 3
      %p124 = por %p122, %p123
      %p126 = scmp.ne.s32.totalorder %s111, %s125
      %p127 = scmp.eq.s32.totalorder %s17, 0
      %p128 = por %p126, %p127
      %s129 = ssub.s32 %s18, %s30
      %s130 = ssub.s32 %s19, %s26
      %s131 = sor.u32 %s129, %s130
      %p132 = scmp.eq.s32.totalorder %s131, 0
      %s134 = sadd.s32 %s133, 1
      %s135 = scalar_select %p132, %s133, %s134
      %p138 = pneg %p132
      %p139 = scmp.eq.s32.totalorder %s11, 3
      %p140 = por %p138, %p139
      %p141 = scmp.ne.s32.totalorder %s133, %s136
      %p142 = scmp.eq.s32.totalorder %s11, 0
      %p143 = por %p141, %p142
      %p144 = scmp.ne.s32.totalorder %s133, %s136
      %p145 = scmp.eq.s32.totalorder %s16, 3
      %p146 = por %p144, %p145
      %p147 = scmp.ne.s32.totalorder %s136, %s137
      %p148 = scmp.eq.s32.totalorder %s16, 0
      %p149 = por %p147, %p148
      %p150 = scmp.ne.s32.totalorder %s136, %s137
      %p151 = scmp.eq.s32.totalorder %s17, 3
      %p152 = por %p150, %p151
      %p154 = scmp.ne.s32.totalorder %s137, %s153
      %p155 = scmp.eq.s32.totalorder %s17, 0
      %p156 = por %p154, %p155
      %p157 = scmp.le.s32.totalorder 1, %s11
      %p158 = scmp.lt.s32.totalorder %s11, 5
      %p159 = pnand %p157, %p158
      %p160 = pneg %p159
      // Predicated region
      $region9: #{upsample_net2_forward.5} parent=5 // pred_check
        _
      $region10: #{upsample_net2_forward.5} parent=5 // pred_check_branch
        %162 = sbr.rel (%p159) target = $region12
      $region11: #{upsample_net2_forward.5} parent=5 // pred_region
        %s163 = ssub.s32 %s11, 1
        // Predicated region
        $region13: #{upsample_net2_forward.5} parent=11 // pred_check
          %p164 = pneg %p100
        $region14: #{upsample_net2_forward.5} parent=11 // pred_check_branch
          %166 = sbr.rel (%p164) target = $region16
        $region15: #{upsample_net2_forward.5} parent=11 // pred_region
          _
        $region16: #{upsample_net2_forward.5} parent=11 // pred_fallthru
          _
        // Predicated region
        $region17: #{upsample_net2_forward.5} parent=11 // pred_check
          %p167 = pneg %p121
        $region18: #{upsample_net2_forward.5} parent=11 // pred_check_branch
          %169 = sbr.rel (%p167) target = $region20
        $region19: #{upsample_net2_forward.5} parent=11 // pred_region
          _
        $region20: #{upsample_net2_forward.5} parent=11 // pred_fallthru
          _
      $region12: #{upsample_net2_forward.5} parent=5 // pred_fallthru
        _
      %p170 = scmp.lt.s32.totalorder %s11, 4
      // Predicated region
      $region21: #{upsample_net2_forward.5} parent=5 // pred_check
        %p171 = pneg %p170
      $region22: #{upsample_net2_forward.5} parent=5 // pred_check_branch
        %173 = sbr.rel (%p171) target = $region24
      $region23: #{upsample_net2_forward.5} parent=5 // pred_region
        // Predicated region
        $region25: #{upsample_net2_forward.5} parent=23 // pred_check
          %p174 = pneg %p45
        $region26: #{upsample_net2_forward.5} parent=23 // pred_check_branch
          %176 = sbr.rel (%p174) target = $region28
        $region27: #{upsample_net2_forward.5} parent=23 // pred_region
          %s177 = sand.u32 %s35, 1
          %s178 = sand.u32 %s35, 1
          %s179 = smul.addr %s178, 96
          %s180 = scalar_lea.vmem [#allocation3], %s179
          %s181 = smul.u32 2, %s19
          %s182 = smul.addr %s18, 48
          %s183 = sadd.s32 %s181, %s182
          %s184 = smul.addr %s183, 4
          %s185 = scalar_lea.vmem %s0, %s184
          // Predicated region
          $region29: #{upsample_net2_forward.5} parent=27 // pred_check
            _
          $region30: #{upsample_net2_forward.5} parent=27 // pred_check_branch
            %187 = sbr.rel (0) target = $region32
          $region31: #{upsample_net2_forward.5} parent=27 // pred_region
            // Predicated region
            $region33: #{upsample_net2_forward.5} parent=31 // pred_check
              _
            $region34: #{upsample_net2_forward.5} parent=31 // pred_check_branch
              %189 = sbr.rel (0) target = $region36
            $region35: #{upsample_net2_forward.5} parent=31 // pred_region
              // Predicated region
              $region48: #{upsample_net2_forward.5} parent=35 // pred_check
                _
              $region49: #{upsample_net2_forward.5} parent=35 // pred_check_branch
                %226 = sbr.rel (0) target = $region51
              $region50: #{upsample_net2_forward.5} parent=35 // pred_region
                loop: start=0, step=1, limit=1
                $region52: #{upsample_net2_forward.5} parent=50 // loop_pre_header
                  _
                $region53: #{upsample_net2_forward.5} parent=50 // loop_header
                  %s228 = sphi 0, %s232
                  %p229 = scmp.ge.s32.totalorder %s228, 1
                  %s233 = sphi %s185, %s185
                  %s234 = sphi %s180, %s180
                $region54: #{upsample_net2_forward.5} parent=50 // loop_header_branch
                  %231 = sbr.rel (%p229) target = $region58
                $region55: #{upsample_net2_forward.5} parent=50 // loop_body
                  %v235 = vld [vmem:[%s233] sm:$0xff]
                  %236 = vst [vmem:[%s234] sm:$0xff] %v235
                  %v237 = vld [vmem:[%s233 + $0x10] sm:$0xff]
                  %238 = vst [vmem:[%s234 + $0x8] sm:$0xff] %v237
                  %v239 = vld [vmem:[%s233 + $0x20] sm:$0xff]
                  %240 = vst [vmem:[%s234 + $0x10] sm:$0xff] %v239
                  %v241 = vld [vmem:[%s233 + $0x30] sm:$0xff]
                  %242 = vst [vmem:[%s234 + $0x18] sm:$0xff] %v241
                  %v243 = vld [vmem:[%s233 + $0x40] sm:$0xff]
                  %244 = vst [vmem:[%s234 + $0x20] sm:$0xff] %v243
                  %v245 = vld [vmem:[%s233 + $0x50] sm:$0xff]
                  %246 = vst [vmem:[%s234 + $0x28] sm:$0xff] %v245
                  %v247 = vld [vmem:[%s233 + $0x60] sm:$0xff]
                  %248 = vst [vmem:[%s234 + $0x30] sm:$0xff] %v247
                  %v249 = vld [vmem:[%s233 + $0x70] sm:$0xff]
                  %250 = vst [vmem:[%s234 + $0x38] sm:$0xff] %v249
                  %v251 = vld [vmem:[%s233 + $0x80] sm:$0xff]
                  %252 = vst [vmem:[%s234 + $0x40] sm:$0xff] %v251
                  %v253 = vld [vmem:[%s233 + $0x90] sm:$0xff]
                  %254 = vst [vmem:[%s234 + $0x48] sm:$0xff] %v253
                  %v255 = vld [vmem:[%s233 + $0xa0] sm:$0xff]
                  %256 = vst [vmem:[%s234 + $0x50] sm:$0xff] %v255
                  %v257 = vld [vmem:[%s233 + $0xb0] sm:$0xff]
                  %258 = vst [vmem:[%s234 + $0x58] sm:$0xff] %v257
                $region56: #{upsample_net2_forward.5} parent=50 // loop_footer
                  %s232 = sadd.s32 1, %s228
                $region57: #{upsample_net2_forward.5} parent=50 // loop_footer_branch
                  %227 = sbr.rel target = $region53
                $region58: #{upsample_net2_forward.5} parent=50 // loop_exit
                  _
              $region51: #{upsample_net2_forward.5} parent=35 // pred_fallthru
                _
              // Predicated region
              $region59: #{upsample_net2_forward.5} parent=35 // pred_check
                _
              $region60: #{upsample_net2_forward.5} parent=35 // pred_check_branch
                %260 = sbr.rel target = $region62
              $region61: #{upsample_net2_forward.5} parent=35 // pred_region
                _
              $region62: #{upsample_net2_forward.5} parent=35 // pred_fallthru
                _
            $region36: #{upsample_net2_forward.5} parent=31 // pred_fallthru
              _
            // Predicated region
            $region37: #{upsample_net2_forward.5} parent=31 // pred_check
              _
            $region38: #{upsample_net2_forward.5} parent=31 // pred_check_branch
              %191 = sbr.rel target = $region40
            $region39: #{upsample_net2_forward.5} parent=31 // pred_region
              loop: start=0, step=1, limit=1
              $region41: #{upsample_net2_forward.5} parent=39 // loop_pre_header
                _
              $region42: #{upsample_net2_forward.5} parent=39 // loop_header
                %s194 = sphi 0, %s198
                %p195 = scmp.ge.s32.totalorder %s194, 1
                %s199 = sphi %s185, %s185
                %s200 = sphi %s180, %s180
              $region43: #{upsample_net2_forward.5} parent=39 // loop_header_branch
                %197 = sbr.rel (%p195) target = $region47
              $region44: #{upsample_net2_forward.5} parent=39 // loop_body
                %v201 = vld [vmem:[%s199] sm:$0xff]
                %202 = vst [vmem:[%s200] sm:$0xff] %v201
                %v203 = vld [vmem:[%s199 + $0x10] sm:$0xff]
                %204 = vst [vmem:[%s200 + $0x8] sm:$0xff] %v203
                %v205 = vld [vmem:[%s199 + $0x20] sm:$0xff]
                %206 = vst [vmem:[%s200 + $0x10] sm:$0xff] %v205
                %v207 = vld [vmem:[%s199 + $0x30] sm:$0xff]
                %208 = vst [vmem:[%s200 + $0x18] sm:$0xff] %v207
                %v209 = vld [vmem:[%s199 + $0x40] sm:$0xff]
                %210 = vst [vmem:[%s200 + $0x20] sm:$0xff] %v209
                %v211 = vld [vmem:[%s199 + $0x50] sm:$0xff]
                %212 = vst [vmem:[%s200 + $0x28] sm:$0xff] %v211
                %v213 = vld [vmem:[%s199 + $0x60] sm:$0xff]
                %214 = vst [vmem:[%s200 + $0x30] sm:$0xff] %v213
                %v215 = vld [vmem:[%s199 + $0x70] sm:$0xff]
                %216 = vst [vmem:[%s200 + $0x38] sm:$0xff] %v215
                %v217 = vld [vmem:[%s199 + $0x80] sm:$0xff]
                %218 = vst [vmem:[%s200 + $0x40] sm:$0xff] %v217
                %v219 = vld [vmem:[%s199 + $0x90] sm:$0xff]
                %220 = vst [vmem:[%s200 + $0x48] sm:$0xff] %v219
                %v221 = vld [vmem:[%s199 + $0xa0] sm:$0xff]
                %222 = vst [vmem:[%s200 + $0x50] sm:$0xff] %v221
                %v223 = vld [vmem:[%s199 + $0xb0] sm:$0xff]
                %224 = vst [vmem:[%s200 + $0x58] sm:$0xff] %v223
              $region45: #{upsample_net2_forward.5} parent=39 // loop_footer
                %s198 = sadd.s32 1, %s194
              $region46: #{upsample_net2_forward.5} parent=39 // loop_footer_branch
                %193 = sbr.rel target = $region42
              $region47: #{upsample_net2_forward.5} parent=39 // loop_exit
                _
            $region40: #{upsample_net2_forward.5} parent=31 // pred_fallthru
              _
          $region32: #{upsample_net2_forward.5} parent=27 // pred_fallthru
            _
          %261 = vnop
        $region28: #{upsample_net2_forward.5} parent=23 // pred_fallthru
          _
        // Predicated region
        $region63: #{upsample_net2_forward.5} parent=23 // pred_check
          %p262 = pneg %p73
        $region64: #{upsample_net2_forward.5} parent=23 // pred_check_branch
          %264 = sbr.rel (%p262) target = $region66
        $region65: #{upsample_net2_forward.5} parent=23 // pred_region
          %p265 = scmp.lt.s32.totalorder %s18, 1
          %s266 = scalar_select %p265, %s18, 1
          %p267 = scmp.lt.s32.totalorder %s19, 1
          %s268 = scalar_select %p267, %s19, 1
          %s269 = smul.addr %s268, 12
          %s270 = smul.addr %s266, 24
          %s271 = sadd.s32 %s269, %s270
          %s272 = smul.addr %s271, 4
          %s273 = scalar_lea.vmem %s1, %s272
        $region66: #{upsample_net2_forward.5} parent=23 // pred_fallthru
          _
      $region24: #{upsample_net2_forward.5} parent=5 // pred_fallthru
        _
      %p274 = scmp.le.s32.totalorder 1, %s11
      %p275 = scmp.lt.s32.totalorder %s11, 5
      %p276 = pnand %p274, %p275
      %p277 = pneg %p276
      // Predicated region
      $region67: #{upsample_net2_forward.5} parent=5 // pred_check
        _
      $region68: #{upsample_net2_forward.5} parent=5 // pred_check_branch
        %279 = sbr.rel (%p276) target = $region70
      $region69: #{upsample_net2_forward.5} parent=5 // pred_region
        %s280 = ssub.s32 %s11, 1
        %s281 = sand.u32 %s38, 1
        %s282 = sand.u32 %s38, 1
        %s283 = smul.addr %s282, 96
        %s284 = scalar_lea.vmem [#allocation3], %s283
        // Predicated region
        $region71: #{upsample_net2_forward.5} parent=69 // pred_check
          %p285 = pneg %p51
        $region72: #{upsample_net2_forward.5} parent=69 // pred_check_branch
          %287 = sbr.rel (%p285) target = $region74
        $region73: #{upsample_net2_forward.5} parent=69 // pred_region
          _
        $region74: #{upsample_net2_forward.5} parent=69 // pred_fallthru
          _
        %s288 = sand.u32 %s38, 1
        %s289 = sand.u32 %s38, 1
        %s290 = smul.addr %s289, 96
        %s291 = scalar_lea.vmem [#allocation3], %s290
        %p292 = pneg %p51
        %p293 = pneg %p48
        %p294 = scmp.lt.s32.totalorder %s20, 1
        %s295 = scalar_select %p294, %s20, 1
        %p296 = scmp.lt.s32.totalorder %s21, 1
        %s297 = scalar_select %p296, %s21, 1
        %s298 = smul.addr %s297, 12
        %s299 = smul.addr %s295, 24
        %s300 = sadd.s32 %s298, %s299
        %s301 = smul.addr %s300, 4
        %s302 = scalar_lea.vmem %s1, %s301
        %p303 = pneg %p79
        %p304 = pneg %p76
        %p305 = pneg %p100
        %p306 = pneg %p97
        %p307 = pneg %p121
        %p308 = pneg %p118
        %p309 = pneg %p149
        %p310 = pneg %p146
        %s311 = sand.u32 %s136, 1
        %s312 = sand.u32 %s136, 1
        %s313 = smul.addr %s312, 192
        %s314 = scalar_lea.vmem [#allocation4], %s313
        %s315 = smul.u32 2, %s21
        %p316 = scmp.lt.s32.totalorder %s20, 1
        %s317 = scalar_select %p316, %s20, 1
        %p318 = scmp.lt.s32.totalorder %s21, 1
        %s319 = scalar_select %p318, %s21, 1
        %s320 = smul.addr %s319, 12
        %s321 = smul.addr %s317, 24
        %s322 = sadd.s32 %s320, %s321
        %s323 = smul.addr %s322, 4
        %s324 = scalar_lea.vmem %s1, %s323
        %s325 = smul.u32 4, %s21
        %v327 = vld [vmem:[%s284] sm:$0xff]
        %v328 = vld [vmem:[%s284 + $0x8] sm:$0xff]
        %v329 = vld [vmem:[%s284 + $0x10] sm:$0xff]
        %v330 = vld [vmem:[%s284 + $0x18] sm:$0xff]
        %v331 = vld [vmem:[%s284 + $0x20] sm:$0xff]
        %v332 = vld [vmem:[%s284 + $0x28] sm:$0xff]
        %v333 = vld [vmem:[%s284 + $0x30] sm:$0xff]
        %v334 = vld [vmem:[%s284 + $0x38] sm:$0xff]
        %v335 = vld [vmem:[%s284 + $0x40] sm:$0xff]
        %v336 = vld [vmem:[%s284 + $0x48] sm:$0xff]
        %v337 = vld [vmem:[%s284 + $0x50] sm:$0xff]
        %v338 = vld [vmem:[%s284 + $0x58] sm:$0xff]
        %v339 = vld [vmem:[%s324] sm:$0xf]
        %v340 = vld [vmem:[%s324 + $0x4] sm:$0xf]
        %v341 = vld [vmem:[%s324 + $0x8] sm:$0xf]
        %v342 = vld [vmem:[%s324 + $0xc] sm:$0xf]
        %v343 = vld [vmem:[%s324 + $0x10] sm:$0xf]
        %v344 = vld [vmem:[%s324 + $0x14] sm:$0xf]
        %v345 = vld [vmem:[%s324 + $0x18] sm:$0xf]
        %v346 = vld [vmem:[%s324 + $0x1c] sm:$0xf]
        %v347 = vld [vmem:[%s324 + $0x20] sm:$0xf]
        %v348 = vld [vmem:[%s324 + $0x24] sm:$0xf]
        %v349 = vld [vmem:[%s324 + $0x28] sm:$0xf]
        %v350 = vld [vmem:[%s324 + $0x2c] sm:$0xf]
        %v363 = vunpack.c.l.b16 %v327
        %v364 = vunpack.c.l.b16 %v328
        %v365 = vunpack.c.l.b16 %v329
        %v366 = vunpack.c.l.b16 %v330
        %v367 = vunpack.c.l.b16 %v331
        %v368 = vunpack.c.l.b16 %v332
        %v369 = vunpack.c.l.b16 %v333
        %v370 = vunpack.c.l.b16 %v334
        %v371 = vunpack.c.l.b16 %v335
        %v372 = vunpack.c.l.b16 %v336
        %v373 = vunpack.c.l.b16 %v337
        %v374 = vunpack.c.l.b16 %v338
        %v375 = vpack.c.b16 %v364, %v363
        %v376 = vpack.c.b16 %v366, %v365
        %v377 = vpack.c.b16 %v368, %v367
        %v378 = vpack.c.b16 %v370, %v369
        %v379 = vpack.c.b16 %v372, %v371
        %v380 = vpack.c.b16 %v374, %v373
        %v393 = vunpack.c.l.b16 %v339
        %v394 = vunpack.c.l.b16 %v340
        %v395 = vunpack.c.l.b16 %v341
        %v396 = vunpack.c.l.b16 %v342
        %v397 = vunpack.c.l.b16 %v343
        %v398 = vunpack.c.l.b16 %v344
        %v399 = vunpack.c.l.b16 %v345
        %v400 = vunpack.c.l.b16 %v346
        %v401 = vunpack.c.l.b16 %v347
        %v402 = vunpack.c.l.b16 %v348
        %v403 = vunpack.c.l.b16 %v349
        %v404 = vunpack.c.l.b16 %v350
        %v405 = vpack.c.b16 %v394, %v393
        %v406 = vpack.c.b16 %v396, %v395
        %v407 = vpack.c.b16 %v398, %v397
        %v408 = vpack.c.b16 %v400, %v399
        %v409 = vpack.c.b16 %v402, %v401
        %v410 = vpack.c.b16 %v404, %v403
        %v411 = vunpack.c.h.b16 %v327
        %v412 = vunpack.c.h.b16 %v328
        %v413 = vunpack.c.h.b16 %v329
        %v414 = vunpack.c.h.b16 %v330
        %v415 = vunpack.c.h.b16 %v331
        %v416 = vunpack.c.h.b16 %v332
        %v417 = vunpack.c.h.b16 %v333
        %v418 = vunpack.c.h.b16 %v334
        %v419 = vunpack.c.h.b16 %v335
        %v420 = vunpack.c.h.b16 %v336
        %v421 = vunpack.c.h.b16 %v337
        %v422 = vunpack.c.h.b16 %v338
        %v423 = vpack.c.b16 %v412, %v411
        %v424 = vpack.c.b16 %v414, %v413
        %v425 = vpack.c.b16 %v416, %v415
        %v426 = vpack.c.b16 %v418, %v417
        %v427 = vpack.c.b16 %v420, %v419
        %v428 = vpack.c.b16 %v422, %v421
        %429 = vrot.lane.b32.xlu0 %v423, 1
        %v430 = vpop.permute.xlu0 %429
        %431 = vrot.lane.b32.xlu0 %v424, 1
        %v432 = vpop.permute.xlu0 %431
        %433 = vrot.lane.b32.xlu0 %v425, 1
        %v434 = vpop.permute.xlu0 %433
        %435 = vrot.lane.b32.xlu0 %v426, 1
        %v436 = vpop.permute.xlu0 %435
        %437 = vrot.lane.b32.xlu0 %v427, 1
        %v438 = vpop.permute.xlu0 %437
        %439 = vrot.lane.b32.xlu0 %v428, 1
        %v440 = vpop.permute.xlu0 %439
        %vm441 = vcmask 7168
        %v444 = vsel %vm441, %v405, %v430
        %v447 = vsel %vm441, %v406, %v432
        %v450 = vsel %vm441, %v407, %v434
        %v453 = vsel %vm441, %v408, %v436
        %v456 = vsel %vm441, %v409, %v438
        %v459 = vsel %vm441, %v410, %v440
        %460 = vrot.lane.b32.xlu0 %v375, 1
        %v461 = vpop.permute.xlu0 %460
        %462 = vrot.lane.b32.xlu0 %v376, 1
        %v463 = vpop.permute.xlu0 %462
        %464 = vrot.lane.b32.xlu0 %v377, 1
        %v465 = vpop.permute.xlu0 %464
        %466 = vrot.lane.b32.xlu0 %v378, 1
        %v467 = vpop.permute.xlu0 %466
        %468 = vrot.lane.b32.xlu0 %v379, 1
        %v469 = vpop.permute.xlu0 %468
        %470 = vrot.lane.b32.xlu0 %v380, 1
        %v471 = vpop.permute.xlu0 %470
        %v473 = vsel %vm441, %v461, %v405
        %v475 = vsel %vm441, %v463, %v406
        %v477 = vsel %vm441, %v465, %v407
        %v479 = vsel %vm441, %v467, %v408
        %v481 = vsel %vm441, %v469, %v409
        %v483 = vsel %vm441, %v471, %v410
        %vm484 = vsmask.f32 7424
        %v486 = vshrl.u32 %v375, 16
        %v488 = vshll.u32 %v375, 16
        %v490 = vrot.slane %v488, 1
        %v491 = vor.u32 %v486, %v490
        %v493 = vshll.u32 %v376, 16
        %v495 = vrot.slane %v493, 1
        %v496 = vsel %vm484, %v491, %v495
        %v497 = vshrl.u32 %v444, 16
        %v499 = vshll.u32 %v444, 16
        %v501 = vrot.slane %v499, 1
        %v502 = vor.u32 %v497, %v501
        %v503 = vshll.u32 %v447, 16
        %v505 = vrot.slane %v503, 1
        %v506 = vsel %vm484, %v502, %v505
        %v507 = vshrl.u32 %v376, 16
        %v509 = vor.u32 %v507, %v495
        %v511 = vshll.u32 %v377, 16
        %v513 = vrot.slane %v511, 1
        %v514 = vsel %vm484, %v509, %v513
        %v515 = vshrl.u32 %v447, 16
        %v517 = vor.u32 %v515, %v505
        %v518 = vshll.u32 %v450, 16
        %v520 = vrot.slane %v518, 1
        %v521 = vsel %vm484, %v517, %v520
        %v522 = vshrl.u32 %v377, 16
        %v524 = vor.u32 %v522, %v513
        %v526 = vshll.u32 %v378, 16
        %v528 = vrot.slane %v526, 1
        %v529 = vsel %vm484, %v524, %v528
        %v530 = vshrl.u32 %v450, 16
        %v532 = vor.u32 %v530, %v520
        %v533 = vshll.u32 %v453, 16
        %v535 = vrot.slane %v533, 1
        %v536 = vsel %vm484, %v532, %v535
        %v537 = vshrl.u32 %v378, 16
        %v539 = vor.u32 %v537, %v528
        %v541 = vshll.u32 %v379, 16
        %v543 = vrot.slane %v541, 1
        %v544 = vsel %vm484, %v539, %v543
        %v545 = vshrl.u32 %v453, 16
        %v547 = vor.u32 %v545, %v535
        %v548 = vshll.u32 %v456, 16
        %v550 = vrot.slane %v548, 1
        %v551 = vsel %vm484, %v547, %v550
        %v552 = vshrl.u32 %v379, 16
        %v554 = vor.u32 %v552, %v543
        %v556 = vshll.u32 %v380, 16
        %v558 = vrot.slane %v556, 1
        %v559 = vsel %vm484, %v554, %v558
        %v560 = vshrl.u32 %v456, 16
        %v562 = vor.u32 %v560, %v550
        %v563 = vshll.u32 %v459, 16
        %v565 = vrot.slane %v563, 1
        %v566 = vsel %vm484, %v562, %v565
        %v567 = vshrl.u32 %v380, 16
        %v569 = vor.u32 %v567, %v558
        %v571 = vshll.u32 %v423, 16
        %v573 = vrot.slane %v571, 1
        %v574 = vsel %vm484, %v569, %v573
        %v575 = vshrl.u32 %v459, 16
        %v577 = vor.u32 %v575, %v565
        %v578 = vshll.u32 %v473, 16
        %v580 = vrot.slane %v578, 1
        %v581 = vsel %vm484, %v577, %v580
        %v582 = vshrl.u32 %v423, 16
        %v584 = vor.u32 %v582, %v573
        %v586 = vshll.u32 %v424, 16
        %v588 = vrot.slane %v586, 1
        %v589 = vsel %vm484, %v584, %v588
        %v590 = vshrl.u32 %v473, 16
        %v592 = vor.u32 %v590, %v580
        %v593 = vshll.u32 %v475, 16
        %v595 = vrot.slane %v593, 1
        %v596 = vsel %vm484, %v592, %v595
        %v597 = vshrl.u32 %v424, 16
        %v599 = vor.u32 %v597, %v588
        %v601 = vshll.u32 %v425, 16
        %v603 = vrot.slane %v601, 1
        %v604 = vsel %vm484, %v599, %v603
        %v605 = vshrl.u32 %v475, 16
        %v607 = vor.u32 %v605, %v595
        %v608 = vshll.u32 %v477, 16
        %v610 = vrot.slane %v608, 1
        %v611 = vsel %vm484, %v607, %v610
        %v612 = vshrl.u32 %v425, 16
        %v614 = vor.u32 %v612, %v603
        %v616 = vshll.u32 %v426, 16
        %v618 = vrot.slane %v616, 1
        %v619 = vsel %vm484, %v614, %v618
        %v620 = vshrl.u32 %v477, 16
        %v622 = vor.u32 %v620, %v610
        %v623 = vshll.u32 %v479, 16
        %v625 = vrot.slane %v623, 1
        %v626 = vsel %vm484, %v622, %v625
        %v627 = vshrl.u32 %v426, 16
        %v629 = vor.u32 %v627, %v618
        %v631 = vshll.u32 %v427, 16
        %v633 = vrot.slane %v631, 1
        %v634 = vsel %vm484, %v629, %v633
        %v635 = vshrl.u32 %v479, 16
        %v637 = vor.u32 %v635, %v625
        %v638 = vshll.u32 %v481, 16
        %v640 = vrot.slane %v638, 1
        %v641 = vsel %vm484, %v637, %v640
        %v642 = vshrl.u32 %v427, 16
        %v644 = vor.u32 %v642, %v633
        %v646 = vshll.u32 %v428, 16
        %v648 = vrot.slane %v646, 1
        %v649 = vsel %vm484, %v644, %v648
        %v650 = vshrl.u32 %v481, 16
        %v652 = vor.u32 %v650, %v640
        %v653 = vshll.u32 %v483, 16
        %v655 = vrot.slane %v653, 1
        %v656 = vsel %vm484, %v652, %v655
        %v657 = vshrl.u32 %v428, 16
        %v659 = vor.u32 %v657, %v648
        %v660 = vshrl.u32 %v483, 16
        %v662 = vor.u32 %v660, %v655
        %vm676 = vcmask 1047552
        %vm677 = vmand %vm676, %vm484
        %v678 = vsel %vm677, %v659, 0
        %v679 = vsel %vm677, %v662, 0
        %vm680 = vsmask.f32 256
        %v681 = vrot.slane %v486, 7
        %v682 = vor.u32 %v681, %v488
        %v683 = vrot.slane %v497, 7
        %v684 = vor.u32 %v683, %v499
        %v685 = vrot.slane %v507, 7
        %v686 = vor.u32 %v685, %v493
        %v687 = vsel %vm680, %v681, %v686
        %v688 = vrot.slane %v515, 7
        %v689 = vor.u32 %v688, %v503
        %v690 = vsel %vm680, %v683, %v689
        %v691 = vrot.slane %v522, 7
        %v692 = vor.u32 %v691, %v511
        %v693 = vsel %vm680, %v685, %v692
        %v694 = vrot.slane %v530, 7
        %v695 = vor.u32 %v694, %v518
        %v696 = vsel %vm680, %v688, %v695
        %v697 = vrot.slane %v537, 7
        %v698 = vor.u32 %v697, %v526
        %v699 = vsel %vm680, %v691, %v698
        %v700 = vrot.slane %v545, 7
        %v701 = vor.u32 %v700, %v533
        %v702 = vsel %vm680, %v694, %v701
        %v703 = vrot.slane %v552, 7
        %v704 = vor.u32 %v703, %v541
        %v705 = vsel %vm680, %v697, %v704
        %v706 = vrot.slane %v560, 7
        %v707 = vor.u32 %v706, %v548
        %v708 = vsel %vm680, %v700, %v707
        %v709 = vrot.slane %v567, 7
        %v710 = vor.u32 %v709, %v556
        %v711 = vsel %vm680, %v703, %v710
        %v712 = vrot.slane %v575, 7
        %v713 = vor.u32 %v712, %v563
        %v714 = vsel %vm680, %v706, %v713
        %v715 = vrot.slane %v582, 7
        %v716 = vor.u32 %v715, %v571
        %v717 = vsel %vm680, %v709, %v716
        %v718 = vrot.slane %v590, 7
        %v719 = vor.u32 %v718, %v578
        %v720 = vsel %vm680, %v712, %v719
        %v721 = vrot.slane %v597, 7
        %v722 = vor.u32 %v721, %v586
        %v723 = vsel %vm680, %v715, %v722
        %v724 = vrot.slane %v605, 7
        %v725 = vor.u32 %v724, %v593
        %v726 = vsel %vm680, %v718, %v725
        %v727 = vrot.slane %v612, 7
        %v728 = vor.u32 %v727, %v601
        %v729 = vsel %vm680, %v721, %v728
        %v730 = vrot.slane %v620, 7
        %v731 = vor.u32 %v730, %v608
        %v732 = vsel %vm680, %v724, %v731
        %v733 = vrot.slane %v627, 7
        %v734 = vor.u32 %v733, %v616
        %v735 = vsel %vm680, %v727, %v734
        %v736 = vrot.slane %v635, 7
        %v737 = vor.u32 %v736, %v623
        %v738 = vsel %vm680, %v730, %v737
        %v739 = vrot.slane %v642, 7
        %v740 = vor.u32 %v739, %v631
        %v741 = vsel %vm680, %v733, %v740
        %v742 = vrot.slane %v650, 7
        %v743 = vor.u32 %v742, %v638
        %v744 = vsel %vm680, %v736, %v743
        %v745 = vrot.slane %v657, 7
        %v746 = vor.u32 %v745, %v646
        %v747 = vsel %vm680, %v739, %v746
        %v748 = vrot.slane %v660, 7
        %v749 = vor.u32 %v748, %v653
        %v750 = vsel %vm680, %v742, %v749
        %vm753 = vcmask 1040384
        %vm754 = vmand %vm753, %vm680
        %v755 = vsel %vm754, 0, %v682
        %v756 = vsel %vm754, 0, %v684
        %769 = vrot.lane.b32.xlu0 %v375, 2
        %v770 = vpop.permute.xlu0 %769
        %771 = vrot.lane.b32.xlu0 %v444, 2
        %v772 = vpop.permute.xlu0 %771
        %773 = vrot.lane.b32.xlu0 %v376, 2
        %v774 = vpop.permute.xlu0 %773
        %775 = vrot.lane.b32.xlu0 %v447, 2
        %v776 = vpop.permute.xlu0 %775
        %777 = vrot.lane.b32.xlu0 %v377, 2
        %v778 = vpop.permute.xlu0 %777
        %779 = vrot.lane.b32.xlu0 %v450, 2
        %v780 = vpop.permute.xlu0 %779
        %781 = vrot.lane.b32.xlu0 %v378, 2
        %v782 = vpop.permute.xlu0 %781
        %783 = vrot.lane.b32.xlu0 %v453, 2
        %v784 = vpop.permute.xlu0 %783
        %785 = vrot.lane.b32.xlu0 %v379, 2
        %v786 = vpop.permute.xlu0 %785
        %787 = vrot.lane.b32.xlu0 %v456, 2
        %v788 = vpop.permute.xlu0 %787
        %789 = vrot.lane.b32.xlu0 %v380, 2
        %v790 = vpop.permute.xlu0 %789
        %791 = vrot.lane.b32.xlu0 %v459, 2
        %v792 = vpop.permute.xlu0 %791
        %793 = vrot.lane.b32.xlu0 %v423, 2
        %v794 = vpop.permute.xlu0 %793
        %795 = vrot.lane.b32.xlu0 %v473, 2
        %v796 = vpop.permute.xlu0 %795
        %797 = vrot.lane.b32.xlu0 %v424, 2
        %v798 = vpop.permute.xlu0 %797
        %799 = vrot.lane.b32.xlu0 %v475, 2
        %v800 = vpop.permute.xlu0 %799
        %801 = vrot.lane.b32.xlu0 %v425, 2
        %v802 = vpop.permute.xlu0 %801
        %803 = vrot.lane.b32.xlu0 %v477, 2
        %v804 = vpop.permute.xlu0 %803
        %805 = vrot.lane.b32.xlu0 %v426, 2
        %v806 = vpop.permute.xlu0 %805
        %807 = vrot.lane.b32.xlu0 %v479, 2
        %v808 = vpop.permute.xlu0 %807
        %809 = vrot.lane.b32.xlu0 %v427, 2
        %v810 = vpop.permute.xlu0 %809
        %811 = vrot.lane.b32.xlu0 %v481, 2
        %v812 = vpop.permute.xlu0 %811
        %813 = vrot.lane.b32.xlu0 %v428, 2
        %v814 = vpop.permute.xlu0 %813
        %815 = vrot.lane.b32.xlu0 %v483, 2
        %v816 = vpop.permute.xlu0 %815
        %vm817 = vcmask 15360
        %v818 = vsel %vm817, %v770, %v772
        %v819 = vsel %vm817, %v774, %v776
        %v820 = vsel %vm817, %v778, %v780
        %v821 = vsel %vm817, %v782, %v784
        %v822 = vsel %vm817, %v786, %v788
        %v823 = vsel %vm817, %v790, %v792
        %v824 = vsel %vm817, %v794, %v796
        %v825 = vsel %vm817, %v798, %v800
        %v826 = vsel %vm817, %v802, %v804
        %v827 = vsel %vm817, %v806, %v808
        %v828 = vsel %vm817, %v810, %v812
        %v829 = vsel %vm817, %v814, %v816
        %832 = vrot.lane.b32.xlu0 %v755, 4
        %v833 = vpop.permute.xlu0 %832
        %834 = vrot.lane.b32.xlu0 %v756, 4
        %v835 = vpop.permute.xlu0 %834
        %836 = vrot.lane.b32.xlu0 %v687, 4
        %v837 = vpop.permute.xlu0 %836
        %838 = vrot.lane.b32.xlu0 %v690, 4
        %v839 = vpop.permute.xlu0 %838
        %840 = vrot.lane.b32.xlu0 %v693, 4
        %v841 = vpop.permute.xlu0 %840
        %842 = vrot.lane.b32.xlu0 %v696, 4
        %v843 = vpop.permute.xlu0 %842
        %844 = vrot.lane.b32.xlu0 %v699, 4
        %v845 = vpop.permute.xlu0 %844
        %846 = vrot.lane.b32.xlu0 %v702, 4
        %v847 = vpop.permute.xlu0 %846
        %848 = vrot.lane.b32.xlu0 %v705, 4
        %v849 = vpop.permute.xlu0 %848
        %850 = vrot.lane.b32.xlu0 %v708, 4
        %v851 = vpop.permute.xlu0 %850
        %852 = vrot.lane.b32.xlu0 %v711, 4
        %v853 = vpop.permute.xlu0 %852
        %854 = vrot.lane.b32.xlu0 %v714, 4
        %v855 = vpop.permute.xlu0 %854
        %856 = vrot.lane.b32.xlu0 %v717, 4
        %v857 = vpop.permute.xlu0 %856
        %858 = vrot.lane.b32.xlu0 %v720, 4
        %v859 = vpop.permute.xlu0 %858
        %860 = vrot.lane.b32.xlu0 %v723, 4
        %v861 = vpop.permute.xlu0 %860
        %862 = vrot.lane.b32.xlu0 %v726, 4
        %v863 = vpop.permute.xlu0 %862
        %864 = vrot.lane.b32.xlu0 %v729, 4
        %v865 = vpop.permute.xlu0 %864
        %866 = vrot.lane.b32.xlu0 %v732, 4
        %v867 = vpop.permute.xlu0 %866
        %868 = vrot.lane.b32.xlu0 %v735, 4
        %v869 = vpop.permute.xlu0 %868
        %870 = vrot.lane.b32.xlu0 %v738, 4
        %v871 = vpop.permute.xlu0 %870
        %872 = vrot.lane.b32.xlu0 %v741, 4
        %v873 = vpop.permute.xlu0 %872
        %874 = vrot.lane.b32.xlu0 %v744, 4
        %v875 = vpop.permute.xlu0 %874
        %876 = vrot.lane.b32.xlu0 %v747, 4
        %v877 = vpop.permute.xlu0 %876
        %878 = vrot.lane.b32.xlu0 %v750, 4
        %v879 = vpop.permute.xlu0 %878
        %vm880 = vcmask 31744
        %v881 = vsel %vm880, %v833, %v835
        %v882 = vsel %vm880, %v837, %v839
        %v883 = vsel %vm880, %v841, %v843
        %v884 = vsel %vm880, %v845, %v847
        %v885 = vsel %vm880, %v849, %v851
        %v886 = vsel %vm880, %v853, %v855
        %v887 = vsel %vm880, %v857, %v859
        %v888 = vsel %vm880, %v861, %v863
        %v889 = vsel %vm880, %v865, %v867
        %v890 = vsel %vm880, %v869, %v871
        %v891 = vsel %vm880, %v873, %v875
        %v892 = vsel %vm880, %v877, %v879
        %vm893 = vcmask 15360
        %v896 = vsel %vm893, %v506, %v770
        %v900 = vsel %vm893, %v521, %v774
        %v904 = vsel %vm893, %v536, %v778
        %v908 = vsel %vm893, %v551, %v782
        %v912 = vsel %vm893, %v566, %v786
        %v916 = vsel %vm893, %v581, %v790
        %v920 = vsel %vm893, %v596, %v794
        %v924 = vsel %vm893, %v611, %v798
        %v928 = vsel %vm893, %v626, %v802
        %v932 = vsel %vm893, %v641, %v806
        %v936 = vsel %vm893, %v656, %v810
        %v940 = vsel %vm893, %v679, %v814
        %vm942 = vcmask 31744
        %v945 = vsel %vm942, %v818, %v833
        %v949 = vsel %vm942, %v819, %v837
        %v953 = vsel %vm942, %v820, %v841
        %v957 = vsel %vm942, %v821, %v845
        %v961 = vsel %vm942, %v822, %v849
        %v965 = vsel %vm942, %v823, %v853
        %v969 = vsel %vm942, %v824, %v857
        %v973 = vsel %vm942, %v825, %v861
        %v977 = vsel %vm942, %v826, %v865
        %v981 = vsel %vm942, %v827, %v869
        %v985 = vsel %vm942, %v828, %v873
        %v989 = vsel %vm942, %v829, %v877
        %v991 = vld [vmem:[%s2] sm:$0xff]
        %v992 = vld [vmem:[%s2 + $0x8] sm:$0xff]
        %v993 = vld [vmem:[%s2 + $0x10] sm:$0xff]
        %v994 = vld [vmem:[%s2 + $0x18] sm:$0xff]
        %v995 = vld [vmem:[%s2 + $0x20] sm:$0xff]
        %v996 = vld [vmem:[%s2 + $0x28] sm:$0xff]
        %v997 = vld [vmem:[%s2 + $0x30] sm:$0xff]
        %v998 = vld [vmem:[%s2 + $0x38] sm:$0xff]
        %v999 = vld [vmem:[%s2 + $0x40] sm:$0xff]
        %v1000 = vld [vmem:[%s2 + $0x48] sm:$0xff]
        %v1001 = vld [vmem:[%s2 + $0x50] sm:$0xff]
        %v1002 = vld [vmem:[%s2 + $0x58] sm:$0xff]
        %v1003 = vld [vmem:[%s2 + $0x60] sm:$0xff]
        %v1004 = vld [vmem:[%s2 + $0x68] sm:$0xff]
        %v1005 = vld [vmem:[%s2 + $0x70] sm:$0xff]
        %v1006 = vld [vmem:[%s2 + $0x78] sm:$0xff]
        %v1007 = vld [vmem:[%s2 + $0x80] sm:$0xff]
        %v1008 = vld [vmem:[%s2 + $0x88] sm:$0xff]
        %v1009 = vld [vmem:[%s2 + $0x90] sm:$0xff]
        %v1010 = vld [vmem:[%s2 + $0x98] sm:$0xff]
        %v1011 = vld [vmem:[%s2 + $0xa0] sm:$0xff]
        %v1012 = vld [vmem:[%s2 + $0xa8] sm:$0xff]
        %v1013 = vld [vmem:[%s2 + $0xb0] sm:$0xff]
        %v1014 = vld [vmem:[%s2 + $0xb8] sm:$0xff]
        %v1015 = vld [vmem:[%s2 + $0xc0] sm:$0xff]
        %v1016 = vld [vmem:[%s2 + $0xc8] sm:$0xff]
        %v1017 = vld [vmem:[%s2 + $0xd0] sm:$0xff]
        %v1018 = vld [vmem:[%s2 + $0xd8] sm:$0xff]
        %v1019 = vld [vmem:[%s2 + $0xe0] sm:$0xff]
        %v1020 = vld [vmem:[%s2 + $0xe8] sm:$0xff]
        %v1021 = vld [vmem:[%s2 + $0xf0] sm:$0xff]
        %v1022 = vld [vmem:[%s2 + $0xf8] sm:$0xff]
        %v1023 = vld [vmem:[%s2 + $0x100] sm:$0xff]
        %v1024 = vld [vmem:[%s2 + $0x108] sm:$0xff]
        %v1025 = vld [vmem:[%s2 + $0x110] sm:$0xff]
        %v1026 = vld [vmem:[%s2 + $0x118] sm:$0xff]
        %v1027 = vld [vmem:[%s2 + $0x120] sm:$0xff]
        %v1028 = vld [vmem:[%s2 + $0x128] sm:$0xff]
        %v1029 = vld [vmem:[%s2 + $0x130] sm:$0xff]
        %v1030 = vld [vmem:[%s2 + $0x138] sm:$0xff]
        %v1031 = vld [vmem:[%s2 + $0x140] sm:$0xff]
        %v1032 = vld [vmem:[%s2 + $0x148] sm:$0xff]
        %v1033 = vld [vmem:[%s2 + $0x150] sm:$0xff]
        %v1034 = vld [vmem:[%s2 + $0x158] sm:$0xff]
        %v1035 = vld [vmem:[%s2 + $0x160] sm:$0xff]
        %v1036 = vld [vmem:[%s2 + $0x168] sm:$0xff]
        %v1037 = vld [vmem:[%s2 + $0x170] sm:$0xff]
        %v1038 = vld [vmem:[%s2 + $0x178] sm:$0xff]
        %v1039 = vld [vmem:[%s2 + $0x180] sm:$0x77]
        %s1040 = sld [smem:[#allocation2]]
        %v1041 = vstv %s1040
        %v1091 = vunpack.c.l.b16 %v991
        %v1092 = vunpack.c.h.b16 %v991
        %v1093 = vunpack.c.l.b16 %v992
        %v1094 = vunpack.c.h.b16 %v992
        %v1095 = vunpack.c.l.b16 %v993
        %v1096 = vunpack.c.h.b16 %v993
        %v1097 = vunpack.c.l.b16 %v994
        %v1098 = vunpack.c.h.b16 %v994
        %v1099 = vunpack.c.l.b16 %v995
        %v1100 = vunpack.c.h.b16 %v995
        %v1101 = vunpack.c.l.b16 %v996
        %v1102 = vunpack.c.h.b16 %v996
        %v1103 = vunpack.c.l.b16 %v997
        %v1104 = vunpack.c.h.b16 %v997
        %v1105 = vunpack.c.l.b16 %v998
        %v1106 = vunpack.c.h.b16 %v998
        %v1107 = vunpack.c.l.b16 %v999
        %v1108 = vunpack.c.h.b16 %v999
        %v1109 = vunpack.c.l.b16 %v1000
        %v1110 = vunpack.c.h.b16 %v1000
        %v1111 = vunpack.c.l.b16 %v1001
        %v1112 = vunpack.c.h.b16 %v1001
        %v1113 = vunpack.c.l.b16 %v1002
        %v1114 = vunpack.c.h.b16 %v1002
        %v1115 = vunpack.c.l.b16 %v1003
        %v1116 = vunpack.c.h.b16 %v1003
        %v1117 = vunpack.c.l.b16 %v1004
        %v1118 = vunpack.c.h.b16 %v1004
        %v1119 = vunpack.c.l.b16 %v1005
        %v1120 = vunpack.c.h.b16 %v1005
        %v1121 = vunpack.c.l.b16 %v1006
        %v1122 = vunpack.c.h.b16 %v1006
        %v1123 = vunpack.c.l.b16 %v1007
        %v1124 = vunpack.c.h.b16 %v1007
        %v1125 = vunpack.c.l.b16 %v1008
        %v1126 = vunpack.c.h.b16 %v1008
        %v1127 = vunpack.c.l.b16 %v1009
        %v1128 = vunpack.c.h.b16 %v1009
        %v1129 = vunpack.c.l.b16 %v1010
        %v1130 = vunpack.c.h.b16 %v1010
        %v1131 = vunpack.c.l.b16 %v1011
        %v1132 = vunpack.c.h.b16 %v1011
        %v1133 = vunpack.c.l.b16 %v1012
        %v1134 = vunpack.c.h.b16 %v1012
        %v1135 = vunpack.c.l.b16 %v1013
        %v1136 = vunpack.c.h.b16 %v1013
        %v1137 = vunpack.c.l.b16 %v1014
        %v1138 = vunpack.c.h.b16 %v1014
        %v1139 = vunpack.c.l.b16 %v1015
        %v1140 = vunpack.c.h.b16 %v1015
        %v1141 = vunpack.c.l.b16 %v1016
        %v1142 = vunpack.c.h.b16 %v1016
        %v1143 = vunpack.c.l.b16 %v1017
        %v1144 = vunpack.c.h.b16 %v1017
        %v1145 = vunpack.c.l.b16 %v1018
        %v1146 = vunpack.c.h.b16 %v1018
        %v1147 = vunpack.c.l.b16 %v1019
        %v1148 = vunpack.c.h.b16 %v1019
        %v1149 = vunpack.c.l.b16 %v1020
        %v1150 = vunpack.c.h.b16 %v1020
        %v1151 = vunpack.c.l.b16 %v1021
        %v1152 = vunpack.c.h.b16 %v1021
        %v1153 = vunpack.c.l.b16 %v1022
        %v1154 = vunpack.c.h.b16 %v1022
        %v1155 = vunpack.c.l.b16 %v1023
        %v1156 = vunpack.c.h.b16 %v1023
        %v1157 = vunpack.c.l.b16 %v1024
        %v1158 = vunpack.c.h.b16 %v1024
        %v1159 = vunpack.c.l.b16 %v1025
        %v1160 = vunpack.c.h.b16 %v1025
        %v1161 = vunpack.c.l.b16 %v1026
        %v1162 = vunpack.c.h.b16 %v1026
        %v1163 = vunpack.c.l.b16 %v1027
        %v1164 = vunpack.c.h.b16 %v1027
        %v1165 = vunpack.c.l.b16 %v1028
        %v1166 = vunpack.c.h.b16 %v1028
        %v1167 = vunpack.c.l.b16 %v1029
        %v1168 = vunpack.c.h.b16 %v1029
        %v1169 = vunpack.c.l.b16 %v1030
        %v1170 = vunpack.c.h.b16 %v1030
        %v1171 = vunpack.c.l.b16 %v1031
        %v1172 = vunpack.c.h.b16 %v1031
        %v1173 = vunpack.c.l.b16 %v1032
        %v1174 = vunpack.c.h.b16 %v1032
        %v1175 = vunpack.c.l.b16 %v1033
        %v1176 = vunpack.c.h.b16 %v1033
        %v1177 = vunpack.c.l.b16 %v1034
        %v1178 = vunpack.c.h.b16 %v1034
        %v1179 = vunpack.c.l.b16 %v1035
        %v1180 = vunpack.c.h.b16 %v1035
        %v1181 = vunpack.c.l.b16 %v1036
        %v1182 = vunpack.c.h.b16 %v1036
        %v1183 = vunpack.c.l.b16 %v1037
        %v1184 = vunpack.c.h.b16 %v1037
        %v1185 = vunpack.c.l.b16 %v1038
        %v1186 = vunpack.c.h.b16 %v1038
        %v1187 = vunpack.c.l.b16 %v1039
        %v1188 = vunpack.c.h.b16 %v1039
        %v1189 = vpack.c.b16 %v1093, %v1091
        %v1190 = vpack.c.b16 %v1094, %v1092
        %v1191 = vpack.c.b16 %v1097, %v1095
        %v1192 = vpack.c.b16 %v1098, %v1096
        %v1193 = vpack.c.b16 %v1101, %v1099
        %v1194 = vpack.c.b16 %v1102, %v1100
        %v1195 = vpack.c.b16 %v1105, %v1103
        %v1196 = vpack.c.b16 %v1106, %v1104
        %v1197 = vpack.c.b16 %v1109, %v1107
        %v1198 = vpack.c.b16 %v1110, %v1108
        %v1199 = vpack.c.b16 %v1113, %v1111
        %v1200 = vpack.c.b16 %v1114, %v1112
        %v1201 = vpack.c.b16 %v1117, %v1115
        %v1202 = vpack.c.b16 %v1118, %v1116
        %v1203 = vpack.c.b16 %v1121, %v1119
        %v1204 = vpack.c.b16 %v1122, %v1120
        %v1205 = vpack.c.b16 %v1125, %v1123
        %v1206 = vpack.c.b16 %v1126, %v1124
        %v1207 = vpack.c.b16 %v1129, %v1127
        %v1208 = vpack.c.b16 %v1130, %v1128
        %v1209 = vpack.c.b16 %v1133, %v1131
        %v1210 = vpack.c.b16 %v1134, %v1132
        %v1211 = vpack.c.b16 %v1137, %v1135
        %v1212 = vpack.c.b16 %v1138, %v1136
        %v1213 = vpack.c.b16 %v1141, %v1139
        %v1214 = vpack.c.b16 %v1142, %v1140
        %v1215 = vpack.c.b16 %v1145, %v1143
        %v1216 = vpack.c.b16 %v1146, %v1144
        %v1217 = vpack.c.b16 %v1149, %v1147
        %v1218 = vpack.c.b16 %v1150, %v1148
        %v1219 = vpack.c.b16 %v1153, %v1151
        %v1220 = vpack.c.b16 %v1154, %v1152
        %v1221 = vpack.c.b16 %v1157, %v1155
        %v1222 = vpack.c.b16 %v1158, %v1156
        %v1223 = vpack.c.b16 %v1161, %v1159
        %v1224 = vpack.c.b16 %v1162, %v1160
        %v1225 = vpack.c.b16 %v1165, %v1163
        %v1226 = vpack.c.b16 %v1166, %v1164
        %v1227 = vpack.c.b16 %v1169, %v1167
        %v1228 = vpack.c.b16 %v1170, %v1168
        %v1229 = vpack.c.b16 %v1173, %v1171
        %v1230 = vpack.c.b16 %v1174, %v1172
        %v1231 = vpack.c.b16 %v1177, %v1175
        %v1232 = vpack.c.b16 %v1178, %v1176
        %v1233 = vpack.c.b16 %v1181, %v1179
        %v1234 = vpack.c.b16 %v1182, %v1180
        %v1235 = vpack.c.b16 %v1185, %v1183
        %v1236 = vpack.c.b16 %v1186, %v1184
        %v1237 = vpack.c.b16 %v1187, %v1187
        %v1238 = vpack.c.b16 %v1188, %v1188
        %vm1287 = vcmask 48128
        %v1289 = vsel %vm1287, %v881, 0
        %v1292 = vsel %vm1287, %v882, 0
        %v1295 = vsel %vm1287, %v883, 0
        %v1298 = vsel %vm1287, %v884, 0
        %v1301 = vsel %vm1287, %v885, 0
        %v1304 = vsel %vm1287, %v886, 0
        %v1307 = vsel %vm1287, %v887, 0
        %v1310 = vsel %vm1287, %v888, 0
        %v1313 = vsel %vm1287, %v889, 0
        %v1316 = vsel %vm1287, %v890, 0
        %v1319 = vsel %vm1287, %v891, 0
        %v1322 = vsel %vm1287, %v892, 0
        %vm1324 = vcmask 1042432
        %v1326 = vsel %vm1324, %v1237, 0
        %v1329 = vsel %vm1324, %v1238, 0
        %1331 = vmatprep.subr.bf16.mxu0 %v1190
        %1332 = vmatpush1.bf16.msra.mxu0 %v1189
        %1333 = vmatprep.subr.bf16.mxu0 %v1192
        %1334 = vmatpush1.bf16.msra.mxu0 %v1191
        %1335 = vmatprep.subr.bf16.mxu0 %v1194
        %1336 = vmatpush1.bf16.msra.mxu0 %v1193
        %1337 = vmatprep.subr.bf16.mxu0 %v1196
        %1338 = vmatpush1.bf16.msra.mxu0 %v1195
        %1339 = vmatprep.subr.bf16.mxu0 %v1198
        %1340 = vmatpush1.bf16.msra.mxu0 %v1197
        %1341 = vmatprep.subr.bf16.mxu0 %v1200
        %1342 = vmatpush1.bf16.msra.mxu0 %v1199
        %1343 = vmatprep.subr.bf16.mxu0 %v1202
        %1344 = vmatpush1.bf16.msra.mxu0 %v1201
        %1345 = vmatprep.subr.bf16.mxu0 %v1204
        %1346 = vmatpush1.bf16.msra.mxu0 %v1203
        %1347 = vmatprep.subr.bf16.mxu0 %v1206
        %1348 = vmatpush1.bf16.msra.mxu0 %v1205
        %1349 = vmatprep.subr.bf16.mxu0 %v1208
        %1350 = vmatpush1.bf16.msra.mxu0 %v1207
        %1351 = vmatprep.subr.bf16.mxu0 %v1210
        %1352 = vmatpush1.bf16.msra.mxu0 %v1209
        %1353 = vmatprep.subr.bf16.mxu0 %v1212
        %1354 = vmatpush1.bf16.msra.mxu0 %v1211
        %1355 = vmatprep.subr.bf16.mxu0 %v1214
        %1356 = vmatpush1.bf16.msra.mxu0 %v1213
        %1357 = vmatprep.subr.bf16.mxu0 %v1216
        %1358 = vmatpush1.bf16.msra.mxu0 %v1215
        %1359 = vmatprep.subr.bf16.mxu0 %v1218
        %1360 = vmatpush1.bf16.msra.mxu0 %v1217
        %1361 = vmatprep.subr.bf16.mxu0 %v1220
        %1362 = vmatpush1.bf16.msra.mxu0 %v1219
        %1363 = vmatprep.mubr.bf16.mxu0 %v896
        %1364 = vmatmul.mubr.bf16.gmra.mrb[0].mxu0 %v496
        %v1365 = vpop.f32.mrb[0].mxu0
        %v1366 = vadd.f32 %v1041, %v1365
        %v1367 = vpop.f32.mrb[0].mxu0
        %v1368 = vadd.f32 %v1041, %v1367
        %v1369 = vpop.f32.mrb[0].mxu0
        %v1370 = vadd.f32 %v1041, %v1369
        %v1371 = vpop.f32.mrb[0].mxu0
        %v1372 = vadd.f32 %v1041, %v1371
        %1373 = vmatprep.mubr.bf16.mxu0 %v900
        %1374 = vmatmul.mubr.bf16.gmra.mrb[0].mxu0 %v514
        %v1375 = vpop.f32.mrb[0].mxu0
        %v1376 = vadd.f32 %v1041, %v1375
        %v1377 = vpop.f32.mrb[0].mxu0
        %v1378 = vadd.f32 %v1041, %v1377
        %v1379 = vpop.f32.mrb[0].mxu0
        %v1380 = vadd.f32 %v1041, %v1379
        %v1381 = vpop.f32.mrb[0].mxu0
        %v1382 = vadd.f32 %v1041, %v1381
        %1383 = vmatprep.mubr.bf16.mxu0 %v904
        %1384 = vmatmul.mubr.bf16.gmra.mrb[0].mxu0 %v529
        %v1385 = vpop.f32.mrb[0].mxu0
        %v1386 = vadd.f32 %v1041, %v1385
        %v1387 = vpop.f32.mrb[0].mxu0
        %v1388 = vadd.f32 %v1041, %v1387
        %v1389 = vpop.f32.mrb[0].mxu0
        %v1390 = vadd.f32 %v1041, %v1389
        %v1391 = vpop.f32.mrb[0].mxu0
        %v1392 = vadd.f32 %v1041, %v1391
        %1393 = vmatprep.mubr.bf16.mxu0 %v908
        %1394 = vmatmul.mubr.bf16.gmra.mrb[0].mxu0 %v544
        %v1395 = vpop.f32.mrb[0].mxu0
        %v1396 = vadd.f32 %v1041, %v1395
        %v1397 = vpop.f32.mrb[0].mxu0
        %v1398 = vadd.f32 %v1041, %v1397
        %v1399 = vpop.f32.mrb[0].mxu0
        %v1400 = vadd.f32 %v1041, %v1399
        %v1401 = vpop.f32.mrb[0].mxu0
        %v1402 = vadd.f32 %v1041, %v1401
        %1403 = vmatprep.mubr.bf16.mxu0 %v912
        %1404 = vmatmul.mubr.bf16.gmra.mrb[0].mxu0 %v559
        %v1405 = vpop.f32.mrb[0].mxu0
        %v1406 = vadd.f32 %v1041, %v1405
        %v1407 = vpop.f32.mrb[0].mxu0
        %v1408 = vadd.f32 %v1041, %v1407
        %v1409 = vpop.f32.mrb[0].mxu0
        %v1410 = vadd.f32 %v1041, %v1409
        %v1411 = vpop.f32.mrb[0].mxu0
        %v1412 = vadd.f32 %v1041, %v1411
        %1413 = vmatprep.mubr.bf16.mxu0 %v916
        %1414 = vmatmul.mubr.bf16.gmra.mrb[0].mxu0 %v574
        %v1415 = vpop.f32.mrb[0].mxu0
        %v1416 = vadd.f32 %v1041, %v1415
        %v1417 = vpop.f32.mrb[0].mxu0
        %v1418 = vadd.f32 %v1041, %v1417
        %v1419 = vpop.f32.mrb[0].mxu0
        %v1420 = vadd.f32 %v1041, %v1419
        %v1421 = vpop.f32.mrb[0].mxu0
        %v1422 = vadd.f32 %v1041, %v1421
        %1423 = vmatprep.mubr.bf16.mxu0 %v920
        %1424 = vmatmul.mubr.bf16.gmra.mrb[0].mxu0 %v589
        %v1425 = vpop.f32.mrb[0].mxu0
        %v1426 = vadd.f32 %v1041, %v1425
        %v1427 = vpop.f32.mrb[0].mxu0
        %v1428 = vadd.f32 %v1041, %v1427
        %v1429 = vpop.f32.mrb[0].mxu0
        %v1430 = vadd.f32 %v1041, %v1429
        %v1431 = vpop.f32.mrb[0].mxu0
        %v1432 = vadd.f32 %v1041, %v1431
        %1433 = vmatprep.mubr.bf16.mxu0 %v924
        %1434 = vmatmul.mubr.bf16.gmra.mrb[0].mxu0 %v604
        %v1435 = vpop.f32.mrb[0].mxu0
        %v1436 = vadd.f32 %v1041, %v1435
        %v1437 = vpop.f32.mrb[0].mxu0
        %v1438 = vadd.f32 %v1041, %v1437
        %v1439 = vpop.f32.mrb[0].mxu0
        %v1440 = vadd.f32 %v1041, %v1439
        %v1441 = vpop.f32.mrb[0].mxu0
        %v1442 = vadd.f32 %v1041, %v1441
        %1443 = vmatprep.mubr.bf16.mxu0 %v928
        %1444 = vmatmul.mubr.bf16.gmra.mrb[0].mxu0 %v619
        %v1445 = vpop.f32.mrb[0].mxu0
        %v1446 = vadd.f32 %v1041, %v1445
        %v1447 = vpop.f32.mrb[0].mxu0
        %v1448 = vadd.f32 %v1041, %v1447
        %v1449 = vpop.f32.mrb[0].mxu0
        %v1450 = vadd.f32 %v1041, %v1449
        %v1451 = vpop.f32.mrb[0].mxu0
        %v1452 = vadd.f32 %v1041, %v1451
        %1453 = vmatprep.mubr.bf16.mxu0 %v932
        %1454 = vmatmul.mubr.bf16.gmra.mrb[0].mxu0 %v634
        %v1455 = vpop.f32.mrb[0].mxu0
        %v1456 = vadd.f32 %v1041, %v1455
        %v1457 = vpop.f32.mrb[0].mxu0
        %v1458 = vadd.f32 %v1041, %v1457
        %v1459 = vpop.f32.mrb[0].mxu0
        %v1460 = vadd.f32 %v1041, %v1459
        %v1461 = vpop.f32.mrb[0].mxu0
        %v1462 = vadd.f32 %v1041, %v1461
        %1463 = vmatprep.mubr.bf16.mxu0 %v936
        %1464 = vmatmul.mubr.bf16.gmra.mrb[0].mxu0 %v649
        %v1465 = vpop.f32.mrb[0].mxu0
        %v1466 = vadd.f32 %v1041, %v1465
        %v1467 = vpop.f32.mrb[0].mxu0
        %v1468 = vadd.f32 %v1041, %v1467
        %v1469 = vpop.f32.mrb[0].mxu0
        %v1470 = vadd.f32 %v1041, %v1469
        %v1471 = vpop.f32.mrb[0].mxu0
        %v1472 = vadd.f32 %v1041, %v1471
        %1473 = vmatprep.mubr.bf16.mxu0 %v940
        %1474 = vmatmul.mubr.bf16.gmra.mrb[0].mxu0 %v678
        %v1475 = vpop.f32.mrb[0].mxu0
        %v1476 = vadd.f32 %v1041, %v1475
        %v1477 = vpop.f32.mrb[0].mxu0
        %v1478 = vadd.f32 %v1041, %v1477
        %v1479 = vpop.f32.mrb[0].mxu0
        %v1480 = vadd.f32 %v1041, %v1479
        %v1481 = vpop.f32.mrb[0].mxu0
        %v1482 = vadd.f32 %v1041, %v1481
        %1483 = vdwg.mxu0
        %1484 = vmatprep.subr.bf16.mxu0 %v1222
        %1485 = vmatpush1.bf16.msra.mxu0 %v1221
        %1486 = vmatprep.subr.bf16.mxu0 %v1224
        %1487 = vmatpush1.bf16.msra.mxu0 %v1223
        %1488 = vmatprep.subr.bf16.mxu0 %v1226
        %1489 = vmatpush1.bf16.msra.mxu0 %v1225
        %1490 = vmatprep.subr.bf16.mxu0 %v1228
        %1491 = vmatpush1.bf16.msra.mxu0 %v1227
        %1492 = vmatprep.subr.bf16.mxu0 %v1230
        %1493 = vmatpush1.bf16.msra.mxu0 %v1229
        %1494 = vmatprep.subr.bf16.mxu0 %v1232
        %1495 = vmatpush1.bf16.msra.mxu0 %v1231
        %1496 = vmatprep.subr.bf16.mxu0 %v1234
        %1497 = vmatpush1.bf16.msra.mxu0 %v1233
        %1498 = vmatprep.subr.bf16.mxu0 %v1236
        %1499 = vmatpush1.bf16.msra.mxu0 %v1235
        %1500 = vmatprep.subr.bf16.mxu0 %v1329
        %1501 = vmatpush1.bf16.msra.mxu0 %v1326
        %1502 = vmatprep.subr.bf16.mxu0 0
        %1503 = vmatpush1.bf16.msra.mxu0 0
        %1504 = vmatprep.subr.bf16.mxu0 0
        %1505 = vmatpush1.bf16.msra.mxu0 0
        %1506 = vmatprep.subr.bf16.mxu0 0
        %1507 = vmatpush1.bf16.msra.mxu0 0
        %1508 = vmatprep.subr.bf16.mxu0 0
        %1509 = vmatpush1.bf16.msra.mxu0 0
        %1510 = vmatprep.subr.bf16.mxu0 0
        %1511 = vmatpush1.bf16.msra.mxu0 0
        %1512 = vmatprep.subr.bf16.mxu0 0
        %1513 = vmatpush1.bf16.msra.mxu0 0
        %1514 = vmatprep.subr.bf16.mxu0 0
        %1515 = vmatpush1.bf16.msra.mxu0 0
        %1516 = vmatprep.mubr.bf16.mxu0 %v1289
        %1517 = vmatmul.mubr.bf16.gmra.mrb[0].mxu0 %v945
        %v1518 = vpop.f32.mrb[0].mxu0
        %v1519 = vadd.f32 %v1366, %v1518
        %v1520 = vpop.f32.mrb[0].mxu0
        %v1521 = vadd.f32 %v1368, %v1520
        %v1522 = vpop.f32.mrb[0].mxu0
        %v1523 = vadd.f32 %v1370, %v1522
        %v1524 = vpop.f32.mrb[0].mxu0
        %v1525 = vadd.f32 %v1372, %v1524
        %1526 = vmatprep.mubr.bf16.mxu0 %v1292
        %1527 = vmatmul.mubr.bf16.gmra.mrb[0].mxu0 %v949
        %v1528 = vpop.f32.mrb[0].mxu0
        %v1529 = vadd.f32 %v1376, %v1528
        %v1530 = vpop.f32.mrb[0].mxu0
        %v1531 = vadd.f32 %v1378, %v1530
        %v1532 = vpop.f32.mrb[0].mxu0
        %v1533 = vadd.f32 %v1380, %v1532
        %v1534 = vpop.f32.mrb[0].mxu0
        %v1535 = vadd.f32 %v1382, %v1534
        %1536 = vmatprep.mubr.bf16.mxu0 %v1295
        %1537 = vmatmul.mubr.bf16.gmra.mrb[0].mxu0 %v953
        %v1538 = vpop.f32.mrb[0].mxu0
        %v1539 = vadd.f32 %v1386, %v1538
        %v1540 = vpop.f32.mrb[0].mxu0
        %v1541 = vadd.f32 %v1388, %v1540
        %v1542 = vpop.f32.mrb[0].mxu0
        %v1543 = vadd.f32 %v1390, %v1542
        %v1544 = vpop.f32.mrb[0].mxu0
        %v1545 = vadd.f32 %v1392, %v1544
        %1546 = vmatprep.mubr.bf16.mxu0 %v1298
        %1547 = vmatmul.mubr.bf16.gmra.mrb[0].mxu0 %v957
        %v1548 = vpop.f32.mrb[0].mxu0
        %v1549 = vadd.f32 %v1396, %v1548
        %v1550 = vpop.f32.mrb[0].mxu0
        %v1551 = vadd.f32 %v1398, %v1550
        %v1552 = vpop.f32.mrb[0].mxu0
        %v1553 = vadd.f32 %v1400, %v1552
        %v1554 = vpop.f32.mrb[0].mxu0
        %v1555 = vadd.f32 %v1402, %v1554
        %1556 = vmatprep.mubr.bf16.mxu0 %v1301
        %1557 = vmatmul.mubr.bf16.gmra.mrb[0].mxu0 %v961
        %v1558 = vpop.f32.mrb[0].mxu0
        %v1559 = vadd.f32 %v1406, %v1558
        %v1560 = vpop.f32.mrb[0].mxu0
        %v1561 = vadd.f32 %v1408, %v1560
        %v1562 = vpop.f32.mrb[0].mxu0
        %v1563 = vadd.f32 %v1410, %v1562
        %v1564 = vpop.f32.mrb[0].mxu0
        %v1565 = vadd.f32 %v1412, %v1564
        %1566 = vmatprep.mubr.bf16.mxu0 %v1304
        %1567 = vmatmul.mubr.bf16.gmra.mrb[0].mxu0 %v965
        %v1568 = vpop.f32.mrb[0].mxu0
        %v1569 = vadd.f32 %v1416, %v1568
        %v1570 = vpop.f32.mrb[0].mxu0
        %v1571 = vadd.f32 %v1418, %v1570
        %v1572 = vpop.f32.mrb[0].mxu0
        %v1573 = vadd.f32 %v1420, %v1572
        %v1574 = vpop.f32.mrb[0].mxu0
        %v1575 = vadd.f32 %v1422, %v1574
        %1576 = vmatprep.mubr.bf16.mxu0 %v1307
        %1577 = vmatmul.mubr.bf16.gmra.mrb[0].mxu0 %v969
        %v1578 = vpop.f32.mrb[0].mxu0
        %v1579 = vadd.f32 %v1426, %v1578
        %v1580 = vpop.f32.mrb[0].mxu0
        %v1581 = vadd.f32 %v1428, %v1580
        %v1582 = vpop.f32.mrb[0].mxu0
        %v1583 = vadd.f32 %v1430, %v1582
        %v1584 = vpop.f32.mrb[0].mxu0
        %v1585 = vadd.f32 %v1432, %v1584
        %1586 = vmatprep.mubr.bf16.mxu0 %v1310
        %1587 = vmatmul.mubr.bf16.gmra.mrb[0].mxu0 %v973
        %v1588 = vpop.f32.mrb[0].mxu0
        %v1589 = vadd.f32 %v1436, %v1588
        %v1590 = vpop.f32.mrb[0].mxu0
        %v1591 = vadd.f32 %v1438, %v1590
        %v1592 = vpop.f32.mrb[0].mxu0
        %v1593 = vadd.f32 %v1440, %v1592
        %v1594 = vpop.f32.mrb[0].mxu0
        %v1595 = vadd.f32 %v1442, %v1594
        %1596 = vmatprep.mubr.bf16.mxu0 %v1313
        %1597 = vmatmul.mubr.bf16.gmra.mrb[0].mxu0 %v977
        %v1598 = vpop.f32.mrb[0].mxu0
        %v1599 = vadd.f32 %v1446, %v1598
        %v1600 = vpop.f32.mrb[0].mxu0
        %v1601 = vadd.f32 %v1448, %v1600
        %v1602 = vpop.f32.mrb[0].mxu0
        %v1603 = vadd.f32 %v1450, %v1602
        %v1604 = vpop.f32.mrb[0].mxu0
        %v1605 = vadd.f32 %v1452, %v1604
        %1606 = vmatprep.mubr.bf16.mxu0 %v1316
        %1607 = vmatmul.mubr.bf16.gmra.mrb[0].mxu0 %v981
        %v1608 = vpop.f32.mrb[0].mxu0
        %v1609 = vadd.f32 %v1456, %v1608
        %v1610 = vpop.f32.mrb[0].mxu0
        %v1611 = vadd.f32 %v1458, %v1610
        %v1612 = vpop.f32.mrb[0].mxu0
        %v1613 = vadd.f32 %v1460, %v1612
        %v1614 = vpop.f32.mrb[0].mxu0
        %v1615 = vadd.f32 %v1462, %v1614
        %1616 = vmatprep.mubr.bf16.mxu0 %v1319
        %1617 = vmatmul.mubr.bf16.gmra.mrb[0].mxu0 %v985
        %v1618 = vpop.f32.mrb[0].mxu0
        %v1619 = vadd.f32 %v1466, %v1618
        %v1620 = vpop.f32.mrb[0].mxu0
        %v1621 = vadd.f32 %v1468, %v1620
        %v1622 = vpop.f32.mrb[0].mxu0
        %v1623 = vadd.f32 %v1470, %v1622
        %v1624 = vpop.f32.mrb[0].mxu0
        %v1625 = vadd.f32 %v1472, %v1624
        %1626 = vmatprep.mubr.bf16.mxu0 %v1322
        %1627 = vmatmul.mubr.bf16.gmra.mrb[0].mxu0 %v989
        %v1628 = vpop.f32.mrb[0].mxu0
        %v1629 = vadd.f32 %v1476, %v1628
        %v1630 = vpop.f32.mrb[0].mxu0
        %v1631 = vadd.f32 %v1478, %v1630
        %v1632 = vpop.f32.mrb[0].mxu0
        %v1633 = vadd.f32 %v1480, %v1632
        %v1634 = vpop.f32.mrb[0].mxu0
        %v1635 = vadd.f32 %v1482, %v1634
        %1636 = vdwg.mxu0
        %vm1637 = vcmp.ge.f32.partialorder %v1519, 0.0
        %vm1638 = vcmp.ge.f32.partialorder %v1521, 0.0
        %vm1639 = vcmp.ge.f32.partialorder %v1523, 0.0
        %vm1640 = vcmp.ge.f32.partialorder %v1525, 0.0
        %vm1641 = vcmp.ge.f32.partialorder %v1529, 0.0
        %vm1642 = vcmp.ge.f32.partialorder %v1531, 0.0
        %vm1643 = vcmp.ge.f32.partialorder %v1533, 0.0
        %vm1644 = vcmp.ge.f32.partialorder %v1535, 0.0
        %vm1645 = vcmp.ge.f32.partialorder %v1539, 0.0
        %vm1646 = vcmp.ge.f32.partialorder %v1541, 0.0
        %vm1647 = vcmp.ge.f32.partialorder %v1543, 0.0
        %vm1648 = vcmp.ge.f32.partialorder %v1545, 0.0
        %vm1649 = vcmp.ge.f32.partialorder %v1549, 0.0
        %vm1650 = vcmp.ge.f32.partialorder %v1551, 0.0
        %vm1651 = vcmp.ge.f32.partialorder %v1553, 0.0
        %vm1652 = vcmp.ge.f32.partialorder %v1555, 0.0
        %vm1653 = vcmp.ge.f32.partialorder %v1559, 0.0
        %vm1654 = vcmp.ge.f32.partialorder %v1561, 0.0
        %vm1655 = vcmp.ge.f32.partialorder %v1563, 0.0
        %vm1656 = vcmp.ge.f32.partialorder %v1565, 0.0
        %vm1657 = vcmp.ge.f32.partialorder %v1569, 0.0
        %vm1658 = vcmp.ge.f32.partialorder %v1571, 0.0
        %vm1659 = vcmp.ge.f32.partialorder %v1573, 0.0
        %vm1660 = vcmp.ge.f32.partialorder %v1575, 0.0
        %vm1661 = vcmp.ge.f32.partialorder %v1579, 0.0
        %vm1662 = vcmp.ge.f32.partialorder %v1581, 0.0
        %vm1663 = vcmp.ge.f32.partialorder %v1583, 0.0
        %vm1664 = vcmp.ge.f32.partialorder %v1585, 0.0
        %vm1665 = vcmp.ge.f32.partialorder %v1589, 0.0
        %vm1666 = vcmp.ge.f32.partialorder %v1591, 0.0
        %vm1667 = vcmp.ge.f32.partialorder %v1593, 0.0
        %vm1668 = vcmp.ge.f32.partialorder %v1595, 0.0
        %vm1669 = vcmp.ge.f32.partialorder %v1599, 0.0
        %vm1670 = vcmp.ge.f32.partialorder %v1601, 0.0
        %vm1671 = vcmp.ge.f32.partialorder %v1603, 0.0
        %vm1672 = vcmp.ge.f32.partialorder %v1605, 0.0
        %vm1673 = vcmp.ge.f32.partialorder %v1609, 0.0
        %vm1674 = vcmp.ge.f32.partialorder %v1611, 0.0
        %vm1675 = vcmp.ge.f32.partialorder %v1613, 0.0
        %vm1676 = vcmp.ge.f32.partialorder %v1615, 0.0
        %vm1677 = vcmp.ge.f32.partialorder %v1619, 0.0
        %vm1678 = vcmp.ge.f32.partialorder %v1621, 0.0
        %vm1679 = vcmp.ge.f32.partialorder %v1623, 0.0
        %vm1680 = vcmp.ge.f32.partialorder %v1625, 0.0
        %vm1681 = vcmp.ge.f32.partialorder %v1629, 0.0
        %vm1682 = vcmp.ge.f32.partialorder %v1631, 0.0
        %vm1683 = vcmp.ge.f32.partialorder %v1633, 0.0
        %vm1684 = vcmp.ge.f32.partialorder %v1635, 0.0
        %v1685 = vmul.f32 %v1519, 0.4
        %v1686 = vmul.f32 %v1521, 0.4
        %v1687 = vmul.f32 %v1523, 0.4
        %v1688 = vmul.f32 %v1525, 0.4
        %v1689 = vmul.f32 %v1529, 0.4
        %v1690 = vmul.f32 %v1531, 0.4
        %v1691 = vmul.f32 %v1533, 0.4
        %v1692 = vmul.f32 %v1535, 0.4
        %v1693 = vmul.f32 %v1539, 0.4
        %v1694 = vmul.f32 %v1541, 0.4
        %v1695 = vmul.f32 %v1543, 0.4
        %v1696 = vmul.f32 %v1545, 0.4
        %v1697 = vmul.f32 %v1549, 0.4
        %v1698 = vmul.f32 %v1551, 0.4
        %v1699 = vmul.f32 %v1553, 0.4
        %v1700 = vmul.f32 %v1555, 0.4
        %v1701 = vmul.f32 %v1559, 0.4
        %v1702 = vmul.f32 %v1561, 0.4
        %v1703 = vmul.f32 %v1563, 0.4
        %v1704 = vmul.f32 %v1565, 0.4
        %v1705 = vmul.f32 %v1569, 0.4
        %v1706 = vmul.f32 %v1571, 0.4
        %v1707 = vmul.f32 %v1573, 0.4
        %v1708 = vmul.f32 %v1575, 0.4
        %v1709 = vmul.f32 %v1579, 0.4
        %v1710 = vmul.f32 %v1581, 0.4
        %v1711 = vmul.f32 %v1583, 0.4
        %v1712 = vmul.f32 %v1585, 0.4
        %v1713 = vmul.f32 %v1589, 0.4
        %v1714 = vmul.f32 %v1591, 0.4
        %v1715 = vmul.f32 %v1593, 0.4
        %v1716 = vmul.f32 %v1595, 0.4
        %v1717 = vmul.f32 %v1599, 0.4
        %v1718 = vmul.f32 %v1601, 0.4
        %v1719 = vmul.f32 %v1603, 0.4
        %v1720 = vmul.f32 %v1605, 0.4
        %v1721 = vmul.f32 %v1609, 0.4
        %v1722 = vmul.f32 %v1611, 0.4
        %v1723 = vmul.f32 %v1613, 0.4
        %v1724 = vmul.f32 %v1615, 0.4
        %v1725 = vmul.f32 %v1619, 0.4
        %v1726 = vmul.f32 %v1621, 0.4
        %v1727 = vmul.f32 %v1623, 0.4
        %v1728 = vmul.f32 %v1625, 0.4
        %v1729 = vmul.f32 %v1629, 0.4
        %v1730 = vmul.f32 %v1631, 0.4
        %v1731 = vmul.f32 %v1633, 0.4
        %v1732 = vmul.f32 %v1635, 0.4
        %v1733 = vsel %vm1637, %v1519, %v1685
        %v1734 = vsel %vm1638, %v1521, %v1686
        %v1735 = vsel %vm1639, %v1523, %v1687
        %v1736 = vsel %vm1640, %v1525, %v1688
        %v1737 = vsel %vm1641, %v1529, %v1689
        %v1738 = vsel %vm1642, %v1531, %v1690
        %v1739 = vsel %vm1643, %v1533, %v1691
        %v1740 = vsel %vm1644, %v1535, %v1692
        %v1741 = vsel %vm1645, %v1539, %v1693
        %v1742 = vsel %vm1646, %v1541, %v1694
        %v1743 = vsel %vm1647, %v1543, %v1695
        %v1744 = vsel %vm1648, %v1545, %v1696
        %v1745 = vsel %vm1649, %v1549, %v1697
        %v1746 = vsel %vm1650, %v1551, %v1698
        %v1747 = vsel %vm1651, %v1553, %v1699
        %v1748 = vsel %vm1652, %v1555, %v1700
        %v1749 = vsel %vm1653, %v1559, %v1701
        %v1750 = vsel %vm1654, %v1561, %v1702
        %v1751 = vsel %vm1655, %v1563, %v1703
        %v1752 = vsel %vm1656, %v1565, %v1704
        %v1753 = vsel %vm1657, %v1569, %v1705
        %v1754 = vsel %vm1658, %v1571, %v1706
        %v1755 = vsel %vm1659, %v1573, %v1707
        %v1756 = vsel %vm1660, %v1575, %v1708
        %v1757 = vsel %vm1661, %v1579, %v1709
        %v1758 = vsel %vm1662, %v1581, %v1710
        %v1759 = vsel %vm1663, %v1583, %v1711
        %v1760 = vsel %vm1664, %v1585, %v1712
        %v1761 = vsel %vm1665, %v1589, %v1713
        %v1762 = vsel %vm1666, %v1591, %v1714
        %v1763 = vsel %vm1667, %v1593, %v1715
        %v1764 = vsel %vm1668, %v1595, %v1716
        %v1765 = vsel %vm1669, %v1599, %v1717
        %v1766 = vsel %vm1670, %v1601, %v1718
        %v1767 = vsel %vm1671, %v1603, %v1719
        %v1768 = vsel %vm1672, %v1605, %v1720
        %v1769 = vsel %vm1673, %v1609, %v1721
        %v1770 = vsel %vm1674, %v1611, %v1722
        %v1771 = vsel %vm1675, %v1613, %v1723
        %v1772 = vsel %vm1676, %v1615, %v1724
        %v1773 = vsel %vm1677, %v1619, %v1725
        %v1774 = vsel %vm1678, %v1621, %v1726
        %v1775 = vsel %vm1679, %v1623, %v1727
        %v1776 = vsel %vm1680, %v1625, %v1728
        %v1777 = vsel %vm1681, %v1629, %v1729
        %v1778 = vsel %vm1682, %v1631, %v1730
        %v1779 = vsel %vm1683, %v1633, %v1731
        %v1780 = vsel %vm1684, %v1635, %v1732
        %v1781 = vlaneseq
        %v1782 = vshrl.u32 %v1781, 7
        %v1783 = vadd.s32 %v1782, 8
        %v1784 = vadd.s32 %v1782, 16
        %v1785 = vadd.s32 %v1782, 24
        %v1786 = vadd.s32 %v1782, 32
        %v1787 = vadd.s32 %v1782, 40
        %v1788 = vadd.s32 %v1782, 48
        %v1789 = vadd.s32 %v1782, 56
        %v1790 = vadd.s32 %v1782, 64
        %v1791 = vadd.s32 %v1782, 72
        %v1792 = vadd.s32 %v1782, 80
        %v1793 = vadd.s32 %v1782, 88
        %vm1794 = vcmp.ge.s32.totalorder %v1782, 1
        %vm1795 = vcmp.ge.s32.totalorder %v1783, 1
        %vm1796 = vcmp.ge.s32.totalorder %v1784, 1
        %vm1797 = vcmp.ge.s32.totalorder %v1785, 1
        %vm1798 = vcmp.ge.s32.totalorder %v1786, 1
        %vm1799 = vcmp.ge.s32.totalorder %v1787, 1
        %vm1800 = vcmp.ge.s32.totalorder %v1788, 1
        %vm1801 = vcmp.ge.s32.totalorder %v1789, 1
        %vm1802 = vcmp.ge.s32.totalorder %v1790, 1
        %vm1803 = vcmp.ge.s32.totalorder %v1791, 1
        %vm1804 = vcmp.ge.s32.totalorder %v1792, 1
        %vm1805 = vcmp.ge.s32.totalorder %v1793, 1
        %vm1806 = vcmp.le.s32.totalorder %v1782, 80
        %vm1807 = vcmp.le.s32.totalorder %v1783, 80
        %vm1808 = vcmp.le.s32.totalorder %v1784, 80
        %vm1809 = vcmp.le.s32.totalorder %v1785, 80
        %vm1810 = vcmp.le.s32.totalorder %v1786, 80
        %vm1811 = vcmp.le.s32.totalorder %v1787, 80
        %vm1812 = vcmp.le.s32.totalorder %v1788, 80
        %vm1813 = vcmp.le.s32.totalorder %v1789, 80
        %vm1814 = vcmp.le.s32.totalorder %v1790, 80
        %vm1815 = vcmp.le.s32.totalorder %v1791, 80
        %vm1816 = vcmp.le.s32.totalorder %v1792, 80
        %vm1817 = vcmp.le.s32.totalorder %v1793, 80
        %vm1818 = vmand %vm1794, %vm1806
        %vm1819 = vmand %vm1795, %vm1807
        %vm1820 = vmand %vm1796, %vm1808
        %vm1821 = vmand %vm1797, %vm1809
        %vm1822 = vmand %vm1798, %vm1810
        %vm1823 = vmand %vm1799, %vm1811
        %vm1824 = vmand %vm1800, %vm1812
        %vm1825 = vmand %vm1801, %vm1813
        %vm1826 = vmand %vm1802, %vm1814
        %vm1827 = vmand %vm1803, %vm1815
        %vm1828 = vmand %vm1804, %vm1816
        %vm1829 = vmand %vm1805, %vm1817
        %s1830 = sadd.s32 %s21, 1
        %s1831 = smul.u32 %s1830, 512
        %p1832 = scmp.gt.s32.totalorder %s1831, 64
        // Predicated region
        $region75: #{upsample_net2_forward.5} parent=69 // pred_check
          %p1833 = pneg %p1832
        $region76: #{upsample_net2_forward.5} parent=69 // pred_check_branch
          %1835 = sbr.rel (%p1833) target = $region78
        $region77: #{upsample_net2_forward.5} parent=69 // pred_region
          %s1836 = smul.u32 %s21, 512
          %v1837 = vlaneseq
          %v1838 = vand.u32 %v1837, 127
          %v1839 = vadd.s32 %v1838, 128
          %s1840 = ssub.s32 64, %s1836
          %v1841 = vstv %s1840
          %vm1842 = vcmp.lt.s32.totalorder %v1838, %v1841
          %vm1843 = vcmp.lt.s32.totalorder %v1839, %v1841
          %vm1844 = vmand %vm1818, %vm1842
          %vm1845 = vmand %vm1818, %vm1843
          %vm1846 = vmand %vm1819, %vm1842
          %vm1847 = vmand %vm1819, %vm1843
          %vm1848 = vmand %vm1820, %vm1842
          %vm1849 = vmand %vm1820, %vm1843
          %vm1850 = vmand %vm1821, %vm1842
          %vm1851 = vmand %vm1821, %vm1843
          %vm1852 = vmand %vm1822, %vm1842
          %vm1853 = vmand %vm1822, %vm1843
          %vm1854 = vmand %vm1823, %vm1842
          %vm1855 = vmand %vm1823, %vm1843
          %vm1856 = vmand %vm1824, %vm1842
          %vm1857 = vmand %vm1824, %vm1843
          %vm1858 = vmand %vm1825, %vm1842
          %vm1859 = vmand %vm1825, %vm1843
          %vm1860 = vmand %vm1826, %vm1842
          %vm1861 = vmand %vm1826, %vm1843
          %vm1862 = vmand %vm1827, %vm1842
          %vm1863 = vmand %vm1827, %vm1843
          %vm1864 = vmand %vm1828, %vm1842
          %vm1865 = vmand %vm1828, %vm1843
          %vm1866 = vmand %vm1829, %vm1842
          %vm1867 = vmand %vm1829, %vm1843
          %v1868 = vsel %vm1844, %v1733, 0.0
          %v1869 = vsel %vm1845, %v1734, 0.0
          %v1870 = vsel %vm1846, %v1735, 0.0
          %v1871 = vsel %vm1847, %v1736, 0.0
          %v1872 = vsel %vm1848, %v1737, 0.0
          %v1873 = vsel %vm1849, %v1738, 0.0
          %v1874 = vsel %vm1850, %v1739, 0.0
          %v1875 = vsel %vm1851, %v1740, 0.0
          %v1876 = vsel %vm1852, %v1741, 0.0
          %v1877 = vsel %vm1853, %v1742, 0.0
          %v1878 = vsel %vm1854, %v1743, 0.0
          %v1879 = vsel %vm1855, %v1744, 0.0
          %v1880 = vsel %vm1856, %v1745, 0.0
          %v1881 = vsel %vm1857, %v1746, 0.0
          %v1882 = vsel %vm1858, %v1747, 0.0
          %v1883 = vsel %vm1859, %v1748, 0.0
          %v1884 = vsel %vm1860, %v1749, 0.0
          %v1885 = vsel %vm1861, %v1750, 0.0
          %v1886 = vsel %vm1862, %v1751, 0.0
          %v1887 = vsel %vm1863, %v1752, 0.0
          %v1888 = vsel %vm1864, %v1753, 0.0
          %v1889 = vsel %vm1865, %v1754, 0.0
          %v1890 = vsel %vm1866, %v1755, 0.0
          %v1891 = vsel %vm1867, %v1756, 0.0
          %s1892 = smul.u32 %s21, 2
          %s1893 = sadd.s32 %s1892, 1
          %s1894 = smul.u32 %s1893, 256
          %s1895 = ssub.s32 64, %s1894
          %v1896 = vstv %s1895
          %vm1897 = vcmp.lt.s32.totalorder %v1838, %v1896
          %vm1898 = vcmp.lt.s32.totalorder %v1839, %v1896
          %vm1899 = vmand %vm1818, %vm1897
          %vm1900 = vmand %vm1818, %vm1898
          %vm1901 = vmand %vm1819, %vm1897
          %vm1902 = vmand %vm1819, %vm1898
          %vm1903 = vmand %vm1820, %vm1897
          %vm1904 = vmand %vm1820, %vm1898
          %vm1905 = vmand %vm1821, %vm1897
          %vm1906 = vmand %vm1821, %vm1898
          %vm1907 = vmand %vm1822, %vm1897
          %vm1908 = vmand %vm1822, %vm1898
          %vm1909 = vmand %vm1823, %vm1897
          %vm1910 = vmand %vm1823, %vm1898
          %vm1911 = vmand %vm1824, %vm1897
          %vm1912 = vmand %vm1824, %vm1898
          %vm1913 = vmand %vm1825, %vm1897
          %vm1914 = vmand %vm1825, %vm1898
          %vm1915 = vmand %vm1826, %vm1897
          %vm1916 = vmand %vm1826, %vm1898
          %vm1917 = vmand %vm1827, %vm1897
          %vm1918 = vmand %vm1827, %vm1898
          %vm1919 = vmand %vm1828, %vm1897
          %vm1920 = vmand %vm1828, %vm1898
          %vm1921 = vmand %vm1829, %vm1897
          %vm1922 = vmand %vm1829, %vm1898
          %v1923 = vsel %vm1899, %v1757, 0.0
          %v1924 = vsel %vm1900, %v1758, 0.0
          %v1925 = vsel %vm1901, %v1759, 0.0
          %v1926 = vsel %vm1902, %v1760, 0.0
          %v1927 = vsel %vm1903, %v1761, 0.0
          %v1928 = vsel %vm1904, %v1762, 0.0
          %v1929 = vsel %vm1905, %v1763, 0.0
          %v1930 = vsel %vm1906, %v1764, 0.0
          %v1931 = vsel %vm1907, %v1765, 0.0
          %v1932 = vsel %vm1908, %v1766, 0.0
          %v1933 = vsel %vm1909, %v1767, 0.0
          %v1934 = vsel %vm1910, %v1768, 0.0
          %v1935 = vsel %vm1911, %v1769, 0.0
          %v1936 = vsel %vm1912, %v1770, 0.0
          %v1937 = vsel %vm1913, %v1771, 0.0
          %v1938 = vsel %vm1914, %v1772, 0.0
          %v1939 = vsel %vm1915, %v1773, 0.0
          %v1940 = vsel %vm1916, %v1774, 0.0
          %v1941 = vsel %vm1917, %v1775, 0.0
          %v1942 = vsel %vm1918, %v1776, 0.0
          %v1943 = vsel %vm1919, %v1777, 0.0
          %v1944 = vsel %vm1920, %v1778, 0.0
          %v1945 = vsel %vm1921, %v1779, 0.0
          %v1946 = vsel %vm1922, %v1780, 0.0
          %v1947 = vpack.c.bf16 %v1870, %v1868
          %v1948 = vpack.c.bf16 %v1871, %v1869
          %v1949 = vpack.c.bf16 %v1925, %v1923
          %v1950 = vpack.c.bf16 %v1926, %v1924
          %v1951 = vpack.c.bf16 %v1874, %v1872
          %v1952 = vpack.c.bf16 %v1875, %v1873
          %v1953 = vpack.c.bf16 %v1929, %v1927
          %v1954 = vpack.c.bf16 %v1930, %v1928
          %v1955 = vpack.c.bf16 %v1878, %v1876
          %v1956 = vpack.c.bf16 %v1879, %v1877
          %v1957 = vpack.c.bf16 %v1933, %v1931
          %v1958 = vpack.c.bf16 %v1934, %v1932
          %v1959 = vpack.c.bf16 %v1882, %v1880
          %v1960 = vpack.c.bf16 %v1883, %v1881
          %v1961 = vpack.c.bf16 %v1937, %v1935
          %v1962 = vpack.c.bf16 %v1938, %v1936
          %v1963 = vpack.c.bf16 %v1886, %v1884
          %v1964 = vpack.c.bf16 %v1887, %v1885
          %v1965 = vpack.c.bf16 %v1941, %v1939
          %v1966 = vpack.c.bf16 %v1942, %v1940
          %v1967 = vpack.c.bf16 %v1890, %v1888
          %v1968 = vpack.c.bf16 %v1891, %v1889
          %v1969 = vpack.c.bf16 %v1945, %v1943
          %v1970 = vpack.c.bf16 %v1946, %v1944
          %v1995 = vunpack.c.l.b16 %v1947
          %v1996 = vunpack.c.l.b16 %v1948
          %v1997 = vunpack.c.l.b16 %v1949
          %v1998 = vunpack.c.l.b16 %v1950
          %v1999 = vunpack.c.h.b16 %v1947
          %v2000 = vunpack.c.h.b16 %v1948
          %v2001 = vunpack.c.h.b16 %v1949
          %v2002 = vunpack.c.h.b16 %v1950
          %v2003 = vunpack.c.l.b16 %v1951
          %v2004 = vunpack.c.l.b16 %v1952
          %v2005 = vunpack.c.l.b16 %v1953
          %v2006 = vunpack.c.l.b16 %v1954
          %v2007 = vunpack.c.h.b16 %v1951
          %v2008 = vunpack.c.h.b16 %v1952
          %v2009 = vunpack.c.h.b16 %v1953
          %v2010 = vunpack.c.h.b16 %v1954
          %v2011 = vunpack.c.l.b16 %v1955
          %v2012 = vunpack.c.l.b16 %v1956
          %v2013 = vunpack.c.l.b16 %v1957
          %v2014 = vunpack.c.l.b16 %v1958
          %v2015 = vunpack.c.h.b16 %v1955
          %v2016 = vunpack.c.h.b16 %v1956
          %v2017 = vunpack.c.h.b16 %v1957
          %v2018 = vunpack.c.h.b16 %v1958
          %v2019 = vunpack.c.l.b16 %v1959
          %v2020 = vunpack.c.l.b16 %v1960
          %v2021 = vunpack.c.l.b16 %v1961
          %v2022 = vunpack.c.l.b16 %v1962
          %v2023 = vunpack.c.h.b16 %v1959
          %v2024 = vunpack.c.h.b16 %v1960
          %v2025 = vunpack.c.h.b16 %v1961
          %v2026 = vunpack.c.h.b16 %v1962
          %v2027 = vunpack.c.l.b16 %v1963
          %v2028 = vunpack.c.l.b16 %v1964
          %v2029 = vunpack.c.l.b16 %v1965
          %v2030 = vunpack.c.l.b16 %v1966
          %v2031 = vunpack.c.h.b16 %v1963
          %v2032 = vunpack.c.h.b16 %v1964
          %v2033 = vunpack.c.h.b16 %v1965
          %v2034 = vunpack.c.h.b16 %v1966
          %v2035 = vunpack.c.l.b16 %v1967
          %v2036 = vunpack.c.l.b16 %v1968
          %v2037 = vunpack.c.l.b16 %v1969
          %v2038 = vunpack.c.l.b16 %v1970
          %v2039 = vunpack.c.h.b16 %v1967
          %v2040 = vunpack.c.h.b16 %v1968
          %v2041 = vunpack.c.h.b16 %v1969
          %v2042 = vunpack.c.h.b16 %v1970
          %v2043 = vpack.c.b16 %v1996, %v1995
          %v2044 = vpack.c.b16 %v1998, %v1997
          %v2045 = vpack.c.b16 %v2000, %v1999
          %v2046 = vpack.c.b16 %v2002, %v2001
          %v2047 = vpack.c.b16 %v2004, %v2003
          %v2048 = vpack.c.b16 %v2006, %v2005
          %v2049 = vpack.c.b16 %v2008, %v2007
          %v2050 = vpack.c.b16 %v2010, %v2009
          %v2051 = vpack.c.b16 %v2012, %v2011
          %v2052 = vpack.c.b16 %v2014, %v2013
          %v2053 = vpack.c.b16 %v2016, %v2015
          %v2054 = vpack.c.b16 %v2018, %v2017
          %v2055 = vpack.c.b16 %v2020, %v2019
          %v2056 = vpack.c.b16 %v2022, %v2021
          %v2057 = vpack.c.b16 %v2024, %v2023
          %v2058 = vpack.c.b16 %v2026, %v2025
          %v2059 = vpack.c.b16 %v2028, %v2027
          %v2060 = vpack.c.b16 %v2030, %v2029
          %v2061 = vpack.c.b16 %v2032, %v2031
          %v2062 = vpack.c.b16 %v2034, %v2033
          %v2063 = vpack.c.b16 %v2036, %v2035
          %v2064 = vpack.c.b16 %v2038, %v2037
          %v2065 = vpack.c.b16 %v2040, %v2039
          %v2066 = vpack.c.b16 %v2042, %v2041
          %2091 = vst [vmem:[%s314] sm:$0xff] %v2043
          %2092 = vst [vmem:[%s314 + $0x8] sm:$0xff] %v2044
          %2093 = vst [vmem:[%s314 + $0x10] sm:$0xff] %v2045
          %2094 = vst [vmem:[%s314 + $0x18] sm:$0xff] %v2046
          %2095 = vst [vmem:[%s314 + $0x20] sm:$0xff] %v2047
          %2096 = vst [vmem:[%s314 + $0x28] sm:$0xff] %v2048
          %2097 = vst [vmem:[%s314 + $0x30] sm:$0xff] %v2049
          %2098 = vst [vmem:[%s314 + $0x38] sm:$0xff] %v2050
          %2099 = vst [vmem:[%s314 + $0x40] sm:$0xff] %v2051
          %2100 = vst [vmem:[%s314 + $0x48] sm:$0xff] %v2052
          %2101 = vst [vmem:[%s314 + $0x50] sm:$0xff] %v2053
          %2102 = vst [vmem:[%s314 + $0x58] sm:$0xff] %v2054
          %2103 = vst [vmem:[%s314 + $0x60] sm:$0xff] %v2055
          %2104 = vst [vmem:[%s314 + $0x68] sm:$0xff] %v2056
          %2105 = vst [vmem:[%s314 + $0x70] sm:$0xff] %v2057
          %2106 = vst [vmem:[%s314 + $0x78] sm:$0xff] %v2058
          %2107 = vst [vmem:[%s314 + $0x80] sm:$0xff] %v2059
          %2108 = vst [vmem:[%s314 + $0x88] sm:$0xff] %v2060
          %2109 = vst [vmem:[%s314 + $0x90] sm:$0xff] %v2061
          %2110 = vst [vmem:[%s314 + $0x98] sm:$0xff] %v2062
          %2111 = vst [vmem:[%s314 + $0xa0] sm:$0xff] %v2063
          %2112 = vst [vmem:[%s314 + $0xa8] sm:$0xff] %v2064
          %2113 = vst [vmem:[%s314 + $0xb0] sm:$0xff] %v2065
          %2114 = vst [vmem:[%s314 + $0xb8] sm:$0xff] %v2066
        $region78: #{upsample_net2_forward.5} parent=69 // pred_fallthru
          _
        %p2115 = scmp.le.s32.totalorder %s1831, 64
        // Predicated region
        $region79: #{upsample_net2_forward.5} parent=69 // pred_check
          %p2116 = pneg %p2115
        $region80: #{upsample_net2_forward.5} parent=69 // pred_check_branch
          %2118 = sbr.rel (%p2116) target = $region82
        $region81: #{upsample_net2_forward.5} parent=69 // pred_region
          %v2119 = vsel %vm1818, %v1733, 0.0
          %v2120 = vsel %vm1818, %v1734, 0.0
          %v2121 = vsel %vm1819, %v1735, 0.0
          %v2122 = vsel %vm1819, %v1736, 0.0
          %v2123 = vsel %vm1820, %v1737, 0.0
          %v2124 = vsel %vm1820, %v1738, 0.0
          %v2125 = vsel %vm1821, %v1739, 0.0
          %v2126 = vsel %vm1821, %v1740, 0.0
          %v2127 = vsel %vm1822, %v1741, 0.0
          %v2128 = vsel %vm1822, %v1742, 0.0
          %v2129 = vsel %vm1823, %v1743, 0.0
          %v2130 = vsel %vm1823, %v1744, 0.0
          %v2131 = vsel %vm1824, %v1745, 0.0
          %v2132 = vsel %vm1824, %v1746, 0.0
          %v2133 = vsel %vm1825, %v1747, 0.0
          %v2134 = vsel %vm1825, %v1748, 0.0
          %v2135 = vsel %vm1826, %v1749, 0.0
          %v2136 = vsel %vm1826, %v1750, 0.0
          %v2137 = vsel %vm1827, %v1751, 0.0
          %v2138 = vsel %vm1827, %v1752, 0.0
          %v2139 = vsel %vm1828, %v1753, 0.0
          %v2140 = vsel %vm1828, %v1754, 0.0
          %v2141 = vsel %vm1829, %v1755, 0.0
          %v2142 = vsel %vm1829, %v1756, 0.0
          %v2143 = vsel %vm1818, %v1757, 0.0
          %v2144 = vsel %vm1818, %v1758, 0.0
          %v2145 = vsel %vm1819, %v1759, 0.0
          %v2146 = vsel %vm1819, %v1760, 0.0
          %v2147 = vsel %vm1820, %v1761, 0.0
          %v2148 = vsel %vm1820, %v1762, 0.0
          %v2149 = vsel %vm1821, %v1763, 0.0
          %v2150 = vsel %vm1821, %v1764, 0.0
          %v2151 = vsel %vm1822, %v1765, 0.0
          %v2152 = vsel %vm1822, %v1766, 0.0
          %v2153 = vsel %vm1823, %v1767, 0.0
          %v2154 = vsel %vm1823, %v1768, 0.0
          %v2155 = vsel %vm1824, %v1769, 0.0
          %v2156 = vsel %vm1824, %v1770, 0.0
          %v2157 = vsel %vm1825, %v1771, 0.0
          %v2158 = vsel %vm1825, %v1772, 0.0
          %v2159 = vsel %vm1826, %v1773, 0.0
          %v2160 = vsel %vm1826, %v1774, 0.0
          %v2161 = vsel %vm1827, %v1775, 0.0
          %v2162 = vsel %vm1827, %v1776, 0.0
          %v2163 = vsel %vm1828, %v1777, 0.0
          %v2164 = vsel %vm1828, %v1778, 0.0
          %v2165 = vsel %vm1829, %v1779, 0.0
          %v2166 = vsel %vm1829, %v1780, 0.0
          %v2167 = vpack.c.bf16 %v2121, %v2119
          %v2168 = vpack.c.bf16 %v2122, %v2120
          %v2169 = vpack.c.bf16 %v2145, %v2143
          %v2170 = vpack.c.bf16 %v2146, %v2144
          %v2171 = vpack.c.bf16 %v2125, %v2123
          %v2172 = vpack.c.bf16 %v2126, %v2124
          %v2173 = vpack.c.bf16 %v2149, %v2147
          %v2174 = vpack.c.bf16 %v2150, %v2148
          %v2175 = vpack.c.bf16 %v2129, %v2127
          %v2176 = vpack.c.bf16 %v2130, %v2128
          %v2177 = vpack.c.bf16 %v2153, %v2151
          %v2178 = vpack.c.bf16 %v2154, %v2152
          %v2179 = vpack.c.bf16 %v2133, %v2131
          %v2180 = vpack.c.bf16 %v2134, %v2132
          %v2181 = vpack.c.bf16 %v2157, %v2155
          %v2182 = vpack.c.bf16 %v2158, %v2156
          %v2183 = vpack.c.bf16 %v2137, %v2135
          %v2184 = vpack.c.bf16 %v2138, %v2136
          %v2185 = vpack.c.bf16 %v2161, %v2159
          %v2186 = vpack.c.bf16 %v2162, %v2160
          %v2187 = vpack.c.bf16 %v2141, %v2139
          %v2188 = vpack.c.bf16 %v2142, %v2140
          %v2189 = vpack.c.bf16 %v2165, %v2163
          %v2190 = vpack.c.bf16 %v2166, %v2164
          %v2215 = vunpack.c.l.b16 %v2167
          %v2216 = vunpack.c.l.b16 %v2168
          %v2217 = vunpack.c.l.b16 %v2169
          %v2218 = vunpack.c.l.b16 %v2170
          %v2219 = vunpack.c.h.b16 %v2167
          %v2220 = vunpack.c.h.b16 %v2168
          %v2221 = vunpack.c.h.b16 %v2169
          %v2222 = vunpack.c.h.b16 %v2170
          %v2223 = vunpack.c.l.b16 %v2171
          %v2224 = vunpack.c.l.b16 %v2172
          %v2225 = vunpack.c.l.b16 %v2173
          %v2226 = vunpack.c.l.b16 %v2174
          %v2227 = vunpack.c.h.b16 %v2171
          %v2228 = vunpack.c.h.b16 %v2172
          %v2229 = vunpack.c.h.b16 %v2173
          %v2230 = vunpack.c.h.b16 %v2174
          %v2231 = vunpack.c.l.b16 %v2175
          %v2232 = vunpack.c.l.b16 %v2176
          %v2233 = vunpack.c.l.b16 %v2177
          %v2234 = vunpack.c.l.b16 %v2178
          %v2235 = vunpack.c.h.b16 %v2175
          %v2236 = vunpack.c.h.b16 %v2176
          %v2237 = vunpack.c.h.b16 %v2177
          %v2238 = vunpack.c.h.b16 %v2178
          %v2239 = vunpack.c.l.b16 %v2179
          %v2240 = vunpack.c.l.b16 %v2180
          %v2241 = vunpack.c.l.b16 %v2181
          %v2242 = vunpack.c.l.b16 %v2182
          %v2243 = vunpack.c.h.b16 %v2179
          %v2244 = vunpack.c.h.b16 %v2180
          %v2245 = vunpack.c.h.b16 %v2181
          %v2246 = vunpack.c.h.b16 %v2182
          %v2247 = vunpack.c.l.b16 %v2183
          %v2248 = vunpack.c.l.b16 %v2184
          %v2249 = vunpack.c.l.b16 %v2185
          %v2250 = vunpack.c.l.b16 %v2186
          %v2251 = vunpack.c.h.b16 %v2183
          %v2252 = vunpack.c.h.b16 %v2184
          %v2253 = vunpack.c.h.b16 %v2185
          %v2254 = vunpack.c.h.b16 %v2186
          %v2255 = vunpack.c.l.b16 %v2187
          %v2256 = vunpack.c.l.b16 %v2188
          %v2257 = vunpack.c.l.b16 %v2189
          %v2258 = vunpack.c.l.b16 %v2190
          %v2259 = vunpack.c.h.b16 %v2187
          %v2260 = vunpack.c.h.b16 %v2188
          %v2261 = vunpack.c.h.b16 %v2189
          %v2262 = vunpack.c.h.b16 %v2190
          %v2263 = vpack.c.b16 %v2216, %v2215
          %v2264 = vpack.c.b16 %v2218, %v2217
          %v2265 = vpack.c.b16 %v2220, %v2219
          %v2266 = vpack.c.b16 %v2222, %v2221
          %v2267 = vpack.c.b16 %v2224, %v2223
          %v2268 = vpack.c.b16 %v2226, %v2225
          %v2269 = vpack.c.b16 %v2228, %v2227
          %v2270 = vpack.c.b16 %v2230, %v2229
          %v2271 = vpack.c.b16 %v2232, %v2231
          %v2272 = vpack.c.b16 %v2234, %v2233
          %v2273 = vpack.c.b16 %v2236, %v2235
          %v2274 = vpack.c.b16 %v2238, %v2237
          %v2275 = vpack.c.b16 %v2240, %v2239
          %v2276 = vpack.c.b16 %v2242, %v2241
          %v2277 = vpack.c.b16 %v2244, %v2243
          %v2278 = vpack.c.b16 %v2246, %v2245
          %v2279 = vpack.c.b16 %v2248, %v2247
          %v2280 = vpack.c.b16 %v2250, %v2249
          %v2281 = vpack.c.b16 %v2252, %v2251
          %v2282 = vpack.c.b16 %v2254, %v2253
          %v2283 = vpack.c.b16 %v2256, %v2255
          %v2284 = vpack.c.b16 %v2258, %v2257
          %v2285 = vpack.c.b16 %v2260, %v2259
          %v2286 = vpack.c.b16 %v2262, %v2261
          %2311 = vst [vmem:[%s314] sm:$0xff] %v2263
          %2312 = vst [vmem:[%s314 + $0x8] sm:$0xff] %v2264
          %2313 = vst [vmem:[%s314 + $0x10] sm:$0xff] %v2265
          %2314 = vst [vmem:[%s314 + $0x18] sm:$0xff] %v2266
          %2315 = vst [vmem:[%s314 + $0x20] sm:$0xff] %v2267
          %2316 = vst [vmem:[%s314 + $0x28] sm:$0xff] %v2268
          %2317 = vst [vmem:[%s314 + $0x30] sm:$0xff] %v2269
          %2318 = vst [vmem:[%s314 + $0x38] sm:$0xff] %v2270
          %2319 = vst [vmem:[%s314 + $0x40] sm:$0xff] %v2271
          %2320 = vst [vmem:[%s314 + $0x48] sm:$0xff] %v2272
          %2321 = vst [vmem:[%s314 + $0x50] sm:$0xff] %v2273
          %2322 = vst [vmem:[%s314 + $0x58] sm:$0xff] %v2274
          %2323 = vst [vmem:[%s314 + $0x60] sm:$0xff] %v2275
          %2324 = vst [vmem:[%s314 + $0x68] sm:$0xff] %v2276
          %2325 = vst [vmem:[%s314 + $0x70] sm:$0xff] %v2277
          %2326 = vst [vmem:[%s314 + $0x78] sm:$0xff] %v2278
          %2327 = vst [vmem:[%s314 + $0x80] sm:$0xff] %v2279
          %2328 = vst [vmem:[%s314 + $0x88] sm:$0xff] %v2280
          %2329 = vst [vmem:[%s314 + $0x90] sm:$0xff] %v2281
          %2330 = vst [vmem:[%s314 + $0x98] sm:$0xff] %v2282
          %2331 = vst [vmem:[%s314 + $0xa0] sm:$0xff] %v2283
          %2332 = vst [vmem:[%s314 + $0xa8] sm:$0xff] %v2284
          %2333 = vst [vmem:[%s314 + $0xb0] sm:$0xff] %v2285
          %2334 = vst [vmem:[%s314 + $0xb8] sm:$0xff] %v2286
        $region82: #{upsample_net2_forward.5} parent=69 // pred_fallthru
          _
        %s2335 = sand.u32 %s136, 1
        %s2336 = sand.u32 %s136, 1
        %s2337 = smul.addr %s2336, 192
        %s2338 = scalar_lea.vmem [#allocation4], %s2337
        // Predicated region
        $region83: #{upsample_net2_forward.5} parent=69 // pred_check
          %p2339 = pneg %p146
        $region84: #{upsample_net2_forward.5} parent=69 // pred_check_branch
          %2341 = sbr.rel (%p2339) target = $region86
        $region85: #{upsample_net2_forward.5} parent=69 // pred_region
          %s2342 = smul.u32 4, %s21
          %s2343 = smul.addr %s20, 96
          %s2344 = sadd.s32 %s2342, %s2343
          %s2345 = smul.addr %s2344, 4
          %s2346 = scalar_lea.vmem %s4, %s2345
          // Predicated region
          $region87: #{upsample_net2_forward.5} parent=85 // pred_check
            _
          $region88: #{upsample_net2_forward.5} parent=85 // pred_check_branch
            %2348 = sbr.rel (0) target = $region90
          $region89: #{upsample_net2_forward.5} parent=85 // pred_region
            // Predicated region
            $region91: #{upsample_net2_forward.5} parent=89 // pred_check
              _
            $region92: #{upsample_net2_forward.5} parent=89 // pred_check_branch
              %2350 = sbr.rel (0) target = $region94
            $region93: #{upsample_net2_forward.5} parent=89 // pred_region
              loop: start=0, step=1, limit=1
              $region95: #{upsample_net2_forward.5} parent=93 // loop_pre_header
                _
              $region96: #{upsample_net2_forward.5} parent=93 // loop_header
                %s2352 = sphi 0, %s2356
                %p2353 = scmp.ge.s32.totalorder %s2352, 1
                %s2357 = sphi %s2338, %s2338
                %s2358 = sphi %s2346, %s2346
              $region97: #{upsample_net2_forward.5} parent=93 // loop_header_branch
                %2355 = sbr.rel (%p2353) target = $region101
              $region98: #{upsample_net2_forward.5} parent=93 // loop_body
                %v2359 = vld [vmem:[%s2357] sm:$0xff]
                %2360 = vst [vmem:[%s2358] sm:$0xff] %v2359
                %v2361 = vld [vmem:[%s2357 + $0x8] sm:$0xff]
                %2362 = vst [vmem:[%s2358 + $0x8] sm:$0xff] %v2361
                %v2363 = vld [vmem:[%s2357 + $0x10] sm:$0xff]
                %2364 = vst [vmem:[%s2358 + $0x20] sm:$0xff] %v2363
                %v2365 = vld [vmem:[%s2357 + $0x18] sm:$0xff]
                %2366 = vst [vmem:[%s2358 + $0x28] sm:$0xff] %v2365
                %v2367 = vld [vmem:[%s2357 + $0x20] sm:$0xff]
                %2368 = vst [vmem:[%s2358 + $0x40] sm:$0xff] %v2367
                %v2369 = vld [vmem:[%s2357 + $0x28] sm:$0xff]
                %2370 = vst [vmem:[%s2358 + $0x48] sm:$0xff] %v2369
                %v2371 = vld [vmem:[%s2357 + $0x30] sm:$0xff]
                %2372 = vst [vmem:[%s2358 + $0x60] sm:$0xff] %v2371
                %v2373 = vld [vmem:[%s2357 + $0x38] sm:$0xff]
                %2374 = vst [vmem:[%s2358 + $0x68] sm:$0xff] %v2373
                %v2375 = vld [vmem:[%s2357 + $0x40] sm:$0xff]
                %2376 = vst [vmem:[%s2358 + $0x80] sm:$0xff] %v2375
                %v2377 = vld [vmem:[%s2357 + $0x48] sm:$0xff]
                %2378 = vst [vmem:[%s2358 + $0x88] sm:$0xff] %v2377
                %v2379 = vld [vmem:[%s2357 + $0x50] sm:$0xff]
                %2380 = vst [vmem:[%s2358 + $0xa0] sm:$0xff] %v2379
                %v2381 = vld [vmem:[%s2357 + $0x58] sm:$0xff]
                %2382 = vst [vmem:[%s2358 + $0xa8] sm:$0xff] %v2381
                %v2383 = vld [vmem:[%s2357 + $0x60] sm:$0xff]
                %2384 = vst [vmem:[%s2358 + $0xc0] sm:$0xff] %v2383
                %v2385 = vld [vmem:[%s2357 + $0x68] sm:$0xff]
                %2386 = vst [vmem:[%s2358 + $0xc8] sm:$0xff] %v2385
                %v2387 = vld [vmem:[%s2357 + $0x70] sm:$0xff]
                %2388 = vst [vmem:[%s2358 + $0xe0] sm:$0xff] %v2387
                %v2389 = vld [vmem:[%s2357 + $0x78] sm:$0xff]
                %2390 = vst [vmem:[%s2358 + $0xe8] sm:$0xff] %v2389
                %v2391 = vld [vmem:[%s2357 + $0x80] sm:$0xff]
                %2392 = vst [vmem:[%s2358 + $0x100] sm:$0xff] %v2391
                %v2393 = vld [vmem:[%s2357 + $0x88] sm:$0xff]
                %2394 = vst [vmem:[%s2358 + $0x108] sm:$0xff] %v2393
                %v2395 = vld [vmem:[%s2357 + $0x90] sm:$0xff]
                %2396 = vst [vmem:[%s2358 + $0x120] sm:$0xff] %v2395
                %v2397 = vld [vmem:[%s2357 + $0x98] sm:$0xff]
                %2398 = vst [vmem:[%s2358 + $0x128] sm:$0xff] %v2397
                %v2399 = vld [vmem:[%s2357 + $0xa0] sm:$0xff]
                %2400 = vst [vmem:[%s2358 + $0x140] sm:$0xff] %v2399
                %v2401 = vld [vmem:[%s2357 + $0xa8] sm:$0xff]
                %2402 = vst [vmem:[%s2358 + $0x148] sm:$0xff] %v2401
                %v2403 = vld [vmem:[%s2357 + $0xb0] sm:$0xff]
                %2404 = vst [vmem:[%s2358 + $0x160] sm:$0xff] %v2403
                %v2405 = vld [vmem:[%s2357 + $0xb8] sm:$0xff]
                %2406 = vst [vmem:[%s2358 + $0x168] sm:$0xff] %v2405
              $region99: #{upsample_net2_forward.5} parent=93 // loop_footer
                %s2356 = sadd.s32 1, %s2352
              $region100: #{upsample_net2_forward.5} parent=93 // loop_footer_branch
                %2351 = sbr.rel target = $region96
              $region101: #{upsample_net2_forward.5} parent=93 // loop_exit
                _
            $region94: #{upsample_net2_forward.5} parent=89 // pred_fallthru
              _
            // Predicated region
            $region102: #{upsample_net2_forward.5} parent=89 // pred_check
              _
            $region103: #{upsample_net2_forward.5} parent=89 // pred_check_branch
              %2408 = sbr.rel target = $region105
            $region104: #{upsample_net2_forward.5} parent=89 // pred_region
              _
            $region105: #{upsample_net2_forward.5} parent=89 // pred_fallthru
              _
          $region90: #{upsample_net2_forward.5} parent=85 // pred_fallthru
            _
          %2409 = vnop
        $region86: #{upsample_net2_forward.5} parent=69 // pred_fallthru
          _
      $region70: #{upsample_net2_forward.5} parent=5 // pred_fallthru
        _
      %p2410 = scmp.le.s32.totalorder 2, %s11
      // Predicated region
      $region106: #{upsample_net2_forward.5} parent=5 // pred_check
        %p2411 = pneg %p2410
      $region107: #{upsample_net2_forward.5} parent=5 // pred_check_branch
        %2413 = sbr.rel (%p2411) target = $region109
      $region108: #{upsample_net2_forward.5} parent=5 // pred_region
        %s2414 = ssub.s32 %s11, 2
        // Predicated region
        $region110: #{upsample_net2_forward.5} parent=108 // pred_check
          %p2415 = pneg %p152
        $region111: #{upsample_net2_forward.5} parent=108 // pred_check_branch
          %2417 = sbr.rel (%p2415) target = $region113
        $region112: #{upsample_net2_forward.5} parent=108 // pred_region
          %s2418 = sand.u32 %s137, 1
          %s2419 = sand.u32 %s137, 1
          %s2420 = smul.addr %s2419, 192
          %s2421 = scalar_lea.vmem [#allocation4], %s2420
        $region113: #{upsample_net2_forward.5} parent=108 // pred_fallthru
          _
      $region109: #{upsample_net2_forward.5} parent=5 // pred_fallthru
        _
    $region6: #{upsample_net2_forward.5} parent=1 // loop_footer
      %s15 = sadd.s32 1, %s11
    $region7: #{upsample_net2_forward.5} parent=1 // loop_footer_branch
      %10 = sbr.rel target = $region3
    $region8: #{upsample_net2_forward.5} parent=1 // loop_exit
      _

// kernel: upsample_net2_forward.6
$region0: #{upsample_net2_forward.6}
  #allocation0 [shape = 'u32[]', space=smem, size = 0x4, offset = 0x4, fixed_abs, tag = 'smem constant byte address 0x4 - core index']
  #allocation1 [shape = 'u32[144,128]{1,0:T(1,128)}', space=vmem, size = 0x12000, scoped, tag = 'internal scratch']
  #allocation2 [shape = 'f32[1]{0:T(128)S(6)}', space=smem, size = 0x200, scoped, tag = 'scoped memory for upsample_net2_forward.6']
  %s0 = inlined_call_operand.vmem [shape: bf16[2,96,1024], index: 0, kind: input, shape index: {}]
  %s1 = inlined_call_operand.vmem [shape: bf16[2,4,96,2], index: 1, kind: input, shape index: {}]
  %s2 = inlined_call_operand.vmem [shape: bf16[390,256], index: 2, kind: input, shape index: {}]
  %s3 = inlined_call_operand.<no memory space> [shape: f32[1], index: 3, kind: input, shape index: {}]
  %s4 = inlined_call_operand.vmem [shape: bf16[2,96,2048], index: 4, kind: output, shape index: {}]
  %s5 = sld [smem:[#allocation0]]
  $region114: #{upsample_net2_forward.6} parent=0
    _
  %s7 = ssub.s32 1, %s5
  %s8 = scalar_select 0, %s7, %s5
  %9 = sst [smem:[#allocation2]] %s3
  $region1: #{upsample_net2_forward.6} parent=0
    #allocation3 [shape = 'u8[98304]{0}', space=vmem, size = 0x18000, scoped, tag = 'input window, operand 0']
    #allocation4 [shape = 'u8[196608]{0}', space=vmem, size = 0x30000, scoped, tag = 'output window, operand 0']
    loop: start=0, step=1, limit=10
    $region2: #{upsample_net2_forward.6} parent=1 // loop_pre_header
      _
    $region3: #{upsample_net2_forward.6} parent=1 // loop_header
      %s11 = sphi 0, %s15
      %p12 = scmp.ge.s32.totalorder %s11, 10
      %s18 = sphi 0, %s30
      %s19 = sphi 0, %s26
      %s20 = sphi 0, %s18
      %s21 = sphi 0, %s19
      %s22 = sphi 0, %s20
      %s23 = sphi 0, %s21
      %s35 = sphi 0, %s37
      %s38 = sphi 0, %s35
      %s39 = sphi 0, %s38
      %s55 = sphi 0, %s39
      %s63 = sphi 0, %s65
      %s66 = sphi 0, %s63
      %s67 = sphi 0, %s66
      %s83 = sphi 0, %s67
      %s87 = sphi 0, %s87
      %s89 = sphi 0, %s87
      %s90 = sphi 0, %s89
      %s104 = sphi 0, %s90
      %s108 = sphi 0, %s108
      %s110 = sphi 0, %s108
      %s111 = sphi 0, %s110
      %s125 = sphi 0, %s111
      %s133 = sphi 0, %s135
      %s136 = sphi 0, %s133
      %s137 = sphi 0, %s136
      %s153 = sphi 0, %s137
    $region4: #{upsample_net2_forward.6} parent=1 // loop_header_branch
      %14 = sbr.rel (%p12) target = $region8
    $region5: #{upsample_net2_forward.6} parent=1 // loop_body
      %s16 = ssub.s32 %s11, 1
      %s17 = ssub.s32 %s11, 2
      %s24 = sadd.s32 1, %s19
      %p25 = scmp.ge.s32.totalorder %s24, 4
      %s26 = scalar_select %p25, 0, %s24
      %s27 = sadd.s32 1, %s18
      %s28 = scalar_select %p25, %s27, %s18
      %p29 = scmp.ge.s32.totalorder %s28, 2
      %s30 = scalar_select %p29, 0, %s28
      %s31 = ssub.s32 %s18, %s30
      %s32 = ssub.s32 %s19, %s26
      %s33 = sor.u32 %s31, %s32
      %p34 = scmp.eq.s32.totalorder %s33, 0
      %s36 = sadd.s32 %s35, 1
      %s37 = scalar_select %p34, %s35, %s36
      %p40 = pneg %p34
      %p41 = scmp.eq.s32.totalorder %s11, 7
      %p42 = por %p40, %p41
      %p43 = scmp.ne.s32.totalorder %s35, %s38
      %p44 = scmp.eq.s32.totalorder %s11, 0
      %p45 = por %p43, %p44
      %p46 = scmp.ne.s32.totalorder %s35, %s38
      %p47 = scmp.eq.s32.totalorder %s16, 7
      %p48 = por %p46, %p47
      %p49 = scmp.ne.s32.totalorder %s38, %s39
      %p50 = scmp.eq.s32.totalorder %s16, 0
      %p51 = por %p49, %p50
      %p52 = scmp.ne.s32.totalorder %s38, %s39
      %p53 = scmp.eq.s32.totalorder %s17, 7
      %p54 = por %p52, %p53
      %p56 = scmp.ne.s32.totalorder %s39, %s55
      %p57 = scmp.eq.s32.totalorder %s17, 0
      %p58 = por %p56, %p57
      %s59 = ssub.s32 %s18, %s30
      %s60 = ssub.s32 %s19, %s26
      %s61 = sor.u32 %s59, %s60
      %p62 = scmp.eq.s32.totalorder %s61, 0
      %s64 = sadd.s32 %s63, 1
      %s65 = scalar_select %p62, %s63, %s64
      %p68 = pneg %p62
      %p69 = scmp.eq.s32.totalorder %s11, 7
      %p70 = por %p68, %p69
      %p71 = scmp.ne.s32.totalorder %s63, %s66
      %p72 = scmp.eq.s32.totalorder %s11, 0
      %p73 = por %p71, %p72
      %p74 = scmp.ne.s32.totalorder %s63, %s66
      %p75 = scmp.eq.s32.totalorder %s16, 7
      %p76 = por %p74, %p75
      %p77 = scmp.ne.s32.totalorder %s66, %s67
      %p78 = scmp.eq.s32.totalorder %s16, 0
      %p79 = por %p77, %p78
      %p80 = scmp.ne.s32.totalorder %s66, %s67
      %p81 = scmp.eq.s32.totalorder %s17, 7
      %p82 = por %p80, %p81
      %p84 = scmp.ne.s32.totalorder %s67, %s83
      %p85 = scmp.eq.s32.totalorder %s17, 0
      %p86 = por %p84, %p85
      %s88 = sadd.s32 %s87, 1
      %p91 = scmp.eq.s32.totalorder %s11, 7
      %p92 = scmp.ne.s32.totalorder %s87, %s89
      %p93 = scmp.eq.s32.totalorder %s11, 0
      %p94 = por %p92, %p93
      %p95 = scmp.ne.s32.totalorder %s87, %s89
      %p96 = scmp.eq.s32.totalorder %s16, 7
      %p97 = por %p95, %p96
      %p98 = scmp.ne.s32.totalorder %s89, %s90
      %p99 = scmp.eq.s32.totalorder %s16, 0
      %p100 = por %p98, %p99
      %p101 = scmp.ne.s32.totalorder %s89, %s90
      %p102 = scmp.eq.s32.totalorder %s17, 7
      %p103 = por %p101, %p102
      %p105 = scmp.ne.s32.totalorder %s90, %s104
      %p106 = scmp.eq.s32.totalorder %s17, 0
      %p107 = por %p105, %p106
      %s109 = sadd.s32 %s108, 1
      %p112 = scmp.eq.s32.totalorder %s11, 7
      %p113 = scmp.ne.s32.totalorder %s108, %s110
      %p114 = scmp.eq.s32.totalorder %s11, 0
      %p115 = por %p113, %p114
      %p116 = scmp.ne.s32.totalorder %s108, %s110
      %p117 = scmp.eq.s32.totalorder %s16, 7
      %p118 = por %p116, %p117
      %p119 = scmp.ne.s32.totalorder %s110, %s111
      %p120 = scmp.eq.s32.totalorder %s16, 0
      %p121 = por %p119, %p120
      %p122 = scmp.ne.s32.totalorder %s110, %s111
      %p123 = scmp.eq.s32.totalorder %s17, 7
      %p124 = por %p122, %p123
      %p126 = scmp.ne.s32.totalorder %s111, %s125
      %p127 = scmp.eq.s32.totalorder %s17, 0
      %p128 = por %p126, %p127
      %s129 = ssub.s32 %s18, %s30
      %s130 = ssub.s32 %s19, %s26
      %s131 = sor.u32 %s129, %s130
      %p132 = scmp.eq.s32.totalorder %s131, 0
      %s134 = sadd.s32 %s133, 1
      %s135 = scalar_select %p132, %s133, %s134
      %p138 = pneg %p132
      %p139 = scmp.eq.s32.totalorder %s11, 7
      %p140 = por %p138, %p139
      %p141 = scmp.ne.s32.totalorder %s133, %s136
      %p142 = scmp.eq.s32.totalorder %s11, 0
      %p143 = por %p141, %p142
      %p144 = scmp.ne.s32.totalorder %s133, %s136
      %p145 = scmp.eq.s32.totalorder %s16, 7
      %p146 = por %p144, %p145
      %p147 = scmp.ne.s32.totalorder %s136, %s137
      %p148 = scmp.eq.s32.totalorder %s16, 0
      %p149 = por %p147, %p148
      %p150 = scmp.ne.s32.totalorder %s136, %s137
      %p151 = scmp.eq.s32.totalorder %s17, 7
      %p152 = por %p150, %p151
      %p154 = scmp.ne.s32.totalorder %s137, %s153
      %p155 = scmp.eq.s32.totalorder %s17, 0
      %p156 = por %p154, %p155
      %p157 = scmp.le.s32.totalorder 1, %s11
      %p158 = scmp.lt.s32.totalorder %s11, 9
      %p159 = pnand %p157, %p158
      %p160 = pneg %p159
      // Predicated region
      $region9: #{upsample_net2_forward.6} parent=5 // pred_check
        _
      $region10: #{upsample_net2_forward.6} parent=5 // pred_check_branch
        %162 = sbr.rel (%p159) target = $region12
      $region11: #{upsample_net2_forward.6} parent=5 // pred_region
        %s163 = ssub.s32 %s11, 1
        // Predicated region
        $region13: #{upsample_net2_forward.6} parent=11 // pred_check
          %p164 = pneg %p100
        $region14: #{upsample_net2_forward.6} parent=11 // pred_check_branch
          %166 = sbr.rel (%p164) target = $region16
        $region15: #{upsample_net2_forward.6} parent=11 // pred_region
          _
        $region16: #{upsample_net2_forward.6} parent=11 // pred_fallthru
          _
        // Predicated region
        $region17: #{upsample_net2_forward.6} parent=11 // pred_check
          %p167 = pneg %p121
        $region18: #{upsample_net2_forward.6} parent=11 // pred_check_branch
          %169 = sbr.rel (%p167) target = $region20
        $region19: #{upsample_net2_forward.6} parent=11 // pred_region
          _
        $region20: #{upsample_net2_forward.6} parent=11 // pred_fallthru
          _
      $region12: #{upsample_net2_forward.6} parent=5 // pred_fallthru
        _
      %p170 = scmp.lt.s32.totalorder %s11, 8
      // Predicated region
      $region21: #{upsample_net2_forward.6} parent=5 // pred_check
        %p171 = pneg %p170
      $region22: #{upsample_net2_forward.6} parent=5 // pred_check_branch
        %173 = sbr.rel (%p171) target = $region24
      $region23: #{upsample_net2_forward.6} parent=5 // pred_region
        // Predicated region
        $region25: #{upsample_net2_forward.6} parent=23 // pred_check
          %p174 = pneg %p45
        $region26: #{upsample_net2_forward.6} parent=23 // pred_check_branch
          %176 = sbr.rel (%p174) target = $region28
        $region27: #{upsample_net2_forward.6} parent=23 // pred_region
          %s177 = sand.u32 %s35, 1
          %s178 = sand.u32 %s35, 1
          %s179 = smul.addr %s178, 96
          %s180 = scalar_lea.vmem [#allocation3], %s179
          %s181 = smul.u32 2, %s19
          %s182 = smul.addr %s18, 96
          %s183 = sadd.s32 %s181, %s182
          %s184 = smul.addr %s183, 4
          %s185 = scalar_lea.vmem %s0, %s184
          // Predicated region
          $region29: #{upsample_net2_forward.6} parent=27 // pred_check
            _
          $region30: #{upsample_net2_forward.6} parent=27 // pred_check_branch
            %187 = sbr.rel (0) target = $region32
          $region31: #{upsample_net2_forward.6} parent=27 // pred_region
            // Predicated region
            $region33: #{upsample_net2_forward.6} parent=31 // pred_check
              _
            $region34: #{upsample_net2_forward.6} parent=31 // pred_check_branch
              %189 = sbr.rel (0) target = $region36
            $region35: #{upsample_net2_forward.6} parent=31 // pred_region
              // Predicated region
              $region48: #{upsample_net2_forward.6} parent=35 // pred_check
                _
              $region49: #{upsample_net2_forward.6} parent=35 // pred_check_branch
                %226 = sbr.rel (0) target = $region51
              $region50: #{upsample_net2_forward.6} parent=35 // pred_region
                loop: start=0, step=1, limit=1
                $region52: #{upsample_net2_forward.6} parent=50 // loop_pre_header
                  _
                $region53: #{upsample_net2_forward.6} parent=50 // loop_header
                  %s228 = sphi 0, %s232
                  %p229 = scmp.ge.s32.totalorder %s228, 1
                  %s233 = sphi %s185, %s185
                  %s234 = sphi %s180, %s180
                $region54: #{upsample_net2_forward.6} parent=50 // loop_header_branch
                  %231 = sbr.rel (%p229) target = $region58
                $region55: #{upsample_net2_forward.6} parent=50 // loop_body
                  %v235 = vld [vmem:[%s233] sm:$0xff]
                  %236 = vst [vmem:[%s234] sm:$0xff] %v235
                  %v237 = vld [vmem:[%s233 + $0x20] sm:$0xff]
                  %238 = vst [vmem:[%s234 + $0x8] sm:$0xff] %v237
                  %v239 = vld [vmem:[%s233 + $0x40] sm:$0xff]
                  %240 = vst [vmem:[%s234 + $0x10] sm:$0xff] %v239
                  %v241 = vld [vmem:[%s233 + $0x60] sm:$0xff]
                  %242 = vst [vmem:[%s234 + $0x18] sm:$0xff] %v241
                  %v243 = vld [vmem:[%s233 + $0x80] sm:$0xff]
                  %244 = vst [vmem:[%s234 + $0x20] sm:$0xff] %v243
                  %v245 = vld [vmem:[%s233 + $0xa0] sm:$0xff]
                  %246 = vst [vmem:[%s234 + $0x28] sm:$0xff] %v245
                  %v247 = vld [vmem:[%s233 + $0xc0] sm:$0xff]
                  %248 = vst [vmem:[%s234 + $0x30] sm:$0xff] %v247
                  %v249 = vld [vmem:[%s233 + $0xe0] sm:$0xff]
                  %250 = vst [vmem:[%s234 + $0x38] sm:$0xff] %v249
                  %v251 = vld [vmem:[%s233 + $0x100] sm:$0xff]
                  %252 = vst [vmem:[%s234 + $0x40] sm:$0xff] %v251
                  %v253 = vld [vmem:[%s233 + $0x120] sm:$0xff]
                  %254 = vst [vmem:[%s234 + $0x48] sm:$0xff] %v253
                  %v255 = vld [vmem:[%s233 + $0x140] sm:$0xff]
                  %256 = vst [vmem:[%s234 + $0x50] sm:$0xff] %v255
                  %v257 = vld [vmem:[%s233 + $0x160] sm:$0xff]
                  %258 = vst [vmem:[%s234 + $0x58] sm:$0xff] %v257
                $region56: #{upsample_net2_forward.6} parent=50 // loop_footer
                  %s232 = sadd.s32 1, %s228
                $region57: #{upsample_net2_forward.6} parent=50 // loop_footer_branch
                  %227 = sbr.rel target = $region53
                $region58: #{upsample_net2_forward.6} parent=50 // loop_exit
                  _
              $region51: #{upsample_net2_forward.6} parent=35 // pred_fallthru
                _
              // Predicated region
              $region59: #{upsample_net2_forward.6} parent=35 // pred_check
                _
              $region60: #{upsample_net2_forward.6} parent=35 // pred_check_branch
                %260 = sbr.rel target = $region62
              $region61: #{upsample_net2_forward.6} parent=35 // pred_region
                _
              $region62: #{upsample_net2_forward.6} parent=35 // pred_fallthru
                _
            $region36: #{upsample_net2_forward.6} parent=31 // pred_fallthru
              _
            // Predicated region
            $region37: #{upsample_net2_forward.6} parent=31 // pred_check
              _
            $region38: #{upsample_net2_forward.6} parent=31 // pred_check_branch
              %191 = sbr.rel target = $region40
            $region39: #{upsample_net2_forward.6} parent=31 // pred_region
              loop: start=0, step=1, limit=1
              $region41: #{upsample_net2_forward.6} parent=39 // loop_pre_header
                _
              $region42: #{upsample_net2_forward.6} parent=39 // loop_header
                %s194 = sphi 0, %s198
                %p195 = scmp.ge.s32.totalorder %s194, 1
                %s199 = sphi %s185, %s185
                %s200 = sphi %s180, %s180
              $region43: #{upsample_net2_forward.6} parent=39 // loop_header_branch
                %197 = sbr.rel (%p195) target = $region47
              $region44: #{upsample_net2_forward.6} parent=39 // loop_body
                %v201 = vld [vmem:[%s199] sm:$0xff]
                %202 = vst [vmem:[%s200] sm:$0xff] %v201
                %v203 = vld [vmem:[%s199 + $0x20] sm:$0xff]
                %204 = vst [vmem:[%s200 + $0x8] sm:$0xff] %v203
                %v205 = vld [vmem:[%s199 + $0x40] sm:$0xff]
                %206 = vst [vmem:[%s200 + $0x10] sm:$0xff] %v205
                %v207 = vld [vmem:[%s199 + $0x60] sm:$0xff]
                %208 = vst [vmem:[%s200 + $0x18] sm:$0xff] %v207
                %v209 = vld [vmem:[%s199 + $0x80] sm:$0xff]
                %210 = vst [vmem:[%s200 + $0x20] sm:$0xff] %v209
                %v211 = vld [vmem:[%s199 + $0xa0] sm:$0xff]
                %212 = vst [vmem:[%s200 + $0x28] sm:$0xff] %v211
                %v213 = vld [vmem:[%s199 + $0xc0] sm:$0xff]
                %214 = vst [vmem:[%s200 + $0x30] sm:$0xff] %v213
                %v215 = vld [vmem:[%s199 + $0xe0] sm:$0xff]
                %216 = vst [vmem:[%s200 + $0x38] sm:$0xff] %v215
                %v217 = vld [vmem:[%s199 + $0x100] sm:$0xff]
                %218 = vst [vmem:[%s200 + $0x40] sm:$0xff] %v217
                %v219 = vld [vmem:[%s199 + $0x120] sm:$0xff]
                %220 = vst [vmem:[%s200 + $0x48] sm:$0xff] %v219
                %v221 = vld [vmem:[%s199 + $0x140] sm:$0xff]
                %222 = vst [vmem:[%s200 + $0x50] sm:$0xff] %v221
                %v223 = vld [vmem:[%s199 + $0x160] sm:$0xff]
                %224 = vst [vmem:[%s200 + $0x58] sm:$0xff] %v223
              $region45: #{upsample_net2_forward.6} parent=39 // loop_footer
                %s198 = sadd.s32 1, %s194
              $region46: #{upsample_net2_forward.6} parent=39 // loop_footer_branch
                %193 = sbr.rel target = $region42
              $region47: #{upsample_net2_forward.6} parent=39 // loop_exit
                _
            $region40: #{upsample_net2_forward.6} parent=31 // pred_fallthru
              _
          $region32: #{upsample_net2_forward.6} parent=27 // pred_fallthru
            _
          %261 = vnop
        $region28: #{upsample_net2_forward.6} parent=23 // pred_fallthru
          _
        // Predicated region
        $region63: #{upsample_net2_forward.6} parent=23 // pred_check
          %p262 = pneg %p73
        $region64: #{upsample_net2_forward.6} parent=23 // pred_check_branch
          %264 = sbr.rel (%p262) target = $region66
        $region65: #{upsample_net2_forward.6} parent=23 // pred_region
          %p265 = scmp.lt.s32.totalorder %s18, 1
          %s266 = scalar_select %p265, %s18, 1
          %p267 = scmp.lt.s32.totalorder %s19, 3
          %s268 = scalar_select %p267, %s19, 3
          %s269 = smul.addr %s268, 12
          %s270 = smul.addr %s266, 48
          %s271 = sadd.s32 %s269, %s270
          %s272 = smul.addr %s271, 4
          %s273 = scalar_lea.vmem %s1, %s272
        $region66: #{upsample_net2_forward.6} parent=23 // pred_fallthru
          _
      $region24: #{upsample_net2_forward.6} parent=5 // pred_fallthru
        _
      %p274 = scmp.le.s32.totalorder 1, %s11
      %p275 = scmp.lt.s32.totalorder %s11, 9
      %p276 = pnand %p274, %p275
      %p277 = pneg %p276
      // Predicated region
      $region67: #{upsample_net2_forward.6} parent=5 // pred_check
        _
      $region68: #{upsample_net2_forward.6} parent=5 // pred_check_branch
        %279 = sbr.rel (%p276) target = $region70
      $region69: #{upsample_net2_forward.6} parent=5 // pred_region
        %s280 = ssub.s32 %s11, 1
        %s281 = sand.u32 %s38, 1
        %s282 = sand.u32 %s38, 1
        %s283 = smul.addr %s282, 96
        %s284 = scalar_lea.vmem [#allocation3], %s283
        // Predicated region
        $region71: #{upsample_net2_forward.6} parent=69 // pred_check
          %p285 = pneg %p51
        $region72: #{upsample_net2_forward.6} parent=69 // pred_check_branch
          %287 = sbr.rel (%p285) target = $region74
        $region73: #{upsample_net2_forward.6} parent=69 // pred_region
          _
        $region74: #{upsample_net2_forward.6} parent=69 // pred_fallthru
          _
        %s288 = sand.u32 %s38, 1
        %s289 = sand.u32 %s38, 1
        %s290 = smul.addr %s289, 96
        %s291 = scalar_lea.vmem [#allocation3], %s290
        %p292 = pneg %p51
        %p293 = pneg %p48
        %p294 = scmp.lt.s32.totalorder %s20, 1
        %s295 = scalar_select %p294, %s20, 1
        %p296 = scmp.lt.s32.totalorder %s21, 3
        %s297 = scalar_select %p296, %s21, 3
        %s298 = smul.addr %s297, 12
        %s299 = smul.addr %s295, 48
        %s300 = sadd.s32 %s298, %s299
        %s301 = smul.addr %s300, 4
        %s302 = scalar_lea.vmem %s1, %s301
        %p303 = pneg %p79
        %p304 = pneg %p76
        %p305 = pneg %p100
        %p306 = pneg %p97
        %p307 = pneg %p121
        %p308 = pneg %p118
        %p309 = pneg %p149
        %p310 = pneg %p146
        %s311 = sand.u32 %s136, 1
        %s312 = sand.u32 %s136, 1
        %s313 = smul.addr %s312, 192
        %s314 = scalar_lea.vmem [#allocation4], %s313
        %s315 = smul.u32 2, %s21
        %p316 = scmp.lt.s32.totalorder %s20, 1
        %s317 = scalar_select %p316, %s20, 1
        %p318 = scmp.lt.s32.totalorder %s21, 3
        %s319 = scalar_select %p318, %s21, 3
        %s320 = smul.addr %s319, 12
        %s321 = smul.addr %s317, 48
        %s322 = sadd.s32 %s320, %s321
        %s323 = smul.addr %s322, 4
        %s324 = scalar_lea.vmem %s1, %s323
        %s325 = smul.u32 4, %s21
        %v327 = vld [vmem:[%s284] sm:$0xff]
        %v328 = vld [vmem:[%s284 + $0x8] sm:$0xff]
        %v329 = vld [vmem:[%s284 + $0x10] sm:$0xff]
        %v330 = vld [vmem:[%s284 + $0x18] sm:$0xff]
        %v331 = vld [vmem:[%s284 + $0x20] sm:$0xff]
        %v332 = vld [vmem:[%s284 + $0x28] sm:$0xff]
        %v333 = vld [vmem:[%s284 + $0x30] sm:$0xff]
        %v334 = vld [vmem:[%s284 + $0x38] sm:$0xff]
        %v335 = vld [vmem:[%s284 + $0x40] sm:$0xff]
        %v336 = vld [vmem:[%s284 + $0x48] sm:$0xff]
        %v337 = vld [vmem:[%s284 + $0x50] sm:$0xff]
        %v338 = vld [vmem:[%s284 + $0x58] sm:$0xff]
        %v339 = vld [vmem:[%s324] sm:$0xf]
        %v340 = vld [vmem:[%s324 + $0x4] sm:$0xf]
        %v341 = vld [vmem:[%s324 + $0x8] sm:$0xf]
        %v342 = vld [vmem:[%s324 + $0xc] sm:$0xf]
        %v343 = vld [vmem:[%s324 + $0x10] sm:$0xf]
        %v344 = vld [vmem:[%s324 + $0x14] sm:$0xf]
        %v345 = vld [vmem:[%s324 + $0x18] sm:$0xf]
        %v346 = vld [vmem:[%s324 + $0x1c] sm:$0xf]
        %v347 = vld [vmem:[%s324 + $0x20] sm:$0xf]
        %v348 = vld [vmem:[%s324 + $0x24] sm:$0xf]
        %v349 = vld [vmem:[%s324 + $0x28] sm:$0xf]
        %v350 = vld [vmem:[%s324 + $0x2c] sm:$0xf]
        %v363 = vunpack.c.l.b16 %v327
        %v364 = vunpack.c.l.b16 %v328
        %v365 = vunpack.c.l.b16 %v329
        %v366 = vunpack.c.l.b16 %v330
        %v367 = vunpack.c.l.b16 %v331
        %v368 = vunpack.c.l.b16 %v332
        %v369 = vunpack.c.l.b16 %v333
        %v370 = vunpack.c.l.b16 %v334
        %v371 = vunpack.c.l.b16 %v335
        %v372 = vunpack.c.l.b16 %v336
        %v373 = vunpack.c.l.b16 %v337
        %v374 = vunpack.c.l.b16 %v338
        %v375 = vpack.c.b16 %v364, %v363
        %v376 = vpack.c.b16 %v366, %v365
        %v377 = vpack.c.b16 %v368, %v367
        %v378 = vpack.c.b16 %v370, %v369
        %v379 = vpack.c.b16 %v372, %v371
        %v380 = vpack.c.b16 %v374, %v373
        %v393 = vunpack.c.l.b16 %v339
        %v394 = vunpack.c.l.b16 %v340
        %v395 = vunpack.c.l.b16 %v341
        %v396 = vunpack.c.l.b16 %v342
        %v397 = vunpack.c.l.b16 %v343
        %v398 = vunpack.c.l.b16 %v344
        %v399 = vunpack.c.l.b16 %v345
        %v400 = vunpack.c.l.b16 %v346
        %v401 = vunpack.c.l.b16 %v347
        %v402 = vunpack.c.l.b16 %v348
        %v403 = vunpack.c.l.b16 %v349
        %v404 = vunpack.c.l.b16 %v350
        %v405 = vpack.c.b16 %v394, %v393
        %v406 = vpack.c.b16 %v396, %v395
        %v407 = vpack.c.b16 %v398, %v397
        %v408 = vpack.c.b16 %v400, %v399
        %v409 = vpack.c.b16 %v402, %v401
        %v410 = vpack.c.b16 %v404, %v403
        %v411 = vunpack.c.h.b16 %v327
        %v412 = vunpack.c.h.b16 %v328
        %v413 = vunpack.c.h.b16 %v329
        %v414 = vunpack.c.h.b16 %v330
        %v415 = vunpack.c.h.b16 %v331
        %v416 = vunpack.c.h.b16 %v332
        %v417 = vunpack.c.h.b16 %v333
        %v418 = vunpack.c.h.b16 %v334
        %v419 = vunpack.c.h.b16 %v335
        %v420 = vunpack.c.h.b16 %v336
        %v421 = vunpack.c.h.b16 %v337
        %v422 = vunpack.c.h.b16 %v338
        %v423 = vpack.c.b16 %v412, %v411
        %v424 = vpack.c.b16 %v414, %v413
        %v425 = vpack.c.b16 %v416, %v415
        %v426 = vpack.c.b16 %v418, %v417
        %v427 = vpack.c.b16 %v420, %v419
        %v428 = vpack.c.b16 %v422, %v421
        %429 = vrot.lane.b32.xlu0 %v423, 1
        %v430 = vpop.permute.xlu0 %429
        %431 = vrot.lane.b32.xlu0 %v424, 1
        %v432 = vpop.permute.xlu0 %431
        %433 = vrot.lane.b32.xlu0 %v425, 1
        %v434 = vpop.permute.xlu0 %433
        %435 = vrot.lane.b32.xlu0 %v426, 1
        %v436 = vpop.permute.xlu0 %435
        %437 = vrot.lane.b32.xlu0 %v427, 1
        %v438 = vpop.permute.xlu0 %437
        %439 = vrot.lane.b32.xlu0 %v428, 1
        %v440 = vpop.permute.xlu0 %439
        %vm441 = vcmask 7168
        %v444 = vsel %vm441, %v405, %v430
        %v447 = vsel %vm441, %v406, %v432
        %v450 = vsel %vm441, %v407, %v434
        %v453 = vsel %vm441, %v408, %v436
        %v456 = vsel %vm441, %v409, %v438
        %v459 = vsel %vm441, %v410, %v440
        %460 = vrot.lane.b32.xlu0 %v375, 1
        %v461 = vpop.permute.xlu0 %460
        %462 = vrot.lane.b32.xlu0 %v376, 1
        %v463 = vpop.permute.xlu0 %462
        %464 = vrot.lane.b32.xlu0 %v377, 1
        %v465 = vpop.permute.xlu0 %464
        %466 = vrot.lane.b32.xlu0 %v378, 1
        %v467 = vpop.permute.xlu0 %466
        %468 = vrot.lane.b32.xlu0 %v379, 1
        %v469 = vpop.permute.xlu0 %468
        %470 = vrot.lane.b32.xlu0 %v380, 1
        %v471 = vpop.permute.xlu0 %470
        %v473 = vsel %vm441, %v461, %v405
        %v475 = vsel %vm441, %v463, %v406
        %v477 = vsel %vm441, %v465, %v407
        %v479 = vsel %vm441, %v467, %v408
        %v481 = vsel %vm441, %v469, %v409
        %v483 = vsel %vm441, %v471, %v410
        %vm484 = vsmask.f32 7424
        %v486 = vshrl.u32 %v375, 16
        %v488 = vshll.u32 %v375, 16
        %v490 = vrot.slane %v488, 1
        %v491 = vor.u32 %v486, %v490
        %v493 = vshll.u32 %v376, 16
        %v495 = vrot.slane %v493, 1
        %v496 = vsel %vm484, %v491, %v495
        %v497 = vshrl.u32 %v444, 16
        %v499 = vshll.u32 %v444, 16
        %v501 = vrot.slane %v499, 1
        %v502 = vor.u32 %v497, %v501
        %v503 = vshll.u32 %v447, 16
        %v505 = vrot.slane %v503, 1
        %v506 = vsel %vm484, %v502, %v505
        %v507 = vshrl.u32 %v376, 16
        %v509 = vor.u32 %v507, %v495
        %v511 = vshll.u32 %v377, 16
        %v513 = vrot.slane %v511, 1
        %v514 = vsel %vm484, %v509, %v513
        %v515 = vshrl.u32 %v447, 16
        %v517 = vor.u32 %v515, %v505
        %v518 = vshll.u32 %v450, 16
        %v520 = vrot.slane %v518, 1
        %v521 = vsel %vm484, %v517, %v520
        %v522 = vshrl.u32 %v377, 16
        %v524 = vor.u32 %v522, %v513
        %v526 = vshll.u32 %v378, 16
        %v528 = vrot.slane %v526, 1
        %v529 = vsel %vm484, %v524, %v528
        %v530 = vshrl.u32 %v450, 16
        %v532 = vor.u32 %v530, %v520
        %v533 = vshll.u32 %v453, 16
        %v535 = vrot.slane %v533, 1
        %v536 = vsel %vm484, %v532, %v535
        %v537 = vshrl.u32 %v378, 16
        %v539 = vor.u32 %v537, %v528
        %v541 = vshll.u32 %v379, 16
        %v543 = vrot.slane %v541, 1
        %v544 = vsel %vm484, %v539, %v543
        %v545 = vshrl.u32 %v453, 16
        %v547 = vor.u32 %v545, %v535
        %v548 = vshll.u32 %v456, 16
        %v550 = vrot.slane %v548, 1
        %v551 = vsel %vm484, %v547, %v550
        %v552 = vshrl.u32 %v379, 16
        %v554 = vor.u32 %v552, %v543
        %v556 = vshll.u32 %v380, 16
        %v558 = vrot.slane %v556, 1
        %v559 = vsel %vm484, %v554, %v558
        %v560 = vshrl.u32 %v456, 16
        %v562 = vor.u32 %v560, %v550
        %v563 = vshll.u32 %v459, 16
        %v565 = vrot.slane %v563, 1
        %v566 = vsel %vm484, %v562, %v565
        %v567 = vshrl.u32 %v380, 16
        %v569 = vor.u32 %v567, %v558
        %v571 = vshll.u32 %v423, 16
        %v573 = vrot.slane %v571, 1
        %v574 = vsel %vm484, %v569, %v573
        %v575 = vshrl.u32 %v459, 16
        %v577 = vor.u32 %v575, %v565
        %v578 = vshll.u32 %v473, 16
        %v580 = vrot.slane %v578, 1
        %v581 = vsel %vm484, %v577, %v580
        %v582 = vshrl.u32 %v423, 16
        %v584 = vor.u32 %v582, %v573
        %v586 = vshll.u32 %v424, 16
        %v588 = vrot.slane %v586, 1
        %v589 = vsel %vm484, %v584, %v588
        %v590 = vshrl.u32 %v473, 16
        %v592 = vor.u32 %v590, %v580
        %v593 = vshll.u32 %v475, 16
        %v595 = vrot.slane %v593, 1
        %v596 = vsel %vm484, %v592, %v595
        %v597 = vshrl.u32 %v424, 16
        %v599 = vor.u32 %v597, %v588
        %v601 = vshll.u32 %v425, 16
        %v603 = vrot.slane %v601, 1
        %v604 = vsel %vm484, %v599, %v603
        %v605 = vshrl.u32 %v475, 16
        %v607 = vor.u32 %v605, %v595
        %v608 = vshll.u32 %v477, 16
        %v610 = vrot.slane %v608, 1
        %v611 = vsel %vm484, %v607, %v610
        %v612 = vshrl.u32 %v425, 16
        %v614 = vor.u32 %v612, %v603
        %v616 = vshll.u32 %v426, 16
        %v618 = vrot.slane %v616, 1
        %v619 = vsel %vm484, %v614, %v618
        %v620 = vshrl.u32 %v477, 16
        %v622 = vor.u32 %v620, %v610
        %v623 = vshll.u32 %v479, 16
        %v625 = vrot.slane %v623, 1
        %v626 = vsel %vm484, %v622, %v625
        %v627 = vshrl.u32 %v426, 16
        %v629 = vor.u32 %v627, %v618
        %v631 = vshll.u32 %v427, 16
        %v633 = vrot.slane %v631, 1
        %v634 = vsel %vm484, %v629, %v633
        %v635 = vshrl.u32 %v479, 16
        %v637 = vor.u32 %v635, %v625
        %v638 = vshll.u32 %v481, 16
        %v640 = vrot.slane %v638, 1
        %v641 = vsel %vm484, %v637, %v640
        %v642 = vshrl.u32 %v427, 16
        %v644 = vor.u32 %v642, %v633
        %v646 = vshll.u32 %v428, 16
        %v648 = vrot.slane %v646, 1
        %v649 = vsel %vm484, %v644, %v648
        %v650 = vshrl.u32 %v481, 16
        %v652 = vor.u32 %v650, %v640
        %v653 = vshll.u32 %v483, 16
        %v655 = vrot.slane %v653, 1
        %v656 = vsel %vm484, %v652, %v655
        %v657 = vshrl.u32 %v428, 16
        %v659 = vor.u32 %v657, %v648
        %v660 = vshrl.u32 %v483, 16
        %v662 = vor.u32 %v660, %v655
        %vm676 = vcmask 1047552
        %vm677 = vmand %vm676, %vm484
        %v678 = vsel %vm677, %v659, 0
        %v679 = vsel %vm677, %v662, 0
        %vm680 = vsmask.f32 256
        %v681 = vrot.slane %v486, 7
        %v682 = vor.u32 %v681, %v488
        %v683 = vrot.slane %v497, 7
        %v684 = vor.u32 %v683, %v499
        %v685 = vrot.slane %v507, 7
        %v686 = vor.u32 %v685, %v493
        %v687 = vsel %vm680, %v681, %v686
        %v688 = vrot.slane %v515, 7
        %v689 = vor.u32 %v688, %v503
        %v690 = vsel %vm680, %v683, %v689
        %v691 = vrot.slane %v522, 7
        %v692 = vor.u32 %v691, %v511
        %v693 = vsel %vm680, %v685, %v692
        %v694 = vrot.slane %v530, 7
        %v695 = vor.u32 %v694, %v518
        %v696 = vsel %vm680, %v688, %v695
        %v697 = vrot.slane %v537, 7
        %v698 = vor.u32 %v697, %v526
        %v699 = vsel %vm680, %v691, %v698
        %v700 = vrot.slane %v545, 7
        %v701 = vor.u32 %v700, %v533
        %v702 = vsel %vm680, %v694, %v701
        %v703 = vrot.slane %v552, 7
        %v704 = vor.u32 %v703, %v541
        %v705 = vsel %vm680, %v697, %v704
        %v706 = vrot.slane %v560, 7
        %v707 = vor.u32 %v706, %v548
        %v708 = vsel %vm680, %v700, %v707
        %v709 = vrot.slane %v567, 7
        %v710 = vor.u32 %v709, %v556
        %v711 = vsel %vm680, %v703, %v710
        %v712 = vrot.slane %v575, 7
        %v713 = vor.u32 %v712, %v563
        %v714 = vsel %vm680, %v706, %v713
        %v715 = vrot.slane %v582, 7
        %v716 = vor.u32 %v715, %v571
        %v717 = vsel %vm680, %v709, %v716
        %v718 = vrot.slane %v590, 7
        %v719 = vor.u32 %v718, %v578
        %v720 = vsel %vm680, %v712, %v719
        %v721 = vrot.slane %v597, 7
        %v722 = vor.u32 %v721, %v586
        %v723 = vsel %vm680, %v715, %v722
        %v724 = vrot.slane %v605, 7
        %v725 = vor.u32 %v724, %v593
        %v726 = vsel %vm680, %v718, %v725
        %v727 = vrot.slane %v612, 7
        %v728 = vor.u32 %v727, %v601
        %v729 = vsel %vm680, %v721, %v728
        %v730 = vrot.slane %v620, 7
        %v731 = vor.u32 %v730, %v608
        %v732 = vsel %vm680, %v724, %v731
        %v733 = vrot.slane %v627, 7
        %v734 = vor.u32 %v733, %v616
        %v735 = vsel %vm680, %v727, %v734
        %v736 = vrot.slane %v635, 7
        %v737 = vor.u32 %v736, %v623
        %v738 = vsel %vm680, %v730, %v737
        %v739 = vrot.slane %v642, 7
        %v740 = vor.u32 %v739, %v631
        %v741 = vsel %vm680, %v733, %v740
        %v742 = vrot.slane %v650, 7
        %v743 = vor.u32 %v742, %v638
        %v744 = vsel %vm680, %v736, %v743
        %v745 = vrot.slane %v657, 7
        %v746 = vor.u32 %v745, %v646
        %v747 = vsel %vm680, %v739, %v746
        %v748 = vrot.slane %v660, 7
        %v749 = vor.u32 %v748, %v653
        %v750 = vsel %vm680, %v742, %v749
        %vm753 = vcmask 1040384
        %vm754 = vmand %vm753, %vm680
        %v755 = vsel %vm754, 0, %v682
        %v756 = vsel %vm754, 0, %v684
        %769 = vrot.lane.b32.xlu0 %v375, 2
        %v770 = vpop.permute.xlu0 %769
        %771 = vrot.lane.b32.xlu0 %v444, 2
        %v772 = vpop.permute.xlu0 %771
        %773 = vrot.lane.b32.xlu0 %v376, 2
        %v774 = vpop.permute.xlu0 %773
        %775 = vrot.lane.b32.xlu0 %v447, 2
        %v776 = vpop.permute.xlu0 %775
        %777 = vrot.lane.b32.xlu0 %v377, 2
        %v778 = vpop.permute.xlu0 %777
        %779 = vrot.lane.b32.xlu0 %v450, 2
        %v780 = vpop.permute.xlu0 %779
        %781 = vrot.lane.b32.xlu0 %v378, 2
        %v782 = vpop.permute.xlu0 %781
        %783 = vrot.lane.b32.xlu0 %v453, 2
        %v784 = vpop.permute.xlu0 %783
        %785 = vrot.lane.b32.xlu0 %v379, 2
        %v786 = vpop.permute.xlu0 %785
        %787 = vrot.lane.b32.xlu0 %v456, 2
        %v788 = vpop.permute.xlu0 %787
        %789 = vrot.lane.b32.xlu0 %v380, 2
        %v790 = vpop.permute.xlu0 %789
        %791 = vrot.lane.b32.xlu0 %v459, 2
        %v792 = vpop.permute.xlu0 %791
        %793 = vrot.lane.b32.xlu0 %v423, 2
        %v794 = vpop.permute.xlu0 %793
        %795 = vrot.lane.b32.xlu0 %v473, 2
        %v796 = vpop.permute.xlu0 %795
        %797 = vrot.lane.b32.xlu0 %v424, 2
        %v798 = vpop.permute.xlu0 %797
        %799 = vrot.lane.b32.xlu0 %v475, 2
        %v800 = vpop.permute.xlu0 %799
        %801 = vrot.lane.b32.xlu0 %v425, 2
        %v802 = vpop.permute.xlu0 %801
        %803 = vrot.lane.b32.xlu0 %v477, 2
        %v804 = vpop.permute.xlu0 %803
        %805 = vrot.lane.b32.xlu0 %v426, 2
        %v806 = vpop.permute.xlu0 %805
        %807 = vrot.lane.b32.xlu0 %v479, 2
        %v808 = vpop.permute.xlu0 %807
        %809 = vrot.lane.b32.xlu0 %v427, 2
        %v810 = vpop.permute.xlu0 %809
        %811 = vrot.lane.b32.xlu0 %v481, 2
        %v812 = vpop.permute.xlu0 %811
        %813 = vrot.lane.b32.xlu0 %v428, 2
        %v814 = vpop.permute.xlu0 %813
        %815 = vrot.lane.b32.xlu0 %v483, 2
        %v816 = vpop.permute.xlu0 %815
        %vm817 = vcmask 15360
        %v818 = vsel %vm817, %v770, %v772
        %v819 = vsel %vm817, %v774, %v776
        %v820 = vsel %vm817, %v778, %v780
        %v821 = vsel %vm817, %v782, %v784
        %v822 = vsel %vm817, %v786, %v788
        %v823 = vsel %vm817, %v790, %v792
        %v824 = vsel %vm817, %v794, %v796
        %v825 = vsel %vm817, %v798, %v800
        %v826 = vsel %vm817, %v802, %v804
        %v827 = vsel %vm817, %v806, %v808
        %v828 = vsel %vm817, %v810, %v812
        %v829 = vsel %vm817, %v814, %v816
        %832 = vrot.lane.b32.xlu0 %v755, 4
        %v833 = vpop.permute.xlu0 %832
        %834 = vrot.lane.b32.xlu0 %v756, 4
        %v835 = vpop.permute.xlu0 %834
        %836 = vrot.lane.b32.xlu0 %v687, 4
        %v837 = vpop.permute.xlu0 %836
        %838 = vrot.lane.b32.xlu0 %v690, 4
        %v839 = vpop.permute.xlu0 %838
        %840 = vrot.lane.b32.xlu0 %v693, 4
        %v841 = vpop.permute.xlu0 %840
        %842 = vrot.lane.b32.xlu0 %v696, 4
        %v843 = vpop.permute.xlu0 %842
        %844 = vrot.lane.b32.xlu0 %v699, 4
        %v845 = vpop.permute.xlu0 %844
        %846 = vrot.lane.b32.xlu0 %v702, 4
        %v847 = vpop.permute.xlu0 %846
        %848 = vrot.lane.b32.xlu0 %v705, 4
        %v849 = vpop.permute.xlu0 %848
        %850 = vrot.lane.b32.xlu0 %v708, 4
        %v851 = vpop.permute.xlu0 %850
        %852 = vrot.lane.b32.xlu0 %v711, 4
        %v853 = vpop.permute.xlu0 %852
        %854 = vrot.lane.b32.xlu0 %v714, 4
        %v855 = vpop.permute.xlu0 %854
        %856 = vrot.lane.b32.xlu0 %v717, 4
        %v857 = vpop.permute.xlu0 %856
        %858 = vrot.lane.b32.xlu0 %v720, 4
        %v859 = vpop.permute.xlu0 %858
        %860 = vrot.lane.b32.xlu0 %v723, 4
        %v861 = vpop.permute.xlu0 %860
        %862 = vrot.lane.b32.xlu0 %v726, 4
        %v863 = vpop.permute.xlu0 %862
        %864 = vrot.lane.b32.xlu0 %v729, 4
        %v865 = vpop.permute.xlu0 %864
        %866 = vrot.lane.b32.xlu0 %v732, 4
        %v867 = vpop.permute.xlu0 %866
        %868 = vrot.lane.b32.xlu0 %v735, 4
        %v869 = vpop.permute.xlu0 %868
        %870 = vrot.lane.b32.xlu0 %v738, 4
        %v871 = vpop.permute.xlu0 %870
        %872 = vrot.lane.b32.xlu0 %v741, 4
        %v873 = vpop.permute.xlu0 %872
        %874 = vrot.lane.b32.xlu0 %v744, 4
        %v875 = vpop.permute.xlu0 %874
        %876 = vrot.lane.b32.xlu0 %v747, 4
        %v877 = vpop.permute.xlu0 %876
        %878 = vrot.lane.b32.xlu0 %v750, 4
        %v879 = vpop.permute.xlu0 %878
        %vm880 = vcmask 31744
        %v881 = vsel %vm880, %v833, %v835
        %v882 = vsel %vm880, %v837, %v839
        %v883 = vsel %vm880, %v841, %v843
        %v884 = vsel %vm880, %v845, %v847
        %v885 = vsel %vm880, %v849, %v851
        %v886 = vsel %vm880, %v853, %v855
        %v887 = vsel %vm880, %v857, %v859
        %v888 = vsel %vm880, %v861, %v863
        %v889 = vsel %vm880, %v865, %v867
        %v890 = vsel %vm880, %v869, %v871
        %v891 = vsel %vm880, %v873, %v875
        %v892 = vsel %vm880, %v877, %v879
        %vm893 = vcmask 15360
        %v896 = vsel %vm893, %v506, %v770
        %v900 = vsel %vm893, %v521, %v774
        %v904 = vsel %vm893, %v536, %v778
        %v908 = vsel %vm893, %v551, %v782
        %v912 = vsel %vm893, %v566, %v786
        %v916 = vsel %vm893, %v581, %v790
        %v920 = vsel %vm893, %v596, %v794
        %v924 = vsel %vm893, %v611, %v798
        %v928 = vsel %vm893, %v626, %v802
        %v932 = vsel %vm893, %v641, %v806
        %v936 = vsel %vm893, %v656, %v810
        %v940 = vsel %vm893, %v679, %v814
        %vm942 = vcmask 31744
        %v945 = vsel %vm942, %v818, %v833
        %v949 = vsel %vm942, %v819, %v837
        %v953 = vsel %vm942, %v820, %v841
        %v957 = vsel %vm942, %v821, %v845
        %v961 = vsel %vm942, %v822, %v849
        %v965 = vsel %vm942, %v823, %v853
        %v969 = vsel %vm942, %v824, %v857
        %v973 = vsel %vm942, %v825, %v861
        %v977 = vsel %vm942, %v826, %v865
        %v981 = vsel %vm942, %v827, %v869
        %v985 = vsel %vm942, %v828, %v873
        %v989 = vsel %vm942, %v829, %v877
        %v991 = vld [vmem:[%s2] sm:$0xff]
        %v992 = vld [vmem:[%s2 + $0x8] sm:$0xff]
        %v993 = vld [vmem:[%s2 + $0x10] sm:$0xff]
        %v994 = vld [vmem:[%s2 + $0x18] sm:$0xff]
        %v995 = vld [vmem:[%s2 + $0x20] sm:$0xff]
        %v996 = vld [vmem:[%s2 + $0x28] sm:$0xff]
        %v997 = vld [vmem:[%s2 + $0x30] sm:$0xff]
        %v998 = vld [vmem:[%s2 + $0x38] sm:$0xff]
        %v999 = vld [vmem:[%s2 + $0x40] sm:$0xff]
        %v1000 = vld [vmem:[%s2 + $0x48] sm:$0xff]
        %v1001 = vld [vmem:[%s2 + $0x50] sm:$0xff]
        %v1002 = vld [vmem:[%s2 + $0x58] sm:$0xff]
        %v1003 = vld [vmem:[%s2 + $0x60] sm:$0xff]
        %v1004 = vld [vmem:[%s2 + $0x68] sm:$0xff]
        %v1005 = vld [vmem:[%s2 + $0x70] sm:$0xff]
        %v1006 = vld [vmem:[%s2 + $0x78] sm:$0xff]
        %v1007 = vld [vmem:[%s2 + $0x80] sm:$0xff]
        %v1008 = vld [vmem:[%s2 + $0x88] sm:$0xff]
        %v1009 = vld [vmem:[%s2 + $0x90] sm:$0xff]
        %v1010 = vld [vmem:[%s2 + $0x98] sm:$0xff]
        %v1011 = vld [vmem:[%s2 + $0xa0] sm:$0xff]
        %v1012 = vld [vmem:[%s2 + $0xa8] sm:$0xff]
        %v1013 = vld [vmem:[%s2 + $0xb0] sm:$0xff]
        %v1014 = vld [vmem:[%s2 + $0xb8] sm:$0xff]
        %v1015 = vld [vmem:[%s2 + $0xc0] sm:$0xff]
        %v1016 = vld [vmem:[%s2 + $0xc8] sm:$0xff]
        %v1017 = vld [vmem:[%s2 + $0xd0] sm:$0xff]
        %v1018 = vld [vmem:[%s2 + $0xd8] sm:$0xff]
        %v1019 = vld [vmem:[%s2 + $0xe0] sm:$0xff]
        %v1020 = vld [vmem:[%s2 + $0xe8] sm:$0xff]
        %v1021 = vld [vmem:[%s2 + $0xf0] sm:$0xff]
        %v1022 = vld [vmem:[%s2 + $0xf8] sm:$0xff]
        %v1023 = vld [vmem:[%s2 + $0x100] sm:$0xff]
        %v1024 = vld [vmem:[%s2 + $0x108] sm:$0xff]
        %v1025 = vld [vmem:[%s2 + $0x110] sm:$0xff]
        %v1026 = vld [vmem:[%s2 + $0x118] sm:$0xff]
        %v1027 = vld [vmem:[%s2 + $0x120] sm:$0xff]
        %v1028 = vld [vmem:[%s2 + $0x128] sm:$0xff]
        %v1029 = vld [vmem:[%s2 + $0x130] sm:$0xff]
        %v1030 = vld [vmem:[%s2 + $0x138] sm:$0xff]
        %v1031 = vld [vmem:[%s2 + $0x140] sm:$0xff]
        %v1032 = vld [vmem:[%s2 + $0x148] sm:$0xff]
        %v1033 = vld [vmem:[%s2 + $0x150] sm:$0xff]
        %v1034 = vld [vmem:[%s2 + $0x158] sm:$0xff]
        %v1035 = vld [vmem:[%s2 + $0x160] sm:$0xff]
        %v1036 = vld [vmem:[%s2 + $0x168] sm:$0xff]
        %v1037 = vld [vmem:[%s2 + $0x170] sm:$0xff]
        %v1038 = vld [vmem:[%s2 + $0x178] sm:$0xff]
        %v1039 = vld [vmem:[%s2 + $0x180] sm:$0x77]
        %s1040 = sld [smem:[#allocation2]]
        %v1041 = vstv %s1040
        %v1091 = vunpack.c.l.b16 %v991
        %v1092 = vunpack.c.h.b16 %v991
        %v1093 = vunpack.c.l.b16 %v992
        %v1094 = vunpack.c.h.b16 %v992
        %v1095 = vunpack.c.l.b16 %v993
        %v1096 = vunpack.c.h.b16 %v993
        %v1097 = vunpack.c.l.b16 %v994
        %v1098 = vunpack.c.h.b16 %v994
        %v1099 = vunpack.c.l.b16 %v995
        %v1100 = vunpack.c.h.b16 %v995
        %v1101 = vunpack.c.l.b16 %v996
        %v1102 = vunpack.c.h.b16 %v996
        %v1103 = vunpack.c.l.b16 %v997
        %v1104 = vunpack.c.h.b16 %v997
        %v1105 = vunpack.c.l.b16 %v998
        %v1106 = vunpack.c.h.b16 %v998
        %v1107 = vunpack.c.l.b16 %v999
        %v1108 = vunpack.c.h.b16 %v999
        %v1109 = vunpack.c.l.b16 %v1000
        %v1110 = vunpack.c.h.b16 %v1000
        %v1111 = vunpack.c.l.b16 %v1001
        %v1112 = vunpack.c.h.b16 %v1001
        %v1113 = vunpack.c.l.b16 %v1002
        %v1114 = vunpack.c.h.b16 %v1002
        %v1115 = vunpack.c.l.b16 %v1003
        %v1116 = vunpack.c.h.b16 %v1003
        %v1117 = vunpack.c.l.b16 %v1004
        %v1118 = vunpack.c.h.b16 %v1004
        %v1119 = vunpack.c.l.b16 %v1005
        %v1120 = vunpack.c.h.b16 %v1005
        %v1121 = vunpack.c.l.b16 %v1006
        %v1122 = vunpack.c.h.b16 %v1006
        %v1123 = vunpack.c.l.b16 %v1007
        %v1124 = vunpack.c.h.b16 %v1007
        %v1125 = vunpack.c.l.b16 %v1008
        %v1126 = vunpack.c.h.b16 %v1008
        %v1127 = vunpack.c.l.b16 %v1009
        %v1128 = vunpack.c.h.b16 %v1009
        %v1129 = vunpack.c.l.b16 %v1010
        %v1130 = vunpack.c.h.b16 %v1010
        %v1131 = vunpack.c.l.b16 %v1011
        %v1132 = vunpack.c.h.b16 %v1011
        %v1133 = vunpack.c.l.b16 %v1012
        %v1134 = vunpack.c.h.b16 %v1012
        %v1135 = vunpack.c.l.b16 %v1013
        %v1136 = vunpack.c.h.b16 %v1013
        %v1137 = vunpack.c.l.b16 %v1014
        %v1138 = vunpack.c.h.b16 %v1014
        %v1139 = vunpack.c.l.b16 %v1015
        %v1140 = vunpack.c.h.b16 %v1015
        %v1141 = vunpack.c.l.b16 %v1016
        %v1142 = vunpack.c.h.b16 %v1016
        %v1143 = vunpack.c.l.b16 %v1017
        %v1144 = vunpack.c.h.b16 %v1017
        %v1145 = vunpack.c.l.b16 %v1018
        %v1146 = vunpack.c.h.b16 %v1018
        %v1147 = vunpack.c.l.b16 %v1019
        %v1148 = vunpack.c.h.b16 %v1019
        %v1149 = vunpack.c.l.b16 %v1020
        %v1150 = vunpack.c.h.b16 %v1020
        %v1151 = vunpack.c.l.b16 %v1021
        %v1152 = vunpack.c.h.b16 %v1021
        %v1153 = vunpack.c.l.b16 %v1022
        %v1154 = vunpack.c.h.b16 %v1022
        %v1155 = vunpack.c.l.b16 %v1023
        %v1156 = vunpack.c.h.b16 %v1023
        %v1157 = vunpack.c.l.b16 %v1024
        %v1158 = vunpack.c.h.b16 %v1024
        %v1159 = vunpack.c.l.b16 %v1025
        %v1160 = vunpack.c.h.b16 %v1025
        %v1161 = vunpack.c.l.b16 %v1026
        %v1162 = vunpack.c.h.b16 %v1026
        %v1163 = vunpack.c.l.b16 %v1027
        %v1164 = vunpack.c.h.b16 %v1027
        %v1165 = vunpack.c.l.b16 %v1028
        %v1166 = vunpack.c.h.b16 %v1028
        %v1167 = vunpack.c.l.b16 %v1029
        %v1168 = vunpack.c.h.b16 %v1029
        %v1169 = vunpack.c.l.b16 %v1030
        %v1170 = vunpack.c.h.b16 %v1030
        %v1171 = vunpack.c.l.b16 %v1031
        %v1172 = vunpack.c.h.b16 %v1031
        %v1173 = vunpack.c.l.b16 %v1032
        %v1174 = vunpack.c.h.b16 %v1032
        %v1175 = vunpack.c.l.b16 %v1033
        %v1176 = vunpack.c.h.b16 %v1033
        %v1177 = vunpack.c.l.b16 %v1034
        %v1178 = vunpack.c.h.b16 %v1034
        %v1179 = vunpack.c.l.b16 %v1035
        %v1180 = vunpack.c.h.b16 %v1035
        %v1181 = vunpack.c.l.b16 %v1036
        %v1182 = vunpack.c.h.b16 %v1036
        %v1183 = vunpack.c.l.b16 %v1037
        %v1184 = vunpack.c.h.b16 %v1037
        %v1185 = vunpack.c.l.b16 %v1038
        %v1186 = vunpack.c.h.b16 %v1038
        %v1187 = vunpack.c.l.b16 %v1039
        %v1188 = vunpack.c.h.b16 %v1039
        %v1189 = vpack.c.b16 %v1093, %v1091
        %v1190 = vpack.c.b16 %v1094, %v1092
        %v1191 = vpack.c.b16 %v1097, %v1095
        %v1192 = vpack.c.b16 %v1098, %v1096
        %v1193 = vpack.c.b16 %v1101, %v1099
        %v1194 = vpack.c.b16 %v1102, %v1100
        %v1195 = vpack.c.b16 %v1105, %v1103
        %v1196 = vpack.c.b16 %v1106, %v1104
        %v1197 = vpack.c.b16 %v1109, %v1107
        %v1198 = vpack.c.b16 %v1110, %v1108
        %v1199 = vpack.c.b16 %v1113, %v1111
        %v1200 = vpack.c.b16 %v1114, %v1112
        %v1201 = vpack.c.b16 %v1117, %v1115
        %v1202 = vpack.c.b16 %v1118, %v1116
        %v1203 = vpack.c.b16 %v1121, %v1119
        %v1204 = vpack.c.b16 %v1122, %v1120
        %v1205 = vpack.c.b16 %v1125, %v1123
        %v1206 = vpack.c.b16 %v1126, %v1124
        %v1207 = vpack.c.b16 %v1129, %v1127
        %v1208 = vpack.c.b16 %v1130, %v1128
        %v1209 = vpack.c.b16 %v1133, %v1131
        %v1210 = vpack.c.b16 %v1134, %v1132
        %v1211 = vpack.c.b16 %v1137, %v1135
        %v1212 = vpack.c.b16 %v1138, %v1136
        %v1213 = vpack.c.b16 %v1141, %v1139
        %v1214 = vpack.c.b16 %v1142, %v1140
        %v1215 = vpack.c.b16 %v1145, %v1143
        %v1216 = vpack.c.b16 %v1146, %v1144
        %v1217 = vpack.c.b16 %v1149, %v1147
        %v1218 = vpack.c.b16 %v1150, %v1148
        %v1219 = vpack.c.b16 %v1153, %v1151
        %v1220 = vpack.c.b16 %v1154, %v1152
        %v1221 = vpack.c.b16 %v1157, %v1155
        %v1222 = vpack.c.b16 %v1158, %v1156
        %v1223 = vpack.c.b16 %v1161, %v1159
        %v1224 = vpack.c.b16 %v1162, %v1160
        %v1225 = vpack.c.b16 %v1165, %v1163
        %v1226 = vpack.c.b16 %v1166, %v1164
        %v1227 = vpack.c.b16 %v1169, %v1167
        %v1228 = vpack.c.b16 %v1170, %v1168
        %v1229 = vpack.c.b16 %v1173, %v1171
        %v1230 = vpack.c.b16 %v1174, %v1172
        %v1231 = vpack.c.b16 %v1177, %v1175
        %v1232 = vpack.c.b16 %v1178, %v1176
        %v1233 = vpack.c.b16 %v1181, %v1179
        %v1234 = vpack.c.b16 %v1182, %v1180
        %v1235 = vpack.c.b16 %v1185, %v1183
        %v1236 = vpack.c.b16 %v1186, %v1184
        %v1237 = vpack.c.b16 %v1187, %v1187
        %v1238 = vpack.c.b16 %v1188, %v1188
        %vm1287 = vcmask 48128
        %v1289 = vsel %vm1287, %v881, 0
        %v1292 = vsel %vm1287, %v882, 0
        %v1295 = vsel %vm1287, %v883, 0
        %v1298 = vsel %vm1287, %v884, 0
        %v1301 = vsel %vm1287, %v885, 0
        %v1304 = vsel %vm1287, %v886, 0
        %v1307 = vsel %vm1287, %v887, 0
        %v1310 = vsel %vm1287, %v888, 0
        %v1313 = vsel %vm1287, %v889, 0
        %v1316 = vsel %vm1287, %v890, 0
        %v1319 = vsel %vm1287, %v891, 0
        %v1322 = vsel %vm1287, %v892, 0
        %vm1324 = vcmask 1042432
        %v1326 = vsel %vm1324, %v1237, 0
        %v1329 = vsel %vm1324, %v1238, 0
        %1331 = vmatprep.subr.bf16.mxu0 %v1190
        %1332 = vmatpush1.bf16.msra.mxu0 %v1189
        %1333 = vmatprep.subr.bf16.mxu0 %v1192
        %1334 = vmatpush1.bf16.msra.mxu0 %v1191
        %1335 = vmatprep.subr.bf16.mxu0 %v1194
        %1336 = vmatpush1.bf16.msra.mxu0 %v1193
        %1337 = vmatprep.subr.bf16.mxu0 %v1196
        %1338 = vmatpush1.bf16.msra.mxu0 %v1195
        %1339 = vmatprep.subr.bf16.mxu0 %v1198
        %1340 = vmatpush1.bf16.msra.mxu0 %v1197
        %1341 = vmatprep.subr.bf16.mxu0 %v1200
        %1342 = vmatpush1.bf16.msra.mxu0 %v1199
        %1343 = vmatprep.subr.bf16.mxu0 %v1202
        %1344 = vmatpush1.bf16.msra.mxu0 %v1201
        %1345 = vmatprep.subr.bf16.mxu0 %v1204
        %1346 = vmatpush1.bf16.msra.mxu0 %v1203
        %1347 = vmatprep.subr.bf16.mxu0 %v1206
        %1348 = vmatpush1.bf16.msra.mxu0 %v1205
        %1349 = vmatprep.subr.bf16.mxu0 %v1208
        %1350 = vmatpush1.bf16.msra.mxu0 %v1207
        %1351 = vmatprep.subr.bf16.mxu0 %v1210
        %1352 = vmatpush1.bf16.msra.mxu0 %v1209
        %1353 = vmatprep.subr.bf16.mxu0 %v1212
        %1354 = vmatpush1.bf16.msra.mxu0 %v1211
        %1355 = vmatprep.subr.bf16.mxu0 %v1214
        %1356 = vmatpush1.bf16.msra.mxu0 %v1213
        %1357 = vmatprep.subr.bf16.mxu0 %v1216
        %1358 = vmatpush1.bf16.msra.mxu0 %v1215
        %1359 = vmatprep.subr.bf16.mxu0 %v1218
        %1360 = vmatpush1.bf16.msra.mxu0 %v1217
        %1361 = vmatprep.subr.bf16.mxu0 %v1220
        %1362 = vmatpush1.bf16.msra.mxu0 %v1219
        %1363 = vmatprep.mubr.bf16.mxu0 %v896
        %1364 = vmatmul.mubr.bf16.gmra.mrb[0].mxu0 %v496
        %v1365 = vpop.f32.mrb[0].mxu0
        %v1366 = vadd.f32 %v1041, %v1365
        %v1367 = vpop.f32.mrb[0].mxu0
        %v1368 = vadd.f32 %v1041, %v1367
        %v1369 = vpop.f32.mrb[0].mxu0
        %v1370 = vadd.f32 %v1041, %v1369
        %v1371 = vpop.f32.mrb[0].mxu0
        %v1372 = vadd.f32 %v1041, %v1371
        %1373 = vmatprep.mubr.bf16.mxu0 %v900
        %1374 = vmatmul.mubr.bf16.gmra.mrb[0].mxu0 %v514
        %v1375 = vpop.f32.mrb[0].mxu0
        %v1376 = vadd.f32 %v1041, %v1375
        %v1377 = vpop.f32.mrb[0].mxu0
        %v1378 = vadd.f32 %v1041, %v1377
        %v1379 = vpop.f32.mrb[0].mxu0
        %v1380 = vadd.f32 %v1041, %v1379
        %v1381 = vpop.f32.mrb[0].mxu0
        %v1382 = vadd.f32 %v1041, %v1381
        %1383 = vmatprep.mubr.bf16.mxu0 %v904
        %1384 = vmatmul.mubr.bf16.gmra.mrb[0].mxu0 %v529
        %v1385 = vpop.f32.mrb[0].mxu0
        %v1386 = vadd.f32 %v1041, %v1385
        %v1387 = vpop.f32.mrb[0].mxu0
        %v1388 = vadd.f32 %v1041, %v1387
        %v1389 = vpop.f32.mrb[0].mxu0
        %v1390 = vadd.f32 %v1041, %v1389
        %v1391 = vpop.f32.mrb[0].mxu0
        %v1392 = vadd.f32 %v1041, %v1391
        %1393 = vmatprep.mubr.bf16.mxu0 %v908
        %1394 = vmatmul.mubr.bf16.gmra.mrb[0].mxu0 %v544
        %v1395 = vpop.f32.mrb[0].mxu0
        %v1396 = vadd.f32 %v1041, %v1395
        %v1397 = vpop.f32.mrb[0].mxu0
        %v1398 = vadd.f32 %v1041, %v1397
        %v1399 = vpop.f32.mrb[0].mxu0
        %v1400 = vadd.f32 %v1041, %v1399
        %v1401 = vpop.f32.mrb[0].mxu0
        %v1402 = vadd.f32 %v1041, %v1401
        %1403 = vmatprep.mubr.bf16.mxu0 %v912
        %1404 = vmatmul.mubr.bf16.gmra.mrb[0].mxu0 %v559
        %v1405 = vpop.f32.mrb[0].mxu0
        %v1406 = vadd.f32 %v1041, %v1405
        %v1407 = vpop.f32.mrb[0].mxu0
        %v1408 = vadd.f32 %v1041, %v1407
        %v1409 = vpop.f32.mrb[0].mxu0
        %v1410 = vadd.f32 %v1041, %v1409
        %v1411 = vpop.f32.mrb[0].mxu0
        %v1412 = vadd.f32 %v1041, %v1411
        %1413 = vmatprep.mubr.bf16.mxu0 %v916
        %1414 = vmatmul.mubr.bf16.gmra.mrb[0].mxu0 %v574
        %v1415 = vpop.f32.mrb[0].mxu0
        %v1416 = vadd.f32 %v1041, %v1415
        %v1417 = vpop.f32.mrb[0].mxu0
        %v1418 = vadd.f32 %v1041, %v1417
        %v1419 = vpop.f32.mrb[0].mxu0
        %v1420 = vadd.f32 %v1041, %v1419
        %v1421 = vpop.f32.mrb[0].mxu0
        %v1422 = vadd.f32 %v1041, %v1421
        %1423 = vmatprep.mubr.bf16.mxu0 %v920
        %1424 = vmatmul.mubr.bf16.gmra.mrb[0].mxu0 %v589
        %v1425 = vpop.f32.mrb[0].mxu0
        %v1426 = vadd.f32 %v1041, %v1425
        %v1427 = vpop.f32.mrb[0].mxu0
        %v1428 = vadd.f32 %v1041, %v1427
        %v1429 = vpop.f32.mrb[0].mxu0
        %v1430 = vadd.f32 %v1041, %v1429
        %v1431 = vpop.f32.mrb[0].mxu0
        %v1432 = vadd.f32 %v1041, %v1431
        %1433 = vmatprep.mubr.bf16.mxu0 %v924
        %1434 = vmatmul.mubr.bf16.gmra.mrb[0].mxu0 %v604
        %v1435 = vpop.f32.mrb[0].mxu0
        %v1436 = vadd.f32 %v1041, %v1435
        %v1437 = vpop.f32.mrb[0].mxu0
        %v1438 = vadd.f32 %v1041, %v1437
        %v1439 = vpop.f32.mrb[0].mxu0
        %v1440 = vadd.f32 %v1041, %v1439
        %v1441 = vpop.f32.mrb[0].mxu0
        %v1442 = vadd.f32 %v1041, %v1441
        %1443 = vmatprep.mubr.bf16.mxu0 %v928
        %1444 = vmatmul.mubr.bf16.gmra.mrb[0].mxu0 %v619
        %v1445 = vpop.f32.mrb[0].mxu0
        %v1446 = vadd.f32 %v1041, %v1445
        %v1447 = vpop.f32.mrb[0].mxu0
        %v1448 = vadd.f32 %v1041, %v1447
        %v1449 = vpop.f32.mrb[0].mxu0
        %v1450 = vadd.f32 %v1041, %v1449
        %v1451 = vpop.f32.mrb[0].mxu0
        %v1452 = vadd.f32 %v1041, %v1451
        %1453 = vmatprep.mubr.bf16.mxu0 %v932
        %1454 = vmatmul.mubr.bf16.gmra.mrb[0].mxu0 %v634
        %v1455 = vpop.f32.mrb[0].mxu0
        %v1456 = vadd.f32 %v1041, %v1455
        %v1457 = vpop.f32.mrb[0].mxu0
        %v1458 = vadd.f32 %v1041, %v1457
        %v1459 = vpop.f32.mrb[0].mxu0
        %v1460 = vadd.f32 %v1041, %v1459
        %v1461 = vpop.f32.mrb[0].mxu0
        %v1462 = vadd.f32 %v1041, %v1461
        %1463 = vmatprep.mubr.bf16.mxu0 %v936
        %1464 = vmatmul.mubr.bf16.gmra.mrb[0].mxu0 %v649
        %v1465 = vpop.f32.mrb[0].mxu0
        %v1466 = vadd.f32 %v1041, %v1465
        %v1467 = vpop.f32.mrb[0].mxu0
        %v1468 = vadd.f32 %v1041, %v1467
        %v1469 = vpop.f32.mrb[0].mxu0
        %v1470 = vadd.f32 %v1041, %v1469
        %v1471 = vpop.f32.mrb[0].mxu0
        %v1472 = vadd.f32 %v1041, %v1471
        %1473 = vmatprep.mubr.bf16.mxu0 %v940
        %1474 = vmatmul.mubr.bf16.gmra.mrb[0].mxu0 %v678
        %v1475 = vpop.f32.mrb[0].mxu0
        %v1476 = vadd.f32 %v1041, %v1475
        %v1477 = vpop.f32.mrb[0].mxu0
        %v1478 = vadd.f32 %v1041, %v1477
        %v1479 = vpop.f32.mrb[0].mxu0
        %v1480 = vadd.f32 %v1041, %v1479
        %v1481 = vpop.f32.mrb[0].mxu0
        %v1482 = vadd.f32 %v1041, %v1481
        %1483 = vdwg.mxu0
        %1484 = vmatprep.subr.bf16.mxu0 %v1222
        %1485 = vmatpush1.bf16.msra.mxu0 %v1221
        %1486 = vmatprep.subr.bf16.mxu0 %v1224
        %1487 = vmatpush1.bf16.msra.mxu0 %v1223
        %1488 = vmatprep.subr.bf16.mxu0 %v1226
        %1489 = vmatpush1.bf16.msra.mxu0 %v1225
        %1490 = vmatprep.subr.bf16.mxu0 %v1228
        %1491 = vmatpush1.bf16.msra.mxu0 %v1227
        %1492 = vmatprep.subr.bf16.mxu0 %v1230
        %1493 = vmatpush1.bf16.msra.mxu0 %v1229
        %1494 = vmatprep.subr.bf16.mxu0 %v1232
        %1495 = vmatpush1.bf16.msra.mxu0 %v1231
        %1496 = vmatprep.subr.bf16.mxu0 %v1234
        %1497 = vmatpush1.bf16.msra.mxu0 %v1233
        %1498 = vmatprep.subr.bf16.mxu0 %v1236
        %1499 = vmatpush1.bf16.msra.mxu0 %v1235
        %1500 = vmatprep.subr.bf16.mxu0 %v1329
        %1501 = vmatpush1.bf16.msra.mxu0 %v1326
        %1502 = vmatprep.subr.bf16.mxu0 0
        %1503 = vmatpush1.bf16.msra.mxu0 0
        %1504 = vmatprep.subr.bf16.mxu0 0
        %1505 = vmatpush1.bf16.msra.mxu0 0
        %1506 = vmatprep.subr.bf16.mxu0 0
        %1507 = vmatpush1.bf16.msra.mxu0 0
        %1508 = vmatprep.subr.bf16.mxu0 0
        %1509 = vmatpush1.bf16.msra.mxu0 0
        %1510 = vmatprep.subr.bf16.mxu0 0
        %1511 = vmatpush1.bf16.msra.mxu0 0
        %1512 = vmatprep.subr.bf16.mxu0 0
        %1513 = vmatpush1.bf16.msra.mxu0 0
        %1514 = vmatprep.subr.bf16.mxu0 0
        %1515 = vmatpush1.bf16.msra.mxu0 0
        %1516 = vmatprep.mubr.bf16.mxu0 %v1289
        %1517 = vmatmul.mubr.bf16.gmra.mrb[0].mxu0 %v945
        %v1518 = vpop.f32.mrb[0].mxu0
        %v1519 = vadd.f32 %v1366, %v1518
        %v1520 = vpop.f32.mrb[0].mxu0
        %v1521 = vadd.f32 %v1368, %v1520
        %v1522 = vpop.f32.mrb[0].mxu0
        %v1523 = vadd.f32 %v1370, %v1522
        %v1524 = vpop.f32.mrb[0].mxu0
        %v1525 = vadd.f32 %v1372, %v1524
        %1526 = vmatprep.mubr.bf16.mxu0 %v1292
        %1527 = vmatmul.mubr.bf16.gmra.mrb[0].mxu0 %v949
        %v1528 = vpop.f32.mrb[0].mxu0
        %v1529 = vadd.f32 %v1376, %v1528
        %v1530 = vpop.f32.mrb[0].mxu0
        %v1531 = vadd.f32 %v1378, %v1530
        %v1532 = vpop.f32.mrb[0].mxu0
        %v1533 = vadd.f32 %v1380, %v1532
        %v1534 = vpop.f32.mrb[0].mxu0
        %v1535 = vadd.f32 %v1382, %v1534
        %1536 = vmatprep.mubr.bf16.mxu0 %v1295
        %1537 = vmatmul.mubr.bf16.gmra.mrb[0].mxu0 %v953
        %v1538 = vpop.f32.mrb[0].mxu0
        %v1539 = vadd.f32 %v1386, %v1538
        %v1540 = vpop.f32.mrb[0].mxu0
        %v1541 = vadd.f32 %v1388, %v1540
        %v1542 = vpop.f32.mrb[0].mxu0
        %v1543 = vadd.f32 %v1390, %v1542
        %v1544 = vpop.f32.mrb[0].mxu0
        %v1545 = vadd.f32 %v1392, %v1544
        %1546 = vmatprep.mubr.bf16.mxu0 %v1298
        %1547 = vmatmul.mubr.bf16.gmra.mrb[0].mxu0 %v957
        %v1548 = vpop.f32.mrb[0].mxu0
        %v1549 = vadd.f32 %v1396, %v1548
        %v1550 = vpop.f32.mrb[0].mxu0
        %v1551 = vadd.f32 %v1398, %v1550
        %v1552 = vpop.f32.mrb[0].mxu0
        %v1553 = vadd.f32 %v1400, %v1552
        %v1554 = vpop.f32.mrb[0].mxu0
        %v1555 = vadd.f32 %v1402, %v1554
        %1556 = vmatprep.mubr.bf16.mxu0 %v1301
        %1557 = vmatmul.mubr.bf16.gmra.mrb[0].mxu0 %v961
        %v1558 = vpop.f32.mrb[0].mxu0
        %v1559 = vadd.f32 %v1406, %v1558
        %v1560 = vpop.f32.mrb[0].mxu0
        %v1561 = vadd.f32 %v1408, %v1560
        %v1562 = vpop.f32.mrb[0].mxu0
        %v1563 = vadd.f32 %v1410, %v1562
        %v1564 = vpop.f32.mrb[0].mxu0
        %v1565 = vadd.f32 %v1412, %v1564
        %1566 = vmatprep.mubr.bf16.mxu0 %v1304
        %1567 = vmatmul.mubr.bf16.gmra.mrb[0].mxu0 %v965
        %v1568 = vpop.f32.mrb[0].mxu0
        %v1569 = vadd.f32 %v1416, %v1568
        %v1570 = vpop.f32.mrb[0].mxu0
        %v1571 = vadd.f32 %v1418, %v1570
        %v1572 = vpop.f32.mrb[0].mxu0
        %v1573 = vadd.f32 %v1420, %v1572
        %v1574 = vpop.f32.mrb[0].mxu0
        %v1575 = vadd.f32 %v1422, %v1574
        %1576 = vmatprep.mubr.bf16.mxu0 %v1307
        %1577 = vmatmul.mubr.bf16.gmra.mrb[0].mxu0 %v969
        %v1578 = vpop.f32.mrb[0].mxu0
        %v1579 = vadd.f32 %v1426, %v1578
        %v1580 = vpop.f32.mrb[0].mxu0
        %v1581 = vadd.f32 %v1428, %v1580
        %v1582 = vpop.f32.mrb[0].mxu0
        %v1583 = vadd.f32 %v1430, %v1582
        %v1584 = vpop.f32.mrb[0].mxu0
        %v1585 = vadd.f32 %v1432, %v1584
        %1586 = vmatprep.mubr.bf16.mxu0 %v1310
        %1587 = vmatmul.mubr.bf16.gmra.mrb[0].mxu0 %v973
        %v1588 = vpop.f32.mrb[0].mxu0
        %v1589 = vadd.f32 %v1436, %v1588
        %v1590 = vpop.f32.mrb[0].mxu0
        %v1591 = vadd.f32 %v1438, %v1590
        %v1592 = vpop.f32.mrb[0].mxu0
        %v1593 = vadd.f32 %v1440, %v1592
        %v1594 = vpop.f32.mrb[0].mxu0
        %v1595 = vadd.f32 %v1442, %v1594
        %1596 = vmatprep.mubr.bf16.mxu0 %v1313
        %1597 = vmatmul.mubr.bf16.gmra.mrb[0].mxu0 %v977
        %v1598 = vpop.f32.mrb[0].mxu0
        %v1599 = vadd.f32 %v1446, %v1598
        %v1600 = vpop.f32.mrb[0].mxu0
        %v1601 = vadd.f32 %v1448, %v1600
        %v1602 = vpop.f32.mrb[0].mxu0
        %v1603 = vadd.f32 %v1450, %v1602
        %v1604 = vpop.f32.mrb[0].mxu0
        %v1605 = vadd.f32 %v1452, %v1604
        %1606 = vmatprep.mubr.bf16.mxu0 %v1316
        %1607 = vmatmul.mubr.bf16.gmra.mrb[0].mxu0 %v981
        %v1608 = vpop.f32.mrb[0].mxu0
        %v1609 = vadd.f32 %v1456, %v1608
        %v1610 = vpop.f32.mrb[0].mxu0
        %v1611 = vadd.f32 %v1458, %v1610
        %v1612 = vpop.f32.mrb[0].mxu0
        %v1613 = vadd.f32 %v1460, %v1612
        %v1614 = vpop.f32.mrb[0].mxu0
        %v1615 = vadd.f32 %v1462, %v1614
        %1616 = vmatprep.mubr.bf16.mxu0 %v1319
        %1617 = vmatmul.mubr.bf16.gmra.mrb[0].mxu0 %v985
        %v1618 = vpop.f32.mrb[0].mxu0
        %v1619 = vadd.f32 %v1466, %v1618
        %v1620 = vpop.f32.mrb[0].mxu0
        %v1621 = vadd.f32 %v1468, %v1620
        %v1622 = vpop.f32.mrb[0].mxu0
        %v1623 = vadd.f32 %v1470, %v1622
        %v1624 = vpop.f32.mrb[0].mxu0
        %v1625 = vadd.f32 %v1472, %v1624
        %1626 = vmatprep.mubr.bf16.mxu0 %v1322
        %1627 = vmatmul.mubr.bf16.gmra.mrb[0].mxu0 %v989
        %v1628 = vpop.f32.mrb[0].mxu0
        %v1629 = vadd.f32 %v1476, %v1628
        %v1630 = vpop.f32.mrb[0].mxu0
        %v1631 = vadd.f32 %v1478, %v1630
        %v1632 = vpop.f32.mrb[0].mxu0
        %v1633 = vadd.f32 %v1480, %v1632
        %v1634 = vpop.f32.mrb[0].mxu0
        %v1635 = vadd.f32 %v1482, %v1634
        %1636 = vdwg.mxu0
        %vm1637 = vcmp.ge.f32.partialorder %v1519, 0.0
        %vm1638 = vcmp.ge.f32.partialorder %v1521, 0.0
        %vm1639 = vcmp.ge.f32.partialorder %v1523, 0.0
        %vm1640 = vcmp.ge.f32.partialorder %v1525, 0.0
        %vm1641 = vcmp.ge.f32.partialorder %v1529, 0.0
        %vm1642 = vcmp.ge.f32.partialorder %v1531, 0.0
        %vm1643 = vcmp.ge.f32.partialorder %v1533, 0.0
        %vm1644 = vcmp.ge.f32.partialorder %v1535, 0.0
        %vm1645 = vcmp.ge.f32.partialorder %v1539, 0.0
        %vm1646 = vcmp.ge.f32.partialorder %v1541, 0.0
        %vm1647 = vcmp.ge.f32.partialorder %v1543, 0.0
        %vm1648 = vcmp.ge.f32.partialorder %v1545, 0.0
        %vm1649 = vcmp.ge.f32.partialorder %v1549, 0.0
        %vm1650 = vcmp.ge.f32.partialorder %v1551, 0.0
        %vm1651 = vcmp.ge.f32.partialorder %v1553, 0.0
        %vm1652 = vcmp.ge.f32.partialorder %v1555, 0.0
        %vm1653 = vcmp.ge.f32.partialorder %v1559, 0.0
        %vm1654 = vcmp.ge.f32.partialorder %v1561, 0.0
        %vm1655 = vcmp.ge.f32.partialorder %v1563, 0.0
        %vm1656 = vcmp.ge.f32.partialorder %v1565, 0.0
        %vm1657 = vcmp.ge.f32.partialorder %v1569, 0.0
        %vm1658 = vcmp.ge.f32.partialorder %v1571, 0.0
        %vm1659 = vcmp.ge.f32.partialorder %v1573, 0.0
        %vm1660 = vcmp.ge.f32.partialorder %v1575, 0.0
        %vm1661 = vcmp.ge.f32.partialorder %v1579, 0.0
        %vm1662 = vcmp.ge.f32.partialorder %v1581, 0.0
        %vm1663 = vcmp.ge.f32.partialorder %v1583, 0.0
        %vm1664 = vcmp.ge.f32.partialorder %v1585, 0.0
        %vm1665 = vcmp.ge.f32.partialorder %v1589, 0.0
        %vm1666 = vcmp.ge.f32.partialorder %v1591, 0.0
        %vm1667 = vcmp.ge.f32.partialorder %v1593, 0.0
        %vm1668 = vcmp.ge.f32.partialorder %v1595, 0.0
        %vm1669 = vcmp.ge.f32.partialorder %v1599, 0.0
        %vm1670 = vcmp.ge.f32.partialorder %v1601, 0.0
        %vm1671 = vcmp.ge.f32.partialorder %v1603, 0.0
        %vm1672 = vcmp.ge.f32.partialorder %v1605, 0.0
        %vm1673 = vcmp.ge.f32.partialorder %v1609, 0.0
        %vm1674 = vcmp.ge.f32.partialorder %v1611, 0.0
        %vm1675 = vcmp.ge.f32.partialorder %v1613, 0.0
        %vm1676 = vcmp.ge.f32.partialorder %v1615, 0.0
        %vm1677 = vcmp.ge.f32.partialorder %v1619, 0.0
        %vm1678 = vcmp.ge.f32.partialorder %v1621, 0.0
        %vm1679 = vcmp.ge.f32.partialorder %v1623, 0.0
        %vm1680 = vcmp.ge.f32.partialorder %v1625, 0.0
        %vm1681 = vcmp.ge.f32.partialorder %v1629, 0.0
        %vm1682 = vcmp.ge.f32.partialorder %v1631, 0.0
        %vm1683 = vcmp.ge.f32.partialorder %v1633, 0.0
        %vm1684 = vcmp.ge.f32.partialorder %v1635, 0.0
        %v1685 = vmul.f32 %v1519, 0.4
        %v1686 = vmul.f32 %v1521, 0.4
        %v1687 = vmul.f32 %v1523, 0.4
        %v1688 = vmul.f32 %v1525, 0.4
        %v1689 = vmul.f32 %v1529, 0.4
        %v1690 = vmul.f32 %v1531, 0.4
        %v1691 = vmul.f32 %v1533, 0.4
        %v1692 = vmul.f32 %v1535, 0.4
        %v1693 = vmul.f32 %v1539, 0.4
        %v1694 = vmul.f32 %v1541, 0.4
        %v1695 = vmul.f32 %v1543, 0.4
        %v1696 = vmul.f32 %v1545, 0.4
        %v1697 = vmul.f32 %v1549, 0.4
        %v1698 = vmul.f32 %v1551, 0.4
        %v1699 = vmul.f32 %v1553, 0.4
        %v1700 = vmul.f32 %v1555, 0.4
        %v1701 = vmul.f32 %v1559, 0.4
        %v1702 = vmul.f32 %v1561, 0.4
        %v1703 = vmul.f32 %v1563, 0.4
        %v1704 = vmul.f32 %v1565, 0.4
        %v1705 = vmul.f32 %v1569, 0.4
        %v1706 = vmul.f32 %v1571, 0.4
        %v1707 = vmul.f32 %v1573, 0.4
        %v1708 = vmul.f32 %v1575, 0.4
        %v1709 = vmul.f32 %v1579, 0.4
        %v1710 = vmul.f32 %v1581, 0.4
        %v1711 = vmul.f32 %v1583, 0.4
        %v1712 = vmul.f32 %v1585, 0.4
        %v1713 = vmul.f32 %v1589, 0.4
        %v1714 = vmul.f32 %v1591, 0.4
        %v1715 = vmul.f32 %v1593, 0.4
        %v1716 = vmul.f32 %v1595, 0.4
        %v1717 = vmul.f32 %v1599, 0.4
        %v1718 = vmul.f32 %v1601, 0.4
        %v1719 = vmul.f32 %v1603, 0.4
        %v1720 = vmul.f32 %v1605, 0.4
        %v1721 = vmul.f32 %v1609, 0.4
        %v1722 = vmul.f32 %v1611, 0.4
        %v1723 = vmul.f32 %v1613, 0.4
        %v1724 = vmul.f32 %v1615, 0.4
        %v1725 = vmul.f32 %v1619, 0.4
        %v1726 = vmul.f32 %v1621, 0.4
        %v1727 = vmul.f32 %v1623, 0.4
        %v1728 = vmul.f32 %v1625, 0.4
        %v1729 = vmul.f32 %v1629, 0.4
        %v1730 = vmul.f32 %v1631, 0.4
        %v1731 = vmul.f32 %v1633, 0.4
        %v1732 = vmul.f32 %v1635, 0.4
        %v1733 = vsel %vm1637, %v1519, %v1685
        %v1734 = vsel %vm1638, %v1521, %v1686
        %v1735 = vsel %vm1639, %v1523, %v1687
        %v1736 = vsel %vm1640, %v1525, %v1688
        %v1737 = vsel %vm1641, %v1529, %v1689
        %v1738 = vsel %vm1642, %v1531, %v1690
        %v1739 = vsel %vm1643, %v1533, %v1691
        %v1740 = vsel %vm1644, %v1535, %v1692
        %v1741 = vsel %vm1645, %v1539, %v1693
        %v1742 = vsel %vm1646, %v1541, %v1694
        %v1743 = vsel %vm1647, %v1543, %v1695
        %v1744 = vsel %vm1648, %v1545, %v1696
        %v1745 = vsel %vm1649, %v1549, %v1697
        %v1746 = vsel %vm1650, %v1551, %v1698
        %v1747 = vsel %vm1651, %v1553, %v1699
        %v1748 = vsel %vm1652, %v1555, %v1700
        %v1749 = vsel %vm1653, %v1559, %v1701
        %v1750 = vsel %vm1654, %v1561, %v1702
        %v1751 = vsel %vm1655, %v1563, %v1703
        %v1752 = vsel %vm1656, %v1565, %v1704
        %v1753 = vsel %vm1657, %v1569, %v1705
        %v1754 = vsel %vm1658, %v1571, %v1706
        %v1755 = vsel %vm1659, %v1573, %v1707
        %v1756 = vsel %vm1660, %v1575, %v1708
        %v1757 = vsel %vm1661, %v1579, %v1709
        %v1758 = vsel %vm1662, %v1581, %v1710
        %v1759 = vsel %vm1663, %v1583, %v1711
        %v1760 = vsel %vm1664, %v1585, %v1712
        %v1761 = vsel %vm1665, %v1589, %v1713
        %v1762 = vsel %vm1666, %v1591, %v1714
        %v1763 = vsel %vm1667, %v1593, %v1715
        %v1764 = vsel %vm1668, %v1595, %v1716
        %v1765 = vsel %vm1669, %v1599, %v1717
        %v1766 = vsel %vm1670, %v1601, %v1718
        %v1767 = vsel %vm1671, %v1603, %v1719
        %v1768 = vsel %vm1672, %v1605, %v1720
        %v1769 = vsel %vm1673, %v1609, %v1721
        %v1770 = vsel %vm1674, %v1611, %v1722
        %v1771 = vsel %vm1675, %v1613, %v1723
        %v1772 = vsel %vm1676, %v1615, %v1724
        %v1773 = vsel %vm1677, %v1619, %v1725
        %v1774 = vsel %vm1678, %v1621, %v1726
        %v1775 = vsel %vm1679, %v1623, %v1727
        %v1776 = vsel %vm1680, %v1625, %v1728
        %v1777 = vsel %vm1681, %v1629, %v1729
        %v1778 = vsel %vm1682, %v1631, %v1730
        %v1779 = vsel %vm1683, %v1633, %v1731
        %v1780 = vsel %vm1684, %v1635, %v1732
        %v1781 = vlaneseq
        %v1782 = vshrl.u32 %v1781, 7
        %v1783 = vadd.s32 %v1782, 8
        %v1784 = vadd.s32 %v1782, 16
        %v1785 = vadd.s32 %v1782, 24
        %v1786 = vadd.s32 %v1782, 32
        %v1787 = vadd.s32 %v1782, 40
        %v1788 = vadd.s32 %v1782, 48
        %v1789 = vadd.s32 %v1782, 56
        %v1790 = vadd.s32 %v1782, 64
        %v1791 = vadd.s32 %v1782, 72
        %v1792 = vadd.s32 %v1782, 80
        %v1793 = vadd.s32 %v1782, 88
        %vm1794 = vcmp.ge.s32.totalorder %v1782, 1
        %vm1795 = vcmp.ge.s32.totalorder %v1783, 1
        %vm1796 = vcmp.ge.s32.totalorder %v1784, 1
        %vm1797 = vcmp.ge.s32.totalorder %v1785, 1
        %vm1798 = vcmp.ge.s32.totalorder %v1786, 1
        %vm1799 = vcmp.ge.s32.totalorder %v1787, 1
        %vm1800 = vcmp.ge.s32.totalorder %v1788, 1
        %vm1801 = vcmp.ge.s32.totalorder %v1789, 1
        %vm1802 = vcmp.ge.s32.totalorder %v1790, 1
        %vm1803 = vcmp.ge.s32.totalorder %v1791, 1
        %vm1804 = vcmp.ge.s32.totalorder %v1792, 1
        %vm1805 = vcmp.ge.s32.totalorder %v1793, 1
        %vm1806 = vcmp.le.s32.totalorder %v1782, 80
        %vm1807 = vcmp.le.s32.totalorder %v1783, 80
        %vm1808 = vcmp.le.s32.totalorder %v1784, 80
        %vm1809 = vcmp.le.s32.totalorder %v1785, 80
        %vm1810 = vcmp.le.s32.totalorder %v1786, 80
        %vm1811 = vcmp.le.s32.totalorder %v1787, 80
        %vm1812 = vcmp.le.s32.totalorder %v1788, 80
        %vm1813 = vcmp.le.s32.totalorder %v1789, 80
        %vm1814 = vcmp.le.s32.totalorder %v1790, 80
        %vm1815 = vcmp.le.s32.totalorder %v1791, 80
        %vm1816 = vcmp.le.s32.totalorder %v1792, 80
        %vm1817 = vcmp.le.s32.totalorder %v1793, 80
        %vm1818 = vmand %vm1794, %vm1806
        %vm1819 = vmand %vm1795, %vm1807
        %vm1820 = vmand %vm1796, %vm1808
        %vm1821 = vmand %vm1797, %vm1809
        %vm1822 = vmand %vm1798, %vm1810
        %vm1823 = vmand %vm1799, %vm1811
        %vm1824 = vmand %vm1800, %vm1812
        %vm1825 = vmand %vm1801, %vm1813
        %vm1826 = vmand %vm1802, %vm1814
        %vm1827 = vmand %vm1803, %vm1815
        %vm1828 = vmand %vm1804, %vm1816
        %vm1829 = vmand %vm1805, %vm1817
        %s1830 = sadd.s32 %s21, 1
        %s1831 = smul.u32 %s1830, 512
        %p1832 = scmp.gt.s32.totalorder %s1831, 128
        // Predicated region
        $region75: #{upsample_net2_forward.6} parent=69 // pred_check
          %p1833 = pneg %p1832
        $region76: #{upsample_net2_forward.6} parent=69 // pred_check_branch
          %1835 = sbr.rel (%p1833) target = $region78
        $region77: #{upsample_net2_forward.6} parent=69 // pred_region
          %s1836 = smul.u32 %s21, 512
          %v1837 = vlaneseq
          %v1838 = vand.u32 %v1837, 127
          %v1839 = vadd.s32 %v1838, 128
          %s1840 = ssub.s32 128, %s1836
          %v1841 = vstv %s1840
          %vm1842 = vcmp.lt.s32.totalorder %v1838, %v1841
          %vm1843 = vcmp.lt.s32.totalorder %v1839, %v1841
          %vm1844 = vmand %vm1818, %vm1842
          %vm1845 = vmand %vm1818, %vm1843
          %vm1846 = vmand %vm1819, %vm1842
          %vm1847 = vmand %vm1819, %vm1843
          %vm1848 = vmand %vm1820, %vm1842
          %vm1849 = vmand %vm1820, %vm1843
          %vm1850 = vmand %vm1821, %vm1842
          %vm1851 = vmand %vm1821, %vm1843
          %vm1852 = vmand %vm1822, %vm1842
          %vm1853 = vmand %vm1822, %vm1843
          %vm1854 = vmand %vm1823, %vm1842
          %vm1855 = vmand %vm1823, %vm1843
          %vm1856 = vmand %vm1824, %vm1842
          %vm1857 = vmand %vm1824, %vm1843
          %vm1858 = vmand %vm1825, %vm1842
          %vm1859 = vmand %vm1825, %vm1843
          %vm1860 = vmand %vm1826, %vm1842
          %vm1861 = vmand %vm1826, %vm1843
          %vm1862 = vmand %vm1827, %vm1842
          %vm1863 = vmand %vm1827, %vm1843
          %vm1864 = vmand %vm1828, %vm1842
          %vm1865 = vmand %vm1828, %vm1843
          %vm1866 = vmand %vm1829, %vm1842
          %vm1867 = vmand %vm1829, %vm1843
          %v1868 = vsel %vm1844, %v1733, 0.0
          %v1869 = vsel %vm1845, %v1734, 0.0
          %v1870 = vsel %vm1846, %v1735, 0.0
          %v1871 = vsel %vm1847, %v1736, 0.0
          %v1872 = vsel %vm1848, %v1737, 0.0
          %v1873 = vsel %vm1849, %v1738, 0.0
          %v1874 = vsel %vm1850, %v1739, 0.0
          %v1875 = vsel %vm1851, %v1740, 0.0
          %v1876 = vsel %vm1852, %v1741, 0.0
          %v1877 = vsel %vm1853, %v1742, 0.0
          %v1878 = vsel %vm1854, %v1743, 0.0
          %v1879 = vsel %vm1855, %v1744, 0.0
          %v1880 = vsel %vm1856, %v1745, 0.0
          %v1881 = vsel %vm1857, %v1746, 0.0
          %v1882 = vsel %vm1858, %v1747, 0.0
          %v1883 = vsel %vm1859, %v1748, 0.0
          %v1884 = vsel %vm1860, %v1749, 0.0
          %v1885 = vsel %vm1861, %v1750, 0.0
          %v1886 = vsel %vm1862, %v1751, 0.0
          %v1887 = vsel %vm1863, %v1752, 0.0
          %v1888 = vsel %vm1864, %v1753, 0.0
          %v1889 = vsel %vm1865, %v1754, 0.0
          %v1890 = vsel %vm1866, %v1755, 0.0
          %v1891 = vsel %vm1867, %v1756, 0.0
          %s1892 = smul.u32 %s21, 2
          %s1893 = sadd.s32 %s1892, 1
          %s1894 = smul.u32 %s1893, 256
          %s1895 = ssub.s32 128, %s1894
          %v1896 = vstv %s1895
          %vm1897 = vcmp.lt.s32.totalorder %v1838, %v1896
          %vm1898 = vcmp.lt.s32.totalorder %v1839, %v1896
          %vm1899 = vmand %vm1818, %vm1897
          %vm1900 = vmand %vm1818, %vm1898
          %vm1901 = vmand %vm1819, %vm1897
          %vm1902 = vmand %vm1819, %vm1898
          %vm1903 = vmand %vm1820, %vm1897
          %vm1904 = vmand %vm1820, %vm1898
          %vm1905 = vmand %vm1821, %vm1897
          %vm1906 = vmand %vm1821, %vm1898
          %vm1907 = vmand %vm1822, %vm1897
          %vm1908 = vmand %vm1822, %vm1898
          %vm1909 = vmand %vm1823, %vm1897
          %vm1910 = vmand %vm1823, %vm1898
          %vm1911 = vmand %vm1824, %vm1897
          %vm1912 = vmand %vm1824, %vm1898
          %vm1913 = vmand %vm1825, %vm1897
          %vm1914 = vmand %vm1825, %vm1898
          %vm1915 = vmand %vm1826, %vm1897
          %vm1916 = vmand %vm1826, %vm1898
          %vm1917 = vmand %vm1827, %vm1897
          %vm1918 = vmand %vm1827, %vm1898
          %vm1919 = vmand %vm1828, %vm1897
          %vm1920 = vmand %vm1828, %vm1898
          %vm1921 = vmand %vm1829, %vm1897
          %vm1922 = vmand %vm1829, %vm1898
          %v1923 = vsel %vm1899, %v1757, 0.0
          %v1924 = vsel %vm1900, %v1758, 0.0
          %v1925 = vsel %vm1901, %v1759, 0.0
          %v1926 = vsel %vm1902, %v1760, 0.0
          %v1927 = vsel %vm1903, %v1761, 0.0
          %v1928 = vsel %vm1904, %v1762, 0.0
          %v1929 = vsel %vm1905, %v1763, 0.0
          %v1930 = vsel %vm1906, %v1764, 0.0
          %v1931 = vsel %vm1907, %v1765, 0.0
          %v1932 = vsel %vm1908, %v1766, 0.0
          %v1933 = vsel %vm1909, %v1767, 0.0
          %v1934 = vsel %vm1910, %v1768, 0.0
          %v1935 = vsel %vm1911, %v1769, 0.0
          %v1936 = vsel %vm1912, %v1770, 0.0
          %v1937 = vsel %vm1913, %v1771, 0.0
          %v1938 = vsel %vm1914, %v1772, 0.0
          %v1939 = vsel %vm1915, %v1773, 0.0
          %v1940 = vsel %vm1916, %v1774, 0.0
          %v1941 = vsel %vm1917, %v1775, 0.0
          %v1942 = vsel %vm1918, %v1776, 0.0
          %v1943 = vsel %vm1919, %v1777, 0.0
          %v1944 = vsel %vm1920, %v1778, 0.0
          %v1945 = vsel %vm1921, %v1779, 0.0
          %v1946 = vsel %vm1922, %v1780, 0.0
          %v1947 = vpack.c.bf16 %v1870, %v1868
          %v1948 = vpack.c.bf16 %v1871, %v1869
          %v1949 = vpack.c.bf16 %v1925, %v1923
          %v1950 = vpack.c.bf16 %v1926, %v1924
          %v1951 = vpack.c.bf16 %v1874, %v1872
          %v1952 = vpack.c.bf16 %v1875, %v1873
          %v1953 = vpack.c.bf16 %v1929, %v1927
          %v1954 = vpack.c.bf16 %v1930, %v1928
          %v1955 = vpack.c.bf16 %v1878, %v1876
          %v1956 = vpack.c.bf16 %v1879, %v1877
          %v1957 = vpack.c.bf16 %v1933, %v1931
          %v1958 = vpack.c.bf16 %v1934, %v1932
          %v1959 = vpack.c.bf16 %v1882, %v1880
          %v1960 = vpack.c.bf16 %v1883, %v1881
          %v1961 = vpack.c.bf16 %v1937, %v1935
          %v1962 = vpack.c.bf16 %v1938, %v1936
          %v1963 = vpack.c.bf16 %v1886, %v1884
          %v1964 = vpack.c.bf16 %v1887, %v1885
          %v1965 = vpack.c.bf16 %v1941, %v1939
          %v1966 = vpack.c.bf16 %v1942, %v1940
          %v1967 = vpack.c.bf16 %v1890, %v1888
          %v1968 = vpack.c.bf16 %v1891, %v1889
          %v1969 = vpack.c.bf16 %v1945, %v1943
          %v1970 = vpack.c.bf16 %v1946, %v1944
          %v1995 = vunpack.c.l.b16 %v1947
          %v1996 = vunpack.c.l.b16 %v1948
          %v1997 = vunpack.c.l.b16 %v1949
          %v1998 = vunpack.c.l.b16 %v1950
          %v1999 = vunpack.c.h.b16 %v1947
          %v2000 = vunpack.c.h.b16 %v1948
          %v2001 = vunpack.c.h.b16 %v1949
          %v2002 = vunpack.c.h.b16 %v1950
          %v2003 = vunpack.c.l.b16 %v1951
          %v2004 = vunpack.c.l.b16 %v1952
          %v2005 = vunpack.c.l.b16 %v1953
          %v2006 = vunpack.c.l.b16 %v1954
          %v2007 = vunpack.c.h.b16 %v1951
          %v2008 = vunpack.c.h.b16 %v1952
          %v2009 = vunpack.c.h.b16 %v1953
          %v2010 = vunpack.c.h.b16 %v1954
          %v2011 = vunpack.c.l.b16 %v1955
          %v2012 = vunpack.c.l.b16 %v1956
          %v2013 = vunpack.c.l.b16 %v1957
          %v2014 = vunpack.c.l.b16 %v1958
          %v2015 = vunpack.c.h.b16 %v1955
          %v2016 = vunpack.c.h.b16 %v1956
          %v2017 = vunpack.c.h.b16 %v1957
          %v2018 = vunpack.c.h.b16 %v1958
          %v2019 = vunpack.c.l.b16 %v1959
          %v2020 = vunpack.c.l.b16 %v1960
          %v2021 = vunpack.c.l.b16 %v1961
          %v2022 = vunpack.c.l.b16 %v1962
          %v2023 = vunpack.c.h.b16 %v1959
          %v2024 = vunpack.c.h.b16 %v1960
          %v2025 = vunpack.c.h.b16 %v1961
          %v2026 = vunpack.c.h.b16 %v1962
          %v2027 = vunpack.c.l.b16 %v1963
          %v2028 = vunpack.c.l.b16 %v1964
          %v2029 = vunpack.c.l.b16 %v1965
          %v2030 = vunpack.c.l.b16 %v1966
          %v2031 = vunpack.c.h.b16 %v1963
          %v2032 = vunpack.c.h.b16 %v1964
          %v2033 = vunpack.c.h.b16 %v1965
          %v2034 = vunpack.c.h.b16 %v1966
          %v2035 = vunpack.c.l.b16 %v1967
          %v2036 = vunpack.c.l.b16 %v1968
          %v2037 = vunpack.c.l.b16 %v1969
          %v2038 = vunpack.c.l.b16 %v1970
          %v2039 = vunpack.c.h.b16 %v1967
          %v2040 = vunpack.c.h.b16 %v1968
          %v2041 = vunpack.c.h.b16 %v1969
          %v2042 = vunpack.c.h.b16 %v1970
          %v2043 = vpack.c.b16 %v1996, %v1995
          %v2044 = vpack.c.b16 %v1998, %v1997
          %v2045 = vpack.c.b16 %v2000, %v1999
          %v2046 = vpack.c.b16 %v2002, %v2001
          %v2047 = vpack.c.b16 %v2004, %v2003
          %v2048 = vpack.c.b16 %v2006, %v2005
          %v2049 = vpack.c.b16 %v2008, %v2007
          %v2050 = vpack.c.b16 %v2010, %v2009
          %v2051 = vpack.c.b16 %v2012, %v2011
          %v2052 = vpack.c.b16 %v2014, %v2013
          %v2053 = vpack.c.b16 %v2016, %v2015
          %v2054 = vpack.c.b16 %v2018, %v2017
          %v2055 = vpack.c.b16 %v2020, %v2019
          %v2056 = vpack.c.b16 %v2022, %v2021
          %v2057 = vpack.c.b16 %v2024, %v2023
          %v2058 = vpack.c.b16 %v2026, %v2025
          %v2059 = vpack.c.b16 %v2028, %v2027
          %v2060 = vpack.c.b16 %v2030, %v2029
          %v2061 = vpack.c.b16 %v2032, %v2031
          %v2062 = vpack.c.b16 %v2034, %v2033
          %v2063 = vpack.c.b16 %v2036, %v2035
          %v2064 = vpack.c.b16 %v2038, %v2037
          %v2065 = vpack.c.b16 %v2040, %v2039
          %v2066 = vpack.c.b16 %v2042, %v2041
          %2091 = vst [vmem:[%s314] sm:$0xff] %v2043
          %2092 = vst [vmem:[%s314 + $0x8] sm:$0xff] %v2044
          %2093 = vst [vmem:[%s314 + $0x10] sm:$0xff] %v2045
          %2094 = vst [vmem:[%s314 + $0x18] sm:$0xff] %v2046
          %2095 = vst [vmem:[%s314 + $0x20] sm:$0xff] %v2047
          %2096 = vst [vmem:[%s314 + $0x28] sm:$0xff] %v2048
          %2097 = vst [vmem:[%s314 + $0x30] sm:$0xff] %v2049
          %2098 = vst [vmem:[%s314 + $0x38] sm:$0xff] %v2050
          %2099 = vst [vmem:[%s314 + $0x40] sm:$0xff] %v2051
          %2100 = vst [vmem:[%s314 + $0x48] sm:$0xff] %v2052
          %2101 = vst [vmem:[%s314 + $0x50] sm:$0xff] %v2053
          %2102 = vst [vmem:[%s314 + $0x58] sm:$0xff] %v2054
          %2103 = vst [vmem:[%s314 + $0x60] sm:$0xff] %v2055
          %2104 = vst [vmem:[%s314 + $0x68] sm:$0xff] %v2056
          %2105 = vst [vmem:[%s314 + $0x70] sm:$0xff] %v2057
          %2106 = vst [vmem:[%s314 + $0x78] sm:$0xff] %v2058
          %2107 = vst [vmem:[%s314 + $0x80] sm:$0xff] %v2059
          %2108 = vst [vmem:[%s314 + $0x88] sm:$0xff] %v2060
          %2109 = vst [vmem:[%s314 + $0x90] sm:$0xff] %v2061
          %2110 = vst [vmem:[%s314 + $0x98] sm:$0xff] %v2062
          %2111 = vst [vmem:[%s314 + $0xa0] sm:$0xff] %v2063
          %2112 = vst [vmem:[%s314 + $0xa8] sm:$0xff] %v2064
          %2113 = vst [vmem:[%s314 + $0xb0] sm:$0xff] %v2065
          %2114 = vst [vmem:[%s314 + $0xb8] sm:$0xff] %v2066
        $region78: #{upsample_net2_forward.6} parent=69 // pred_fallthru
          _
        %p2115 = scmp.le.s32.totalorder %s1831, 128
        // Predicated region
        $region79: #{upsample_net2_forward.6} parent=69 // pred_check
          %p2116 = pneg %p2115
        $region80: #{upsample_net2_forward.6} parent=69 // pred_check_branch
          %2118 = sbr.rel (%p2116) target = $region82
        $region81: #{upsample_net2_forward.6} parent=69 // pred_region
          %v2119 = vsel %vm1818, %v1733, 0.0
          %v2120 = vsel %vm1818, %v1734, 0.0
          %v2121 = vsel %vm1819, %v1735, 0.0
          %v2122 = vsel %vm1819, %v1736, 0.0
          %v2123 = vsel %vm1820, %v1737, 0.0
          %v2124 = vsel %vm1820, %v1738, 0.0
          %v2125 = vsel %vm1821, %v1739, 0.0
          %v2126 = vsel %vm1821, %v1740, 0.0
          %v2127 = vsel %vm1822, %v1741, 0.0
          %v2128 = vsel %vm1822, %v1742, 0.0
          %v2129 = vsel %vm1823, %v1743, 0.0
          %v2130 = vsel %vm1823, %v1744, 0.0
          %v2131 = vsel %vm1824, %v1745, 0.0
          %v2132 = vsel %vm1824, %v1746, 0.0
          %v2133 = vsel %vm1825, %v1747, 0.0
          %v2134 = vsel %vm1825, %v1748, 0.0
          %v2135 = vsel %vm1826, %v1749, 0.0
          %v2136 = vsel %vm1826, %v1750, 0.0
          %v2137 = vsel %vm1827, %v1751, 0.0
          %v2138 = vsel %vm1827, %v1752, 0.0
          %v2139 = vsel %vm1828, %v1753, 0.0
          %v2140 = vsel %vm1828, %v1754, 0.0
          %v2141 = vsel %vm1829, %v1755, 0.0
          %v2142 = vsel %vm1829, %v1756, 0.0
          %v2143 = vsel %vm1818, %v1757, 0.0
          %v2144 = vsel %vm1818, %v1758, 0.0
          %v2145 = vsel %vm1819, %v1759, 0.0
          %v2146 = vsel %vm1819, %v1760, 0.0
          %v2147 = vsel %vm1820, %v1761, 0.0
          %v2148 = vsel %vm1820, %v1762, 0.0
          %v2149 = vsel %vm1821, %v1763, 0.0
          %v2150 = vsel %vm1821, %v1764, 0.0
          %v2151 = vsel %vm1822, %v1765, 0.0
          %v2152 = vsel %vm1822, %v1766, 0.0
          %v2153 = vsel %vm1823, %v1767, 0.0
          %v2154 = vsel %vm1823, %v1768, 0.0
          %v2155 = vsel %vm1824, %v1769, 0.0
          %v2156 = vsel %vm1824, %v1770, 0.0
          %v2157 = vsel %vm1825, %v1771, 0.0
          %v2158 = vsel %vm1825, %v1772, 0.0
          %v2159 = vsel %vm1826, %v1773, 0.0
          %v2160 = vsel %vm1826, %v1774, 0.0
          %v2161 = vsel %vm1827, %v1775, 0.0
          %v2162 = vsel %vm1827, %v1776, 0.0
          %v2163 = vsel %vm1828, %v1777, 0.0
          %v2164 = vsel %vm1828, %v1778, 0.0
          %v2165 = vsel %vm1829, %v1779, 0.0
          %v2166 = vsel %vm1829, %v1780, 0.0
          %v2167 = vpack.c.bf16 %v2121, %v2119
          %v2168 = vpack.c.bf16 %v2122, %v2120
          %v2169 = vpack.c.bf16 %v2145, %v2143
          %v2170 = vpack.c.bf16 %v2146, %v2144
          %v2171 = vpack.c.bf16 %v2125, %v2123
          %v2172 = vpack.c.bf16 %v2126, %v2124
          %v2173 = vpack.c.bf16 %v2149, %v2147
          %v2174 = vpack.c.bf16 %v2150, %v2148
          %v2175 = vpack.c.bf16 %v2129, %v2127
          %v2176 = vpack.c.bf16 %v2130, %v2128
          %v2177 = vpack.c.bf16 %v2153, %v2151
          %v2178 = vpack.c.bf16 %v2154, %v2152
          %v2179 = vpack.c.bf16 %v2133, %v2131
          %v2180 = vpack.c.bf16 %v2134, %v2132
          %v2181 = vpack.c.bf16 %v2157, %v2155
          %v2182 = vpack.c.bf16 %v2158, %v2156
          %v2183 = vpack.c.bf16 %v2137, %v2135
          %v2184 = vpack.c.bf16 %v2138, %v2136
          %v2185 = vpack.c.bf16 %v2161, %v2159
          %v2186 = vpack.c.bf16 %v2162, %v2160
          %v2187 = vpack.c.bf16 %v2141, %v2139
          %v2188 = vpack.c.bf16 %v2142, %v2140
          %v2189 = vpack.c.bf16 %v2165, %v2163
          %v2190 = vpack.c.bf16 %v2166, %v2164
          %v2215 = vunpack.c.l.b16 %v2167
          %v2216 = vunpack.c.l.b16 %v2168
          %v2217 = vunpack.c.l.b16 %v2169
          %v2218 = vunpack.c.l.b16 %v2170
          %v2219 = vunpack.c.h.b16 %v2167
          %v2220 = vunpack.c.h.b16 %v2168
          %v2221 = vunpack.c.h.b16 %v2169
          %v2222 = vunpack.c.h.b16 %v2170
          %v2223 = vunpack.c.l.b16 %v2171
          %v2224 = vunpack.c.l.b16 %v2172
          %v2225 = vunpack.c.l.b16 %v2173
          %v2226 = vunpack.c.l.b16 %v2174
          %v2227 = vunpack.c.h.b16 %v2171
          %v2228 = vunpack.c.h.b16 %v2172
          %v2229 = vunpack.c.h.b16 %v2173
          %v2230 = vunpack.c.h.b16 %v2174
          %v2231 = vunpack.c.l.b16 %v2175
          %v2232 = vunpack.c.l.b16 %v2176
          %v2233 = vunpack.c.l.b16 %v2177
          %v2234 = vunpack.c.l.b16 %v2178
          %v2235 = vunpack.c.h.b16 %v2175
          %v2236 = vunpack.c.h.b16 %v2176
          %v2237 = vunpack.c.h.b16 %v2177
          %v2238 = vunpack.c.h.b16 %v2178
          %v2239 = vunpack.c.l.b16 %v2179
          %v2240 = vunpack.c.l.b16 %v2180
          %v2241 = vunpack.c.l.b16 %v2181
          %v2242 = vunpack.c.l.b16 %v2182
          %v2243 = vunpack.c.h.b16 %v2179
          %v2244 = vunpack.c.h.b16 %v2180
          %v2245 = vunpack.c.h.b16 %v2181
          %v2246 = vunpack.c.h.b16 %v2182
          %v2247 = vunpack.c.l.b16 %v2183
          %v2248 = vunpack.c.l.b16 %v2184
          %v2249 = vunpack.c.l.b16 %v2185
          %v2250 = vunpack.c.l.b16 %v2186
          %v2251 = vunpack.c.h.b16 %v2183
          %v2252 = vunpack.c.h.b16 %v2184
          %v2253 = vunpack.c.h.b16 %v2185
          %v2254 = vunpack.c.h.b16 %v2186
          %v2255 = vunpack.c.l.b16 %v2187
          %v2256 = vunpack.c.l.b16 %v2188
          %v2257 = vunpack.c.l.b16 %v2189
          %v2258 = vunpack.c.l.b16 %v2190
          %v2259 = vunpack.c.h.b16 %v2187
          %v2260 = vunpack.c.h.b16 %v2188
          %v2261 = vunpack.c.h.b16 %v2189
          %v2262 = vunpack.c.h.b16 %v2190
          %v2263 = vpack.c.b16 %v2216, %v2215
          %v2264 = vpack.c.b16 %v2218, %v2217
          %v2265 = vpack.c.b16 %v2220, %v2219
          %v2266 = vpack.c.b16 %v2222, %v2221
          %v2267 = vpack.c.b16 %v2224, %v2223
          %v2268 = vpack.c.b16 %v2226, %v2225
          %v2269 = vpack.c.b16 %v2228, %v2227
          %v2270 = vpack.c.b16 %v2230, %v2229
          %v2271 = vpack.c.b16 %v2232, %v2231
          %v2272 = vpack.c.b16 %v2234, %v2233
          %v2273 = vpack.c.b16 %v2236, %v2235
          %v2274 = vpack.c.b16 %v2238, %v2237
          %v2275 = vpack.c.b16 %v2240, %v2239
          %v2276 = vpack.c.b16 %v2242, %v2241
          %v2277 = vpack.c.b16 %v2244, %v2243
          %v2278 = vpack.c.b16 %v2246, %v2245
          %v2279 = vpack.c.b16 %v2248, %v2247
          %v2280 = vpack.c.b16 %v2250, %v2249
          %v2281 = vpack.c.b16 %v2252, %v2251
          %v2282 = vpack.c.b16 %v2254, %v2253
          %v2283 = vpack.c.b16 %v2256, %v2255
          %v2284 = vpack.c.b16 %v2258, %v2257
          %v2285 = vpack.c.b16 %v2260, %v2259
          %v2286 = vpack.c.b16 %v2262, %v2261
          %2311 = vst [vmem:[%s314] sm:$0xff] %v2263
          %2312 = vst [vmem:[%s314 + $0x8] sm:$0xff] %v2264
          %2313 = vst [vmem:[%s314 + $0x10] sm:$0xff] %v2265
          %2314 = vst [vmem:[%s314 + $0x18] sm:$0xff] %v2266
          %2315 = vst [vmem:[%s314 + $0x20] sm:$0xff] %v2267
          %2316 = vst [vmem:[%s314 + $0x28] sm:$0xff] %v2268
          %2317 = vst [vmem:[%s314 + $0x30] sm:$0xff] %v2269
          %2318 = vst [vmem:[%s314 + $0x38] sm:$0xff] %v2270
          %2319 = vst [vmem:[%s314 + $0x40] sm:$0xff] %v2271
          %2320 = vst [vmem:[%s314 + $0x48] sm:$0xff] %v2272
          %2321 = vst [vmem:[%s314 + $0x50] sm:$0xff] %v2273
          %2322 = vst [vmem:[%s314 + $0x58] sm:$0xff] %v2274
          %2323 = vst [vmem:[%s314 + $0x60] sm:$0xff] %v2275
          %2324 = vst [vmem:[%s314 + $0x68] sm:$0xff] %v2276
          %2325 = vst [vmem:[%s314 + $0x70] sm:$0xff] %v2277
          %2326 = vst [vmem:[%s314 + $0x78] sm:$0xff] %v2278
          %2327 = vst [vmem:[%s314 + $0x80] sm:$0xff] %v2279
          %2328 = vst [vmem:[%s314 + $0x88] sm:$0xff] %v2280
          %2329 = vst [vmem:[%s314 + $0x90] sm:$0xff] %v2281
          %2330 = vst [vmem:[%s314 + $0x98] sm:$0xff] %v2282
          %2331 = vst [vmem:[%s314 + $0xa0] sm:$0xff] %v2283
          %2332 = vst [vmem:[%s314 + $0xa8] sm:$0xff] %v2284
          %2333 = vst [vmem:[%s314 + $0xb0] sm:$0xff] %v2285
          %2334 = vst [vmem:[%s314 + $0xb8] sm:$0xff] %v2286
        $region82: #{upsample_net2_forward.6} parent=69 // pred_fallthru
          _
        %s2335 = sand.u32 %s136, 1
        %s2336 = sand.u32 %s136, 1
        %s2337 = smul.addr %s2336, 192
        %s2338 = scalar_lea.vmem [#allocation4], %s2337
        // Predicated region
        $region83: #{upsample_net2_forward.6} parent=69 // pred_check
          %p2339 = pneg %p146
        $region84: #{upsample_net2_forward.6} parent=69 // pred_check_branch
          %2341 = sbr.rel (%p2339) target = $region86
        $region85: #{upsample_net2_forward.6} parent=69 // pred_region
          %s2342 = smul.u32 4, %s21
          %s2343 = smul.addr %s20, 192
          %s2344 = sadd.s32 %s2342, %s2343
          %s2345 = smul.addr %s2344, 4
          %s2346 = scalar_lea.vmem %s4, %s2345
          // Predicated region
          $region87: #{upsample_net2_forward.6} parent=85 // pred_check
            _
          $region88: #{upsample_net2_forward.6} parent=85 // pred_check_branch
            %2348 = sbr.rel (0) target = $region90
          $region89: #{upsample_net2_forward.6} parent=85 // pred_region
            // Predicated region
            $region91: #{upsample_net2_forward.6} parent=89 // pred_check
              _
            $region92: #{upsample_net2_forward.6} parent=89 // pred_check_branch
              %2350 = sbr.rel (0) target = $region94
            $region93: #{upsample_net2_forward.6} parent=89 // pred_region
              loop: start=0, step=1, limit=1
              $region95: #{upsample_net2_forward.6} parent=93 // loop_pre_header
                _
              $region96: #{upsample_net2_forward.6} parent=93 // loop_header
                %s2352 = sphi 0, %s2356
                %p2353 = scmp.ge.s32.totalorder %s2352, 1
                %s2357 = sphi %s2338, %s2338
                %s2358 = sphi %s2346, %s2346
              $region97: #{upsample_net2_forward.6} parent=93 // loop_header_branch
                %2355 = sbr.rel (%p2353) target = $region101
              $region98: #{upsample_net2_forward.6} parent=93 // loop_body
                %v2359 = vld [vmem:[%s2357] sm:$0xff]
                %2360 = vst [vmem:[%s2358] sm:$0xff] %v2359
                %v2361 = vld [vmem:[%s2357 + $0x8] sm:$0xff]
                %2362 = vst [vmem:[%s2358 + $0x8] sm:$0xff] %v2361
                %v2363 = vld [vmem:[%s2357 + $0x10] sm:$0xff]
                %2364 = vst [vmem:[%s2358 + $0x40] sm:$0xff] %v2363
                %v2365 = vld [vmem:[%s2357 + $0x18] sm:$0xff]
                %2366 = vst [vmem:[%s2358 + $0x48] sm:$0xff] %v2365
                %v2367 = vld [vmem:[%s2357 + $0x20] sm:$0xff]
                %2368 = vst [vmem:[%s2358 + $0x80] sm:$0xff] %v2367
                %v2369 = vld [vmem:[%s2357 + $0x28] sm:$0xff]
                %2370 = vst [vmem:[%s2358 + $0x88] sm:$0xff] %v2369
                %v2371 = vld [vmem:[%s2357 + $0x30] sm:$0xff]
                %2372 = vst [vmem:[%s2358 + $0xc0] sm:$0xff] %v2371
                %v2373 = vld [vmem:[%s2357 + $0x38] sm:$0xff]
                %2374 = vst [vmem:[%s2358 + $0xc8] sm:$0xff] %v2373
                %v2375 = vld [vmem:[%s2357 + $0x40] sm:$0xff]
                %2376 = vst [vmem:[%s2358 + $0x100] sm:$0xff] %v2375
                %v2377 = vld [vmem:[%s2357 + $0x48] sm:$0xff]
                %2378 = vst [vmem:[%s2358 + $0x108] sm:$0xff] %v2377
                %v2379 = vld [vmem:[%s2357 + $0x50] sm:$0xff]
                %2380 = vst [vmem:[%s2358 + $0x140] sm:$0xff] %v2379
                %v2381 = vld [vmem:[%s2357 + $0x58] sm:$0xff]
                %2382 = vst [vmem:[%s2358 + $0x148] sm:$0xff] %v2381
                %v2383 = vld [vmem:[%s2357 + $0x60] sm:$0xff]
                %2384 = vst [vmem:[%s2358 + $0x180] sm:$0xff] %v2383
                %v2385 = vld [vmem:[%s2357 + $0x68] sm:$0xff]
                %2386 = vst [vmem:[%s2358 + $0x188] sm:$0xff] %v2385
                %v2387 = vld [vmem:[%s2357 + $0x70] sm:$0xff]
                %2388 = vst [vmem:[%s2358 + $0x1c0] sm:$0xff] %v2387
                %v2389 = vld [vmem:[%s2357 + $0x78] sm:$0xff]
                %2390 = vst [vmem:[%s2358 + $0x1c8] sm:$0xff] %v2389
                %v2391 = vld [vmem:[%s2357 + $0x80] sm:$0xff]
                %2392 = vst [vmem:[%s2358 + $0x200] sm:$0xff] %v2391
                %v2393 = vld [vmem:[%s2357 + $0x88] sm:$0xff]
                %2394 = vst [vmem:[%s2358 + $0x208] sm:$0xff] %v2393
                %v2395 = vld [vmem:[%s2357 + $0x90] sm:$0xff]
                %2396 = vst [vmem:[%s2358 + $0x240] sm:$0xff] %v2395
                %v2397 = vld [vmem:[%s2357 + $0x98] sm:$0xff]
                %2398 = vst [vmem:[%s2358 + $0x248] sm:$0xff] %v2397
                %v2399 = vld [vmem:[%s2357 + $0xa0] sm:$0xff]
                %2400 = vst [vmem:[%s2358 + $0x280] sm:$0xff] %v2399
                %v2401 = vld [vmem:[%s2357 + $0xa8] sm:$0xff]
                %2402 = vst [vmem:[%s2358 + $0x288] sm:$0xff] %v2401
                %v2403 = vld [vmem:[%s2357 + $0xb0] sm:$0xff]
                %2404 = vst [vmem:[%s2358 + $0x2c0] sm:$0xff] %v2403
                %v2405 = vld [vmem:[%s2357 + $0xb8] sm:$0xff]
                %2406 = vst [vmem:[%s2358 + $0x2c8] sm:$0xff] %v2405
              $region99: #{upsample_net2_forward.6} parent=93 // loop_footer
                %s2356 = sadd.s32 1, %s2352
              $region100: #{upsample_net2_forward.6} parent=93 // loop_footer_branch
                %2351 = sbr.rel target = $region96
              $region101: #{upsample_net2_forward.6} parent=93 // loop_exit
                _
            $region94: #{upsample_net2_forward.6} parent=89 // pred_fallthru
              _
            // Predicated region
            $region102: #{upsample_net2_forward.6} parent=89 // pred_check
              _
            $region103: #{upsample_net2_forward.6} parent=89 // pred_check_branch
              %2408 = sbr.rel target = $region105
            $region104: #{upsample_net2_forward.6} parent=89 // pred_region
              _
            $region105: #{upsample_net2_forward.6} parent=89 // pred_fallthru
              _
          $region90: #{upsample_net2_forward.6} parent=85 // pred_fallthru
            _
          %2409 = vnop
        $region86: #{upsample_net2_forward.6} parent=69 // pred_fallthru
          _
      $region70: #{upsample_net2_forward.6} parent=5 // pred_fallthru
        _
      %p2410 = scmp.le.s32.totalorder 2, %s11
      // Predicated region
      $region106: #{upsample_net2_forward.6} parent=5 // pred_check
        %p2411 = pneg %p2410
      $region107: #{upsample_net2_forward.6} parent=5 // pred_check_branch
        %2413 = sbr.rel (%p2411) target = $region109
      $region108: #{upsample_net2_forward.6} parent=5 // pred_region
        %s2414 = ssub.s32 %s11, 2
        // Predicated region
        $region110: #{upsample_net2_forward.6} parent=108 // pred_check
          %p2415 = pneg %p152
        $region111: #{upsample_net2_forward.6} parent=108 // pred_check_branch
          %2417 = sbr.rel (%p2415) target = $region113
        $region112: #{upsample_net2_forward.6} parent=108 // pred_region
          %s2418 = sand.u32 %s137, 1
          %s2419 = sand.u32 %s137, 1
          %s2420 = smul.addr %s2419, 192
          %s2421 = scalar_lea.vmem [#allocation4], %s2420
        $region113: #{upsample_net2_forward.6} parent=108 // pred_fallthru
          _
      $region109: #{upsample_net2_forward.6} parent=5 // pred_fallthru
        _
    $region6: #{upsample_net2_forward.6} parent=1 // loop_footer
      %s15 = sadd.s32 1, %s11
    $region7: #{upsample_net2_forward.6} parent=1 // loop_footer_branch
      %10 = sbr.rel target = $region3
    $region8: #{upsample_net2_forward.6} parent=1 // loop_exit
      _

// kernel: upsample_net2_forward.7
$region0: #{upsample_net2_forward.7}
  #allocation0 [shape = 'u32[]', space=smem, size = 0x4, offset = 0x4, fixed_abs, tag = 'smem constant byte address 0x4 - core index']
  #allocation1 [shape = 'u32[144,128]{1,0:T(1,128)}', space=vmem, size = 0x12000, scoped, tag = 'internal scratch']
  #allocation2 [shape = 'f32[1]{0:T(128)S(6)}', space=smem, size = 0x200, scoped, tag = 'scoped memory for upsample_net2_forward.7']
  %s0 = inlined_call_operand.vmem [shape: bf16[2,96,2048], index: 0, kind: input, shape index: {}]
  %s1 = inlined_call_operand.vmem [shape: bf16[2,8,96,2], index: 1, kind: input, shape index: {}]
  %s2 = inlined_call_operand.vmem [shape: bf16[390,256], index: 2, kind: input, shape index: {}]
  %s3 = inlined_call_operand.<no memory space> [shape: f32[1], index: 3, kind: input, shape index: {}]
  %s4 = inlined_call_operand.vmem [shape: bf16[2,96,4096], index: 4, kind: output, shape index: {}]
  %s5 = sld [smem:[#allocation0]]
  $region114: #{upsample_net2_forward.7} parent=0
    _
  %s7 = ssub.s32 1, %s5
  %s8 = scalar_select 0, %s7, %s5
  %9 = sst [smem:[#allocation2]] %s3
  $region1: #{upsample_net2_forward.7} parent=0
    #allocation3 [shape = 'u8[98304]{0}', space=vmem, size = 0x18000, scoped, tag = 'input window, operand 0']
    #allocation4 [shape = 'u8[196608]{0}', space=vmem, size = 0x30000, scoped, tag = 'output window, operand 0']
    loop: start=0, step=1, limit=18
    $region2: #{upsample_net2_forward.7} parent=1 // loop_pre_header
      _
    $region3: #{upsample_net2_forward.7} parent=1 // loop_header
      %s11 = sphi 0, %s15
      %p12 = scmp.ge.s32.totalorder %s11, 18
      %s18 = sphi 0, %s30
      %s19 = sphi 0, %s26
      %s20 = sphi 0, %s18
      %s21 = sphi 0, %s19
      %s22 = sphi 0, %s20
      %s23 = sphi 0, %s21
      %s35 = sphi 0, %s37
      %s38 = sphi 0, %s35
      %s39 = sphi 0, %s38
      %s55 = sphi 0, %s39
      %s63 = sphi 0, %s65
      %s66 = sphi 0, %s63
      %s67 = sphi 0, %s66
      %s83 = sphi 0, %s67
      %s87 = sphi 0, %s87
      %s89 = sphi 0, %s87
      %s90 = sphi 0, %s89
      %s104 = sphi 0, %s90
      %s108 = sphi 0, %s108
      %s110 = sphi 0, %s108
      %s111 = sphi 0, %s110
      %s125 = sphi 0, %s111
      %s133 = sphi 0, %s135
      %s136 = sphi 0, %s133
      %s137 = sphi 0, %s136
      %s153 = sphi 0, %s137
    $region4: #{upsample_net2_forward.7} parent=1 // loop_header_branch
      %14 = sbr.rel (%p12) target = $region8
    $region5: #{upsample_net2_forward.7} parent=1 // loop_body
      %s16 = ssub.s32 %s11, 1
      %s17 = ssub.s32 %s11, 2
      %s24 = sadd.s32 1, %s19
      %p25 = scmp.ge.s32.totalorder %s24, 8
      %s26 = scalar_select %p25, 0, %s24
      %s27 = sadd.s32 1, %s18
      %s28 = scalar_select %p25, %s27, %s18
      %p29 = scmp.ge.s32.totalorder %s28, 2
      %s30 = scalar_select %p29, 0, %s28
      %s31 = ssub.s32 %s18, %s30
      %s32 = ssub.s32 %s19, %s26
      %s33 = sor.u32 %s31, %s32
      %p34 = scmp.eq.s32.totalorder %s33, 0
      %s36 = sadd.s32 %s35, 1
      %s37 = scalar_select %p34, %s35, %s36
      %p40 = pneg %p34
      %p41 = scmp.eq.s32.totalorder %s11, 15
      %p42 = por %p40, %p41
      %p43 = scmp.ne.s32.totalorder %s35, %s38
      %p44 = scmp.eq.s32.totalorder %s11, 0
      %p45 = por %p43, %p44
      %p46 = scmp.ne.s32.totalorder %s35, %s38
      %p47 = scmp.eq.s32.totalorder %s16, 15
      %p48 = por %p46, %p47
      %p49 = scmp.ne.s32.totalorder %s38, %s39
      %p50 = scmp.eq.s32.totalorder %s16, 0
      %p51 = por %p49, %p50
      %p52 = scmp.ne.s32.totalorder %s38, %s39
      %p53 = scmp.eq.s32.totalorder %s17, 15
      %p54 = por %p52, %p53
      %p56 = scmp.ne.s32.totalorder %s39, %s55
      %p57 = scmp.eq.s32.totalorder %s17, 0
      %p58 = por %p56, %p57
      %s59 = ssub.s32 %s18, %s30
      %s60 = ssub.s32 %s19, %s26
      %s61 = sor.u32 %s59, %s60
      %p62 = scmp.eq.s32.totalorder %s61, 0
      %s64 = sadd.s32 %s63, 1
      %s65 = scalar_select %p62, %s63, %s64
      %p68 = pneg %p62
      %p69 = scmp.eq.s32.totalorder %s11, 15
      %p70 = por %p68, %p69
      %p71 = scmp.ne.s32.totalorder %s63, %s66
      %p72 = scmp.eq.s32.totalorder %s11, 0
      %p73 = por %p71, %p72
      %p74 = scmp.ne.s32.totalorder %s63, %s66
      %p75 = scmp.eq.s32.totalorder %s16, 15
      %p76 = por %p74, %p75
      %p77 = scmp.ne.s32.totalorder %s66, %s67
      %p78 = scmp.eq.s32.totalorder %s16, 0
      %p79 = por %p77, %p78
      %p80 = scmp.ne.s32.totalorder %s66, %s67
      %p81 = scmp.eq.s32.totalorder %s17, 15
      %p82 = por %p80, %p81
      %p84 = scmp.ne.s32.totalorder %s67, %s83
      %p85 = scmp.eq.s32.totalorder %s17, 0
      %p86 = por %p84, %p85
      %s88 = sadd.s32 %s87, 1
      %p91 = scmp.eq.s32.totalorder %s11, 15
      %p92 = scmp.ne.s32.totalorder %s87, %s89
      %p93 = scmp.eq.s32.totalorder %s11, 0
      %p94 = por %p92, %p93
      %p95 = scmp.ne.s32.totalorder %s87, %s89
      %p96 = scmp.eq.s32.totalorder %s16, 15
      %p97 = por %p95, %p96
      %p98 = scmp.ne.s32.totalorder %s89, %s90
      %p99 = scmp.eq.s32.totalorder %s16, 0
      %p100 = por %p98, %p99
      %p101 = scmp.ne.s32.totalorder %s89, %s90
      %p102 = scmp.eq.s32.totalorder %s17, 15
      %p103 = por %p101, %p102
      %p105 = scmp.ne.s32.totalorder %s90, %s104
      %p106 = scmp.eq.s32.totalorder %s17, 0
      %p107 = por %p105, %p106
      %s109 = sadd.s32 %s108, 1
      %p112 = scmp.eq.s32.totalorder %s11, 15
      %p113 = scmp.ne.s32.totalorder %s108, %s110
      %p114 = scmp.eq.s32.totalorder %s11, 0
      %p115 = por %p113, %p114
      %p116 = scmp.ne.s32.totalorder %s108, %s110
      %p117 = scmp.eq.s32.totalorder %s16, 15
      %p118 = por %p116, %p117
      %p119 = scmp.ne.s32.totalorder %s110, %s111
      %p120 = scmp.eq.s32.totalorder %s16, 0
      %p121 = por %p119, %p120
      %p122 = scmp.ne.s32.totalorder %s110, %s111
      %p123 = scmp.eq.s32.totalorder %s17, 15
      %p124 = por %p122, %p123
      %p126 = scmp.ne.s32.totalorder %s111, %s125
      %p127 = scmp.eq.s32.totalorder %s17, 0
      %p128 = por %p126, %p127
      %s129 = ssub.s32 %s18, %s30
      %s130 = ssub.s32 %s19, %s26
      %s131 = sor.u32 %s129, %s130
      %p132 = scmp.eq.s32.totalorder %s131, 0
      %s134 = sadd.s32 %s133, 1
      %s135 = scalar_select %p132, %s133, %s134
      %p138 = pneg %p132
      %p139 = scmp.eq.s32.totalorder %s11, 15
      %p140 = por %p138, %p139
      %p141 = scmp.ne.s32.totalorder %s133, %s136
      %p142 = scmp.eq.s32.totalorder %s11, 0
      %p143 = por %p141, %p142
      %p144 = scmp.ne.s32.totalorder %s133, %s136
      %p145 = scmp.eq.s32.totalorder %s16, 15
      %p146 = por %p144, %p145
      %p147 = scmp.ne.s32.totalorder %s136, %s137
      %p148 = scmp.eq.s32.totalorder %s16, 0
      %p149 = por %p147, %p148
      %p150 = scmp.ne.s32.totalorder %s136, %s137
      %p151 = scmp.eq.s32.totalorder %s17, 15
      %p152 = por %p150, %p151
      %p154 = scmp.ne.s32.totalorder %s137, %s153
      %p155 = scmp.eq.s32.totalorder %s17, 0
      %p156 = por %p154, %p155
      %p157 = scmp.le.s32.totalorder 1, %s11
      %p158 = scmp.lt.s32.totalorder %s11, 17
      %p159 = pnand %p157, %p158
      %p160 = pneg %p159
      // Predicated region
      $region9: #{upsample_net2_forward.7} parent=5 // pred_check
        _
      $region10: #{upsample_net2_forward.7} parent=5 // pred_check_branch
        %162 = sbr.rel (%p159) target = $region12
      $region11: #{upsample_net2_forward.7} parent=5 // pred_region
        %s163 = ssub.s32 %s11, 1
        // Predicated region
        $region13: #{upsample_net2_forward.7} parent=11 // pred_check
          %p164 = pneg %p100
        $region14: #{upsample_net2_forward.7} parent=11 // pred_check_branch
          %166 = sbr.rel (%p164) target = $region16
        $region15: #{upsample_net2_forward.7} parent=11 // pred_region
          _
        $region16: #{upsample_net2_forward.7} parent=11 // pred_fallthru
          _
        // Predicated region
        $region17: #{upsample_net2_forward.7} parent=11 // pred_check
          %p167 = pneg %p121
        $region18: #{upsample_net2_forward.7} parent=11 // pred_check_branch
          %169 = sbr.rel (%p167) target = $region20
        $region19: #{upsample_net2_forward.7} parent=11 // pred_region
          _
        $region20: #{upsample_net2_forward.7} parent=11 // pred_fallthru
          _
      $region12: #{upsample_net2_forward.7} parent=5 // pred_fallthru
        _
      %p170 = scmp.lt.s32.totalorder %s11, 16
      // Predicated region
      $region21: #{upsample_net2_forward.7} parent=5 // pred_check
        %p171 = pneg %p170
      $region22: #{upsample_net2_forward.7} parent=5 // pred_check_branch
        %173 = sbr.rel (%p171) target = $region24
      $region23: #{upsample_net2_forward.7} parent=5 // pred_region
        // Predicated region
        $region25: #{upsample_net2_forward.7} parent=23 // pred_check
          %p174 = pneg %p45
        $region26: #{upsample_net2_forward.7} parent=23 // pred_check_branch
          %176 = sbr.rel (%p174) target = $region28
        $region27: #{upsample_net2_forward.7} parent=23 // pred_region
          %s177 = sand.u32 %s35, 1
          %s178 = sand.u32 %s35, 1
          %s179 = smul.addr %s178, 96
          %s180 = scalar_lea.vmem [#allocation3], %s179
          %s181 = smul.u32 2, %s19
          %s182 = smul.addr %s18, 192
          %s183 = sadd.s32 %s181, %s182
          %s184 = smul.addr %s183, 4
          %s185 = scalar_lea.vmem %s0, %s184
          // Predicated region
          $region29: #{upsample_net2_forward.7} parent=27 // pred_check
            _
          $region30: #{upsample_net2_forward.7} parent=27 // pred_check_branch
            %187 = sbr.rel (0) target = $region32
          $region31: #{upsample_net2_forward.7} parent=27 // pred_region
            // Predicated region
            $region33: #{upsample_net2_forward.7} parent=31 // pred_check
              _
            $region34: #{upsample_net2_forward.7} parent=31 // pred_check_branch
              %189 = sbr.rel (0) target = $region36
            $region35: #{upsample_net2_forward.7} parent=31 // pred_region
              // Predicated region
              $region48: #{upsample_net2_forward.7} parent=35 // pred_check
                _
              $region49: #{upsample_net2_forward.7} parent=35 // pred_check_branch
                %226 = sbr.rel (0) target = $region51
              $region50: #{upsample_net2_forward.7} parent=35 // pred_region
                loop: start=0, step=1, limit=1
                $region52: #{upsample_net2_forward.7} parent=50 // loop_pre_header
                  _
                $region53: #{upsample_net2_forward.7} parent=50 // loop_header
                  %s228 = sphi 0, %s232
                  %p229 = scmp.ge.s32.totalorder %s228, 1
                  %s233 = sphi %s185, %s185
                  %s234 = sphi %s180, %s180
                $region54: #{upsample_net2_forward.7} parent=50 // loop_header_branch
                  %231 = sbr.rel (%p229) target = $region58
                $region55: #{upsample_net2_forward.7} parent=50 // loop_body
                  %v235 = vld [vmem:[%s233] sm:$0xff]
                  %236 = vst [vmem:[%s234] sm:$0xff] %v235
                  %v237 = vld [vmem:[%s233 + $0x40] sm:$0xff]
                  %238 = vst [vmem:[%s234 + $0x8] sm:$0xff] %v237
                  %v239 = vld [vmem:[%s233 + $0x80] sm:$0xff]
                  %240 = vst [vmem:[%s234 + $0x10] sm:$0xff] %v239
                  %v241 = vld [vmem:[%s233 + $0xc0] sm:$0xff]
                  %242 = vst [vmem:[%s234 + $0x18] sm:$0xff] %v241
                  %v243 = vld [vmem:[%s233 + $0x100] sm:$0xff]
                  %244 = vst [vmem:[%s234 + $0x20] sm:$0xff] %v243
                  %v245 = vld [vmem:[%s233 + $0x140] sm:$0xff]
                  %246 = vst [vmem:[%s234 + $0x28] sm:$0xff] %v245
                  %v247 = vld [vmem:[%s233 + $0x180] sm:$0xff]
                  %248 = vst [vmem:[%s234 + $0x30] sm:$0xff] %v247
                  %v249 = vld [vmem:[%s233 + $0x1c0] sm:$0xff]
                  %250 = vst [vmem:[%s234 + $0x38] sm:$0xff] %v249
                  %v251 = vld [vmem:[%s233 + $0x200] sm:$0xff]
                  %252 = vst [vmem:[%s234 + $0x40] sm:$0xff] %v251
                  %v253 = vld [vmem:[%s233 + $0x240] sm:$0xff]
                  %254 = vst [vmem:[%s234 + $0x48] sm:$0xff] %v253
                  %v255 = vld [vmem:[%s233 + $0x280] sm:$0xff]
                  %256 = vst [vmem:[%s234 + $0x50] sm:$0xff] %v255
                  %v257 = vld [vmem:[%s233 + $0x2c0] sm:$0xff]
                  %258 = vst [vmem:[%s234 + $0x58] sm:$0xff] %v257
                $region56: #{upsample_net2_forward.7} parent=50 // loop_footer
                  %s232 = sadd.s32 1, %s228
                $region57: #{upsample_net2_forward.7} parent=50 // loop_footer_branch
                  %227 = sbr.rel target = $region53
                $region58: #{upsample_net2_forward.7} parent=50 // loop_exit
                  _
              $region51: #{upsample_net2_forward.7} parent=35 // pred_fallthru
                _
              // Predicated region
              $region59: #{upsample_net2_forward.7} parent=35 // pred_check
                _
              $region60: #{upsample_net2_forward.7} parent=35 // pred_check_branch
                %260 = sbr.rel target = $region62
              $region61: #{upsample_net2_forward.7} parent=35 // pred_region
                _
              $region62: #{upsample_net2_forward.7} parent=35 // pred_fallthru
                _
            $region36: #{upsample_net2_forward.7} parent=31 // pred_fallthru
              _
            // Predicated region
            $region37: #{upsample_net2_forward.7} parent=31 // pred_check
              _
            $region38: #{upsample_net2_forward.7} parent=31 // pred_check_branch
              %191 = sbr.rel target = $region40
            $region39: #{upsample_net2_forward.7} parent=31 // pred_region
              loop: start=0, step=1, limit=1
              $region41: #{upsample_net2_forward.7} parent=39 // loop_pre_header
                _
              $region42: #{upsample_net2_forward.7} parent=39 // loop_header
                %s194 = sphi 0, %s198
                %p195 = scmp.ge.s32.totalorder %s194, 1
                %s199 = sphi %s185, %s185
                %s200 = sphi %s180, %s180
              $region43: #{upsample_net2_forward.7} parent=39 // loop_header_branch
                %197 = sbr.rel (%p195) target = $region47
              $region44: #{upsample_net2_forward.7} parent=39 // loop_body
                %v201 = vld [vmem:[%s199] sm:$0xff]
                %202 = vst [vmem:[%s200] sm:$0xff] %v201
                %v203 = vld [vmem:[%s199 + $0x40] sm:$0xff]
                %204 = vst [vmem:[%s200 + $0x8] sm:$0xff] %v203
                %v205 = vld [vmem:[%s199 + $0x80] sm:$0xff]
                %206 = vst [vmem:[%s200 + $0x10] sm:$0xff] %v205
                %v207 = vld [vmem:[%s199 + $0xc0] sm:$0xff]
                %208 = vst [vmem:[%s200 + $0x18] sm:$0xff] %v207
                %v209 = vld [vmem:[%s199 + $0x100] sm:$0xff]
                %210 = vst [vmem:[%s200 + $0x20] sm:$0xff] %v209
                %v211 = vld [vmem:[%s199 + $0x140] sm:$0xff]
                %212 = vst [vmem:[%s200 + $0x28] sm:$0xff] %v211
                %v213 = vld [vmem:[%s199 + $0x180] sm:$0xff]
                %214 = vst [vmem:[%s200 + $0x30] sm:$0xff] %v213
                %v215 = vld [vmem:[%s199 + $0x1c0] sm:$0xff]
                %216 = vst [vmem:[%s200 + $0x38] sm:$0xff] %v215
                %v217 = vld [vmem:[%s199 + $0x200] sm:$0xff]
                %218 = vst [vmem:[%s200 + $0x40] sm:$0xff] %v217
                %v219 = vld [vmem:[%s199 + $0x240] sm:$0xff]
                %220 = vst [vmem:[%s200 + $0x48] sm:$0xff] %v219
                %v221 = vld [vmem:[%s199 + $0x280] sm:$0xff]
                %222 = vst [vmem:[%s200 + $0x50] sm:$0xff] %v221
                %v223 = vld [vmem:[%s199 + $0x2c0] sm:$0xff]
                %224 = vst [vmem:[%s200 + $0x58] sm:$0xff] %v223
              $region45: #{upsample_net2_forward.7} parent=39 // loop_footer
                %s198 = sadd.s32 1, %s194
              $region46: #{upsample_net2_forward.7} parent=39 // loop_footer_branch
                %193 = sbr.rel target = $region42
              $region47: #{upsample_net2_forward.7} parent=39 // loop_exit
                _
            $region40: #{upsample_net2_forward.7} parent=31 // pred_fallthru
              _
          $region32: #{upsample_net2_forward.7} parent=27 // pred_fallthru
            _
          %261 = vnop
        $region28: #{upsample_net2_forward.7} parent=23 // pred_fallthru
          _
        // Predicated region
        $region63: #{upsample_net2_forward.7} parent=23 // pred_check
          %p262 = pneg %p73
        $region64: #{upsample_net2_forward.7} parent=23 // pred_check_branch
          %264 = sbr.rel (%p262) target = $region66
        $region65: #{upsample_net2_forward.7} parent=23 // pred_region
          %p265 = scmp.lt.s32.totalorder %s18, 1
          %s266 = scalar_select %p265, %s18, 1
          %p267 = scmp.lt.s32.totalorder %s19, 7
          %s268 = scalar_select %p267, %s19, 7
          %s269 = smul.addr %s268, 12
          %s270 = smul.addr %s266, 96
          %s271 = sadd.s32 %s269, %s270
          %s272 = smul.addr %s271, 4
          %s273 = scalar_lea.vmem %s1, %s272
        $region66: #{upsample_net2_forward.7} parent=23 // pred_fallthru
          _
      $region24: #{upsample_net2_forward.7} parent=5 // pred_fallthru
        _
      %p274 = scmp.le.s32.totalorder 1, %s11
      %p275 = scmp.lt.s32.totalorder %s11, 17
      %p276 = pnand %p274, %p275
      %p277 = pneg %p276
      // Predicated region
      $region67: #{upsample_net2_forward.7} parent=5 // pred_check
        _
      $region68: #{upsample_net2_forward.7} parent=5 // pred_check_branch
        %279 = sbr.rel (%p276) target = $region70
      $region69: #{upsample_net2_forward.7} parent=5 // pred_region
        %s280 = ssub.s32 %s11, 1
        %s281 = sand.u32 %s38, 1
        %s282 = sand.u32 %s38, 1
        %s283 = smul.addr %s282, 96
        %s284 = scalar_lea.vmem [#allocation3], %s283
        // Predicated region
        $region71: #{upsample_net2_forward.7} parent=69 // pred_check
          %p285 = pneg %p51
        $region72: #{upsample_net2_forward.7} parent=69 // pred_check_branch
          %287 = sbr.rel (%p285) target = $region74
        $region73: #{upsample_net2_forward.7} parent=69 // pred_region
          _
        $region74: #{upsample_net2_forward.7} parent=69 // pred_fallthru
          _
        %s288 = sand.u32 %s38, 1
        %s289 = sand.u32 %s38, 1
        %s290 = smul.addr %s289, 96
        %s291 = scalar_lea.vmem [#allocation3], %s290
        %p292 = pneg %p51
        %p293 = pneg %p48
        %p294 = scmp.lt.s32.totalorder %s20, 1
        %s295 = scalar_select %p294, %s20, 1
        %p296 = scmp.lt.s32.totalorder %s21, 7
        %s297 = scalar_select %p296, %s21, 7
        %s298 = smul.addr %s297, 12
        %s299 = smul.addr %s295, 96
        %s300 = sadd.s32 %s298, %s299
        %s301 = smul.addr %s300, 4
        %s302 = scalar_lea.vmem %s1, %s301
        %p303 = pneg %p79
        %p304 = pneg %p76
        %p305 = pneg %p100
        %p306 = pneg %p97
        %p307 = pneg %p121
        %p308 = pneg %p118
        %p309 = pneg %p149
        %p310 = pneg %p146
        %s311 = sand.u32 %s136, 1
        %s312 = sand.u32 %s136, 1
        %s313 = smul.addr %s312, 192
        %s314 = scalar_lea.vmem [#allocation4], %s313
        %s315 = smul.u32 2, %s21
        %p316 = scmp.lt.s32.totalorder %s20, 1
        %s317 = scalar_select %p316, %s20, 1
        %p318 = scmp.lt.s32.totalorder %s21, 7
        %s319 = scalar_select %p318, %s21, 7
        %s320 = smul.addr %s319, 12
        %s321 = smul.addr %s317, 96
        %s322 = sadd.s32 %s320, %s321
        %s323 = smul.addr %s322, 4
        %s324 = scalar_lea.vmem %s1, %s323
        %s325 = smul.u32 4, %s21
        %v327 = vld [vmem:[%s284] sm:$0xff]
        %v328 = vld [vmem:[%s284 + $0x8] sm:$0xff]
        %v329 = vld [vmem:[%s284 + $0x10] sm:$0xff]
        %v330 = vld [vmem:[%s284 + $0x18] sm:$0xff]
        %v331 = vld [vmem:[%s284 + $0x20] sm:$0xff]
        %v332 = vld [vmem:[%s284 + $0x28] sm:$0xff]
        %v333 = vld [vmem:[%s284 + $0x30] sm:$0xff]
        %v334 = vld [vmem:[%s284 + $0x38] sm:$0xff]
        %v335 = vld [vmem:[%s284 + $0x40] sm:$0xff]
        %v336 = vld [vmem:[%s284 + $0x48] sm:$0xff]
        %v337 = vld [vmem:[%s284 + $0x50] sm:$0xff]
        %v338 = vld [vmem:[%s284 + $0x58] sm:$0xff]
        %v339 = vld [vmem:[%s324] sm:$0xf]
        %v340 = vld [vmem:[%s324 + $0x4] sm:$0xf]
        %v341 = vld [vmem:[%s324 + $0x8] sm:$0xf]
        %v342 = vld [vmem:[%s324 + $0xc] sm:$0xf]
        %v343 = vld [vmem:[%s324 + $0x10] sm:$0xf]
        %v344 = vld [vmem:[%s324 + $0x14] sm:$0xf]
        %v345 = vld [vmem:[%s324 + $0x18] sm:$0xf]
        %v346 = vld [vmem:[%s324 + $0x1c] sm:$0xf]
        %v347 = vld [vmem:[%s324 + $0x20] sm:$0xf]
        %v348 = vld [vmem:[%s324 + $0x24] sm:$0xf]
        %v349 = vld [vmem:[%s324 + $0x28] sm:$0xf]
        %v350 = vld [vmem:[%s324 + $0x2c] sm:$0xf]
        %v363 = vunpack.c.l.b16 %v327
        %v364 = vunpack.c.l.b16 %v328
        %v365 = vunpack.c.l.b16 %v329
        %v366 = vunpack.c.l.b16 %v330
        %v367 = vunpack.c.l.b16 %v331
        %v368 = vunpack.c.l.b16 %v332
        %v369 = vunpack.c.l.b16 %v333
        %v370 = vunpack.c.l.b16 %v334
        %v371 = vunpack.c.l.b16 %v335
        %v372 = vunpack.c.l.b16 %v336
        %v373 = vunpack.c.l.b16 %v337
        %v374 = vunpack.c.l.b16 %v338
        %v375 = vpack.c.b16 %v364, %v363
        %v376 = vpack.c.b16 %v366, %v365
        %v377 = vpack.c.b16 %v368, %v367
        %v378 = vpack.c.b16 %v370, %v369
        %v379 = vpack.c.b16 %v372, %v371
        %v380 = vpack.c.b16 %v374, %v373
        %v393 = vunpack.c.l.b16 %v339
        %v394 = vunpack.c.l.b16 %v340
        %v395 = vunpack.c.l.b16 %v341
        %v396 = vunpack.c.l.b16 %v342
        %v397 = vunpack.c.l.b16 %v343
        %v398 = vunpack.c.l.b16 %v344
        %v399 = vunpack.c.l.b16 %v345
        %v400 = vunpack.c.l.b16 %v346
        %v401 = vunpack.c.l.b16 %v347
        %v402 = vunpack.c.l.b16 %v348
        %v403 = vunpack.c.l.b16 %v349
        %v404 = vunpack.c.l.b16 %v350
        %v405 = vpack.c.b16 %v394, %v393
        %v406 = vpack.c.b16 %v396, %v395
        %v407 = vpack.c.b16 %v398, %v397
        %v408 = vpack.c.b16 %v400, %v399
        %v409 = vpack.c.b16 %v402, %v401
        %v410 = vpack.c.b16 %v404, %v403
        %v411 = vunpack.c.h.b16 %v327
        %v412 = vunpack.c.h.b16 %v328
        %v413 = vunpack.c.h.b16 %v329
        %v414 = vunpack.c.h.b16 %v330
        %v415 = vunpack.c.h.b16 %v331
        %v416 = vunpack.c.h.b16 %v332
        %v417 = vunpack.c.h.b16 %v333
        %v418 = vunpack.c.h.b16 %v334
        %v419 = vunpack.c.h.b16 %v335
        %v420 = vunpack.c.h.b16 %v336
        %v421 = vunpack.c.h.b16 %v337
        %v422 = vunpack.c.h.b16 %v338
        %v423 = vpack.c.b16 %v412, %v411
        %v424 = vpack.c.b16 %v414, %v413
        %v425 = vpack.c.b16 %v416, %v415
        %v426 = vpack.c.b16 %v418, %v417
        %v427 = vpack.c.b16 %v420, %v419
        %v428 = vpack.c.b16 %v422, %v421
        %429 = vrot.lane.b32.xlu0 %v423, 1
        %v430 = vpop.permute.xlu0 %429
        %431 = vrot.lane.b32.xlu0 %v424, 1
        %v432 = vpop.permute.xlu0 %431
        %433 = vrot.lane.b32.xlu0 %v425, 1
        %v434 = vpop.permute.xlu0 %433
        %435 = vrot.lane.b32.xlu0 %v426, 1
        %v436 = vpop.permute.xlu0 %435
        %437 = vrot.lane.b32.xlu0 %v427, 1
        %v438 = vpop.permute.xlu0 %437
        %439 = vrot.lane.b32.xlu0 %v428, 1
        %v440 = vpop.permute.xlu0 %439
        %vm441 = vcmask 7168
        %v444 = vsel %vm441, %v405, %v430
        %v447 = vsel %vm441, %v406, %v432
        %v450 = vsel %vm441, %v407, %v434
        %v453 = vsel %vm441, %v408, %v436
        %v456 = vsel %vm441, %v409, %v438
        %v459 = vsel %vm441, %v410, %v440
        %460 = vrot.lane.b32.xlu0 %v375, 1
        %v461 = vpop.permute.xlu0 %460
        %462 = vrot.lane.b32.xlu0 %v376, 1
        %v463 = vpop.permute.xlu0 %462
        %464 = vrot.lane.b32.xlu0 %v377, 1
        %v465 = vpop.permute.xlu0 %464
        %466 = vrot.lane.b32.xlu0 %v378, 1
        %v467 = vpop.permute.xlu0 %466
        %468 = vrot.lane.b32.xlu0 %v379, 1
        %v469 = vpop.permute.xlu0 %468
        %470 = vrot.lane.b32.xlu0 %v380, 1
        %v471 = vpop.permute.xlu0 %470
        %v473 = vsel %vm441, %v461, %v405
        %v475 = vsel %vm441, %v463, %v406
        %v477 = vsel %vm441, %v465, %v407
        %v479 = vsel %vm441, %v467, %v408
        %v481 = vsel %vm441, %v469, %v409
        %v483 = vsel %vm441, %v471, %v410
        %vm484 = vsmask.f32 7424
        %v486 = vshrl.u32 %v375, 16
        %v488 = vshll.u32 %v375, 16
        %v490 = vrot.slane %v488, 1
        %v491 = vor.u32 %v486, %v490
        %v493 = vshll.u32 %v376, 16
        %v495 = vrot.slane %v493, 1
        %v496 = vsel %vm484, %v491, %v495
        %v497 = vshrl.u32 %v444, 16
        %v499 = vshll.u32 %v444, 16
        %v501 = vrot.slane %v499, 1
        %v502 = vor.u32 %v497, %v501
        %v503 = vshll.u32 %v447, 16
        %v505 = vrot.slane %v503, 1
        %v506 = vsel %vm484, %v502, %v505
        %v507 = vshrl.u32 %v376, 16
        %v509 = vor.u32 %v507, %v495
        %v511 = vshll.u32 %v377, 16
        %v513 = vrot.slane %v511, 1
        %v514 = vsel %vm484, %v509, %v513
        %v515 = vshrl.u32 %v447, 16
        %v517 = vor.u32 %v515, %v505
        %v518 = vshll.u32 %v450, 16
        %v520 = vrot.slane %v518, 1
        %v521 = vsel %vm484, %v517, %v520
        %v522 = vshrl.u32 %v377, 16
        %v524 = vor.u32 %v522, %v513
        %v526 = vshll.u32 %v378, 16
        %v528 = vrot.slane %v526, 1
        %v529 = vsel %vm484, %v524, %v528
        %v530 = vshrl.u32 %v450, 16
        %v532 = vor.u32 %v530, %v520
        %v533 = vshll.u32 %v453, 16
        %v535 = vrot.slane %v533, 1
        %v536 = vsel %vm484, %v532, %v535
        %v537 = vshrl.u32 %v378, 16
        %v539 = vor.u32 %v537, %v528
        %v541 = vshll.u32 %v379, 16
        %v543 = vrot.slane %v541, 1
        %v544 = vsel %vm484, %v539, %v543
        %v545 = vshrl.u32 %v453, 16
        %v547 = vor.u32 %v545, %v535
        %v548 = vshll.u32 %v456, 16
        %v550 = vrot.slane %v548, 1
        %v551 = vsel %vm484, %v547, %v550
        %v552 = vshrl.u32 %v379, 16
        %v554 = vor.u32 %v552, %v543
        %v556 = vshll.u32 %v380, 16
        %v558 = vrot.slane %v556, 1
        %v559 = vsel %vm484, %v554, %v558
        %v560 = vshrl.u32 %v456, 16
        %v562 = vor.u32 %v560, %v550
        %v563 = vshll.u32 %v459, 16
        %v565 = vrot.slane %v563, 1
        %v566 = vsel %vm484, %v562, %v565
        %v567 = vshrl.u32 %v380, 16
        %v569 = vor.u32 %v567, %v558
        %v571 = vshll.u32 %v423, 16
        %v573 = vrot.slane %v571, 1
        %v574 = vsel %vm484, %v569, %v573
        %v575 = vshrl.u32 %v459, 16
        %v577 = vor.u32 %v575, %v565
        %v578 = vshll.u32 %v473, 16
        %v580 = vrot.slane %v578, 1
        %v581 = vsel %vm484, %v577, %v580
        %v582 = vshrl.u32 %v423, 16
        %v584 = vor.u32 %v582, %v573
        %v586 = vshll.u32 %v424, 16
        %v588 = vrot.slane %v586, 1
        %v589 = vsel %vm484, %v584, %v588
        %v590 = vshrl.u32 %v473, 16
        %v592 = vor.u32 %v590, %v580
        %v593 = vshll.u32 %v475, 16
        %v595 = vrot.slane %v593, 1
        %v596 = vsel %vm484, %v592, %v595
        %v597 = vshrl.u32 %v424, 16
        %v599 = vor.u32 %v597, %v588
        %v601 = vshll.u32 %v425, 16
        %v603 = vrot.slane %v601, 1
        %v604 = vsel %vm484, %v599, %v603
        %v605 = vshrl.u32 %v475, 16
        %v607 = vor.u32 %v605, %v595
        %v608 = vshll.u32 %v477, 16
        %v610 = vrot.slane %v608, 1
        %v611 = vsel %vm484, %v607, %v610
        %v612 = vshrl.u32 %v425, 16
        %v614 = vor.u32 %v612, %v603
        %v616 = vshll.u32 %v426, 16
        %v618 = vrot.slane %v616, 1
        %v619 = vsel %vm484, %v614, %v618
        %v620 = vshrl.u32 %v477, 16
        %v622 = vor.u32 %v620, %v610
        %v623 = vshll.u32 %v479, 16
        %v625 = vrot.slane %v623, 1
        %v626 = vsel %vm484, %v622, %v625
        %v627 = vshrl.u32 %v426, 16
        %v629 = vor.u32 %v627, %v618
        %v631 = vshll.u32 %v427, 16
        %v633 = vrot.slane %v631, 1
        %v634 = vsel %vm484, %v629, %v633
        %v635 = vshrl.u32 %v479, 16
        %v637 = vor.u32 %v635, %v625
        %v638 = vshll.u32 %v481, 16
        %v640 = vrot.slane %v638, 1
        %v641 = vsel %vm484, %v637, %v640
        %v642 = vshrl.u32 %v427, 16
        %v644 = vor.u32 %v642, %v633
        %v646 = vshll.u32 %v428, 16
        %v648 = vrot.slane %v646, 1
        %v649 = vsel %vm484, %v644, %v648
        %v650 = vshrl.u32 %v481, 16
        %v652 = vor.u32 %v650, %v640
        %v653 = vshll.u32 %v483, 16
        %v655 = vrot.slane %v653, 1
        %v656 = vsel %vm484, %v652, %v655
        %v657 = vshrl.u32 %v428, 16
        %v659 = vor.u32 %v657, %v648
        %v660 = vshrl.u32 %v483, 16
        %v662 = vor.u32 %v660, %v655
        %vm676 = vcmask 1047552
        %vm677 = vmand %vm676, %vm484
        %v678 = vsel %vm677, %v659, 0
        %v679 = vsel %vm677, %v662, 0
        %vm680 = vsmask.f32 256
        %v681 = vrot.slane %v486, 7
        %v682 = vor.u32 %v681, %v488
        %v683 = vrot.slane %v497, 7
        %v684 = vor.u32 %v683, %v499
        %v685 = vrot.slane %v507, 7
        %v686 = vor.u32 %v685, %v493
        %v687 = vsel %vm680, %v681, %v686
        %v688 = vrot.slane %v515, 7
        %v689 = vor.u32 %v688, %v503
        %v690 = vsel %vm680, %v683, %v689
        %v691 = vrot.slane %v522, 7
        %v692 = vor.u32 %v691, %v511
        %v693 = vsel %vm680, %v685, %v692
        %v694 = vrot.slane %v530, 7
        %v695 = vor.u32 %v694, %v518
        %v696 = vsel %vm680, %v688, %v695
        %v697 = vrot.slane %v537, 7
        %v698 = vor.u32 %v697, %v526
        %v699 = vsel %vm680, %v691, %v698
        %v700 = vrot.slane %v545, 7
        %v701 = vor.u32 %v700, %v533
        %v702 = vsel %vm680, %v694, %v701
        %v703 = vrot.slane %v552, 7
        %v704 = vor.u32 %v703, %v541
        %v705 = vsel %vm680, %v697, %v704
        %v706 = vrot.slane %v560, 7
        %v707 = vor.u32 %v706, %v548
        %v708 = vsel %vm680, %v700, %v707
        %v709 = vrot.slane %v567, 7
        %v710 = vor.u32 %v709, %v556
        %v711 = vsel %vm680, %v703, %v710
        %v712 = vrot.slane %v575, 7
        %v713 = vor.u32 %v712, %v563
        %v714 = vsel %vm680, %v706, %v713
        %v715 = vrot.slane %v582, 7
        %v716 = vor.u32 %v715, %v571
        %v717 = vsel %vm680, %v709, %v716
        %v718 = vrot.slane %v590, 7
        %v719 = vor.u32 %v718, %v578
        %v720 = vsel %vm680, %v712, %v719
        %v721 = vrot.slane %v597, 7
        %v722 = vor.u32 %v721, %v586
        %v723 = vsel %vm680, %v715, %v722
        %v724 = vrot.slane %v605, 7
        %v725 = vor.u32 %v724, %v593
        %v726 = vsel %vm680, %v718, %v725
        %v727 = vrot.slane %v612, 7
        %v728 = vor.u32 %v727, %v601
        %v729 = vsel %vm680, %v721, %v728
        %v730 = vrot.slane %v620, 7
        %v731 = vor.u32 %v730, %v608
        %v732 = vsel %vm680, %v724, %v731
        %v733 = vrot.slane %v627, 7
        %v734 = vor.u32 %v733, %v616
        %v735 = vsel %vm680, %v727, %v734
        %v736 = vrot.slane %v635, 7
        %v737 = vor.u32 %v736, %v623
        %v738 = vsel %vm680, %v730, %v737
        %v739 = vrot.slane %v642, 7
        %v740 = vor.u32 %v739, %v631
        %v741 = vsel %vm680, %v733, %v740
        %v742 = vrot.slane %v650, 7
        %v743 = vor.u32 %v742, %v638
        %v744 = vsel %vm680, %v736, %v743
        %v745 = vrot.slane %v657, 7
        %v746 = vor.u32 %v745, %v646
        %v747 = vsel %vm680, %v739, %v746
        %v748 = vrot.slane %v660, 7
        %v749 = vor.u32 %v748, %v653
        %v750 = vsel %vm680, %v742, %v749
        %vm753 = vcmask 1040384
        %vm754 = vmand %vm753, %vm680
        %v755 = vsel %vm754, 0, %v682
        %v756 = vsel %vm754, 0, %v684
        %769 = vrot.lane.b32.xlu0 %v375, 2
        %v770 = vpop.permute.xlu0 %769
        %771 = vrot.lane.b32.xlu0 %v444, 2
        %v772 = vpop.permute.xlu0 %771
        %773 = vrot.lane.b32.xlu0 %v376, 2
        %v774 = vpop.permute.xlu0 %773
        %775 = vrot.lane.b32.xlu0 %v447, 2
        %v776 = vpop.permute.xlu0 %775
        %777 = vrot.lane.b32.xlu0 %v377, 2
        %v778 = vpop.permute.xlu0 %777
        %779 = vrot.lane.b32.xlu0 %v450, 2
        %v780 = vpop.permute.xlu0 %779
        %781 = vrot.lane.b32.xlu0 %v378, 2
        %v782 = vpop.permute.xlu0 %781
        %783 = vrot.lane.b32.xlu0 %v453, 2
        %v784 = vpop.permute.xlu0 %783
        %785 = vrot.lane.b32.xlu0 %v379, 2
        %v786 = vpop.permute.xlu0 %785
        %787 = vrot.lane.b32.xlu0 %v456, 2
        %v788 = vpop.permute.xlu0 %787
        %789 = vrot.lane.b32.xlu0 %v380, 2
        %v790 = vpop.permute.xlu0 %789
        %791 = vrot.lane.b32.xlu0 %v459, 2
        %v792 = vpop.permute.xlu0 %791
        %793 = vrot.lane.b32.xlu0 %v423, 2
        %v794 = vpop.permute.xlu0 %793
        %795 = vrot.lane.b32.xlu0 %v473, 2
        %v796 = vpop.permute.xlu0 %795
        %797 = vrot.lane.b32.xlu0 %v424, 2
        %v798 = vpop.permute.xlu0 %797
        %799 = vrot.lane.b32.xlu0 %v475, 2
        %v800 = vpop.permute.xlu0 %799
        %801 = vrot.lane.b32.xlu0 %v425, 2
        %v802 = vpop.permute.xlu0 %801
        %803 = vrot.lane.b32.xlu0 %v477, 2
        %v804 = vpop.permute.xlu0 %803
        %805 = vrot.lane.b32.xlu0 %v426, 2
        %v806 = vpop.permute.xlu0 %805
        %807 = vrot.lane.b32.xlu0 %v479, 2
        %v808 = vpop.permute.xlu0 %807
        %809 = vrot.lane.b32.xlu0 %v427, 2
        %v810 = vpop.permute.xlu0 %809
        %811 = vrot.lane.b32.xlu0 %v481, 2
        %v812 = vpop.permute.xlu0 %811
        %813 = vrot.lane.b32.xlu0 %v428, 2
        %v814 = vpop.permute.xlu0 %813
        %815 = vrot.lane.b32.xlu0 %v483, 2
        %v816 = vpop.permute.xlu0 %815
        %vm817 = vcmask 15360
        %v818 = vsel %vm817, %v770, %v772
        %v819 = vsel %vm817, %v774, %v776
        %v820 = vsel %vm817, %v778, %v780
        %v821 = vsel %vm817, %v782, %v784
        %v822 = vsel %vm817, %v786, %v788
        %v823 = vsel %vm817, %v790, %v792
        %v824 = vsel %vm817, %v794, %v796
        %v825 = vsel %vm817, %v798, %v800
        %v826 = vsel %vm817, %v802, %v804
        %v827 = vsel %vm817, %v806, %v808
        %v828 = vsel %vm817, %v810, %v812
        %v829 = vsel %vm817, %v814, %v816
        %832 = vrot.lane.b32.xlu0 %v755, 4
        %v833 = vpop.permute.xlu0 %832
        %834 = vrot.lane.b32.xlu0 %v756, 4
        %v835 = vpop.permute.xlu0 %834
        %836 = vrot.lane.b32.xlu0 %v687, 4
        %v837 = vpop.permute.xlu0 %836
        %838 = vrot.lane.b32.xlu0 %v690, 4
        %v839 = vpop.permute.xlu0 %838
        %840 = vrot.lane.b32.xlu0 %v693, 4
        %v841 = vpop.permute.xlu0 %840
        %842 = vrot.lane.b32.xlu0 %v696, 4
        %v843 = vpop.permute.xlu0 %842
        %844 = vrot.lane.b32.xlu0 %v699, 4
        %v845 = vpop.permute.xlu0 %844
        %846 = vrot.lane.b32.xlu0 %v702, 4
        %v847 = vpop.permute.xlu0 %846
        %848 = vrot.lane.b32.xlu0 %v705, 4
        %v849 = vpop.permute.xlu0 %848
        %850 = vrot.lane.b32.xlu0 %v708, 4
        %v851 = vpop.permute.xlu0 %850
        %852 = vrot.lane.b32.xlu0 %v711, 4
        %v853 = vpop.permute.xlu0 %852
        %854 = vrot.lane.b32.xlu0 %v714, 4
        %v855 = vpop.permute.xlu0 %854
        %856 = vrot.lane.b32.xlu0 %v717, 4
        %v857 = vpop.permute.xlu0 %856
        %858 = vrot.lane.b32.xlu0 %v720, 4
        %v859 = vpop.permute.xlu0 %858
        %860 = vrot.lane.b32.xlu0 %v723, 4
        %v861 = vpop.permute.xlu0 %860
        %862 = vrot.lane.b32.xlu0 %v726, 4
        %v863 = vpop.permute.xlu0 %862
        %864 = vrot.lane.b32.xlu0 %v729, 4
        %v865 = vpop.permute.xlu0 %864
        %866 = vrot.lane.b32.xlu0 %v732, 4
        %v867 = vpop.permute.xlu0 %866
        %868 = vrot.lane.b32.xlu0 %v735, 4
        %v869 = vpop.permute.xlu0 %868
        %870 = vrot.lane.b32.xlu0 %v738, 4
        %v871 = vpop.permute.xlu0 %870
        %872 = vrot.lane.b32.xlu0 %v741, 4
        %v873 = vpop.permute.xlu0 %872
        %874 = vrot.lane.b32.xlu0 %v744, 4
        %v875 = vpop.permute.xlu0 %874
        %876 = vrot.lane.b32.xlu0 %v747, 4
        %v877 = vpop.permute.xlu0 %876
        %878 = vrot.lane.b32.xlu0 %v750, 4
        %v879 = vpop.permute.xlu0 %878
        %vm880 = vcmask 31744
        %v881 = vsel %vm880, %v833, %v835
        %v882 = vsel %vm880, %v837, %v839
        %v883 = vsel %vm880, %v841, %v843
        %v884 = vsel %vm880, %v845, %v847
        %v885 = vsel %vm880, %v849, %v851
        %v886 = vsel %vm880, %v853, %v855
        %v887 = vsel %vm880, %v857, %v859
        %v888 = vsel %vm880, %v861, %v863
        %v889 = vsel %vm880, %v865, %v867
        %v890 = vsel %vm880, %v869, %v871
        %v891 = vsel %vm880, %v873, %v875
        %v892 = vsel %vm880, %v877, %v879
        %vm893 = vcmask 15360
        %v896 = vsel %vm893, %v506, %v770
        %v900 = vsel %vm893, %v521, %v774
        %v904 = vsel %vm893, %v536, %v778
        %v908 = vsel %vm893, %v551, %v782
        %v912 = vsel %vm893, %v566, %v786
        %v916 = vsel %vm893, %v581, %v790
        %v920 = vsel %vm893, %v596, %v794
        %v924 = vsel %vm893, %v611, %v798
        %v928 = vsel %vm893, %v626, %v802
        %v932 = vsel %vm893, %v641, %v806
        %v936 = vsel %vm893, %v656, %v810
        %v940 = vsel %vm893, %v679, %v814
        %vm942 = vcmask 31744
        %v945 = vsel %vm942, %v818, %v833
        %v949 = vsel %vm942, %v819, %v837
        %v953 = vsel %vm942, %v820, %v841
        %v957 = vsel %vm942, %v821, %v845
        %v961 = vsel %vm942, %v822, %v849
        %v965 = vsel %vm942, %v823, %v853
        %v969 = vsel %vm942, %v824, %v857
        %v973 = vsel %vm942, %v825, %v861
        %v977 = vsel %vm942, %v826, %v865
        %v981 = vsel %vm942, %v827, %v869
        %v985 = vsel %vm942, %v828, %v873
        %v989 = vsel %vm942, %v829, %v877
        %v991 = vld [vmem:[%s2] sm:$0xff]
        %v992 = vld [vmem:[%s2 + $0x8] sm:$0xff]
        %v993 = vld [vmem:[%s2 + $0x10] sm:$0xff]
        %v994 = vld [vmem:[%s2 + $0x18] sm:$0xff]
        %v995 = vld [vmem:[%s2 + $0x20] sm:$0xff]
        %v996 = vld [vmem:[%s2 + $0x28] sm:$0xff]
        %v997 = vld [vmem:[%s2 + $0x30] sm:$0xff]
        %v998 = vld [vmem:[%s2 + $0x38] sm:$0xff]
        %v999 = vld [vmem:[%s2 + $0x40] sm:$0xff]
        %v1000 = vld [vmem:[%s2 + $0x48] sm:$0xff]
        %v1001 = vld [vmem:[%s2 + $0x50] sm:$0xff]
        %v1002 = vld [vmem:[%s2 + $0x58] sm:$0xff]
        %v1003 = vld [vmem:[%s2 + $0x60] sm:$0xff]
        %v1004 = vld [vmem:[%s2 + $0x68] sm:$0xff]
        %v1005 = vld [vmem:[%s2 + $0x70] sm:$0xff]
        %v1006 = vld [vmem:[%s2 + $0x78] sm:$0xff]
        %v1007 = vld [vmem:[%s2 + $0x80] sm:$0xff]
        %v1008 = vld [vmem:[%s2 + $0x88] sm:$0xff]
        %v1009 = vld [vmem:[%s2 + $0x90] sm:$0xff]
        %v1010 = vld [vmem:[%s2 + $0x98] sm:$0xff]
        %v1011 = vld [vmem:[%s2 + $0xa0] sm:$0xff]
        %v1012 = vld [vmem:[%s2 + $0xa8] sm:$0xff]
        %v1013 = vld [vmem:[%s2 + $0xb0] sm:$0xff]
        %v1014 = vld [vmem:[%s2 + $0xb8] sm:$0xff]
        %v1015 = vld [vmem:[%s2 + $0xc0] sm:$0xff]
        %v1016 = vld [vmem:[%s2 + $0xc8] sm:$0xff]
        %v1017 = vld [vmem:[%s2 + $0xd0] sm:$0xff]
        %v1018 = vld [vmem:[%s2 + $0xd8] sm:$0xff]
        %v1019 = vld [vmem:[%s2 + $0xe0] sm:$0xff]
        %v1020 = vld [vmem:[%s2 + $0xe8] sm:$0xff]
        %v1021 = vld [vmem:[%s2 + $0xf0] sm:$0xff]
        %v1022 = vld [vmem:[%s2 + $0xf8] sm:$0xff]
        %v1023 = vld [vmem:[%s2 + $0x100] sm:$0xff]
        %v1024 = vld [vmem:[%s2 + $0x108] sm:$0xff]
        %v1025 = vld [vmem:[%s2 + $0x110] sm:$0xff]
        %v1026 = vld [vmem:[%s2 + $0x118] sm:$0xff]
        %v1027 = vld [vmem:[%s2 + $0x120] sm:$0xff]
        %v1028 = vld [vmem:[%s2 + $0x128] sm:$0xff]
        %v1029 = vld [vmem:[%s2 + $0x130] sm:$0xff]
        %v1030 = vld [vmem:[%s2 + $0x138] sm:$0xff]
        %v1031 = vld [vmem:[%s2 + $0x140] sm:$0xff]
        %v1032 = vld [vmem:[%s2 + $0x148] sm:$0xff]
        %v1033 = vld [vmem:[%s2 + $0x150] sm:$0xff]
        %v1034 = vld [vmem:[%s2 + $0x158] sm:$0xff]
        %v1035 = vld [vmem:[%s2 + $0x160] sm:$0xff]
        %v1036 = vld [vmem:[%s2 + $0x168] sm:$0xff]
        %v1037 = vld [vmem:[%s2 + $0x170] sm:$0xff]
        %v1038 = vld [vmem:[%s2 + $0x178] sm:$0xff]
        %v1039 = vld [vmem:[%s2 + $0x180] sm:$0x77]
        %s1040 = sld [smem:[#allocation2]]
        %v1041 = vstv %s1040
        %v1091 = vunpack.c.l.b16 %v991
        %v1092 = vunpack.c.h.b16 %v991
        %v1093 = vunpack.c.l.b16 %v992
        %v1094 = vunpack.c.h.b16 %v992
        %v1095 = vunpack.c.l.b16 %v993
        %v1096 = vunpack.c.h.b16 %v993
        %v1097 = vunpack.c.l.b16 %v994
        %v1098 = vunpack.c.h.b16 %v994
        %v1099 = vunpack.c.l.b16 %v995
        %v1100 = vunpack.c.h.b16 %v995
        %v1101 = vunpack.c.l.b16 %v996
        %v1102 = vunpack.c.h.b16 %v996
        %v1103 = vunpack.c.l.b16 %v997
        %v1104 = vunpack.c.h.b16 %v997
        %v1105 = vunpack.c.l.b16 %v998
        %v1106 = vunpack.c.h.b16 %v998
        %v1107 = vunpack.c.l.b16 %v999
        %v1108 = vunpack.c.h.b16 %v999
        %v1109 = vunpack.c.l.b16 %v1000
        %v1110 = vunpack.c.h.b16 %v1000
        %v1111 = vunpack.c.l.b16 %v1001
        %v1112 = vunpack.c.h.b16 %v1001
        %v1113 = vunpack.c.l.b16 %v1002
        %v1114 = vunpack.c.h.b16 %v1002
        %v1115 = vunpack.c.l.b16 %v1003
        %v1116 = vunpack.c.h.b16 %v1003
        %v1117 = vunpack.c.l.b16 %v1004
        %v1118 = vunpack.c.h.b16 %v1004
        %v1119 = vunpack.c.l.b16 %v1005
        %v1120 = vunpack.c.h.b16 %v1005
        %v1121 = vunpack.c.l.b16 %v1006
        %v1122 = vunpack.c.h.b16 %v1006
        %v1123 = vunpack.c.l.b16 %v1007
        %v1124 = vunpack.c.h.b16 %v1007
        %v1125 = vunpack.c.l.b16 %v1008
        %v1126 = vunpack.c.h.b16 %v1008
        %v1127 = vunpack.c.l.b16 %v1009
        %v1128 = vunpack.c.h.b16 %v1009
        %v1129 = vunpack.c.l.b16 %v1010
        %v1130 = vunpack.c.h.b16 %v1010
        %v1131 = vunpack.c.l.b16 %v1011
        %v1132 = vunpack.c.h.b16 %v1011
        %v1133 = vunpack.c.l.b16 %v1012
        %v1134 = vunpack.c.h.b16 %v1012
        %v1135 = vunpack.c.l.b16 %v1013
        %v1136 = vunpack.c.h.b16 %v1013
        %v1137 = vunpack.c.l.b16 %v1014
        %v1138 = vunpack.c.h.b16 %v1014
        %v1139 = vunpack.c.l.b16 %v1015
        %v1140 = vunpack.c.h.b16 %v1015
        %v1141 = vunpack.c.l.b16 %v1016
        %v1142 = vunpack.c.h.b16 %v1016
        %v1143 = vunpack.c.l.b16 %v1017
        %v1144 = vunpack.c.h.b16 %v1017
        %v1145 = vunpack.c.l.b16 %v1018
        %v1146 = vunpack.c.h.b16 %v1018
        %v1147 = vunpack.c.l.b16 %v1019
        %v1148 = vunpack.c.h.b16 %v1019
        %v1149 = vunpack.c.l.b16 %v1020
        %v1150 = vunpack.c.h.b16 %v1020
        %v1151 = vunpack.c.l.b16 %v1021
        %v1152 = vunpack.c.h.b16 %v1021
        %v1153 = vunpack.c.l.b16 %v1022
        %v1154 = vunpack.c.h.b16 %v1022
        %v1155 = vunpack.c.l.b16 %v1023
        %v1156 = vunpack.c.h.b16 %v1023
        %v1157 = vunpack.c.l.b16 %v1024
        %v1158 = vunpack.c.h.b16 %v1024
        %v1159 = vunpack.c.l.b16 %v1025
        %v1160 = vunpack.c.h.b16 %v1025
        %v1161 = vunpack.c.l.b16 %v1026
        %v1162 = vunpack.c.h.b16 %v1026
        %v1163 = vunpack.c.l.b16 %v1027
        %v1164 = vunpack.c.h.b16 %v1027
        %v1165 = vunpack.c.l.b16 %v1028
        %v1166 = vunpack.c.h.b16 %v1028
        %v1167 = vunpack.c.l.b16 %v1029
        %v1168 = vunpack.c.h.b16 %v1029
        %v1169 = vunpack.c.l.b16 %v1030
        %v1170 = vunpack.c.h.b16 %v1030
        %v1171 = vunpack.c.l.b16 %v1031
        %v1172 = vunpack.c.h.b16 %v1031
        %v1173 = vunpack.c.l.b16 %v1032
        %v1174 = vunpack.c.h.b16 %v1032
        %v1175 = vunpack.c.l.b16 %v1033
        %v1176 = vunpack.c.h.b16 %v1033
        %v1177 = vunpack.c.l.b16 %v1034
        %v1178 = vunpack.c.h.b16 %v1034
        %v1179 = vunpack.c.l.b16 %v1035
        %v1180 = vunpack.c.h.b16 %v1035
        %v1181 = vunpack.c.l.b16 %v1036
        %v1182 = vunpack.c.h.b16 %v1036
        %v1183 = vunpack.c.l.b16 %v1037
        %v1184 = vunpack.c.h.b16 %v1037
        %v1185 = vunpack.c.l.b16 %v1038
        %v1186 = vunpack.c.h.b16 %v1038
        %v1187 = vunpack.c.l.b16 %v1039
        %v1188 = vunpack.c.h.b16 %v1039
        %v1189 = vpack.c.b16 %v1093, %v1091
        %v1190 = vpack.c.b16 %v1094, %v1092
        %v1191 = vpack.c.b16 %v1097, %v1095
        %v1192 = vpack.c.b16 %v1098, %v1096
        %v1193 = vpack.c.b16 %v1101, %v1099
        %v1194 = vpack.c.b16 %v1102, %v1100
        %v1195 = vpack.c.b16 %v1105, %v1103
        %v1196 = vpack.c.b16 %v1106, %v1104
        %v1197 = vpack.c.b16 %v1109, %v1107
        %v1198 = vpack.c.b16 %v1110, %v1108
        %v1199 = vpack.c.b16 %v1113, %v1111
        %v1200 = vpack.c.b16 %v1114, %v1112
        %v1201 = vpack.c.b16 %v1117, %v1115
        %v1202 = vpack.c.b16 %v1118, %v1116
        %v1203 = vpack.c.b16 %v1121, %v1119
        %v1204 = vpack.c.b16 %v1122, %v1120
        %v1205 = vpack.c.b16 %v1125, %v1123
        %v1206 = vpack.c.b16 %v1126, %v1124
        %v1207 = vpack.c.b16 %v1129, %v1127
        %v1208 = vpack.c.b16 %v1130, %v1128
        %v1209 = vpack.c.b16 %v1133, %v1131
        %v1210 = vpack.c.b16 %v1134, %v1132
        %v1211 = vpack.c.b16 %v1137, %v1135
        %v1212 = vpack.c.b16 %v1138, %v1136
        %v1213 = vpack.c.b16 %v1141, %v1139
        %v1214 = vpack.c.b16 %v1142, %v1140
        %v1215 = vpack.c.b16 %v1145, %v1143
        %v1216 = vpack.c.b16 %v1146, %v1144
        %v1217 = vpack.c.b16 %v1149, %v1147
        %v1218 = vpack.c.b16 %v1150, %v1148
        %v1219 = vpack.c.b16 %v1153, %v1151
        %v1220 = vpack.c.b16 %v1154, %v1152
        %v1221 = vpack.c.b16 %v1157, %v1155
        %v1222 = vpack.c.b16 %v1158, %v1156
        %v1223 = vpack.c.b16 %v1161, %v1159
        %v1224 = vpack.c.b16 %v1162, %v1160
        %v1225 = vpack.c.b16 %v1165, %v1163
        %v1226 = vpack.c.b16 %v1166, %v1164
        %v1227 = vpack.c.b16 %v1169, %v1167
        %v1228 = vpack.c.b16 %v1170, %v1168
        %v1229 = vpack.c.b16 %v1173, %v1171
        %v1230 = vpack.c.b16 %v1174, %v1172
        %v1231 = vpack.c.b16 %v1177, %v1175
        %v1232 = vpack.c.b16 %v1178, %v1176
        %v1233 = vpack.c.b16 %v1181, %v1179
        %v1234 = vpack.c.b16 %v1182, %v1180
        %v1235 = vpack.c.b16 %v1185, %v1183
        %v1236 = vpack.c.b16 %v1186, %v1184
        %v1237 = vpack.c.b16 %v1187, %v1187
        %v1238 = vpack.c.b16 %v1188, %v1188
        %vm1287 = vcmask 48128
        %v1289 = vsel %vm1287, %v881, 0
        %v1292 = vsel %vm1287, %v882, 0
        %v1295 = vsel %vm1287, %v883, 0
        %v1298 = vsel %vm1287, %v884, 0
        %v1301 = vsel %vm1287, %v885, 0
        %v1304 = vsel %vm1287, %v886, 0
        %v1307 = vsel %vm1287, %v887, 0
        %v1310 = vsel %vm1287, %v888, 0
        %v1313 = vsel %vm1287, %v889, 0
        %v1316 = vsel %vm1287, %v890, 0
        %v1319 = vsel %vm1287, %v891, 0
        %v1322 = vsel %vm1287, %v892, 0
        %vm1324 = vcmask 1042432
        %v1326 = vsel %vm1324, %v1237, 0
        %v1329 = vsel %vm1324, %v1238, 0
        %1331 = vmatprep.subr.bf16.mxu0 %v1190
        %1332 = vmatpush1.bf16.msra.mxu0 %v1189
        %1333 = vmatprep.subr.bf16.mxu0 %v1192
        %1334 = vmatpush1.bf16.msra.mxu0 %v1191
        %1335 = vmatprep.subr.bf16.mxu0 %v1194
        %1336 = vmatpush1.bf16.msra.mxu0 %v1193
        %1337 = vmatprep.subr.bf16.mxu0 %v1196
        %1338 = vmatpush1.bf16.msra.mxu0 %v1195
        %1339 = vmatprep.subr.bf16.mxu0 %v1198
        %1340 = vmatpush1.bf16.msra.mxu0 %v1197
        %1341 = vmatprep.subr.bf16.mxu0 %v1200
        %1342 = vmatpush1.bf16.msra.mxu0 %v1199
        %1343 = vmatprep.subr.bf16.mxu0 %v1202
        %1344 = vmatpush1.bf16.msra.mxu0 %v1201
        %1345 = vmatprep.subr.bf16.mxu0 %v1204
        %1346 = vmatpush1.bf16.msra.mxu0 %v1203
        %1347 = vmatprep.subr.bf16.mxu0 %v1206
        %1348 = vmatpush1.bf16.msra.mxu0 %v1205
        %1349 = vmatprep.subr.bf16.mxu0 %v1208
        %1350 = vmatpush1.bf16.msra.mxu0 %v1207
        %1351 = vmatprep.subr.bf16.mxu0 %v1210
        %1352 = vmatpush1.bf16.msra.mxu0 %v1209
        %1353 = vmatprep.subr.bf16.mxu0 %v1212
        %1354 = vmatpush1.bf16.msra.mxu0 %v1211
        %1355 = vmatprep.subr.bf16.mxu0 %v1214
        %1356 = vmatpush1.bf16.msra.mxu0 %v1213
        %1357 = vmatprep.subr.bf16.mxu0 %v1216
        %1358 = vmatpush1.bf16.msra.mxu0 %v1215
        %1359 = vmatprep.subr.bf16.mxu0 %v1218
        %1360 = vmatpush1.bf16.msra.mxu0 %v1217
        %1361 = vmatprep.subr.bf16.mxu0 %v1220
        %1362 = vmatpush1.bf16.msra.mxu0 %v1219
        %1363 = vmatprep.mubr.bf16.mxu0 %v896
        %1364 = vmatmul.mubr.bf16.gmra.mrb[0].mxu0 %v496
        %v1365 = vpop.f32.mrb[0].mxu0
        %v1366 = vadd.f32 %v1041, %v1365
        %v1367 = vpop.f32.mrb[0].mxu0
        %v1368 = vadd.f32 %v1041, %v1367
        %v1369 = vpop.f32.mrb[0].mxu0
        %v1370 = vadd.f32 %v1041, %v1369
        %v1371 = vpop.f32.mrb[0].mxu0
        %v1372 = vadd.f32 %v1041, %v1371
        %1373 = vmatprep.mubr.bf16.mxu0 %v900
        %1374 = vmatmul.mubr.bf16.gmra.mrb[0].mxu0 %v514
        %v1375 = vpop.f32.mrb[0].mxu0
        %v1376 = vadd.f32 %v1041, %v1375
        %v1377 = vpop.f32.mrb[0].mxu0
        %v1378 = vadd.f32 %v1041, %v1377
        %v1379 = vpop.f32.mrb[0].mxu0
        %v1380 = vadd.f32 %v1041, %v1379
        %v1381 = vpop.f32.mrb[0].mxu0
        %v1382 = vadd.f32 %v1041, %v1381
        %1383 = vmatprep.mubr.bf16.mxu0 %v904
        %1384 = vmatmul.mubr.bf16.gmra.mrb[0].mxu0 %v529
        %v1385 = vpop.f32.mrb[0].mxu0
        %v1386 = vadd.f32 %v1041, %v1385
        %v1387 = vpop.f32.mrb[0].mxu0
        %v1388 = vadd.f32 %v1041, %v1387
        %v1389 = vpop.f32.mrb[0].mxu0
        %v1390 = vadd.f32 %v1041, %v1389
        %v1391 = vpop.f32.mrb[0].mxu0
        %v1392 = vadd.f32 %v1041, %v1391
        %1393 = vmatprep.mubr.bf16.mxu0 %v908
        %1394 = vmatmul.mubr.bf16.gmra.mrb[0].mxu0 %v544
        %v1395 = vpop.f32.mrb[0].mxu0
        %v1396 = vadd.f32 %v1041, %v1395
        %v1397 = vpop.f32.mrb[0].mxu0
        %v1398 = vadd.f32 %v1041, %v1397
        %v1399 = vpop.f32.mrb[0].mxu0
        %v1400 = vadd.f32 %v1041, %v1399
        %v1401 = vpop.f32.mrb[0].mxu0
        %v1402 = vadd.f32 %v1041, %v1401
        %1403 = vmatprep.mubr.bf16.mxu0 %v912
        %1404 = vmatmul.mubr.bf16.gmra.mrb[0].mxu0 %v559
        %v1405 = vpop.f32.mrb[0].mxu0
        %v1406 = vadd.f32 %v1041, %v1405
        %v1407 = vpop.f32.mrb[0].mxu0
        %v1408 = vadd.f32 %v1041, %v1407
        %v1409 = vpop.f32.mrb[0].mxu0
        %v1410 = vadd.f32 %v1041, %v1409
        %v1411 = vpop.f32.mrb[0].mxu0
        %v1412 = vadd.f32 %v1041, %v1411
        %1413 = vmatprep.mubr.bf16.mxu0 %v916
        %1414 = vmatmul.mubr.bf16.gmra.mrb[0].mxu0 %v574
        %v1415 = vpop.f32.mrb[0].mxu0
        %v1416 = vadd.f32 %v1041, %v1415
        %v1417 = vpop.f32.mrb[0].mxu0
        %v1418 = vadd.f32 %v1041, %v1417
        %v1419 = vpop.f32.mrb[0].mxu0
        %v1420 = vadd.f32 %v1041, %v1419
        %v1421 = vpop.f32.mrb[0].mxu0
        %v1422 = vadd.f32 %v1041, %v1421
        %1423 = vmatprep.mubr.bf16.mxu0 %v920
        %1424 = vmatmul.mubr.bf16.gmra.mrb[0].mxu0 %v589
        %v1425 = vpop.f32.mrb[0].mxu0
        %v1426 = vadd.f32 %v1041, %v1425
        %v1427 = vpop.f32.mrb[0].mxu0
        %v1428 = vadd.f32 %v1041, %v1427
        %v1429 = vpop.f32.mrb[0].mxu0
        %v1430 = vadd.f32 %v1041, %v1429
        %v1431 = vpop.f32.mrb[0].mxu0
        %v1432 = vadd.f32 %v1041, %v1431
        %1433 = vmatprep.mubr.bf16.mxu0 %v924
        %1434 = vmatmul.mubr.bf16.gmra.mrb[0].mxu0 %v604
        %v1435 = vpop.f32.mrb[0].mxu0
        %v1436 = vadd.f32 %v1041, %v1435
        %v1437 = vpop.f32.mrb[0].mxu0
        %v1438 = vadd.f32 %v1041, %v1437
        %v1439 = vpop.f32.mrb[0].mxu0
        %v1440 = vadd.f32 %v1041, %v1439
        %v1441 = vpop.f32.mrb[0].mxu0
        %v1442 = vadd.f32 %v1041, %v1441
        %1443 = vmatprep.mubr.bf16.mxu0 %v928
        %1444 = vmatmul.mubr.bf16.gmra.mrb[0].mxu0 %v619
        %v1445 = vpop.f32.mrb[0].mxu0
        %v1446 = vadd.f32 %v1041, %v1445
        %v1447 = vpop.f32.mrb[0].mxu0
        %v1448 = vadd.f32 %v1041, %v1447
        %v1449 = vpop.f32.mrb[0].mxu0
        %v1450 = vadd.f32 %v1041, %v1449
        %v1451 = vpop.f32.mrb[0].mxu0
        %v1452 = vadd.f32 %v1041, %v1451
        %1453 = vmatprep.mubr.bf16.mxu0 %v932
        %1454 = vmatmul.mubr.bf16.gmra.mrb[0].mxu0 %v634
        %v1455 = vpop.f32.mrb[0].mxu0
        %v1456 = vadd.f32 %v1041, %v1455
        %v1457 = vpop.f32.mrb[0].mxu0
        %v1458 = vadd.f32 %v1041, %v1457
        %v1459 = vpop.f32.mrb[0].mxu0
        %v1460 = vadd.f32 %v1041, %v1459
        %v1461 = vpop.f32.mrb[0].mxu0
        %v1462 = vadd.f32 %v1041, %v1461
        %1463 = vmatprep.mubr.bf16.mxu0 %v936
        %1464 = vmatmul.mubr.bf16.gmra.mrb[0].mxu0 %v649
        %v1465 = vpop.f32.mrb[0].mxu0
        %v1466 = vadd.f32 %v1041, %v1465
        %v1467 = vpop.f32.mrb[0].mxu0
        %v1468 = vadd.f32 %v1041, %v1467
        %v1469 = vpop.f32.mrb[0].mxu0
        %v1470 = vadd.f32 %v1041, %v1469
        %v1471 = vpop.f32.mrb[0].mxu0
        %v1472 = vadd.f32 %v1041, %v1471
        %1473 = vmatprep.mubr.bf16.mxu0 %v940
        %1474 = vmatmul.mubr.bf16.gmra.mrb[0].mxu0 %v678
        %v1475 = vpop.f32.mrb[0].mxu0
        %v1476 = vadd.f32 %v1041, %v1475
        %v1477 = vpop.f32.mrb[0].mxu0
        %v1478 = vadd.f32 %v1041, %v1477
        %v1479 = vpop.f32.mrb[0].mxu0
        %v1480 = vadd.f32 %v1041, %v1479
        %v1481 = vpop.f32.mrb[0].mxu0
        %v1482 = vadd.f32 %v1041, %v1481
        %1483 = vdwg.mxu0
        %1484 = vmatprep.subr.bf16.mxu0 %v1222
        %1485 = vmatpush1.bf16.msra.mxu0 %v1221
        %1486 = vmatprep.subr.bf16.mxu0 %v1224
        %1487 = vmatpush1.bf16.msra.mxu0 %v1223
        %1488 = vmatprep.subr.bf16.mxu0 %v1226
        %1489 = vmatpush1.bf16.msra.mxu0 %v1225
        %1490 = vmatprep.subr.bf16.mxu0 %v1228
        %1491 = vmatpush1.bf16.msra.mxu0 %v1227
        %1492 = vmatprep.subr.bf16.mxu0 %v1230
        %1493 = vmatpush1.bf16.msra.mxu0 %v1229
        %1494 = vmatprep.subr.bf16.mxu0 %v1232
        %1495 = vmatpush1.bf16.msra.mxu0 %v1231
        %1496 = vmatprep.subr.bf16.mxu0 %v1234
        %1497 = vmatpush1.bf16.msra.mxu0 %v1233
        %1498 = vmatprep.subr.bf16.mxu0 %v1236
        %1499 = vmatpush1.bf16.msra.mxu0 %v1235
        %1500 = vmatprep.subr.bf16.mxu0 %v1329
        %1501 = vmatpush1.bf16.msra.mxu0 %v1326
        %1502 = vmatprep.subr.bf16.mxu0 0
        %1503 = vmatpush1.bf16.msra.mxu0 0
        %1504 = vmatprep.subr.bf16.mxu0 0
        %1505 = vmatpush1.bf16.msra.mxu0 0
        %1506 = vmatprep.subr.bf16.mxu0 0
        %1507 = vmatpush1.bf16.msra.mxu0 0
        %1508 = vmatprep.subr.bf16.mxu0 0
        %1509 = vmatpush1.bf16.msra.mxu0 0
        %1510 = vmatprep.subr.bf16.mxu0 0
        %1511 = vmatpush1.bf16.msra.mxu0 0
        %1512 = vmatprep.subr.bf16.mxu0 0
        %1513 = vmatpush1.bf16.msra.mxu0 0
        %1514 = vmatprep.subr.bf16.mxu0 0
        %1515 = vmatpush1.bf16.msra.mxu0 0
        %1516 = vmatprep.mubr.bf16.mxu0 %v1289
        %1517 = vmatmul.mubr.bf16.gmra.mrb[0].mxu0 %v945
        %v1518 = vpop.f32.mrb[0].mxu0
        %v1519 = vadd.f32 %v1366, %v1518
        %v1520 = vpop.f32.mrb[0].mxu0
        %v1521 = vadd.f32 %v1368, %v1520
        %v1522 = vpop.f32.mrb[0].mxu0
        %v1523 = vadd.f32 %v1370, %v1522
        %v1524 = vpop.f32.mrb[0].mxu0
        %v1525 = vadd.f32 %v1372, %v1524
        %1526 = vmatprep.mubr.bf16.mxu0 %v1292
        %1527 = vmatmul.mubr.bf16.gmra.mrb[0].mxu0 %v949
        %v1528 = vpop.f32.mrb[0].mxu0
        %v1529 = vadd.f32 %v1376, %v1528
        %v1530 = vpop.f32.mrb[0].mxu0
        %v1531 = vadd.f32 %v1378, %v1530
        %v1532 = vpop.f32.mrb[0].mxu0
        %v1533 = vadd.f32 %v1380, %v1532
        %v1534 = vpop.f32.mrb[0].mxu0
        %v1535 = vadd.f32 %v1382, %v1534
        %1536 = vmatprep.mubr.bf16.mxu0 %v1295
        %1537 = vmatmul.mubr.bf16.gmra.mrb[0].mxu0 %v953
        %v1538 = vpop.f32.mrb[0].mxu0
        %v1539 = vadd.f32 %v1386, %v1538
        %v1540 = vpop.f32.mrb[0].mxu0
        %v1541 = vadd.f32 %v1388, %v1540
        %v1542 = vpop.f32.mrb[0].mxu0
        %v1543 = vadd.f32 %v1390, %v1542
        %v1544 = vpop.f32.mrb[0].mxu0
        %v1545 = vadd.f32 %v1392, %v1544
        %1546 = vmatprep.mubr.bf16.mxu0 %v1298
        %1547 = vmatmul.mubr.bf16.gmra.mrb[0].mxu0 %v957
        %v1548 = vpop.f32.mrb[0].mxu0
        %v1549 = vadd.f32 %v1396, %v1548
        %v1550 = vpop.f32.mrb[0].mxu0
        %v1551 = vadd.f32 %v1398, %v1550
        %v1552 = vpop.f32.mrb[0].mxu0
        %v1553 = vadd.f32 %v1400, %v1552
        %v1554 = vpop.f32.mrb[0].mxu0
        %v1555 = vadd.f32 %v1402, %v1554
        %1556 = vmatprep.mubr.bf16.mxu0 %v1301
        %1557 = vmatmul.mubr.bf16.gmra.mrb[0].mxu0 %v961
        %v1558 = vpop.f32.mrb[0].mxu0
        %v1559 = vadd.f32 %v1406, %v1558
        %v1560 = vpop.f32.mrb[0].mxu0
        %v1561 = vadd.f32 %v1408, %v1560
        %v1562 = vpop.f32.mrb[0].mxu0
        %v1563 = vadd.f32 %v1410, %v1562
        %v1564 = vpop.f32.mrb[0].mxu0
        %v1565 = vadd.f32 %v1412, %v1564
        %1566 = vmatprep.mubr.bf16.mxu0 %v1304
        %1567 = vmatmul.mubr.bf16.gmra.mrb[0].mxu0 %v965
        %v1568 = vpop.f32.mrb[0].mxu0
        %v1569 = vadd.f32 %v1416, %v1568
        %v1570 = vpop.f32.mrb[0].mxu0
        %v1571 = vadd.f32 %v1418, %v1570
        %v1572 = vpop.f32.mrb[0].mxu0
        %v1573 = vadd.f32 %v1420, %v1572
        %v1574 = vpop.f32.mrb[0].mxu0
        %v1575 = vadd.f32 %v1422, %v1574
        %1576 = vmatprep.mubr.bf16.mxu0 %v1307
        %1577 = vmatmul.mubr.bf16.gmra.mrb[0].mxu0 %v969
        %v1578 = vpop.f32.mrb[0].mxu0
        %v1579 = vadd.f32 %v1426, %v1578
        %v1580 = vpop.f32.mrb[0].mxu0
        %v1581 = vadd.f32 %v1428, %v1580
        %v1582 = vpop.f32.mrb[0].mxu0
        %v1583 = vadd.f32 %v1430, %v1582
        %v1584 = vpop.f32.mrb[0].mxu0
        %v1585 = vadd.f32 %v1432, %v1584
        %1586 = vmatprep.mubr.bf16.mxu0 %v1310
        %1587 = vmatmul.mubr.bf16.gmra.mrb[0].mxu0 %v973
        %v1588 = vpop.f32.mrb[0].mxu0
        %v1589 = vadd.f32 %v1436, %v1588
        %v1590 = vpop.f32.mrb[0].mxu0
        %v1591 = vadd.f32 %v1438, %v1590
        %v1592 = vpop.f32.mrb[0].mxu0
        %v1593 = vadd.f32 %v1440, %v1592
        %v1594 = vpop.f32.mrb[0].mxu0
        %v1595 = vadd.f32 %v1442, %v1594
        %1596 = vmatprep.mubr.bf16.mxu0 %v1313
        %1597 = vmatmul.mubr.bf16.gmra.mrb[0].mxu0 %v977
        %v1598 = vpop.f32.mrb[0].mxu0
        %v1599 = vadd.f32 %v1446, %v1598
        %v1600 = vpop.f32.mrb[0].mxu0
        %v1601 = vadd.f32 %v1448, %v1600
        %v1602 = vpop.f32.mrb[0].mxu0
        %v1603 = vadd.f32 %v1450, %v1602
        %v1604 = vpop.f32.mrb[0].mxu0
        %v1605 = vadd.f32 %v1452, %v1604
        %1606 = vmatprep.mubr.bf16.mxu0 %v1316
        %1607 = vmatmul.mubr.bf16.gmra.mrb[0].mxu0 %v981
        %v1608 = vpop.f32.mrb[0].mxu0
        %v1609 = vadd.f32 %v1456, %v1608
        %v1610 = vpop.f32.mrb[0].mxu0
        %v1611 = vadd.f32 %v1458, %v1610
        %v1612 = vpop.f32.mrb[0].mxu0
        %v1613 = vadd.f32 %v1460, %v1612
        %v1614 = vpop.f32.mrb[0].mxu0
        %v1615 = vadd.f32 %v1462, %v1614
        %1616 = vmatprep.mubr.bf16.mxu0 %v1319
        %1617 = vmatmul.mubr.bf16.gmra.mrb[0].mxu0 %v985
        %v1618 = vpop.f32.mrb[0].mxu0
        %v1619 = vadd.f32 %v1466, %v1618
        %v1620 = vpop.f32.mrb[0].mxu0
        %v1621 = vadd.f32 %v1468, %v1620
        %v1622 = vpop.f32.mrb[0].mxu0
        %v1623 = vadd.f32 %v1470, %v1622
        %v1624 = vpop.f32.mrb[0].mxu0
        %v1625 = vadd.f32 %v1472, %v1624
        %1626 = vmatprep.mubr.bf16.mxu0 %v1322
        %1627 = vmatmul.mubr.bf16.gmra.mrb[0].mxu0 %v989
        %v1628 = vpop.f32.mrb[0].mxu0
        %v1629 = vadd.f32 %v1476, %v1628
        %v1630 = vpop.f32.mrb[0].mxu0
        %v1631 = vadd.f32 %v1478, %v1630
        %v1632 = vpop.f32.mrb[0].mxu0
        %v1633 = vadd.f32 %v1480, %v1632
        %v1634 = vpop.f32.mrb[0].mxu0
        %v1635 = vadd.f32 %v1482, %v1634
        %1636 = vdwg.mxu0
        %vm1637 = vcmp.ge.f32.partialorder %v1519, 0.0
        %vm1638 = vcmp.ge.f32.partialorder %v1521, 0.0
        %vm1639 = vcmp.ge.f32.partialorder %v1523, 0.0
        %vm1640 = vcmp.ge.f32.partialorder %v1525, 0.0
        %vm1641 = vcmp.ge.f32.partialorder %v1529, 0.0
        %vm1642 = vcmp.ge.f32.partialorder %v1531, 0.0
        %vm1643 = vcmp.ge.f32.partialorder %v1533, 0.0
        %vm1644 = vcmp.ge.f32.partialorder %v1535, 0.0
        %vm1645 = vcmp.ge.f32.partialorder %v1539, 0.0
        %vm1646 = vcmp.ge.f32.partialorder %v1541, 0.0
        %vm1647 = vcmp.ge.f32.partialorder %v1543, 0.0
        %vm1648 = vcmp.ge.f32.partialorder %v1545, 0.0
        %vm1649 = vcmp.ge.f32.partialorder %v1549, 0.0
        %vm1650 = vcmp.ge.f32.partialorder %v1551, 0.0
        %vm1651 = vcmp.ge.f32.partialorder %v1553, 0.0
        %vm1652 = vcmp.ge.f32.partialorder %v1555, 0.0
        %vm1653 = vcmp.ge.f32.partialorder %v1559, 0.0
        %vm1654 = vcmp.ge.f32.partialorder %v1561, 0.0
        %vm1655 = vcmp.ge.f32.partialorder %v1563, 0.0
        %vm1656 = vcmp.ge.f32.partialorder %v1565, 0.0
        %vm1657 = vcmp.ge.f32.partialorder %v1569, 0.0
        %vm1658 = vcmp.ge.f32.partialorder %v1571, 0.0
        %vm1659 = vcmp.ge.f32.partialorder %v1573, 0.0
        %vm1660 = vcmp.ge.f32.partialorder %v1575, 0.0
        %vm1661 = vcmp.ge.f32.partialorder %v1579, 0.0
        %vm1662 = vcmp.ge.f32.partialorder %v1581, 0.0
        %vm1663 = vcmp.ge.f32.partialorder %v1583, 0.0
        %vm1664 = vcmp.ge.f32.partialorder %v1585, 0.0
        %vm1665 = vcmp.ge.f32.partialorder %v1589, 0.0
        %vm1666 = vcmp.ge.f32.partialorder %v1591, 0.0
        %vm1667 = vcmp.ge.f32.partialorder %v1593, 0.0
        %vm1668 = vcmp.ge.f32.partialorder %v1595, 0.0
        %vm1669 = vcmp.ge.f32.partialorder %v1599, 0.0
        %vm1670 = vcmp.ge.f32.partialorder %v1601, 0.0
        %vm1671 = vcmp.ge.f32.partialorder %v1603, 0.0
        %vm1672 = vcmp.ge.f32.partialorder %v1605, 0.0
        %vm1673 = vcmp.ge.f32.partialorder %v1609, 0.0
        %vm1674 = vcmp.ge.f32.partialorder %v1611, 0.0
        %vm1675 = vcmp.ge.f32.partialorder %v1613, 0.0
        %vm1676 = vcmp.ge.f32.partialorder %v1615, 0.0
        %vm1677 = vcmp.ge.f32.partialorder %v1619, 0.0
        %vm1678 = vcmp.ge.f32.partialorder %v1621, 0.0
        %vm1679 = vcmp.ge.f32.partialorder %v1623, 0.0
        %vm1680 = vcmp.ge.f32.partialorder %v1625, 0.0
        %vm1681 = vcmp.ge.f32.partialorder %v1629, 0.0
        %vm1682 = vcmp.ge.f32.partialorder %v1631, 0.0
        %vm1683 = vcmp.ge.f32.partialorder %v1633, 0.0
        %vm1684 = vcmp.ge.f32.partialorder %v1635, 0.0
        %v1685 = vmul.f32 %v1519, 0.4
        %v1686 = vmul.f32 %v1521, 0.4
        %v1687 = vmul.f32 %v1523, 0.4
        %v1688 = vmul.f32 %v1525, 0.4
        %v1689 = vmul.f32 %v1529, 0.4
        %v1690 = vmul.f32 %v1531, 0.4
        %v1691 = vmul.f32 %v1533, 0.4
        %v1692 = vmul.f32 %v1535, 0.4
        %v1693 = vmul.f32 %v1539, 0.4
        %v1694 = vmul.f32 %v1541, 0.4
        %v1695 = vmul.f32 %v1543, 0.4
        %v1696 = vmul.f32 %v1545, 0.4
        %v1697 = vmul.f32 %v1549, 0.4
        %v1698 = vmul.f32 %v1551, 0.4
        %v1699 = vmul.f32 %v1553, 0.4
        %v1700 = vmul.f32 %v1555, 0.4
        %v1701 = vmul.f32 %v1559, 0.4
        %v1702 = vmul.f32 %v1561, 0.4
        %v1703 = vmul.f32 %v1563, 0.4
        %v1704 = vmul.f32 %v1565, 0.4
        %v1705 = vmul.f32 %v1569, 0.4
        %v1706 = vmul.f32 %v1571, 0.4
        %v1707 = vmul.f32 %v1573, 0.4
        %v1708 = vmul.f32 %v1575, 0.4
        %v1709 = vmul.f32 %v1579, 0.4
        %v1710 = vmul.f32 %v1581, 0.4
        %v1711 = vmul.f32 %v1583, 0.4
        %v1712 = vmul.f32 %v1585, 0.4
        %v1713 = vmul.f32 %v1589, 0.4
        %v1714 = vmul.f32 %v1591, 0.4
        %v1715 = vmul.f32 %v1593, 0.4
        %v1716 = vmul.f32 %v1595, 0.4
        %v1717 = vmul.f32 %v1599, 0.4
        %v1718 = vmul.f32 %v1601, 0.4
        %v1719 = vmul.f32 %v1603, 0.4
        %v1720 = vmul.f32 %v1605, 0.4
        %v1721 = vmul.f32 %v1609, 0.4
        %v1722 = vmul.f32 %v1611, 0.4
        %v1723 = vmul.f32 %v1613, 0.4
        %v1724 = vmul.f32 %v1615, 0.4
        %v1725 = vmul.f32 %v1619, 0.4
        %v1726 = vmul.f32 %v1621, 0.4
        %v1727 = vmul.f32 %v1623, 0.4
        %v1728 = vmul.f32 %v1625, 0.4
        %v1729 = vmul.f32 %v1629, 0.4
        %v1730 = vmul.f32 %v1631, 0.4
        %v1731 = vmul.f32 %v1633, 0.4
        %v1732 = vmul.f32 %v1635, 0.4
        %v1733 = vsel %vm1637, %v1519, %v1685
        %v1734 = vsel %vm1638, %v1521, %v1686
        %v1735 = vsel %vm1639, %v1523, %v1687
        %v1736 = vsel %vm1640, %v1525, %v1688
        %v1737 = vsel %vm1641, %v1529, %v1689
        %v1738 = vsel %vm1642, %v1531, %v1690
        %v1739 = vsel %vm1643, %v1533, %v1691
        %v1740 = vsel %vm1644, %v1535, %v1692
        %v1741 = vsel %vm1645, %v1539, %v1693
        %v1742 = vsel %vm1646, %v1541, %v1694
        %v1743 = vsel %vm1647, %v1543, %v1695
        %v1744 = vsel %vm1648, %v1545, %v1696
        %v1745 = vsel %vm1649, %v1549, %v1697
        %v1746 = vsel %vm1650, %v1551, %v1698
        %v1747 = vsel %vm1651, %v1553, %v1699
        %v1748 = vsel %vm1652, %v1555, %v1700
        %v1749 = vsel %vm1653, %v1559, %v1701
        %v1750 = vsel %vm1654, %v1561, %v1702
        %v1751 = vsel %vm1655, %v1563, %v1703
        %v1752 = vsel %vm1656, %v1565, %v1704
        %v1753 = vsel %vm1657, %v1569, %v1705
        %v1754 = vsel %vm1658, %v1571, %v1706
        %v1755 = vsel %vm1659, %v1573, %v1707
        %v1756 = vsel %vm1660, %v1575, %v1708
        %v1757 = vsel %vm1661, %v1579, %v1709
        %v1758 = vsel %vm1662, %v1581, %v1710
        %v1759 = vsel %vm1663, %v1583, %v1711
        %v1760 = vsel %vm1664, %v1585, %v1712
        %v1761 = vsel %vm1665, %v1589, %v1713
        %v1762 = vsel %vm1666, %v1591, %v1714
        %v1763 = vsel %vm1667, %v1593, %v1715
        %v1764 = vsel %vm1668, %v1595, %v1716
        %v1765 = vsel %vm1669, %v1599, %v1717
        %v1766 = vsel %vm1670, %v1601, %v1718
        %v1767 = vsel %vm1671, %v1603, %v1719
        %v1768 = vsel %vm1672, %v1605, %v1720
        %v1769 = vsel %vm1673, %v1609, %v1721
        %v1770 = vsel %vm1674, %v1611, %v1722
        %v1771 = vsel %vm1675, %v1613, %v1723
        %v1772 = vsel %vm1676, %v1615, %v1724
        %v1773 = vsel %vm1677, %v1619, %v1725
        %v1774 = vsel %vm1678, %v1621, %v1726
        %v1775 = vsel %vm1679, %v1623, %v1727
        %v1776 = vsel %vm1680, %v1625, %v1728
        %v1777 = vsel %vm1681, %v1629, %v1729
        %v1778 = vsel %vm1682, %v1631, %v1730
        %v1779 = vsel %vm1683, %v1633, %v1731
        %v1780 = vsel %vm1684, %v1635, %v1732
        %v1781 = vlaneseq
        %v1782 = vshrl.u32 %v1781, 7
        %v1783 = vadd.s32 %v1782, 8
        %v1784 = vadd.s32 %v1782, 16
        %v1785 = vadd.s32 %v1782, 24
        %v1786 = vadd.s32 %v1782, 32
        %v1787 = vadd.s32 %v1782, 40
        %v1788 = vadd.s32 %v1782, 48
        %v1789 = vadd.s32 %v1782, 56
        %v1790 = vadd.s32 %v1782, 64
        %v1791 = vadd.s32 %v1782, 72
        %v1792 = vadd.s32 %v1782, 80
        %v1793 = vadd.s32 %v1782, 88
        %vm1794 = vcmp.ge.s32.totalorder %v1782, 1
        %vm1795 = vcmp.ge.s32.totalorder %v1783, 1
        %vm1796 = vcmp.ge.s32.totalorder %v1784, 1
        %vm1797 = vcmp.ge.s32.totalorder %v1785, 1
        %vm1798 = vcmp.ge.s32.totalorder %v1786, 1
        %vm1799 = vcmp.ge.s32.totalorder %v1787, 1
        %vm1800 = vcmp.ge.s32.totalorder %v1788, 1
        %vm1801 = vcmp.ge.s32.totalorder %v1789, 1
        %vm1802 = vcmp.ge.s32.totalorder %v1790, 1
        %vm1803 = vcmp.ge.s32.totalorder %v1791, 1
        %vm1804 = vcmp.ge.s32.totalorder %v1792, 1
        %vm1805 = vcmp.ge.s32.totalorder %v1793, 1
        %vm1806 = vcmp.le.s32.totalorder %v1782, 80
        %vm1807 = vcmp.le.s32.totalorder %v1783, 80
        %vm1808 = vcmp.le.s32.totalorder %v1784, 80
        %vm1809 = vcmp.le.s32.totalorder %v1785, 80
        %vm1810 = vcmp.le.s32.totalorder %v1786, 80
        %vm1811 = vcmp.le.s32.totalorder %v1787, 80
        %vm1812 = vcmp.le.s32.totalorder %v1788, 80
        %vm1813 = vcmp.le.s32.totalorder %v1789, 80
        %vm1814 = vcmp.le.s32.totalorder %v1790, 80
        %vm1815 = vcmp.le.s32.totalorder %v1791, 80
        %vm1816 = vcmp.le.s32.totalorder %v1792, 80
        %vm1817 = vcmp.le.s32.totalorder %v1793, 80
        %vm1818 = vmand %vm1794, %vm1806
        %vm1819 = vmand %vm1795, %vm1807
        %vm1820 = vmand %vm1796, %vm1808
        %vm1821 = vmand %vm1797, %vm1809
        %vm1822 = vmand %vm1798, %vm1810
        %vm1823 = vmand %vm1799, %vm1811
        %vm1824 = vmand %vm1800, %vm1812
        %vm1825 = vmand %vm1801, %vm1813
        %vm1826 = vmand %vm1802, %vm1814
        %vm1827 = vmand %vm1803, %vm1815
        %vm1828 = vmand %vm1804, %vm1816
        %vm1829 = vmand %vm1805, %vm1817
        %s1830 = sadd.s32 %s21, 1
        %s1831 = smul.u32 %s1830, 512
        %p1832 = scmp.gt.s32.totalorder %s1831, 256
        // Predicated region
        $region75: #{upsample_net2_forward.7} parent=69 // pred_check
          %p1833 = pneg %p1832
        $region76: #{upsample_net2_forward.7} parent=69 // pred_check_branch
          %1835 = sbr.rel (%p1833) target = $region78
        $region77: #{upsample_net2_forward.7} parent=69 // pred_region
          %s1836 = smul.u32 %s21, 512
          %v1837 = vlaneseq
          %v1838 = vand.u32 %v1837, 127
          %v1839 = vadd.s32 %v1838, 128
          %s1840 = ssub.s32 256, %s1836
          %v1841 = vstv %s1840
          %vm1842 = vcmp.lt.s32.totalorder %v1838, %v1841
          %vm1843 = vcmp.lt.s32.totalorder %v1839, %v1841
          %vm1844 = vmand %vm1818, %vm1842
          %vm1845 = vmand %vm1818, %vm1843
          %vm1846 = vmand %vm1819, %vm1842
          %vm1847 = vmand %vm1819, %vm1843
          %vm1848 = vmand %vm1820, %vm1842
          %vm1849 = vmand %vm1820, %vm1843
          %vm1850 = vmand %vm1821, %vm1842
          %vm1851 = vmand %vm1821, %vm1843
          %vm1852 = vmand %vm1822, %vm1842
          %vm1853 = vmand %vm1822, %vm1843
          %vm1854 = vmand %vm1823, %vm1842
          %vm1855 = vmand %vm1823, %vm1843
          %vm1856 = vmand %vm1824, %vm1842
          %vm1857 = vmand %vm1824, %vm1843
          %vm1858 = vmand %vm1825, %vm1842
          %vm1859 = vmand %vm1825, %vm1843
          %vm1860 = vmand %vm1826, %vm1842
          %vm1861 = vmand %vm1826, %vm1843
          %vm1862 = vmand %vm1827, %vm1842
          %vm1863 = vmand %vm1827, %vm1843
          %vm1864 = vmand %vm1828, %vm1842
          %vm1865 = vmand %vm1828, %vm1843
          %vm1866 = vmand %vm1829, %vm1842
          %vm1867 = vmand %vm1829, %vm1843
          %v1868 = vsel %vm1844, %v1733, 0.0
          %v1869 = vsel %vm1845, %v1734, 0.0
          %v1870 = vsel %vm1846, %v1735, 0.0
          %v1871 = vsel %vm1847, %v1736, 0.0
          %v1872 = vsel %vm1848, %v1737, 0.0
          %v1873 = vsel %vm1849, %v1738, 0.0
          %v1874 = vsel %vm1850, %v1739, 0.0
          %v1875 = vsel %vm1851, %v1740, 0.0
          %v1876 = vsel %vm1852, %v1741, 0.0
          %v1877 = vsel %vm1853, %v1742, 0.0
          %v1878 = vsel %vm1854, %v1743, 0.0
          %v1879 = vsel %vm1855, %v1744, 0.0
          %v1880 = vsel %vm1856, %v1745, 0.0
          %v1881 = vsel %vm1857, %v1746, 0.0
          %v1882 = vsel %vm1858, %v1747, 0.0
          %v1883 = vsel %vm1859, %v1748, 0.0
          %v1884 = vsel %vm1860, %v1749, 0.0
          %v1885 = vsel %vm1861, %v1750, 0.0
          %v1886 = vsel %vm1862, %v1751, 0.0
          %v1887 = vsel %vm1863, %v1752, 0.0
          %v1888 = vsel %vm1864, %v1753, 0.0
          %v1889 = vsel %vm1865, %v1754, 0.0
          %v1890 = vsel %vm1866, %v1755, 0.0
          %v1891 = vsel %vm1867, %v1756, 0.0
          %s1892 = smul.u32 %s21, 2
          %s1893 = sadd.s32 %s1892, 1
          %s1894 = smul.u32 %s1893, 256
          %s1895 = ssub.s32 256, %s1894
          %v1896 = vstv %s1895
          %vm1897 = vcmp.lt.s32.totalorder %v1838, %v1896
          %vm1898 = vcmp.lt.s32.totalorder %v1839, %v1896
          %vm1899 = vmand %vm1818, %vm1897
          %vm1900 = vmand %vm1818, %vm1898
          %vm1901 = vmand %vm1819, %vm1897
          %vm1902 = vmand %vm1819, %vm1898
          %vm1903 = vmand %vm1820, %vm1897
          %vm1904 = vmand %vm1820, %vm1898
          %vm1905 = vmand %vm1821, %vm1897
          %vm1906 = vmand %vm1821, %vm1898
          %vm1907 = vmand %vm1822, %vm1897
          %vm1908 = vmand %vm1822, %vm1898
          %vm1909 = vmand %vm1823, %vm1897
          %vm1910 = vmand %vm1823, %vm1898
          %vm1911 = vmand %vm1824, %vm1897
          %vm1912 = vmand %vm1824, %vm1898
          %vm1913 = vmand %vm1825, %vm1897
          %vm1914 = vmand %vm1825, %vm1898
          %vm1915 = vmand %vm1826, %vm1897
          %vm1916 = vmand %vm1826, %vm1898
          %vm1917 = vmand %vm1827, %vm1897
          %vm1918 = vmand %vm1827, %vm1898
          %vm1919 = vmand %vm1828, %vm1897
          %vm1920 = vmand %vm1828, %vm1898
          %vm1921 = vmand %vm1829, %vm1897
          %vm1922 = vmand %vm1829, %vm1898
          %v1923 = vsel %vm1899, %v1757, 0.0
          %v1924 = vsel %vm1900, %v1758, 0.0
          %v1925 = vsel %vm1901, %v1759, 0.0
          %v1926 = vsel %vm1902, %v1760, 0.0
          %v1927 = vsel %vm1903, %v1761, 0.0
          %v1928 = vsel %vm1904, %v1762, 0.0
          %v1929 = vsel %vm1905, %v1763, 0.0
          %v1930 = vsel %vm1906, %v1764, 0.0
          %v1931 = vsel %vm1907, %v1765, 0.0
          %v1932 = vsel %vm1908, %v1766, 0.0
          %v1933 = vsel %vm1909, %v1767, 0.0
          %v1934 = vsel %vm1910, %v1768, 0.0
          %v1935 = vsel %vm1911, %v1769, 0.0
          %v1936 = vsel %vm1912, %v1770, 0.0
          %v1937 = vsel %vm1913, %v1771, 0.0
          %v1938 = vsel %vm1914, %v1772, 0.0
          %v1939 = vsel %vm1915, %v1773, 0.0
          %v1940 = vsel %vm1916, %v1774, 0.0
          %v1941 = vsel %vm1917, %v1775, 0.0
          %v1942 = vsel %vm1918, %v1776, 0.0
          %v1943 = vsel %vm1919, %v1777, 0.0
          %v1944 = vsel %vm1920, %v1778, 0.0
          %v1945 = vsel %vm1921, %v1779, 0.0
          %v1946 = vsel %vm1922, %v1780, 0.0
          %v1947 = vpack.c.bf16 %v1870, %v1868
          %v1948 = vpack.c.bf16 %v1871, %v1869
          %v1949 = vpack.c.bf16 %v1925, %v1923
          %v1950 = vpack.c.bf16 %v1926, %v1924
          %v1951 = vpack.c.bf16 %v1874, %v1872
          %v1952 = vpack.c.bf16 %v1875, %v1873
          %v1953 = vpack.c.bf16 %v1929, %v1927
          %v1954 = vpack.c.bf16 %v1930, %v1928
          %v1955 = vpack.c.bf16 %v1878, %v1876
          %v1956 = vpack.c.bf16 %v1879, %v1877
          %v1957 = vpack.c.bf16 %v1933, %v1931
          %v1958 = vpack.c.bf16 %v1934, %v1932
          %v1959 = vpack.c.bf16 %v1882, %v1880
          %v1960 = vpack.c.bf16 %v1883, %v1881
          %v1961 = vpack.c.bf16 %v1937, %v1935
          %v1962 = vpack.c.bf16 %v1938, %v1936
          %v1963 = vpack.c.bf16 %v1886, %v1884
          %v1964 = vpack.c.bf16 %v1887, %v1885
          %v1965 = vpack.c.bf16 %v1941, %v1939
          %v1966 = vpack.c.bf16 %v1942, %v1940
          %v1967 = vpack.c.bf16 %v1890, %v1888
          %v1968 = vpack.c.bf16 %v1891, %v1889
          %v1969 = vpack.c.bf16 %v1945, %v1943
          %v1970 = vpack.c.bf16 %v1946, %v1944
          %v1995 = vunpack.c.l.b16 %v1947
          %v1996 = vunpack.c.l.b16 %v1948
          %v1997 = vunpack.c.l.b16 %v1949
          %v1998 = vunpack.c.l.b16 %v1950
          %v1999 = vunpack.c.h.b16 %v1947
          %v2000 = vunpack.c.h.b16 %v1948
          %v2001 = vunpack.c.h.b16 %v1949
          %v2002 = vunpack.c.h.b16 %v1950
          %v2003 = vunpack.c.l.b16 %v1951
          %v2004 = vunpack.c.l.b16 %v1952
          %v2005 = vunpack.c.l.b16 %v1953
          %v2006 = vunpack.c.l.b16 %v1954
          %v2007 = vunpack.c.h.b16 %v1951
          %v2008 = vunpack.c.h.b16 %v1952
          %v2009 = vunpack.c.h.b16 %v1953
          %v2010 = vunpack.c.h.b16 %v1954
          %v2011 = vunpack.c.l.b16 %v1955
          %v2012 = vunpack.c.l.b16 %v1956
          %v2013 = vunpack.c.l.b16 %v1957
          %v2014 = vunpack.c.l.b16 %v1958
          %v2015 = vunpack.c.h.b16 %v1955
          %v2016 = vunpack.c.h.b16 %v1956
          %v2017 = vunpack.c.h.b16 %v1957
          %v2018 = vunpack.c.h.b16 %v1958
          %v2019 = vunpack.c.l.b16 %v1959
          %v2020 = vunpack.c.l.b16 %v1960
          %v2021 = vunpack.c.l.b16 %v1961
          %v2022 = vunpack.c.l.b16 %v1962
          %v2023 = vunpack.c.h.b16 %v1959
          %v2024 = vunpack.c.h.b16 %v1960
          %v2025 = vunpack.c.h.b16 %v1961
          %v2026 = vunpack.c.h.b16 %v1962
          %v2027 = vunpack.c.l.b16 %v1963
          %v2028 = vunpack.c.l.b16 %v1964
          %v2029 = vunpack.c.l.b16 %v1965
          %v2030 = vunpack.c.l.b16 %v1966
          %v2031 = vunpack.c.h.b16 %v1963
          %v2032 = vunpack.c.h.b16 %v1964
          %v2033 = vunpack.c.h.b16 %v1965
          %v2034 = vunpack.c.h.b16 %v1966
          %v2035 = vunpack.c.l.b16 %v1967
          %v2036 = vunpack.c.l.b16 %v1968
          %v2037 = vunpack.c.l.b16 %v1969
          %v2038 = vunpack.c.l.b16 %v1970
          %v2039 = vunpack.c.h.b16 %v1967
          %v2040 = vunpack.c.h.b16 %v1968
          %v2041 = vunpack.c.h.b16 %v1969
          %v2042 = vunpack.c.h.b16 %v1970
          %v2043 = vpack.c.b16 %v1996, %v1995
          %v2044 = vpack.c.b16 %v1998, %v1997
          %v2045 = vpack.c.b16 %v2000, %v1999
          %v2046 = vpack.c.b16 %v2002, %v2001
          %v2047 = vpack.c.b16 %v2004, %v2003
          %v2048 = vpack.c.b16 %v2006, %v2005
          %v2049 = vpack.c.b16 %v2008, %v2007
          %v2050 = vpack.c.b16 %v2010, %v2009
          %v2051 = vpack.c.b16 %v2012, %v2011
          %v2052 = vpack.c.b16 %v2014, %v2013
          %v2053 = vpack.c.b16 %v2016, %v2015
          %v2054 = vpack.c.b16 %v2018, %v2017
          %v2055 = vpack.c.b16 %v2020, %v2019
          %v2056 = vpack.c.b16 %v2022, %v2021
          %v2057 = vpack.c.b16 %v2024, %v2023
          %v2058 = vpack.c.b16 %v2026, %v2025
          %v2059 = vpack.c.b16 %v2028, %v2027
          %v2060 = vpack.c.b16 %v2030, %v2029
          %v2061 = vpack.c.b16 %v2032, %v2031
          %v2062 = vpack.c.b16 %v2034, %v2033
          %v2063 = vpack.c.b16 %v2036, %v2035
          %v2064 = vpack.c.b16 %v2038, %v2037
          %v2065 = vpack.c.b16 %v2040, %v2039
          %v2066 = vpack.c.b16 %v2042, %v2041
          %2091 = vst [vmem:[%s314] sm:$0xff] %v2043
          %2092 = vst [vmem:[%s314 + $0x8] sm:$0xff] %v2044
          %2093 = vst [vmem:[%s314 + $0x10] sm:$0xff] %v2045
          %2094 = vst [vmem:[%s314 + $0x18] sm:$0xff] %v2046
          %2095 = vst [vmem:[%s314 + $0x20] sm:$0xff] %v2047
          %2096 = vst [vmem:[%s314 + $0x28] sm:$0xff] %v2048
          %2097 = vst [vmem:[%s314 + $0x30] sm:$0xff] %v2049
          %2098 = vst [vmem:[%s314 + $0x38] sm:$0xff] %v2050
          %2099 = vst [vmem:[%s314 + $0x40] sm:$0xff] %v2051
          %2100 = vst [vmem:[%s314 + $0x48] sm:$0xff] %v2052
          %2101 = vst [vmem:[%s314 + $0x50] sm:$0xff] %v2053
          %2102 = vst [vmem:[%s314 + $0x58] sm:$0xff] %v2054
          %2103 = vst [vmem:[%s314 + $0x60] sm:$0xff] %v2055
          %2104 = vst [vmem:[%s314 + $0x68] sm:$0xff] %v2056
          %2105 = vst [vmem:[%s314 + $0x70] sm:$0xff] %v2057
          %2106 = vst [vmem:[%s314 + $0x78] sm:$0xff] %v2058
          %2107 = vst [vmem:[%s314 + $0x80] sm:$0xff] %v2059
          %2108 = vst [vmem:[%s314 + $0x88] sm:$0xff] %v2060
          %2109 = vst [vmem:[%s314 + $0x90] sm:$0xff] %v2061
          %2110 = vst [vmem:[%s314 + $0x98] sm:$0xff] %v2062
          %2111 = vst [vmem:[%s314 + $0xa0] sm:$0xff] %v2063
          %2112 = vst [vmem:[%s314 + $0xa8] sm:$0xff] %v2064
          %2113 = vst [vmem:[%s314 + $0xb0] sm:$0xff] %v2065
          %2114 = vst [vmem:[%s314 + $0xb8] sm:$0xff] %v2066
        $region78: #{upsample_net2_forward.7} parent=69 // pred_fallthru
          _
        %p2115 = scmp.le.s32.totalorder %s1831, 256
        // Predicated region
        $region79: #{upsample_net2_forward.7} parent=69 // pred_check
          %p2116 = pneg %p2115
        $region80: #{upsample_net2_forward.7} parent=69 // pred_check_branch
          %2118 = sbr.rel (%p2116) target = $region82
        $region81: #{upsample_net2_forward.7} parent=69 // pred_region
          %v2119 = vsel %vm1818, %v1733, 0.0
          %v2120 = vsel %vm1818, %v1734, 0.0
          %v2121 = vsel %vm1819, %v1735, 0.0
          %v2122 = vsel %vm1819, %v1736, 0.0
          %v2123 = vsel %vm1820, %v1737, 0.0
          %v2124 = vsel %vm1820, %v1738, 0.0
          %v2125 = vsel %vm1821, %v1739, 0.0
          %v2126 = vsel %vm1821, %v1740, 0.0
          %v2127 = vsel %vm1822, %v1741, 0.0
          %v2128 = vsel %vm1822, %v1742, 0.0
          %v2129 = vsel %vm1823, %v1743, 0.0
          %v2130 = vsel %vm1823, %v1744, 0.0
          %v2131 = vsel %vm1824, %v1745, 0.0
          %v2132 = vsel %vm1824, %v1746, 0.0
          %v2133 = vsel %vm1825, %v1747, 0.0
          %v2134 = vsel %vm1825, %v1748, 0.0
          %v2135 = vsel %vm1826, %v1749, 0.0
          %v2136 = vsel %vm1826, %v1750, 0.0
          %v2137 = vsel %vm1827, %v1751, 0.0
          %v2138 = vsel %vm1827, %v1752, 0.0
          %v2139 = vsel %vm1828, %v1753, 0.0
          %v2140 = vsel %vm1828, %v1754, 0.0
          %v2141 = vsel %vm1829, %v1755, 0.0
          %v2142 = vsel %vm1829, %v1756, 0.0
          %v2143 = vsel %vm1818, %v1757, 0.0
          %v2144 = vsel %vm1818, %v1758, 0.0
          %v2145 = vsel %vm1819, %v1759, 0.0
          %v2146 = vsel %vm1819, %v1760, 0.0
          %v2147 = vsel %vm1820, %v1761, 0.0
          %v2148 = vsel %vm1820, %v1762, 0.0
          %v2149 = vsel %vm1821, %v1763, 0.0
          %v2150 = vsel %vm1821, %v1764, 0.0
          %v2151 = vsel %vm1822, %v1765, 0.0
          %v2152 = vsel %vm1822, %v1766, 0.0
          %v2153 = vsel %vm1823, %v1767, 0.0
          %v2154 = vsel %vm1823, %v1768, 0.0
          %v2155 = vsel %vm1824, %v1769, 0.0
          %v2156 = vsel %vm1824, %v1770, 0.0
          %v2157 = vsel %vm1825, %v1771, 0.0
          %v2158 = vsel %vm1825, %v1772, 0.0
          %v2159 = vsel %vm1826, %v1773, 0.0
          %v2160 = vsel %vm1826, %v1774, 0.0
          %v2161 = vsel %vm1827, %v1775, 0.0
          %v2162 = vsel %vm1827, %v1776, 0.0
          %v2163 = vsel %vm1828, %v1777, 0.0
          %v2164 = vsel %vm1828, %v1778, 0.0
          %v2165 = vsel %vm1829, %v1779, 0.0
          %v2166 = vsel %vm1829, %v1780, 0.0
          %v2167 = vpack.c.bf16 %v2121, %v2119
          %v2168 = vpack.c.bf16 %v2122, %v2120
          %v2169 = vpack.c.bf16 %v2145, %v2143
          %v2170 = vpack.c.bf16 %v2146, %v2144
          %v2171 = vpack.c.bf16 %v2125, %v2123
          %v2172 = vpack.c.bf16 %v2126, %v2124
          %v2173 = vpack.c.bf16 %v2149, %v2147
          %v2174 = vpack.c.bf16 %v2150, %v2148
          %v2175 = vpack.c.bf16 %v2129, %v2127
          %v2176 = vpack.c.bf16 %v2130, %v2128
          %v2177 = vpack.c.bf16 %v2153, %v2151
          %v2178 = vpack.c.bf16 %v2154, %v2152
          %v2179 = vpack.c.bf16 %v2133, %v2131
          %v2180 = vpack.c.bf16 %v2134, %v2132
          %v2181 = vpack.c.bf16 %v2157, %v2155
          %v2182 = vpack.c.bf16 %v2158, %v2156
          %v2183 = vpack.c.bf16 %v2137, %v2135
          %v2184 = vpack.c.bf16 %v2138, %v2136
          %v2185 = vpack.c.bf16 %v2161, %v2159
          %v2186 = vpack.c.bf16 %v2162, %v2160
          %v2187 = vpack.c.bf16 %v2141, %v2139
          %v2188 = vpack.c.bf16 %v2142, %v2140
          %v2189 = vpack.c.bf16 %v2165, %v2163
          %v2190 = vpack.c.bf16 %v2166, %v2164
          %v2215 = vunpack.c.l.b16 %v2167
          %v2216 = vunpack.c.l.b16 %v2168
          %v2217 = vunpack.c.l.b16 %v2169
          %v2218 = vunpack.c.l.b16 %v2170
          %v2219 = vunpack.c.h.b16 %v2167
          %v2220 = vunpack.c.h.b16 %v2168
          %v2221 = vunpack.c.h.b16 %v2169
          %v2222 = vunpack.c.h.b16 %v2170
          %v2223 = vunpack.c.l.b16 %v2171
          %v2224 = vunpack.c.l.b16 %v2172
          %v2225 = vunpack.c.l.b16 %v2173
          %v2226 = vunpack.c.l.b16 %v2174
          %v2227 = vunpack.c.h.b16 %v2171
          %v2228 = vunpack.c.h.b16 %v2172
          %v2229 = vunpack.c.h.b16 %v2173
          %v2230 = vunpack.c.h.b16 %v2174
          %v2231 = vunpack.c.l.b16 %v2175
          %v2232 = vunpack.c.l.b16 %v2176
          %v2233 = vunpack.c.l.b16 %v2177
          %v2234 = vunpack.c.l.b16 %v2178
          %v2235 = vunpack.c.h.b16 %v2175
          %v2236 = vunpack.c.h.b16 %v2176
          %v2237 = vunpack.c.h.b16 %v2177
          %v2238 = vunpack.c.h.b16 %v2178
          %v2239 = vunpack.c.l.b16 %v2179
          %v2240 = vunpack.c.l.b16 %v2180
          %v2241 = vunpack.c.l.b16 %v2181
          %v2242 = vunpack.c.l.b16 %v2182
          %v2243 = vunpack.c.h.b16 %v2179
          %v2244 = vunpack.c.h.b16 %v2180
          %v2245 = vunpack.c.h.b16 %v2181
          %v2246 = vunpack.c.h.b16 %v2182
          %v2247 = vunpack.c.l.b16 %v2183
          %v2248 = vunpack.c.l.b16 %v2184
          %v2249 = vunpack.c.l.b16 %v2185
          %v2250 = vunpack.c.l.b16 %v2186
          %v2251 = vunpack.c.h.b16 %v2183
          %v2252 = vunpack.c.h.b16 %v2184
          %v2253 = vunpack.c.h.b16 %v2185
          %v2254 = vunpack.c.h.b16 %v2186
          %v2255 = vunpack.c.l.b16 %v2187
          %v2256 = vunpack.c.l.b16 %v2188
          %v2257 = vunpack.c.l.b16 %v2189
          %v2258 = vunpack.c.l.b16 %v2190
          %v2259 = vunpack.c.h.b16 %v2187
          %v2260 = vunpack.c.h.b16 %v2188
          %v2261 = vunpack.c.h.b16 %v2189
          %v2262 = vunpack.c.h.b16 %v2190
          %v2263 = vpack.c.b16 %v2216, %v2215
          %v2264 = vpack.c.b16 %v2218, %v2217
          %v2265 = vpack.c.b16 %v2220, %v2219
          %v2266 = vpack.c.b16 %v2222, %v2221
          %v2267 = vpack.c.b16 %v2224, %v2223
          %v2268 = vpack.c.b16 %v2226, %v2225
          %v2269 = vpack.c.b16 %v2228, %v2227
          %v2270 = vpack.c.b16 %v2230, %v2229
          %v2271 = vpack.c.b16 %v2232, %v2231
          %v2272 = vpack.c.b16 %v2234, %v2233
          %v2273 = vpack.c.b16 %v2236, %v2235
          %v2274 = vpack.c.b16 %v2238, %v2237
          %v2275 = vpack.c.b16 %v2240, %v2239
          %v2276 = vpack.c.b16 %v2242, %v2241
          %v2277 = vpack.c.b16 %v2244, %v2243
          %v2278 = vpack.c.b16 %v2246, %v2245
          %v2279 = vpack.c.b16 %v2248, %v2247
          %v2280 = vpack.c.b16 %v2250, %v2249
          %v2281 = vpack.c.b16 %v2252, %v2251
          %v2282 = vpack.c.b16 %v2254, %v2253
          %v2283 = vpack.c.b16 %v2256, %v2255
          %v2284 = vpack.c.b16 %v2258, %v2257
          %v2285 = vpack.c.b16 %v2260, %v2259
          %v2286 = vpack.c.b16 %v2262, %v2261
          %2311 = vst [vmem:[%s314] sm:$0xff] %v2263
          %2312 = vst [vmem:[%s314 + $0x8] sm:$0xff] %v2264
          %2313 = vst [vmem:[%s314 + $0x10] sm:$0xff] %v2265
          %2314 = vst [vmem:[%s314 + $0x18] sm:$0xff] %v2266
          %2315 = vst [vmem:[%s314 + $0x20] sm:$0xff] %v2267
          %2316 = vst [vmem:[%s314 + $0x28] sm:$0xff] %v2268
          %2317 = vst [vmem:[%s314 + $0x30] sm:$0xff] %v2269
          %2318 = vst [vmem:[%s314 + $0x38] sm:$0xff] %v2270
          %2319 = vst [vmem:[%s314 + $0x40] sm:$0xff] %v2271
          %2320 = vst [vmem:[%s314 + $0x48] sm:$0xff] %v2272
          %2321 = vst [vmem:[%s314 + $0x50] sm:$0xff] %v2273
          %2322 = vst [vmem:[%s314 + $0x58] sm:$0xff] %v2274
          %2323 = vst [vmem:[%s314 + $0x60] sm:$0xff] %v2275
          %2324 = vst [vmem:[%s314 + $0x68] sm:$0xff] %v2276
          %2325 = vst [vmem:[%s314 + $0x70] sm:$0xff] %v2277
          %2326 = vst [vmem:[%s314 + $0x78] sm:$0xff] %v2278
          %2327 = vst [vmem:[%s314 + $0x80] sm:$0xff] %v2279
          %2328 = vst [vmem:[%s314 + $0x88] sm:$0xff] %v2280
          %2329 = vst [vmem:[%s314 + $0x90] sm:$0xff] %v2281
          %2330 = vst [vmem:[%s314 + $0x98] sm:$0xff] %v2282
          %2331 = vst [vmem:[%s314 + $0xa0] sm:$0xff] %v2283
          %2332 = vst [vmem:[%s314 + $0xa8] sm:$0xff] %v2284
          %2333 = vst [vmem:[%s314 + $0xb0] sm:$0xff] %v2285
          %2334 = vst [vmem:[%s314 + $0xb8] sm:$0xff] %v2286
        $region82: #{upsample_net2_forward.7} parent=69 // pred_fallthru
          _
        %s2335 = sand.u32 %s136, 1
        %s2336 = sand.u32 %s136, 1
        %s2337 = smul.addr %s2336, 192
        %s2338 = scalar_lea.vmem [#allocation4], %s2337
        // Predicated region
        $region83: #{upsample_net2_forward.7} parent=69 // pred_check
          %p2339 = pneg %p146
        $region84: #{upsample_net2_forward.7} parent=69 // pred_check_branch
          %2341 = sbr.rel (%p2339) target = $region86
        $region85: #{upsample_net2_forward.7} parent=69 // pred_region
          %s2342 = smul.u32 4, %s21
          %s2343 = smul.addr %s20, 384
          %s2344 = sadd.s32 %s2342, %s2343
          %s2345 = smul.addr %s2344, 4
          %s2346 = scalar_lea.vmem %s4, %s2345
          // Predicated region
          $region87: #{upsample_net2_forward.7} parent=85 // pred_check
            _
          $region88: #{upsample_net2_forward.7} parent=85 // pred_check_branch
            %2348 = sbr.rel (0) target = $region90
          $region89: #{upsample_net2_forward.7} parent=85 // pred_region
            // Predicated region
            $region91: #{upsample_net2_forward.7} parent=89 // pred_check
              _
            $region92: #{upsample_net2_forward.7} parent=89 // pred_check_branch
              %2350 = sbr.rel (0) target = $region94
            $region93: #{upsample_net2_forward.7} parent=89 // pred_region
              loop: start=0, step=1, limit=1
              $region95: #{upsample_net2_forward.7} parent=93 // loop_pre_header
                _
              $region96: #{upsample_net2_forward.7} parent=93 // loop_header
                %s2352 = sphi 0, %s2356
                %p2353 = scmp.ge.s32.totalorder %s2352, 1
                %s2357 = sphi %s2338, %s2338
                %s2358 = sphi %s2346, %s2346
              $region97: #{upsample_net2_forward.7} parent=93 // loop_header_branch
                %2355 = sbr.rel (%p2353) target = $region101
              $region98: #{upsample_net2_forward.7} parent=93 // loop_body
                %v2359 = vld [vmem:[%s2357] sm:$0xff]
                %2360 = vst [vmem:[%s2358] sm:$0xff] %v2359
                %v2361 = vld [vmem:[%s2357 + $0x8] sm:$0xff]
                %2362 = vst [vmem:[%s2358 + $0x8] sm:$0xff] %v2361
                %v2363 = vld [vmem:[%s2357 + $0x10] sm:$0xff]
                %2364 = vst [vmem:[%s2358 + $0x80] sm:$0xff] %v2363
                %v2365 = vld [vmem:[%s2357 + $0x18] sm:$0xff]
                %2366 = vst [vmem:[%s2358 + $0x88] sm:$0xff] %v2365
                %v2367 = vld [vmem:[%s2357 + $0x20] sm:$0xff]
                %2368 = vst [vmem:[%s2358 + $0x100] sm:$0xff] %v2367
                %v2369 = vld [vmem:[%s2357 + $0x28] sm:$0xff]
                %2370 = vst [vmem:[%s2358 + $0x108] sm:$0xff] %v2369
                %v2371 = vld [vmem:[%s2357 + $0x30] sm:$0xff]
                %2372 = vst [vmem:[%s2358 + $0x180] sm:$0xff] %v2371
                %v2373 = vld [vmem:[%s2357 + $0x38] sm:$0xff]
                %2374 = vst [vmem:[%s2358 + $0x188] sm:$0xff] %v2373
                %v2375 = vld [vmem:[%s2357 + $0x40] sm:$0xff]
                %2376 = vst [vmem:[%s2358 + $0x200] sm:$0xff] %v2375
                %v2377 = vld [vmem:[%s2357 + $0x48] sm:$0xff]
                %2378 = vst [vmem:[%s2358 + $0x208] sm:$0xff] %v2377
                %v2379 = vld [vmem:[%s2357 + $0x50] sm:$0xff]
                %2380 = vst [vmem:[%s2358 + $0x280] sm:$0xff] %v2379
                %v2381 = vld [vmem:[%s2357 + $0x58] sm:$0xff]
                %2382 = vst [vmem:[%s2358 + $0x288] sm:$0xff] %v2381
                %v2383 = vld [vmem:[%s2357 + $0x60] sm:$0xff]
                %2384 = vst [vmem:[%s2358 + $0x300] sm:$0xff] %v2383
                %v2385 = vld [vmem:[%s2357 + $0x68] sm:$0xff]
                %2386 = vst [vmem:[%s2358 + $0x308] sm:$0xff] %v2385
                %v2387 = vld [vmem:[%s2357 + $0x70] sm:$0xff]
                %2388 = vst [vmem:[%s2358 + $0x380] sm:$0xff] %v2387
                %v2389 = vld [vmem:[%s2357 + $0x78] sm:$0xff]
                %2390 = vst [vmem:[%s2358 + $0x388] sm:$0xff] %v2389
                %v2391 = vld [vmem:[%s2357 + $0x80] sm:$0xff]
                %2392 = vst [vmem:[%s2358 + $0x400] sm:$0xff] %v2391
                %v2393 = vld [vmem:[%s2357 + $0x88] sm:$0xff]
                %2394 = vst [vmem:[%s2358 + $0x408] sm:$0xff] %v2393
                %v2395 = vld [vmem:[%s2357 + $0x90] sm:$0xff]
                %2396 = vst [vmem:[%s2358 + $0x480] sm:$0xff] %v2395
                %v2397 = vld [vmem:[%s2357 + $0x98] sm:$0xff]
                %2398 = vst [vmem:[%s2358 + $0x488] sm:$0xff] %v2397
                %v2399 = vld [vmem:[%s2357 + $0xa0] sm:$0xff]
                %2400 = vst [vmem:[%s2358 + $0x500] sm:$0xff] %v2399
                %v2401 = vld [vmem:[%s2357 + $0xa8] sm:$0xff]
                %2402 = vst [vmem:[%s2358 + $0x508] sm:$0xff] %v2401
                %v2403 = vld [vmem:[%s2357 + $0xb0] sm:$0xff]
                %2404 = vst [vmem:[%s2358 + $0x580] sm:$0xff] %v2403
                %v2405 = vld [vmem:[%s2357 + $0xb8] sm:$0xff]
                %2406 = vst [vmem:[%s2358 + $0x588] sm:$0xff] %v2405
              $region99: #{upsample_net2_forward.7} parent=93 // loop_footer
                %s2356 = sadd.s32 1, %s2352
              $region100: #{upsample_net2_forward.7} parent=93 // loop_footer_branch
                %2351 = sbr.rel target = $region96
              $region101: #{upsample_net2_forward.7} parent=93 // loop_exit
                _
            $region94: #{upsample_net2_forward.7} parent=89 // pred_fallthru
              _
            // Predicated region
            $region102: #{upsample_net2_forward.7} parent=89 // pred_check
              _
            $region103: #{upsample_net2_forward.7} parent=89 // pred_check_branch
              %2408 = sbr.rel target = $region105
            $region104: #{upsample_net2_forward.7} parent=89 // pred_region
              _
            $region105: #{upsample_net2_forward.7} parent=89 // pred_fallthru
              _
          $region90: #{upsample_net2_forward.7} parent=85 // pred_fallthru
            _
          %2409 = vnop
        $region86: #{upsample_net2_forward.7} parent=69 // pred_fallthru
          _
      $region70: #{upsample_net2_forward.7} parent=5 // pred_fallthru
        _
      %p2410 = scmp.le.s32.totalorder 2, %s11
      // Predicated region
      $region106: #{upsample_net2_forward.7} parent=5 // pred_check
        %p2411 = pneg %p2410
      $region107: #{upsample_net2_forward.7} parent=5 // pred_check_branch
        %2413 = sbr.rel (%p2411) target = $region109
      $region108: #{upsample_net2_forward.7} parent=5 // pred_region
        %s2414 = ssub.s32 %s11, 2
        // Predicated region
        $region110: #{upsample_net2_forward.7} parent=108 // pred_check
          %p2415 = pneg %p152
        $region111: #{upsample_net2_forward.7} parent=108 // pred_check_branch
          %2417 = sbr.rel (%p2415) target = $region113
        $region112: #{upsample_net2_forward.7} parent=108 // pred_region
          %s2418 = sand.u32 %s137, 1
          %s2419 = sand.u32 %s137, 1
          %s2420 = smul.addr %s2419, 192
          %s2421 = scalar_lea.vmem [#allocation4], %s2420
        $region113: #{upsample_net2_forward.7} parent=108 // pred_fallthru
          _
      $region109: #{upsample_net2_forward.7} parent=5 // pred_fallthru
        _
    $region6: #{upsample_net2_forward.7} parent=1 // loop_footer
      %s15 = sadd.s32 1, %s11
    $region7: #{upsample_net2_forward.7} parent=1 // loop_footer_branch
      %10 = sbr.rel target = $region3
    $region8: #{upsample_net2_forward.7} parent=1 // loop_exit
      _

</llo_original>
